<compile_context>
chip_gen: v5e
topology: v5e:2x2
jax: 0.10.0
libtpu: 0.0.40
codegen_flags: <defaults>
</compile_context>

<pallas_src>
import functools

import jax
import jax.numpy as jnp
from jax import lax
from jax.experimental import pallas as pl
from jax.experimental.pallas import tpu as pltpu


def _round_up(x, m):
    return (x + m - 1) // m * m


# ----------------------------- Pallas kernel ------------------------------

def _basic_block_kernel(xf_ref, w1_ref, b1_ref, w2_ref, b2_ref, mask_ref,
                        out_ref, xa_ref, acc_ref, h1_ref, *, taps, g0, m):
    """Fused BasicBlock forward for ONE image (grid axis = batch).

    xf_ref  : (L, Cp)   bf16  flattened zero-padded input image
    w1_ref  : (9,Cp,Cp) bf16  conv1 weights, BN1 scale folded into columns
    b1_ref  : (1, Cp)   f32   BN1 bias
    w2_ref  : (9,Cp,Cp) bf16  conv2 weights, BN2 scale folded into columns
    b2_ref  : (1, Cp)   f32   BN2 bias
    mask_ref: (M, 1)    f32   1.0 at real pixels, 0.0 at the 2 pad columns/row
    out_ref : (M, Cp)   f32   flattened output (valid pixels at h*Wp + w)
    xa_ref  : (L, Cp)   f32   scratch: widened input (aligned accesses only
                              touch the packed bf16 HBM tile)
    acc_ref : (M, Cp)   f32   scratch: conv accumulator
    h1_ref  : (L, Cp)   f32   scratch: padded conv1 output (never hits HBM)
    """
    # Widen the bf16 HBM tile once (full-tile, aligned); all shifted tap
    # slices below are on 32-bit VMEM scratch.
    xa_ref[...] = xf_ref[...].astype(jnp.float32)

    # ---- conv1 (+ folded BN1 scale) ----
    acc_ref[...] = jnp.zeros_like(acc_ref)
    for t, off in enumerate(taps):
        acc_ref[...] += jnp.dot(
            xa_ref[pl.ds(off, m), :].astype(jnp.bfloat16), w1_ref[t],
            preferred_element_type=jnp.float32)
    # BN1 bias + ReLU, and zero the wrap-around pad columns so the staged
    # buffer is a correct zero-padded image for conv2.
    h1 = jnp.maximum(acc_ref[...] + b1_ref[...], 0.0) * mask_ref[...]

    h1_ref[...] = jnp.zeros_like(h1_ref)          # zero halo + guards
    h1_ref[pl.ds(g0, m), :] = h1                  # aligned interior store

    # ---- conv2 (+ folded BN2 scale) + identity + ReLU ----
    acc_ref[...] = jnp.zeros_like(acc_ref)
    for t, off in enumerate(taps):
        acc_ref[...] += jnp.dot(
            h1_ref[pl.ds(off, m), :].astype(jnp.bfloat16), w2_ref[t],
            preferred_element_type=jnp.float32)
    res = xa_ref[pl.ds(g0, m), :]                 # identity branch (same layout)
    out_ref[...] = jnp.maximum(acc_ref[...] + b2_ref[...] + res, 0.0
                               ).astype(out_ref.dtype)


# ------------------------------- wrapper -----------------------------------

def basic_block_forward(x_nchw, params):
    """BasicBlock.forward(x, aux=False) with stride=1, downsample=None."""
    N, C, H, W = x_nchw.shape
    planes = params["w1_hwio"].shape[-1]
    if planes != C:
        raise NotImplementedError("downsample=None requires inplanes == planes")

    Cp = _round_up(max(C, 128), 128)   # lane-dense channel dim
    Wp = W + 2                         # one pad column on each side
    M = H * Wp                         # flattened conv-output rows per image
    G0 = _round_up(Wp + 1, 32)         # aligned left zero-guard
    D = G0 - Wp - 1
    L = G0 + M + Wp + 8                # buffer length incl. tail guard (no OOB)
    taps = tuple(D + kh * Wp + kw for kh in range(3) for kw in range(3))
    # TODO(synk): for very deep stages (9*C huge) add a K-reduction grid axis
    #             instead of keeping both full weight slabs resident.

    # ---------- XLA-side layout glue (no compute) ----------
    x = jnp.transpose(x_nchw, (0, 2, 3, 1))                       # NHWC
    xq = jnp.pad(x, ((0, 0), (0, 0), (0, Wp - W), (0, Cp - C)))   # (N,H,Wp,Cp)
    xf = jnp.pad(xq.reshape(N, M, Cp), ((0, 0), (G0, L - G0 - M), (0, 0)))
    xf = xf.astype(jnp.bfloat16)                                  # bf16 at boundary

    def prep_w(w_hwio, scale):          # fold BN scale into output columns
        w = w_hwio * scale[None, None, None, :]
        w = jnp.pad(w, ((0, 0), (0, 0),
                        (0, Cp - w.shape[2]), (0, Cp - w.shape[3])))
        return w.reshape(9, Cp, Cp).astype(jnp.bfloat16)

    w1 = prep_w(params["w1_hwio"], params["scale1"])
    w2 = prep_w(params["w2_hwio"], params["scale2"])
    b1 = jnp.pad(params["bias1"], (0, Cp - planes)).reshape(1, Cp).astype(jnp.float32)
    b2 = jnp.pad(params["bias2"], (0, Cp - planes)).reshape(1, Cp).astype(jnp.float32)

    q = jnp.arange(M, dtype=jnp.int32)
    mask = ((q % Wp) < W).astype(jnp.float32).reshape(M, 1)

    kernel = functools.partial(_basic_block_kernel, taps=taps, g0=G0, m=M)

    out_flat = pl.pallas_call(
        kernel,
        out_shape=jax.ShapeDtypeStruct((N, M, Cp), jnp.float32),
        grid=(N,),
        in_specs=[
            pl.BlockSpec((None, L, Cp), lambda n: (n, 0, 0)),   # padded image
            pl.BlockSpec((9, Cp, Cp), lambda n: (0, 0, 0)),     # w1 (resident)
            pl.BlockSpec((1, Cp), lambda n: (0, 0)),            # bn1 bias
            pl.BlockSpec((9, Cp, Cp), lambda n: (0, 0, 0)),     # w2 (resident)
            pl.BlockSpec((1, Cp), lambda n: (0, 0)),            # bn2 bias
            pl.BlockSpec((M, 1), lambda n: (0, 0)),             # pad-column mask
        ],
        out_specs=pl.BlockSpec((None, M, Cp), lambda n: (n, 0, 0)),
        scratch_shapes=[
            pltpu.VMEM((L, Cp), jnp.float32),   # widened input
            pltpu.VMEM((M, Cp), jnp.float32),   # f32 accumulator
            pltpu.VMEM((L, Cp), jnp.float32),   # padded out1 (stays in VMEM)
        ],
        compiler_params=pltpu.CompilerParams(
            dimension_semantics=("parallel",),          # shard images over TCs
            vmem_limit_bytes=48 * 1024 * 1024),
    )(xf, w1, b1, w2, b2, mask)

    out = out_flat.reshape(N, H, Wp, Cp)[:, :, :W, :C]   # drop pad cols/chans
    return jnp.transpose(out, (0, 3, 1, 2))              # NHWC -> NCHW


# ------------------------- deterministic parameters ------------------------

def make_params(key, inplanes, planes, eps=1e-5):
    ks = jax.random.split(key, 12)
    w1_oihw = 0.1 * jax.random.normal(ks[0], (planes, inplanes, 3, 3), jnp.float32)
    w2_oihw = 0.1 * jax.random.normal(ks[1], (planes, planes, 3, 3), jnp.float32)

    def bn(kg, kb, km, kv):
        gamma = 1.0 + 0.1 * jax.random.normal(kg, (planes,), jnp.float32)
        beta = 0.1 * jax.random.normal(kb, (planes,), jnp.float32)
        mean = 0.1 * jax.random.normal(km, (planes,), jnp.float32)
        var = jnp.abs(jax.random.normal(kv, (planes,), jnp.float32)) + 0.5
        scale = gamma / jnp.sqrt(var + eps)
        bias = beta - mean * scale
        return scale, bias

    scale1, bias1 = bn(ks[2], ks[3], ks[4], ks[5])
    scale2, bias2 = bn(ks[6], ks[7], ks[8], ks[9])

    return {
        "w1_oihw": w1_oihw,
        "w2_oihw": w2_oihw,
        "w1_hwio": jnp.transpose(w1_oihw, (2, 3, 1, 0)),
        "w2_hwio": jnp.transpose(w2_oihw, (2, 3, 1, 0)),
        "scale1": scale1, "bias1": bias1,
        "scale2": scale2, "bias2": bias2,
    }


# ------------------------------ XLA reference ------------------------------

def ref_forward(x, params):
    dn = ("NCHW", "OIHW", "NCHW")
    s1, b1 = params["scale1"], params["bias1"]
    s2, b2 = params["scale2"], params["bias2"]
    out = lax.conv_general_dilated(x, params["w1_oihw"], (1, 1), "SAME",
                                   dimension_numbers=dn)
    out = out * s1[None, :, None, None] + b1[None, :, None, None]
    out = jnp.maximum(out, 0.0)
    out = lax.conv_general_dilated(out, params["w2_oihw"], (1, 1), "SAME",
                                   dimension_numbers=dn)
    out = out * s2[None, :, None, None] + b2[None, :, None, None]
    out = out + x
    return jnp.maximum(out, 0.0)


# ---------------------------------- main -----------------------------------

if __name__ == "__main__":
    key = jax.random.PRNGKey(0)
    kx, kp = jax.random.split(key)

    N, C, H, W = 2, 4, 16, 16          # inplanes == planes, stride 1
    x = jax.random.normal(kx, (N, C, H, W), jnp.float32)
    params = make_params(kp, C, C)

    fwd = jax.jit(basic_block_forward)
    out = jax.block_until_ready(fwd(x, params))

    assert out.shape == (N, C, H, W), out.shape
    ref = ref_forward(x, params)
    err = float(jnp.max(jnp.abs(out - ref)))
    assert jnp.allclose(out, ref, atol=5e-2, rtol=5e-2), f"max abs err {err}"

    print("KERNEL_OK")
</pallas_src>

<mosaic_0001>
module attributes {stable_mosaic.version = 11 : i64} {
  func.func @_basic_block_kernel(%arg0: i32, %arg1: memref<1x346x128xbf16, #tpu.memory_space<vmem>>, %arg2: memref<9x128x128xbf16, #tpu.memory_space<vmem>>, %arg3: memref<1x128xf32, #tpu.memory_space<vmem>>, %arg4: memref<9x128x128xbf16, #tpu.memory_space<vmem>>, %arg5: memref<1x128xf32, #tpu.memory_space<vmem>>, %arg6: memref<288x1xf32, #tpu.memory_space<vmem>>, %arg7: memref<1x288x128xf32, #tpu.memory_space<vmem>>, %arg8: memref<346x128xf32, #tpu.memory_space<vmem>>, %arg9: memref<288x128xf32, #tpu.memory_space<vmem>>, %arg10: memref<346x128xf32, #tpu.memory_space<vmem>>) attributes {dimension_semantics = [#tpu.dimension_semantics<parallel>], iteration_bounds = array<i64: 2>, scalar_prefetch = 0 : i64, scratch_operands = 3 : i64, tpu.core_type = #tpu.core_type<tc>, window_params = [{transform_indices = @transform_0, window_bounds = array<i64: 1, 346, 128>}, {pipeline_mode = #tpu.pipeline_mode<synchronous>, transform_indices = @transform_1, window_bounds = array<i64: 9, 128, 128>}, {pipeline_mode = #tpu.pipeline_mode<synchronous>, transform_indices = @transform_2, window_bounds = array<i64: 1, 128>}, {pipeline_mode = #tpu.pipeline_mode<synchronous>, transform_indices = @transform_3, window_bounds = array<i64: 9, 128, 128>}, {pipeline_mode = #tpu.pipeline_mode<synchronous>, transform_indices = @transform_4, window_bounds = array<i64: 1, 128>}, {pipeline_mode = #tpu.pipeline_mode<synchronous>, transform_indices = @transform_5, window_bounds = array<i64: 288, 1>}, {transform_indices = @transform_6, window_bounds = array<i64: 1, 288, 128>}]} {
    %c0 = arith.constant 0 : index
    %c0_0 = arith.constant 0 : index
    %c0_1 = arith.constant 0 : index
    %0 = vector.load %arg1[%c0, %c0_0, %c0_1] : memref<1x346x128xbf16, #tpu.memory_space<vmem>>, vector<1x346x128xbf16>
    %1 = vector.shape_cast %0 : vector<1x346x128xbf16> to vector<346x128xbf16>
    %2 = arith.extf %1 : vector<346x128xbf16> to vector<346x128xf32>
    %c0_2 = arith.constant 0 : index
    %c0_3 = arith.constant 0 : index
    %3 = vector.load %arg8[%c0_2, %c0_3] : memref<346x128xf32, #tpu.memory_space<vmem>>, vector<346x128xf32>
    tpu.vector_store %arg8[%c0_2, %c0_3], %2 {strides = array<i32>} : memref<346x128xf32, #tpu.memory_space<vmem>>, vector<346x128xf32>,
    %cst = arith.constant 0.000000e+00 : f32
    %4 = vector.broadcast %cst : f32 to vector<288x128xf32>
    %c0_4 = arith.constant 0 : index
    %c0_5 = arith.constant 0 : index
    %5 = vector.load %arg9[%c0_4, %c0_5] : memref<288x128xf32, #tpu.memory_space<vmem>>, vector<288x128xf32>
    tpu.vector_store %arg9[%c0_4, %c0_5], %4 {strides = array<i32>} : memref<288x128xf32, #tpu.memory_space<vmem>>, vector<288x128xf32>,
    %c0_6 = arith.constant 0 : index
    %c0_7 = arith.constant 0 : index
    %6 = vector.load %arg9[%c0_6, %c0_7] : memref<288x128xf32, #tpu.memory_space<vmem>>, vector<288x128xf32>
    %c13 = arith.constant 13 : index
    %c0_8 = arith.constant 0 : index
    %7 = vector.load %arg8[%c13, %c0_8] : memref<346x128xf32, #tpu.memory_space<vmem>>, vector<288x128xf32>
    %8 = arith.truncf %7 : vector<288x128xf32> to vector<288x128xbf16>
    %c0_9 = arith.constant 0 : index
    %c0_10 = arith.constant 0 : index
    %c0_11 = arith.constant 0 : index
    %9 = vector.load %arg2[%c0_9, %c0_10, %c0_11] : memref<9x128x128xbf16, #tpu.memory_space<vmem>>, vector<1x128x128xbf16>
    %10 = vector.shape_cast %9 : vector<1x128x128xbf16> to vector<128x128xbf16>
    %cst_12 = arith.constant dense<0.000000e+00> : vector<288x128xf32>
    %11 = tpu.matmul %8, %10, %cst_12 {dimension_numbers = #tpu.dot_dimension_numbers<[1], [0], [0], [1], [0, 0, 1, 1], [], []>} : vector<288x128xbf16>, vector<128x128xbf16>, vector<288x128xf32> -> vector<288x128xf32>
    %12 = arith.addf %6, %11 : vector<288x128xf32>
    %c0_13 = arith.constant 0 : index
    %c0_14 = arith.constant 0 : index
    %13 = vector.load %arg9[%c0_13, %c0_14] : memref<288x128xf32, #tpu.memory_space<vmem>>, vector<288x128xf32>
    tpu.vector_store %arg9[%c0_13, %c0_14], %12 {strides = array<i32>} : memref<288x128xf32, #tpu.memory_space<vmem>>, vector<288x128xf32>,
    %c0_15 = arith.constant 0 : index
    %c0_16 = arith.constant 0 : index
    %14 = vector.load %arg9[%c0_15, %c0_16] : memref<288x128xf32, #tpu.memory_space<vmem>>, vector<288x128xf32>
    %c14 = arith.constant 14 : index
    %c0_17 = arith.constant 0 : index
    %15 = vector.load %arg8[%c14, %c0_17] : memref<346x128xf32, #tpu.memory_space<vmem>>, vector<288x128xf32>
    %16 = arith.truncf %15 : vector<288x128xf32> to vector<288x128xbf16>
    %c1 = arith.constant 1 : index
    %c0_18 = arith.constant 0 : index
    %c0_19 = arith.constant 0 : index
    %17 = vector.load %arg2[%c1, %c0_18, %c0_19] : memref<9x128x128xbf16, #tpu.memory_space<vmem>>, vector<1x128x128xbf16>
    %18 = vector.shape_cast %17 : vector<1x128x128xbf16> to vector<128x128xbf16>
    %cst_20 = arith.constant dense<0.000000e+00> : vector<288x128xf32>
    %19 = tpu.matmul %16, %18, %cst_20 {dimension_numbers = #tpu.dot_dimension_numbers<[1], [0], [0], [1], [0, 0, 1, 1], [], []>} : vector<288x128xbf16>, vector<128x128xbf16>, vector<288x128xf32> -> vector<288x128xf32>
    %20 = arith.addf %14, %19 : vector<288x128xf32>
    %c0_21 = arith.constant 0 : index
    %c0_22 = arith.constant 0 : index
    %21 = vector.load %arg9[%c0_21, %c0_22] : memref<288x128xf32, #tpu.memory_space<vmem>>, vector<288x128xf32>
    tpu.vector_store %arg9[%c0_21, %c0_22], %20 {strides = array<i32>} : memref<288x128xf32, #tpu.memory_space<vmem>>, vector<288x128xf32>,
    %c0_23 = arith.constant 0 : index
    %c0_24 = arith.constant 0 : index
    %22 = vector.load %arg9[%c0_23, %c0_24] : memref<288x128xf32, #tpu.memory_space<vmem>>, vector<288x128xf32>
    %c15 = arith.constant 15 : index
    %c0_25 = arith.constant 0 : index
    %23 = vector.load %arg8[%c15, %c0_25] : memref<346x128xf32, #tpu.memory_space<vmem>>, vector<288x128xf32>
    %24 = arith.truncf %23 : vector<288x128xf32> to vector<288x128xbf16>
    %c2 = arith.constant 2 : index
    %c0_26 = arith.constant 0 : index
    %c0_27 = arith.constant 0 : index
    %25 = vector.load %arg2[%c2, %c0_26, %c0_27] : memref<9x128x128xbf16, #tpu.memory_space<vmem>>, vector<1x128x128xbf16>
    %26 = vector.shape_cast %25 : vector<1x128x128xbf16> to vector<128x128xbf16>
    %cst_28 = arith.constant dense<0.000000e+00> : vector<288x128xf32>
    %27 = tpu.matmul %24, %26, %cst_28 {dimension_numbers = #tpu.dot_dimension_numbers<[1], [0], [0], [1], [0, 0, 1, 1], [], []>} : vector<288x128xbf16>, vector<128x128xbf16>, vector<288x128xf32> -> vector<288x128xf32>
    %28 = arith.addf %22, %27 : vector<288x128xf32>
    %c0_29 = arith.constant 0 : index
    %c0_30 = arith.constant 0 : index
    %29 = vector.load %arg9[%c0_29, %c0_30] : memref<288x128xf32, #tpu.memory_space<vmem>>, vector<288x128xf32>
    tpu.vector_store %arg9[%c0_29, %c0_30], %28 {strides = array<i32>} : memref<288x128xf32, #tpu.memory_space<vmem>>, vector<288x128xf32>,
    %c0_31 = arith.constant 0 : index
    %c0_32 = arith.constant 0 : index
    %30 = vector.load %arg9[%c0_31, %c0_32] : memref<288x128xf32, #tpu.memory_space<vmem>>, vector<288x128xf32>
    %c31 = arith.constant 31 : index
    %c0_33 = arith.constant 0 : index
    %31 = vector.load %arg8[%c31, %c0_33] : memref<346x128xf32, #tpu.memory_space<vmem>>, vector<288x128xf32>
    %32 = arith.truncf %31 : vector<288x128xf32> to vector<288x128xbf16>
    %c3 = arith.constant 3 : index
    %c0_34 = arith.constant 0 : index
    %c0_35 = arith.constant 0 : index
    %33 = vector.load %arg2[%c3, %c0_34, %c0_35] : memref<9x128x128xbf16, #tpu.memory_space<vmem>>, vector<1x128x128xbf16>
    %34 = vector.shape_cast %33 : vector<1x128x128xbf16> to vector<128x128xbf16>
    %cst_36 = arith.constant dense<0.000000e+00> : vector<288x128xf32>
    %35 = tpu.matmul %32, %34, %cst_36 {dimension_numbers = #tpu.dot_dimension_numbers<[1], [0], [0], [1], [0, 0, 1, 1], [], []>} : vector<288x128xbf16>, vector<128x128xbf16>, vector<288x128xf32> -> vector<288x128xf32>
    %36 = arith.addf %30, %35 : vector<288x128xf32>
    %c0_37 = arith.constant 0 : index
    %c0_38 = arith.constant 0 : index
    %37 = vector.load %arg9[%c0_37, %c0_38] : memref<288x128xf32, #tpu.memory_space<vmem>>, vector<288x128xf32>
    tpu.vector_store %arg9[%c0_37, %c0_38], %36 {strides = array<i32>} : memref<288x128xf32, #tpu.memory_space<vmem>>, vector<288x128xf32>,
    %c0_39 = arith.constant 0 : index
    %c0_40 = arith.constant 0 : index
    %38 = vector.load %arg9[%c0_39, %c0_40] : memref<288x128xf32, #tpu.memory_space<vmem>>, vector<288x128xf32>
    %c32 = arith.constant 32 : index
    %c0_41 = arith.constant 0 : index
    %39 = vector.load %arg8[%c32, %c0_41] : memref<346x128xf32, #tpu.memory_space<vmem>>, vector<288x128xf32>
    %40 = arith.truncf %39 : vector<288x128xf32> to vector<288x128xbf16>
    %c4 = arith.constant 4 : index
    %c0_42 = arith.constant 0 : index
    %c0_43 = arith.constant 0 : index
    %41 = vector.load %arg2[%c4, %c0_42, %c0_43] : memref<9x128x128xbf16, #tpu.memory_space<vmem>>, vector<1x128x128xbf16>
    %42 = vector.shape_cast %41 : vector<1x128x128xbf16> to vector<128x128xbf16>
    %cst_44 = arith.constant dense<0.000000e+00> : vector<288x128xf32>
    %43 = tpu.matmul %40, %42, %cst_44 {dimension_numbers = #tpu.dot_dimension_numbers<[1], [0], [0], [1], [0, 0, 1, 1], [], []>} : vector<288x128xbf16>, vector<128x128xbf16>, vector<288x128xf32> -> vector<288x128xf32>
    %44 = arith.addf %38, %43 : vector<288x128xf32>
    %c0_45 = arith.constant 0 : index
    %c0_46 = arith.constant 0 : index
    %45 = vector.load %arg9[%c0_45, %c0_46] : memref<288x128xf32, #tpu.memory_space<vmem>>, vector<288x128xf32>
    tpu.vector_store %arg9[%c0_45, %c0_46], %44 {strides = array<i32>} : memref<288x128xf32, #tpu.memory_space<vmem>>, vector<288x128xf32>,
    %c0_47 = arith.constant 0 : index
    %c0_48 = arith.constant 0 : index
    %46 = vector.load %arg9[%c0_47, %c0_48] : memref<288x128xf32, #tpu.memory_space<vmem>>, vector<288x128xf32>
    %c33 = arith.constant 33 : index
    %c0_49 = arith.constant 0 : index
    %47 = vector.load %arg8[%c33, %c0_49] : memref<346x128xf32, #tpu.memory_space<vmem>>, vector<288x128xf32>
    %48 = arith.truncf %47 : vector<288x128xf32> to vector<288x128xbf16>
    %c5 = arith.constant 5 : index
    %c0_50 = arith.constant 0 : index
    %c0_51 = arith.constant 0 : index
    %49 = vector.load %arg2[%c5, %c0_50, %c0_51] : memref<9x128x128xbf16, #tpu.memory_space<vmem>>, vector<1x128x128xbf16>
    %50 = vector.shape_cast %49 : vector<1x128x128xbf16> to vector<128x128xbf16>
    %cst_52 = arith.constant dense<0.000000e+00> : vector<288x128xf32>
    %51 = tpu.matmul %48, %50, %cst_52 {dimension_numbers = #tpu.dot_dimension_numbers<[1], [0], [0], [1], [0, 0, 1, 1], [], []>} : vector<288x128xbf16>, vector<128x128xbf16>, vector<288x128xf32> -> vector<288x128xf32>
    %52 = arith.addf %46, %51 : vector<288x128xf32>
    %c0_53 = arith.constant 0 : index
    %c0_54 = arith.constant 0 : index
    %53 = vector.load %arg9[%c0_53, %c0_54] : memref<288x128xf32, #tpu.memory_space<vmem>>, vector<288x128xf32>
    tpu.vector_store %arg9[%c0_53, %c0_54], %52 {strides = array<i32>} : memref<288x128xf32, #tpu.memory_space<vmem>>, vector<288x128xf32>,
    %c0_55 = arith.constant 0 : index
    %c0_56 = arith.constant 0 : index
    %54 = vector.load %arg9[%c0_55, %c0_56] : memref<288x128xf32, #tpu.memory_space<vmem>>, vector<288x128xf32>
    %c49 = arith.constant 49 : index
    %c0_57 = arith.constant 0 : index
    %55 = vector.load %arg8[%c49, %c0_57] : memref<346x128xf32, #tpu.memory_space<vmem>>, vector<288x128xf32>
    %56 = arith.truncf %55 : vector<288x128xf32> to vector<288x128xbf16>
    %c6 = arith.constant 6 : index
    %c0_58 = arith.constant 0 : index
    %c0_59 = arith.constant 0 : index
    %57 = vector.load %arg2[%c6, %c0_58, %c0_59] : memref<9x128x128xbf16, #tpu.memory_space<vmem>>, vector<1x128x128xbf16>
    %58 = vector.shape_cast %57 : vector<1x128x128xbf16> to vector<128x128xbf16>
    %cst_60 = arith.constant dense<0.000000e+00> : vector<288x128xf32>
    %59 = tpu.matmul %56, %58, %cst_60 {dimension_numbers = #tpu.dot_dimension_numbers<[1], [0], [0], [1], [0, 0, 1, 1], [], []>} : vector<288x128xbf16>, vector<128x128xbf16>, vector<288x128xf32> -> vector<288x128xf32>
    %60 = arith.addf %54, %59 : vector<288x128xf32>
    %c0_61 = arith.constant 0 : index
    %c0_62 = arith.constant 0 : index
    %61 = vector.load %arg9[%c0_61, %c0_62] : memref<288x128xf32, #tpu.memory_space<vmem>>, vector<288x128xf32>
    tpu.vector_store %arg9[%c0_61, %c0_62], %60 {strides = array<i32>} : memref<288x128xf32, #tpu.memory_space<vmem>>, vector<288x128xf32>,
    %c0_63 = arith.constant 0 : index
    %c0_64 = arith.constant 0 : index
    %62 = vector.load %arg9[%c0_63, %c0_64] : memref<288x128xf32, #tpu.memory_space<vmem>>, vector<288x128xf32>
    %c50 = arith.constant 50 : index
    %c0_65 = arith.constant 0 : index
    %63 = vector.load %arg8[%c50, %c0_65] : memref<346x128xf32, #tpu.memory_space<vmem>>, vector<288x128xf32>
    %64 = arith.truncf %63 : vector<288x128xf32> to vector<288x128xbf16>
    %c7 = arith.constant 7 : index
    %c0_66 = arith.constant 0 : index
    %c0_67 = arith.constant 0 : index
    %65 = vector.load %arg2[%c7, %c0_66, %c0_67] : memref<9x128x128xbf16, #tpu.memory_space<vmem>>, vector<1x128x128xbf16>
    %66 = vector.shape_cast %65 : vector<1x128x128xbf16> to vector<128x128xbf16>
    %cst_68 = arith.constant dense<0.000000e+00> : vector<288x128xf32>
    %67 = tpu.matmul %64, %66, %cst_68 {dimension_numbers = #tpu.dot_dimension_numbers<[1], [0], [0], [1], [0, 0, 1, 1], [], []>} : vector<288x128xbf16>, vector<128x128xbf16>, vector<288x128xf32> -> vector<288x128xf32>
    %68 = arith.addf %62, %67 : vector<288x128xf32>
    %c0_69 = arith.constant 0 : index
    %c0_70 = arith.constant 0 : index
    %69 = vector.load %arg9[%c0_69, %c0_70] : memref<288x128xf32, #tpu.memory_space<vmem>>, vector<288x128xf32>
    tpu.vector_store %arg9[%c0_69, %c0_70], %68 {strides = array<i32>} : memref<288x128xf32, #tpu.memory_space<vmem>>, vector<288x128xf32>,
    %c0_71 = arith.constant 0 : index
    %c0_72 = arith.constant 0 : index
    %70 = vector.load %arg9[%c0_71, %c0_72] : memref<288x128xf32, #tpu.memory_space<vmem>>, vector<288x128xf32>
    %c51 = arith.constant 51 : index
    %c0_73 = arith.constant 0 : index
    %71 = vector.load %arg8[%c51, %c0_73] : memref<346x128xf32, #tpu.memory_space<vmem>>, vector<288x128xf32>
    %72 = arith.truncf %71 : vector<288x128xf32> to vector<288x128xbf16>
    %c8 = arith.constant 8 : index
    %c0_74 = arith.constant 0 : index
    %c0_75 = arith.constant 0 : index
    %73 = vector.load %arg2[%c8, %c0_74, %c0_75] : memref<9x128x128xbf16, #tpu.memory_space<vmem>>, vector<1x128x128xbf16>
    %74 = vector.shape_cast %73 : vector<1x128x128xbf16> to vector<128x128xbf16>
    %cst_76 = arith.constant dense<0.000000e+00> : vector<288x128xf32>
    %75 = tpu.matmul %72, %74, %cst_76 {dimension_numbers = #tpu.dot_dimension_numbers<[1], [0], [0], [1], [0, 0, 1, 1], [], []>} : vector<288x128xbf16>, vector<128x128xbf16>, vector<288x128xf32> -> vector<288x128xf32>
    %76 = arith.addf %70, %75 : vector<288x128xf32>
    %c0_77 = arith.constant 0 : index
    %c0_78 = arith.constant 0 : index
    %77 = vector.load %arg9[%c0_77, %c0_78] : memref<288x128xf32, #tpu.memory_space<vmem>>, vector<288x128xf32>
    tpu.vector_store %arg9[%c0_77, %c0_78], %76 {strides = array<i32>} : memref<288x128xf32, #tpu.memory_space<vmem>>, vector<288x128xf32>,
    %c0_79 = arith.constant 0 : index
    %c0_80 = arith.constant 0 : index
    %78 = vector.load %arg9[%c0_79, %c0_80] : memref<288x128xf32, #tpu.memory_space<vmem>>, vector<288x128xf32>
    %c0_81 = arith.constant 0 : index
    %c0_82 = arith.constant 0 : index
    %79 = vector.load %arg3[%c0_81, %c0_82] : memref<1x128xf32, #tpu.memory_space<vmem>>, vector<1x128xf32>
    %80 = vector.broadcast %79 : vector<1x128xf32> to vector<288x128xf32>
    %81 = arith.addf %78, %80 : vector<288x128xf32>
    %cst_83 = arith.constant 0.000000e+00 : f32
    %82 = vector.broadcast %cst_83 : f32 to vector<288x128xf32>
    %83 = arith.maximumf %81, %82 : vector<288x128xf32>
    %c0_84 = arith.constant 0 : index
    %c0_85 = arith.constant 0 : index
    %84 = vector.load %arg6[%c0_84, %c0_85] : memref<288x1xf32, #tpu.memory_space<vmem>>, vector<288x1xf32>
    %85 = vector.broadcast %84 : vector<288x1xf32> to vector<288x128xf32>
    %86 = arith.mulf %83, %85 : vector<288x128xf32>
    %cst_86 = arith.constant 0.000000e+00 : f32
    %87 = vector.broadcast %cst_86 : f32 to vector<346x128xf32>
    %c0_87 = arith.constant 0 : index
    %c0_88 = arith.constant 0 : index
    %88 = vector.load %arg10[%c0_87, %c0_88] : memref<346x128xf32, #tpu.memory_space<vmem>>, vector<346x128xf32>
    tpu.vector_store %arg10[%c0_87, %c0_88], %87 {strides = array<i32>} : memref<346x128xf32, #tpu.memory_space<vmem>>, vector<346x128xf32>,
    %c32_89 = arith.constant 32 : index
    %c0_90 = arith.constant 0 : index
    %89 = vector.load %arg10[%c32_89, %c0_90] : memref<346x128xf32, #tpu.memory_space<vmem>>, vector<288x128xf32>
    tpu.vector_store %arg10[%c32_89, %c0_90], %86 {strides = array<i32>} : memref<346x128xf32, #tpu.memory_space<vmem>>, vector<288x128xf32>,
    %cst_91 = arith.constant 0.000000e+00 : f32
    %90 = vector.broadcast %cst_91 : f32 to vector<288x128xf32>
    %c0_92 = arith.constant 0 : index
    %c0_93 = arith.constant 0 : index
    %91 = vector.load %arg9[%c0_92, %c0_93] : memref<288x128xf32, #tpu.memory_space<vmem>>, vector<288x128xf32>
    tpu.vector_store %arg9[%c0_92, %c0_93], %90 {strides = array<i32>} : memref<288x128xf32, #tpu.memory_space<vmem>>, vector<288x128xf32>,
    %c0_94 = arith.constant 0 : index
    %c0_95 = arith.constant 0 : index
    %92 = vector.load %arg9[%c0_94, %c0_95] : memref<288x128xf32, #tpu.memory_space<vmem>>, vector<288x128xf32>
    %c13_96 = arith.constant 13 : index
    %c0_97 = arith.constant 0 : index
    %93 = vector.load %arg10[%c13_96, %c0_97] : memref<346x128xf32, #tpu.memory_space<vmem>>, vector<288x128xf32>
    %94 = arith.truncf %93 : vector<288x128xf32> to vector<288x128xbf16>
    %c0_98 = arith.constant 0 : index
    %c0_99 = arith.constant 0 : index
    %c0_100 = arith.constant 0 : index
    %95 = vector.load %arg4[%c0_98, %c0_99, %c0_100] : memref<9x128x128xbf16, #tpu.memory_space<vmem>>, vector<1x128x128xbf16>
    %96 = vector.shape_cast %95 : vector<1x128x128xbf16> to vector<128x128xbf16>
    %cst_101 = arith.constant dense<0.000000e+00> : vector<288x128xf32>
    %97 = tpu.matmul %94, %96, %cst_101 {dimension_numbers = #tpu.dot_dimension_numbers<[1], [0], [0], [1], [0, 0, 1, 1], [], []>} : vector<288x128xbf16>, vector<128x128xbf16>, vector<288x128xf32> -> vector<288x128xf32>
    %98 = arith.addf %92, %97 : vector<288x128xf32>
    %c0_102 = arith.constant 0 : index
    %c0_103 = arith.constant 0 : index
    %99 = vector.load %arg9[%c0_102, %c0_103] : memref<288x128xf32, #tpu.memory_space<vmem>>, vector<288x128xf32>
    tpu.vector_store %arg9[%c0_102, %c0_103], %98 {strides = array<i32>} : memref<288x128xf32, #tpu.memory_space<vmem>>, vector<288x128xf32>,
    %c0_104 = arith.constant 0 : index
    %c0_105 = arith.constant 0 : index
    %100 = vector.load %arg9[%c0_104, %c0_105] : memref<288x128xf32, #tpu.memory_space<vmem>>, vector<288x128xf32>
    %c14_106 = arith.constant 14 : index
    %c0_107 = arith.constant 0 : index
    %101 = vector.load %arg10[%c14_106, %c0_107] : memref<346x128xf32, #tpu.memory_space<vmem>>, vector<288x128xf32>
    %102 = arith.truncf %101 : vector<288x128xf32> to vector<288x128xbf16>
    %c1_108 = arith.constant 1 : index
    %c0_109 = arith.constant 0 : index
    %c0_110 = arith.constant 0 : index
    %103 = vector.load %arg4[%c1_108, %c0_109, %c0_110] : memref<9x128x128xbf16, #tpu.memory_space<vmem>>, vector<1x128x128xbf16>
    %104 = vector.shape_cast %103 : vector<1x128x128xbf16> to vector<128x128xbf16>
    %cst_111 = arith.constant dense<0.000000e+00> : vector<288x128xf32>
    %105 = tpu.matmul %102, %104, %cst_111 {dimension_numbers = #tpu.dot_dimension_numbers<[1], [0], [0], [1], [0, 0, 1, 1], [], []>} : vector<288x128xbf16>, vector<128x128xbf16>, vector<288x128xf32> -> vector<288x128xf32>
    %106 = arith.addf %100, %105 : vector<288x128xf32>
    %c0_112 = arith.constant 0 : index
    %c0_113 = arith.constant 0 : index
    %107 = vector.load %arg9[%c0_112, %c0_113] : memref<288x128xf32, #tpu.memory_space<vmem>>, vector<288x128xf32>
    tpu.vector_store %arg9[%c0_112, %c0_113], %106 {strides = array<i32>} : memref<288x128xf32, #tpu.memory_space<vmem>>, vector<288x128xf32>,
    %c0_114 = arith.constant 0 : index
    %c0_115 = arith.constant 0 : index
    %108 = vector.load %arg9[%c0_114, %c0_115] : memref<288x128xf32, #tpu.memory_space<vmem>>, vector<288x128xf32>
    %c15_116 = arith.constant 15 : index
    %c0_117 = arith.constant 0 : index
    %109 = vector.load %arg10[%c15_116, %c0_117] : memref<346x128xf32, #tpu.memory_space<vmem>>, vector<288x128xf32>
    %110 = arith.truncf %109 : vector<288x128xf32> to vector<288x128xbf16>
    %c2_118 = arith.constant 2 : index
    %c0_119 = arith.constant 0 : index
    %c0_120 = arith.constant 0 : index
    %111 = vector.load %arg4[%c2_118, %c0_119, %c0_120] : memref<9x128x128xbf16, #tpu.memory_space<vmem>>, vector<1x128x128xbf16>
    %112 = vector.shape_cast %111 : vector<1x128x128xbf16> to vector<128x128xbf16>
    %cst_121 = arith.constant dense<0.000000e+00> : vector<288x128xf32>
    %113 = tpu.matmul %110, %112, %cst_121 {dimension_numbers = #tpu.dot_dimension_numbers<[1], [0], [0], [1], [0, 0, 1, 1], [], []>} : vector<288x128xbf16>, vector<128x128xbf16>, vector<288x128xf32> -> vector<288x128xf32>
    %114 = arith.addf %108, %113 : vector<288x128xf32>
    %c0_122 = arith.constant 0 : index
    %c0_123 = arith.constant 0 : index
    %115 = vector.load %arg9[%c0_122, %c0_123] : memref<288x128xf32, #tpu.memory_space<vmem>>, vector<288x128xf32>
    tpu.vector_store %arg9[%c0_122, %c0_123], %114 {strides = array<i32>} : memref<288x128xf32, #tpu.memory_space<vmem>>, vector<288x128xf32>,
    %c0_124 = arith.constant 0 : index
    %c0_125 = arith.constant 0 : index
    %116 = vector.load %arg9[%c0_124, %c0_125] : memref<288x128xf32, #tpu.memory_space<vmem>>, vector<288x128xf32>
    %c31_126 = arith.constant 31 : index
    %c0_127 = arith.constant 0 : index
    %117 = vector.load %arg10[%c31_126, %c0_127] : memref<346x128xf32, #tpu.memory_space<vmem>>, vector<288x128xf32>
    %118 = arith.truncf %117 : vector<288x128xf32> to vector<288x128xbf16>
    %c3_128 = arith.constant 3 : index
    %c0_129 = arith.constant 0 : index
    %c0_130 = arith.constant 0 : index
    %119 = vector.load %arg4[%c3_128, %c0_129, %c0_130] : memref<9x128x128xbf16, #tpu.memory_space<vmem>>, vector<1x128x128xbf16>
    %120 = vector.shape_cast %119 : vector<1x128x128xbf16> to vector<128x128xbf16>
    %cst_131 = arith.constant dense<0.000000e+00> : vector<288x128xf32>
    %121 = tpu.matmul %118, %120, %cst_131 {dimension_numbers = #tpu.dot_dimension_numbers<[1], [0], [0], [1], [0, 0, 1, 1], [], []>} : vector<288x128xbf16>, vector<128x128xbf16>, vector<288x128xf32> -> vector<288x128xf32>
    %122 = arith.addf %116, %121 : vector<288x128xf32>
    %c0_132 = arith.constant 0 : index
    %c0_133 = arith.constant 0 : index
    %123 = vector.load %arg9[%c0_132, %c0_133] : memref<288x128xf32, #tpu.memory_space<vmem>>, vector<288x128xf32>
    tpu.vector_store %arg9[%c0_132, %c0_133], %122 {strides = array<i32>} : memref<288x128xf32, #tpu.memory_space<vmem>>, vector<288x128xf32>,
    %c0_134 = arith.constant 0 : index
    %c0_135 = arith.constant 0 : index
    %124 = vector.load %arg9[%c0_134, %c0_135] : memref<288x128xf32, #tpu.memory_space<vmem>>, vector<288x128xf32>
    %c32_136 = arith.constant 32 : index
    %c0_137 = arith.constant 0 : index
    %125 = vector.load %arg10[%c32_136, %c0_137] : memref<346x128xf32, #tpu.memory_space<vmem>>, vector<288x128xf32>
    %126 = arith.truncf %125 : vector<288x128xf32> to vector<288x128xbf16>
    %c4_138 = arith.constant 4 : index
    %c0_139 = arith.constant 0 : index
    %c0_140 = arith.constant 0 : index
    %127 = vector.load %arg4[%c4_138, %c0_139, %c0_140] : memref<9x128x128xbf16, #tpu.memory_space<vmem>>, vector<1x128x128xbf16>
    %128 = vector.shape_cast %127 : vector<1x128x128xbf16> to vector<128x128xbf16>
    %cst_141 = arith.constant dense<0.000000e+00> : vector<288x128xf32>
    %129 = tpu.matmul %126, %128, %cst_141 {dimension_numbers = #tpu.dot_dimension_numbers<[1], [0], [0], [1], [0, 0, 1, 1], [], []>} : vector<288x128xbf16>, vector<128x128xbf16>, vector<288x128xf32> -> vector<288x128xf32>
    %130 = arith.addf %124, %129 : vector<288x128xf32>
    %c0_142 = arith.constant 0 : index
    %c0_143 = arith.constant 0 : index
    %131 = vector.load %arg9[%c0_142, %c0_143] : memref<288x128xf32, #tpu.memory_space<vmem>>, vector<288x128xf32>
    tpu.vector_store %arg9[%c0_142, %c0_143], %130 {strides = array<i32>} : memref<288x128xf32, #tpu.memory_space<vmem>>, vector<288x128xf32>,
    %c0_144 = arith.constant 0 : index
    %c0_145 = arith.constant 0 : index
    %132 = vector.load %arg9[%c0_144, %c0_145] : memref<288x128xf32, #tpu.memory_space<vmem>>, vector<288x128xf32>
    %c33_146 = arith.constant 33 : index
    %c0_147 = arith.constant 0 : index
    %133 = vector.load %arg10[%c33_146, %c0_147] : memref<346x128xf32, #tpu.memory_space<vmem>>, vector<288x128xf32>
    %134 = arith.truncf %133 : vector<288x128xf32> to vector<288x128xbf16>
    %c5_148 = arith.constant 5 : index
    %c0_149 = arith.constant 0 : index
    %c0_150 = arith.constant 0 : index
    %135 = vector.load %arg4[%c5_148, %c0_149, %c0_150] : memref<9x128x128xbf16, #tpu.memory_space<vmem>>, vector<1x128x128xbf16>
    %136 = vector.shape_cast %135 : vector<1x128x128xbf16> to vector<128x128xbf16>
    %cst_151 = arith.constant dense<0.000000e+00> : vector<288x128xf32>
    %137 = tpu.matmul %134, %136, %cst_151 {dimension_numbers = #tpu.dot_dimension_numbers<[1], [0], [0], [1], [0, 0, 1, 1], [], []>} : vector<288x128xbf16>, vector<128x128xbf16>, vector<288x128xf32> -> vector<288x128xf32>
    %138 = arith.addf %132, %137 : vector<288x128xf32>
    %c0_152 = arith.constant 0 : index
    %c0_153 = arith.constant 0 : index
    %139 = vector.load %arg9[%c0_152, %c0_153] : memref<288x128xf32, #tpu.memory_space<vmem>>, vector<288x128xf32>
    tpu.vector_store %arg9[%c0_152, %c0_153], %138 {strides = array<i32>} : memref<288x128xf32, #tpu.memory_space<vmem>>, vector<288x128xf32>,
    %c0_154 = arith.constant 0 : index
    %c0_155 = arith.constant 0 : index
    %140 = vector.load %arg9[%c0_154, %c0_155] : memref<288x128xf32, #tpu.memory_space<vmem>>, vector<288x128xf32>
    %c49_156 = arith.constant 49 : index
    %c0_157 = arith.constant 0 : index
    %141 = vector.load %arg10[%c49_156, %c0_157] : memref<346x128xf32, #tpu.memory_space<vmem>>, vector<288x128xf32>
    %142 = arith.truncf %141 : vector<288x128xf32> to vector<288x128xbf16>
    %c6_158 = arith.constant 6 : index
    %c0_159 = arith.constant 0 : index
    %c0_160 = arith.constant 0 : index
    %143 = vector.load %arg4[%c6_158, %c0_159, %c0_160] : memref<9x128x128xbf16, #tpu.memory_space<vmem>>, vector<1x128x128xbf16>
    %144 = vector.shape_cast %143 : vector<1x128x128xbf16> to vector<128x128xbf16>
    %cst_161 = arith.constant dense<0.000000e+00> : vector<288x128xf32>
    %145 = tpu.matmul %142, %144, %cst_161 {dimension_numbers = #tpu.dot_dimension_numbers<[1], [0], [0], [1], [0, 0, 1, 1], [], []>} : vector<288x128xbf16>, vector<128x128xbf16>, vector<288x128xf32> -> vector<288x128xf32>
    %146 = arith.addf %140, %145 : vector<288x128xf32>
    %c0_162 = arith.constant 0 : index
    %c0_163 = arith.constant 0 : index
    %147 = vector.load %arg9[%c0_162, %c0_163] : memref<288x128xf32, #tpu.memory_space<vmem>>, vector<288x128xf32>
    tpu.vector_store %arg9[%c0_162, %c0_163], %146 {strides = array<i32>} : memref<288x128xf32, #tpu.memory_space<vmem>>, vector<288x128xf32>,
    %c0_164 = arith.constant 0 : index
    %c0_165 = arith.constant 0 : index
    %148 = vector.load %arg9[%c0_164, %c0_165] : memref<288x128xf32, #tpu.memory_space<vmem>>, vector<288x128xf32>
    %c50_166 = arith.constant 50 : index
    %c0_167 = arith.constant 0 : index
    %149 = vector.load %arg10[%c50_166, %c0_167] : memref<346x128xf32, #tpu.memory_space<vmem>>, vector<288x128xf32>
    %150 = arith.truncf %149 : vector<288x128xf32> to vector<288x128xbf16>
    %c7_168 = arith.constant 7 : index
    %c0_169 = arith.constant 0 : index
    %c0_170 = arith.constant 0 : index
    %151 = vector.load %arg4[%c7_168, %c0_169, %c0_170] : memref<9x128x128xbf16, #tpu.memory_space<vmem>>, vector<1x128x128xbf16>
    %152 = vector.shape_cast %151 : vector<1x128x128xbf16> to vector<128x128xbf16>
    %cst_171 = arith.constant dense<0.000000e+00> : vector<288x128xf32>
    %153 = tpu.matmul %150, %152, %cst_171 {dimension_numbers = #tpu.dot_dimension_numbers<[1], [0], [0], [1], [0, 0, 1, 1], [], []>} : vector<288x128xbf16>, vector<128x128xbf16>, vector<288x128xf32> -> vector<288x128xf32>
    %154 = arith.addf %148, %153 : vector<288x128xf32>
    %c0_172 = arith.constant 0 : index
    %c0_173 = arith.constant 0 : index
    %155 = vector.load %arg9[%c0_172, %c0_173] : memref<288x128xf32, #tpu.memory_space<vmem>>, vector<288x128xf32>
    tpu.vector_store %arg9[%c0_172, %c0_173], %154 {strides = array<i32>} : memref<288x128xf32, #tpu.memory_space<vmem>>, vector<288x128xf32>,
    %c0_174 = arith.constant 0 : index
    %c0_175 = arith.constant 0 : index
    %156 = vector.load %arg9[%c0_174, %c0_175] : memref<288x128xf32, #tpu.memory_space<vmem>>, vector<288x128xf32>
    %c51_176 = arith.constant 51 : index
    %c0_177 = arith.constant 0 : index
    %157 = vector.load %arg10[%c51_176, %c0_177] : memref<346x128xf32, #tpu.memory_space<vmem>>, vector<288x128xf32>
    %158 = arith.truncf %157 : vector<288x128xf32> to vector<288x128xbf16>
    %c8_178 = arith.constant 8 : index
    %c0_179 = arith.constant 0 : index
    %c0_180 = arith.constant 0 : index
    %159 = vector.load %arg4[%c8_178, %c0_179, %c0_180] : memref<9x128x128xbf16, #tpu.memory_space<vmem>>, vector<1x128x128xbf16>
    %160 = vector.shape_cast %159 : vector<1x128x128xbf16> to vector<128x128xbf16>
    %cst_181 = arith.constant dense<0.000000e+00> : vector<288x128xf32>
    %161 = tpu.matmul %158, %160, %cst_181 {dimension_numbers = #tpu.dot_dimension_numbers<[1], [0], [0], [1], [0, 0, 1, 1], [], []>} : vector<288x128xbf16>, vector<128x128xbf16>, vector<288x128xf32> -> vector<288x128xf32>
    %162 = arith.addf %156, %161 : vector<288x128xf32>
    %c0_182 = arith.constant 0 : index
    %c0_183 = arith.constant 0 : index
    %163 = vector.load %arg9[%c0_182, %c0_183] : memref<288x128xf32, #tpu.memory_space<vmem>>, vector<288x128xf32>
    tpu.vector_store %arg9[%c0_182, %c0_183], %162 {strides = array<i32>} : memref<288x128xf32, #tpu.memory_space<vmem>>, vector<288x128xf32>,
    %c32_184 = arith.constant 32 : index
    %c0_185 = arith.constant 0 : index
    %164 = vector.load %arg8[%c32_184, %c0_185] : memref<346x128xf32, #tpu.memory_space<vmem>>, vector<288x128xf32>
    %c0_186 = arith.constant 0 : index
    %c0_187 = arith.constant 0 : index
    %165 = vector.load %arg9[%c0_186, %c0_187] : memref<288x128xf32, #tpu.memory_space<vmem>>, vector<288x128xf32>
    %c0_188 = arith.constant 0 : index
    %c0_189 = arith.constant 0 : index
    %166 = vector.load %arg5[%c0_188, %c0_189] : memref<1x128xf32, #tpu.memory_space<vmem>>, vector<1x128xf32>
    %167 = vector.broadcast %166 : vector<1x128xf32> to vector<288x128xf32>
    %168 = arith.addf %165, %167 : vector<288x128xf32>
    %169 = arith.addf %168, %164 : vector<288x128xf32>
    %cst_190 = arith.constant 0.000000e+00 : f32
    %170 = vector.broadcast %cst_190 : f32 to vector<288x128xf32>
    %171 = arith.maximumf %169, %170 : vector<288x128xf32>
    %c0_191 = arith.constant 0 : index
    %c0_192 = arith.constant 0 : index
    %c0_193 = arith.constant 0 : index
    %172 = vector.load %arg7[%c0_191, %c0_192, %c0_193] : memref<1x288x128xf32, #tpu.memory_space<vmem>>, vector<1x288x128xf32>
    %173 = vector.shape_cast %172 : vector<1x288x128xf32> to vector<288x128xf32>
    %174 = vector.shape_cast %171 : vector<288x128xf32> to vector<1x288x128xf32>
    tpu.vector_store %arg7[%c0_191, %c0_192, %c0_193], %174 {strides = array<i32>} : memref<1x288x128xf32, #tpu.memory_space<vmem>>, vector<1x288x128xf32>,
    return
  }
  func.func @transform_0(%arg0: i32) -> (i32, i32, i32) {
    %c0_i32 = arith.constant 0 : i32
    %c0_i32_0 = arith.constant 0 : i32
    %c0_i32_1 = arith.constant 0 : i32
    return %arg0, %c0_i32, %c0_i32_0 : i32, i32, i32
  }
  func.func @transform_1(%arg0: i32) -> (i32, i32, i32) {
    %c0_i32 = arith.constant 0 : i32
    %c0_i32_0 = arith.constant 0 : i32
    %c0_i32_1 = arith.constant 0 : i32
    %c0_i32_2 = arith.constant 0 : i32
    return %c0_i32, %c0_i32_0, %c0_i32_1 : i32, i32, i32
  }
  func.func @transform_2(%arg0: i32) -> (i32, i32) {
    %c0_i32 = arith.constant 0 : i32
    %c0_i32_0 = arith.constant 0 : i32
    %c0_i32_1 = arith.constant 0 : i32
    return %c0_i32, %c0_i32_0 : i32, i32
  }
  func.func @transform_3(%arg0: i32) -> (i32, i32, i32) {
    %c0_i32 = arith.constant 0 : i32
    %c0_i32_0 = arith.constant 0 : i32
    %c0_i32_1 = arith.constant 0 : i32
    %c0_i32_2 = arith.constant 0 : i32
    return %c0_i32, %c0_i32_0, %c0_i32_1 : i32, i32, i32
  }
  func.func @transform_4(%arg0: i32) -> (i32, i32) {
    %c0_i32 = arith.constant 0 : i32
    %c0_i32_0 = arith.constant 0 : i32
    %c0_i32_1 = arith.constant 0 : i32
    return %c0_i32, %c0_i32_0 : i32, i32
  }
  func.func @transform_5(%arg0: i32) -> (i32, i32) {
    %c0_i32 = arith.constant 0 : i32
    %c0_i32_0 = arith.constant 0 : i32
    %c0_i32_1 = arith.constant 0 : i32
    return %c0_i32, %c0_i32_0 : i32, i32
  }
  func.func @transform_6(%arg0: i32) -> (i32, i32, i32) {
    %c0_i32 = arith.constant 0 : i32
    %c0_i32_0 = arith.constant 0 : i32
    %c0_i32_1 = arith.constant 0 : i32
    return %arg0, %c0_i32, %c0_i32_0 : i32, i32, i32
  }
}

</mosaic_0001>

<llo_original>
// kernel: basic_block_forward.1
$region0: #{basic_block_forward.1}
  #allocation0 [shape = 'u32[]', space=smem, size = 0x4, offset = 0x4, fixed_abs, tag = 'smem constant byte address 0x4 - core index']
  #allocation1 [shape = 'u32[72,128]{1,0:T(1,128)}', space=vmem, size = 0x9000, scoped, tag = 'internal scratch']
  #allocation2 [shape = 'f32[346,128]{1,0:T(8,128)}', space=vmem, size = 0x2c000, scoped, tag = 'scratch operand']
  #allocation3 [shape = 'f32[288,128]{1,0:T(8,128)}', space=vmem, size = 0x24000, scoped, tag = 'scratch operand']
  #allocation4 [shape = 'f32[346,128]{1,0:T(8,128)}', space=vmem, size = 0x2c000, scoped, tag = 'scratch operand']
  %s0 = inlined_call_operand.vmem [shape: bf16[2,346,128], index: 0, kind: input, shape index: {}]
  %s1 = inlined_call_operand.vmem [shape: bf16[9,128,128], index: 1, kind: input, shape index: {}]
  %s2 = inlined_call_operand.vmem [shape: f32[1,128], index: 2, kind: input, shape index: {}]
  %s3 = inlined_call_operand.vmem [shape: bf16[9,128,128], index: 3, kind: input, shape index: {}]
  %s4 = inlined_call_operand.vmem [shape: f32[1,128], index: 4, kind: input, shape index: {}]
  %s5 = inlined_call_operand.vmem [shape: f32[288,1], index: 5, kind: input, shape index: {}]
  %s6 = inlined_call_operand.vmem [shape: f32[2,288,128], index: 6, kind: output, shape index: {}]
  %s7 = sld [smem:[#allocation0]]
  $region57: #{basic_block_forward.1} parent=0
    _
  %s9 = ssub.s32 1, %s7
  %s10 = scalar_select 0, %s9, %s7
  loop: start=0, step=1, limit=4
  $region2: #{basic_block_forward.1} parent=0 // loop_pre_header
    _
  $region3: #{basic_block_forward.1} parent=0 // loop_header
    %s12 = sphi 0, %s16
    %p13 = scmp.ge.s32.totalorder %s12, 4
    %s22 = sphi 0, %s24
    %s25 = sphi 0, %s22
    %s26 = sphi 0, %s25
    %s42 = sphi 0, %s26
    %s46 = sphi 0, %s46
    %s48 = sphi 0, %s46
    %s49 = sphi 0, %s48
    %s63 = sphi 0, %s49
    %s67 = sphi 0, %s67
    %s69 = sphi 0, %s67
    %s70 = sphi 0, %s69
    %s84 = sphi 0, %s70
    %s88 = sphi 0, %s88
    %s90 = sphi 0, %s88
    %s91 = sphi 0, %s90
    %s105 = sphi 0, %s91
    %s109 = sphi 0, %s109
    %s111 = sphi 0, %s109
    %s112 = sphi 0, %s111
    %s126 = sphi 0, %s112
    %s130 = sphi 0, %s130
    %s132 = sphi 0, %s130
    %s133 = sphi 0, %s132
    %s147 = sphi 0, %s133
    %s153 = sphi 0, %s155
    %s156 = sphi 0, %s153
    %s157 = sphi 0, %s156
    %s173 = sphi 0, %s157
  $region4: #{basic_block_forward.1} parent=0 // loop_header_branch
    %15 = sbr.rel (%p13) target = $region8
  $region5: #{basic_block_forward.1} parent=0 // loop_body
    %s17 = ssub.s32 %s12, 1
    %s18 = ssub.s32 %s12, 2
    %s19 = sadd.s32 %s12, 1
    %s20 = ssub.s32 %s12, %s19
    %p21 = scmp.eq.s32.totalorder %s20, 0
    %s23 = sadd.s32 %s22, 1
    %s24 = scalar_select %p21, %s22, %s23
    %p27 = pneg %p21
    %p28 = scmp.eq.s32.totalorder %s12, 1
    %p29 = por %p27, %p28
    %p30 = scmp.ne.s32.totalorder %s22, %s25
    %p31 = scmp.eq.s32.totalorder %s12, 0
    %p32 = por %p30, %p31
    %p33 = scmp.ne.s32.totalorder %s22, %s25
    %p34 = scmp.eq.s32.totalorder %s17, 1
    %p35 = por %p33, %p34
    %p36 = scmp.ne.s32.totalorder %s25, %s26
    %p37 = scmp.eq.s32.totalorder %s17, 0
    %p38 = por %p36, %p37
    %p39 = scmp.ne.s32.totalorder %s25, %s26
    %p40 = scmp.eq.s32.totalorder %s18, 1
    %p41 = por %p39, %p40
    %p43 = scmp.ne.s32.totalorder %s26, %s42
    %p44 = scmp.eq.s32.totalorder %s18, 0
    %p45 = por %p43, %p44
    %s47 = sadd.s32 %s46, 1
    %p50 = scmp.eq.s32.totalorder %s12, 1
    %p51 = scmp.ne.s32.totalorder %s46, %s48
    %p52 = scmp.eq.s32.totalorder %s12, 0
    %p53 = por %p51, %p52
    %p54 = scmp.ne.s32.totalorder %s46, %s48
    %p55 = scmp.eq.s32.totalorder %s17, 1
    %p56 = por %p54, %p55
    %p57 = scmp.ne.s32.totalorder %s48, %s49
    %p58 = scmp.eq.s32.totalorder %s17, 0
    %p59 = por %p57, %p58
    %p60 = scmp.ne.s32.totalorder %s48, %s49
    %p61 = scmp.eq.s32.totalorder %s18, 1
    %p62 = por %p60, %p61
    %p64 = scmp.ne.s32.totalorder %s49, %s63
    %p65 = scmp.eq.s32.totalorder %s18, 0
    %p66 = por %p64, %p65
    %s68 = sadd.s32 %s67, 1
    %p71 = scmp.eq.s32.totalorder %s12, 1
    %p72 = scmp.ne.s32.totalorder %s67, %s69
    %p73 = scmp.eq.s32.totalorder %s12, 0
    %p74 = por %p72, %p73
    %p75 = scmp.ne.s32.totalorder %s67, %s69
    %p76 = scmp.eq.s32.totalorder %s17, 1
    %p77 = por %p75, %p76
    %p78 = scmp.ne.s32.totalorder %s69, %s70
    %p79 = scmp.eq.s32.totalorder %s17, 0
    %p80 = por %p78, %p79
    %p81 = scmp.ne.s32.totalorder %s69, %s70
    %p82 = scmp.eq.s32.totalorder %s18, 1
    %p83 = por %p81, %p82
    %p85 = scmp.ne.s32.totalorder %s70, %s84
    %p86 = scmp.eq.s32.totalorder %s18, 0
    %p87 = por %p85, %p86
    %s89 = sadd.s32 %s88, 1
    %p92 = scmp.eq.s32.totalorder %s12, 1
    %p93 = scmp.ne.s32.totalorder %s88, %s90
    %p94 = scmp.eq.s32.totalorder %s12, 0
    %p95 = por %p93, %p94
    %p96 = scmp.ne.s32.totalorder %s88, %s90
    %p97 = scmp.eq.s32.totalorder %s17, 1
    %p98 = por %p96, %p97
    %p99 = scmp.ne.s32.totalorder %s90, %s91
    %p100 = scmp.eq.s32.totalorder %s17, 0
    %p101 = por %p99, %p100
    %p102 = scmp.ne.s32.totalorder %s90, %s91
    %p103 = scmp.eq.s32.totalorder %s18, 1
    %p104 = por %p102, %p103
    %p106 = scmp.ne.s32.totalorder %s91, %s105
    %p107 = scmp.eq.s32.totalorder %s18, 0
    %p108 = por %p106, %p107
    %s110 = sadd.s32 %s109, 1
    %p113 = scmp.eq.s32.totalorder %s12, 1
    %p114 = scmp.ne.s32.totalorder %s109, %s111
    %p115 = scmp.eq.s32.totalorder %s12, 0
    %p116 = por %p114, %p115
    %p117 = scmp.ne.s32.totalorder %s109, %s111
    %p118 = scmp.eq.s32.totalorder %s17, 1
    %p119 = por %p117, %p118
    %p120 = scmp.ne.s32.totalorder %s111, %s112
    %p121 = scmp.eq.s32.totalorder %s17, 0
    %p122 = por %p120, %p121
    %p123 = scmp.ne.s32.totalorder %s111, %s112
    %p124 = scmp.eq.s32.totalorder %s18, 1
    %p125 = por %p123, %p124
    %p127 = scmp.ne.s32.totalorder %s112, %s126
    %p128 = scmp.eq.s32.totalorder %s18, 0
    %p129 = por %p127, %p128
    %s131 = sadd.s32 %s130, 1
    %p134 = scmp.eq.s32.totalorder %s12, 1
    %p135 = scmp.ne.s32.totalorder %s130, %s132
    %p136 = scmp.eq.s32.totalorder %s12, 0
    %p137 = por %p135, %p136
    %p138 = scmp.ne.s32.totalorder %s130, %s132
    %p139 = scmp.eq.s32.totalorder %s17, 1
    %p140 = por %p138, %p139
    %p141 = scmp.ne.s32.totalorder %s132, %s133
    %p142 = scmp.eq.s32.totalorder %s17, 0
    %p143 = por %p141, %p142
    %p144 = scmp.ne.s32.totalorder %s132, %s133
    %p145 = scmp.eq.s32.totalorder %s18, 1
    %p146 = por %p144, %p145
    %p148 = scmp.ne.s32.totalorder %s133, %s147
    %p149 = scmp.eq.s32.totalorder %s18, 0
    %p150 = por %p148, %p149
    %s151 = ssub.s32 %s12, %s19
    %p152 = scmp.eq.s32.totalorder %s151, 0
    %s154 = sadd.s32 %s153, 1
    %s155 = scalar_select %p152, %s153, %s154
    %p158 = pneg %p152
    %p159 = scmp.eq.s32.totalorder %s12, 1
    %p160 = por %p158, %p159
    %p161 = scmp.ne.s32.totalorder %s153, %s156
    %p162 = scmp.eq.s32.totalorder %s12, 0
    %p163 = por %p161, %p162
    %p164 = scmp.ne.s32.totalorder %s153, %s156
    %p165 = scmp.eq.s32.totalorder %s17, 1
    %p166 = por %p164, %p165
    %p167 = scmp.ne.s32.totalorder %s156, %s157
    %p168 = scmp.eq.s32.totalorder %s17, 0
    %p169 = por %p167, %p168
    %p170 = scmp.ne.s32.totalorder %s156, %s157
    %p171 = scmp.eq.s32.totalorder %s18, 1
    %p172 = por %p170, %p171
    %p174 = scmp.ne.s32.totalorder %s157, %s173
    %p175 = scmp.eq.s32.totalorder %s18, 0
    %p176 = por %p174, %p175
    %p177 = scmp.le.s32.totalorder 1, %s12
    %p178 = scmp.lt.s32.totalorder %s12, 3
    %p179 = pnand %p177, %p178
    %p180 = pneg %p179
    // Predicated region
    $region9: #{basic_block_forward.1} parent=5 // pred_check
      _
    $region10: #{basic_block_forward.1} parent=5 // pred_check_branch
      %182 = sbr.rel (%p179) target = $region12
    $region11: #{basic_block_forward.1} parent=5 // pred_region
      %s183 = ssub.s32 %s12, 1
      // Predicated region
      $region13: #{basic_block_forward.1} parent=11 // pred_check
        %p184 = pneg %p59
      $region14: #{basic_block_forward.1} parent=11 // pred_check_branch
        %186 = sbr.rel (%p184) target = $region16
      $region15: #{basic_block_forward.1} parent=11 // pred_region
        _
      $region16: #{basic_block_forward.1} parent=11 // pred_fallthru
        _
      // Predicated region
      $region17: #{basic_block_forward.1} parent=11 // pred_check
        %p187 = pneg %p80
      $region18: #{basic_block_forward.1} parent=11 // pred_check_branch
        %189 = sbr.rel (%p187) target = $region20
      $region19: #{basic_block_forward.1} parent=11 // pred_region
        _
      $region20: #{basic_block_forward.1} parent=11 // pred_fallthru
        _
      // Predicated region
      $region21: #{basic_block_forward.1} parent=11 // pred_check
        %p190 = pneg %p101
      $region22: #{basic_block_forward.1} parent=11 // pred_check_branch
        %192 = sbr.rel (%p190) target = $region24
      $region23: #{basic_block_forward.1} parent=11 // pred_region
        _
      $region24: #{basic_block_forward.1} parent=11 // pred_fallthru
        _
      // Predicated region
      $region25: #{basic_block_forward.1} parent=11 // pred_check
        %p193 = pneg %p122
      $region26: #{basic_block_forward.1} parent=11 // pred_check_branch
        %195 = sbr.rel (%p193) target = $region28
      $region27: #{basic_block_forward.1} parent=11 // pred_region
        _
      $region28: #{basic_block_forward.1} parent=11 // pred_fallthru
        _
      // Predicated region
      $region29: #{basic_block_forward.1} parent=11 // pred_check
        %p196 = pneg %p143
      $region30: #{basic_block_forward.1} parent=11 // pred_check_branch
        %198 = sbr.rel (%p196) target = $region32
      $region31: #{basic_block_forward.1} parent=11 // pred_region
        _
      $region32: #{basic_block_forward.1} parent=11 // pred_fallthru
        _
    $region12: #{basic_block_forward.1} parent=5 // pred_fallthru
      _
    %p199 = scmp.lt.s32.totalorder %s12, 2
    // Predicated region
    $region33: #{basic_block_forward.1} parent=5 // pred_check
      %p200 = pneg %p199
    $region34: #{basic_block_forward.1} parent=5 // pred_check_branch
      %202 = sbr.rel (%p200) target = $region36
    $region35: #{basic_block_forward.1} parent=5 // pred_region
      // Predicated region
      $region37: #{basic_block_forward.1} parent=35 // pred_check
        %p203 = pneg %p32
      $region38: #{basic_block_forward.1} parent=35 // pred_check_branch
        %205 = sbr.rel (%p203) target = $region40
      $region39: #{basic_block_forward.1} parent=35 // pred_region
        %p206 = scmp.lt.s32.totalorder %s12, 1
        %s207 = scalar_select %p206, %s12, 1
        %s208 = smul.addr %s207, 44
        %s209 = smul.addr %s208, 4
        %s210 = scalar_lea.vmem %s0, %s209
      $region40: #{basic_block_forward.1} parent=35 // pred_fallthru
        _
    $region36: #{basic_block_forward.1} parent=5 // pred_fallthru
      _
    %p211 = scmp.le.s32.totalorder 1, %s12
    %p212 = scmp.lt.s32.totalorder %s12, 3
    %p213 = pnand %p211, %p212
    %p214 = pneg %p213
    // Predicated region
    $region41: #{basic_block_forward.1} parent=5 // pred_check
      _
    $region42: #{basic_block_forward.1} parent=5 // pred_check_branch
      %216 = sbr.rel (%p213) target = $region44
    $region43: #{basic_block_forward.1} parent=5 // pred_region
      %s217 = ssub.s32 %s12, 1
      %p218 = scmp.lt.s32.totalorder %s17, 1
      %s219 = scalar_select %p218, %s17, 1
      %s220 = smul.addr %s219, 44
      %s221 = smul.addr %s220, 4
      %s222 = scalar_lea.vmem %s0, %s221
      %p223 = pneg %p38
      %p224 = pneg %p35
      %p225 = pneg %p59
      %p226 = pneg %p56
      %p227 = pneg %p80
      %p228 = pneg %p77
      %p229 = pneg %p101
      %p230 = pneg %p98
      %p231 = pneg %p122
      %p232 = pneg %p119
      %p233 = pneg %p143
      %p234 = pneg %p140
      %p235 = pneg %p169
      %p236 = pneg %p166
      %p237 = scmp.lt.s32.totalorder %s17, 1
      %s238 = scalar_select %p237, %s17, 1
      %s239 = smul.addr %s238, 36
      %s240 = smul.addr %s239, 8
      %s241 = scalar_lea.vmem %s6, %s240
      %p242 = scmp.lt.s32.totalorder %s17, 1
      %s243 = scalar_select %p242, %s17, 1
      %s244 = smul.addr %s243, 44
      %s245 = smul.addr %s244, 4
      %s246 = scalar_lea.vmem %s0, %s245
      %p247 = scmp.lt.s32.totalorder %s17, 1
      %s248 = scalar_select %p247, %s17, 1
      %s249 = smul.addr %s248, 36
      %s250 = smul.addr %s249, 8
      %s251 = scalar_lea.vmem %s6, %s250
      %v252 = vld [vmem:[%s246] sm:$0xf]
      %v253 = vld [vmem:[%s246 + $0x4] sm:$0xf]
      %v254 = vld [vmem:[%s246 + $0x8] sm:$0xf]
      %v255 = vld [vmem:[%s246 + $0xc] sm:$0xf]
      %v256 = vld [vmem:[%s246 + $0x10] sm:$0xf]
      %v257 = vld [vmem:[%s246 + $0x14] sm:$0xf]
      %v258 = vld [vmem:[%s246 + $0x18] sm:$0xf]
      %v259 = vld [vmem:[%s246 + $0x1c] sm:$0xf]
      %v260 = vld [vmem:[%s246 + $0x20] sm:$0xf]
      %v261 = vld [vmem:[%s246 + $0x24] sm:$0xf]
      %v262 = vld [vmem:[%s246 + $0x28] sm:$0xf]
      %v263 = vld [vmem:[%s246 + $0x2c] sm:$0xf]
      %v264 = vld [vmem:[%s246 + $0x30] sm:$0xf]
      %v265 = vld [vmem:[%s246 + $0x34] sm:$0xf]
      %v266 = vld [vmem:[%s246 + $0x38] sm:$0xf]
      %v267 = vld [vmem:[%s246 + $0x3c] sm:$0xf]
      %v268 = vld [vmem:[%s246 + $0x40] sm:$0xf]
      %v269 = vld [vmem:[%s246 + $0x44] sm:$0xf]
      %v270 = vld [vmem:[%s246 + $0x48] sm:$0xf]
      %v271 = vld [vmem:[%s246 + $0x4c] sm:$0xf]
      %v272 = vld [vmem:[%s246 + $0x50] sm:$0xf]
      %v273 = vld [vmem:[%s246 + $0x54] sm:$0xf]
      %v274 = vld [vmem:[%s246 + $0x58] sm:$0xf]
      %v275 = vld [vmem:[%s246 + $0x5c] sm:$0xf]
      %v276 = vld [vmem:[%s246 + $0x60] sm:$0xf]
      %v277 = vld [vmem:[%s246 + $0x64] sm:$0xf]
      %v278 = vld [vmem:[%s246 + $0x68] sm:$0xf]
      %v279 = vld [vmem:[%s246 + $0x6c] sm:$0xf]
      %v280 = vld [vmem:[%s246 + $0x70] sm:$0xf]
      %v281 = vld [vmem:[%s246 + $0x74] sm:$0xf]
      %v282 = vld [vmem:[%s246 + $0x78] sm:$0xf]
      %v283 = vld [vmem:[%s246 + $0x7c] sm:$0xf]
      %v284 = vld [vmem:[%s246 + $0x80] sm:$0xf]
      %v285 = vld [vmem:[%s246 + $0x84] sm:$0xf]
      %v286 = vld [vmem:[%s246 + $0x88] sm:$0xf]
      %v287 = vld [vmem:[%s246 + $0x8c] sm:$0xf]
      %v288 = vld [vmem:[%s246 + $0x90] sm:$0xf]
      %v289 = vld [vmem:[%s246 + $0x94] sm:$0xf]
      %v290 = vld [vmem:[%s246 + $0x98] sm:$0xf]
      %v291 = vld [vmem:[%s246 + $0x9c] sm:$0xf]
      %v292 = vld [vmem:[%s246 + $0xa0] sm:$0xf]
      %v293 = vld [vmem:[%s246 + $0xa4] sm:$0xf]
      %v294 = vld [vmem:[%s246 + $0xa8] sm:$0xf]
      %v295 = vld [vmem:[%s246 + $0xac] sm:$0x1]
      %v296 = vunpack.c.l.bf16 %v252
      %v297 = vunpack.c.l.bf16 %v253
      %v298 = vunpack.c.l.bf16 %v254
      %v299 = vunpack.c.l.bf16 %v255
      %v300 = vunpack.c.l.bf16 %v256
      %v301 = vunpack.c.l.bf16 %v257
      %v302 = vunpack.c.l.bf16 %v258
      %v303 = vunpack.c.l.bf16 %v259
      %v304 = vunpack.c.l.bf16 %v260
      %v305 = vunpack.c.l.bf16 %v261
      %v306 = vunpack.c.l.bf16 %v262
      %v307 = vunpack.c.l.bf16 %v263
      %v308 = vunpack.c.l.bf16 %v264
      %v309 = vunpack.c.l.bf16 %v265
      %v310 = vunpack.c.l.bf16 %v266
      %v311 = vunpack.c.l.bf16 %v267
      %v312 = vunpack.c.l.bf16 %v268
      %v313 = vunpack.c.l.bf16 %v269
      %v314 = vunpack.c.l.bf16 %v270
      %v315 = vunpack.c.l.bf16 %v271
      %v316 = vunpack.c.l.bf16 %v272
      %v317 = vunpack.c.l.bf16 %v273
      %v318 = vunpack.c.l.bf16 %v274
      %v319 = vunpack.c.l.bf16 %v275
      %v320 = vunpack.c.l.bf16 %v276
      %v321 = vunpack.c.l.bf16 %v277
      %v322 = vunpack.c.l.bf16 %v278
      %v323 = vunpack.c.l.bf16 %v279
      %v324 = vunpack.c.l.bf16 %v280
      %v325 = vunpack.c.l.bf16 %v281
      %v326 = vunpack.c.l.bf16 %v282
      %v327 = vunpack.c.l.bf16 %v283
      %v328 = vunpack.c.l.bf16 %v284
      %v329 = vunpack.c.l.bf16 %v285
      %v330 = vunpack.c.l.bf16 %v286
      %v331 = vunpack.c.l.bf16 %v287
      %v332 = vunpack.c.l.bf16 %v288
      %v333 = vunpack.c.l.bf16 %v289
      %v334 = vunpack.c.l.bf16 %v290
      %v335 = vunpack.c.l.bf16 %v291
      %v336 = vunpack.c.l.bf16 %v292
      %v337 = vunpack.c.l.bf16 %v293
      %v338 = vunpack.c.l.bf16 %v294
      %v339 = vunpack.c.l.bf16 %v295
      %340 = vst [vmem:[#allocation2] sm:$0xff] %v296
      %341 = vst [vmem:[#allocation2 + $0x8] sm:$0xff] %v297
      %342 = vst [vmem:[#allocation2 + $0x10] sm:$0xff] %v298
      %343 = vst [vmem:[#allocation2 + $0x18] sm:$0xff] %v299
      %344 = vst [vmem:[#allocation2 + $0x20] sm:$0xff] %v300
      %345 = vst [vmem:[#allocation2 + $0x28] sm:$0xff] %v301
      %346 = vst [vmem:[#allocation2 + $0x30] sm:$0xff] %v302
      %347 = vst [vmem:[#allocation2 + $0x38] sm:$0xff] %v303
      %348 = vst [vmem:[#allocation2 + $0x40] sm:$0xff] %v304
      %349 = vst [vmem:[#allocation2 + $0x48] sm:$0xff] %v305
      %350 = vst [vmem:[#allocation2 + $0x50] sm:$0xff] %v306
      %351 = vst [vmem:[#allocation2 + $0x58] sm:$0xff] %v307
      %352 = vst [vmem:[#allocation2 + $0x60] sm:$0xff] %v308
      %353 = vst [vmem:[#allocation2 + $0x68] sm:$0xff] %v309
      %354 = vst [vmem:[#allocation2 + $0x70] sm:$0xff] %v310
      %355 = vst [vmem:[#allocation2 + $0x78] sm:$0xff] %v311
      %356 = vst [vmem:[#allocation2 + $0x80] sm:$0xff] %v312
      %357 = vst [vmem:[#allocation2 + $0x88] sm:$0xff] %v313
      %358 = vst [vmem:[#allocation2 + $0x90] sm:$0xff] %v314
      %359 = vst [vmem:[#allocation2 + $0x98] sm:$0xff] %v315
      %360 = vst [vmem:[#allocation2 + $0xa0] sm:$0xff] %v316
      %361 = vst [vmem:[#allocation2 + $0xa8] sm:$0xff] %v317
      %362 = vst [vmem:[#allocation2 + $0xb0] sm:$0xff] %v318
      %363 = vst [vmem:[#allocation2 + $0xb8] sm:$0xff] %v319
      %364 = vst [vmem:[#allocation2 + $0xc0] sm:$0xff] %v320
      %365 = vst [vmem:[#allocation2 + $0xc8] sm:$0xff] %v321
      %366 = vst [vmem:[#allocation2 + $0xd0] sm:$0xff] %v322
      %367 = vst [vmem:[#allocation2 + $0xd8] sm:$0xff] %v323
      %368 = vst [vmem:[#allocation2 + $0xe0] sm:$0xff] %v324
      %369 = vst [vmem:[#allocation2 + $0xe8] sm:$0xff] %v325
      %370 = vst [vmem:[#allocation2 + $0xf0] sm:$0xff] %v326
      %371 = vst [vmem:[#allocation2 + $0xf8] sm:$0xff] %v327
      %372 = vst [vmem:[#allocation2 + $0x100] sm:$0xff] %v328
      %373 = vst [vmem:[#allocation2 + $0x108] sm:$0xff] %v329
      %374 = vst [vmem:[#allocation2 + $0x110] sm:$0xff] %v330
      %375 = vst [vmem:[#allocation2 + $0x118] sm:$0xff] %v331
      %376 = vst [vmem:[#allocation2 + $0x120] sm:$0xff] %v332
      %377 = vst [vmem:[#allocation2 + $0x128] sm:$0xff] %v333
      %378 = vst [vmem:[#allocation2 + $0x130] sm:$0xff] %v334
      %379 = vst [vmem:[#allocation2 + $0x138] sm:$0xff] %v335
      %380 = vst [vmem:[#allocation2 + $0x140] sm:$0xff] %v336
      %381 = vst [vmem:[#allocation2 + $0x148] sm:$0xff] %v337
      %382 = vst [vmem:[#allocation2 + $0x150] sm:$0xff] %v338
      %383 = vst [vmem:[#allocation2 + $0x158] sm:$0x3] %v339
      %384 = vst [vmem:[#allocation3] sm:$0xff] 0.0
      %385 = vst [vmem:[#allocation3 + $0x8] sm:$0xff] 0.0
      %386 = vst [vmem:[#allocation3 + $0x10] sm:$0xff] 0.0
      %387 = vst [vmem:[#allocation3 + $0x18] sm:$0xff] 0.0
      %388 = vst [vmem:[#allocation3 + $0x20] sm:$0xff] 0.0
      %389 = vst [vmem:[#allocation3 + $0x28] sm:$0xff] 0.0
      %390 = vst [vmem:[#allocation3 + $0x30] sm:$0xff] 0.0
      %391 = vst [vmem:[#allocation3 + $0x38] sm:$0xff] 0.0
      %392 = vst [vmem:[#allocation3 + $0x40] sm:$0xff] 0.0
      %393 = vst [vmem:[#allocation3 + $0x48] sm:$0xff] 0.0
      %394 = vst [vmem:[#allocation3 + $0x50] sm:$0xff] 0.0
      %395 = vst [vmem:[#allocation3 + $0x58] sm:$0xff] 0.0
      %396 = vst [vmem:[#allocation3 + $0x60] sm:$0xff] 0.0
      %397 = vst [vmem:[#allocation3 + $0x68] sm:$0xff] 0.0
      %398 = vst [vmem:[#allocation3 + $0x70] sm:$0xff] 0.0
      %399 = vst [vmem:[#allocation3 + $0x78] sm:$0xff] 0.0
      %400 = vst [vmem:[#allocation3 + $0x80] sm:$0xff] 0.0
      %401 = vst [vmem:[#allocation3 + $0x88] sm:$0xff] 0.0
      %402 = vst [vmem:[#allocation3 + $0x90] sm:$0xff] 0.0
      %403 = vst [vmem:[#allocation3 + $0x98] sm:$0xff] 0.0
      %404 = vst [vmem:[#allocation3 + $0xa0] sm:$0xff] 0.0
      %405 = vst [vmem:[#allocation3 + $0xa8] sm:$0xff] 0.0
      %406 = vst [vmem:[#allocation3 + $0xb0] sm:$0xff] 0.0
      %407 = vst [vmem:[#allocation3 + $0xb8] sm:$0xff] 0.0
      %408 = vst [vmem:[#allocation3 + $0xc0] sm:$0xff] 0.0
      %409 = vst [vmem:[#allocation3 + $0xc8] sm:$0xff] 0.0
      %410 = vst [vmem:[#allocation3 + $0xd0] sm:$0xff] 0.0
      %411 = vst [vmem:[#allocation3 + $0xd8] sm:$0xff] 0.0
      %412 = vst [vmem:[#allocation3 + $0xe0] sm:$0xff] 0.0
      %413 = vst [vmem:[#allocation3 + $0xe8] sm:$0xff] 0.0
      %414 = vst [vmem:[#allocation3 + $0xf0] sm:$0xff] 0.0
      %415 = vst [vmem:[#allocation3 + $0xf8] sm:$0xff] 0.0
      %416 = vst [vmem:[#allocation3 + $0x100] sm:$0xff] 0.0
      %417 = vst [vmem:[#allocation3 + $0x108] sm:$0xff] 0.0
      %418 = vst [vmem:[#allocation3 + $0x110] sm:$0xff] 0.0
      %419 = vst [vmem:[#allocation3 + $0x118] sm:$0xff] 0.0
      %v420 = vld [vmem:[#allocation3] sm:$0xff]
      %v421 = vld [vmem:[#allocation3 + $0x8] sm:$0xff]
      %v422 = vld [vmem:[#allocation3 + $0x10] sm:$0xff]
      %v423 = vld [vmem:[#allocation3 + $0x18] sm:$0xff]
      %v424 = vld [vmem:[#allocation3 + $0x20] sm:$0xff]
      %v425 = vld [vmem:[#allocation3 + $0x28] sm:$0xff]
      %v426 = vld [vmem:[#allocation3 + $0x30] sm:$0xff]
      %v427 = vld [vmem:[#allocation3 + $0x38] sm:$0xff]
      %v428 = vld [vmem:[#allocation3 + $0x40] sm:$0xff]
      %v429 = vld [vmem:[#allocation3 + $0x48] sm:$0xff]
      %v430 = vld [vmem:[#allocation3 + $0x50] sm:$0xff]
      %v431 = vld [vmem:[#allocation3 + $0x58] sm:$0xff]
      %v432 = vld [vmem:[#allocation3 + $0x60] sm:$0xff]
      %v433 = vld [vmem:[#allocation3 + $0x68] sm:$0xff]
      %v434 = vld [vmem:[#allocation3 + $0x70] sm:$0xff]
      %v435 = vld [vmem:[#allocation3 + $0x78] sm:$0xff]
      %v436 = vld [vmem:[#allocation3 + $0x80] sm:$0xff]
      %v437 = vld [vmem:[#allocation3 + $0x88] sm:$0xff]
      %v438 = vld [vmem:[#allocation3 + $0x90] sm:$0xff]
      %v439 = vld [vmem:[#allocation3 + $0x98] sm:$0xff]
      %v440 = vld [vmem:[#allocation3 + $0xa0] sm:$0xff]
      %v441 = vld [vmem:[#allocation3 + $0xa8] sm:$0xff]
      %v442 = vld [vmem:[#allocation3 + $0xb0] sm:$0xff]
      %v443 = vld [vmem:[#allocation3 + $0xb8] sm:$0xff]
      %v444 = vld [vmem:[#allocation3 + $0xc0] sm:$0xff]
      %v445 = vld [vmem:[#allocation3 + $0xc8] sm:$0xff]
      %v446 = vld [vmem:[#allocation3 + $0xd0] sm:$0xff]
      %v447 = vld [vmem:[#allocation3 + $0xd8] sm:$0xff]
      %v448 = vld [vmem:[#allocation3 + $0xe0] sm:$0xff]
      %v449 = vld [vmem:[#allocation3 + $0xe8] sm:$0xff]
      %v450 = vld [vmem:[#allocation3 + $0xf0] sm:$0xff]
      %v451 = vld [vmem:[#allocation3 + $0xf8] sm:$0xff]
      %v452 = vld [vmem:[#allocation3 + $0x100] sm:$0xff]
      %v453 = vld [vmem:[#allocation3 + $0x108] sm:$0xff]
      %v454 = vld [vmem:[#allocation3 + $0x110] sm:$0xff]
      %v455 = vld [vmem:[#allocation3 + $0x118] sm:$0xff]
      %v456 = vld [vmem:[#allocation2 + $0xd] sm:$0xff]
      %v457 = vld [vmem:[#allocation2 + $0x15] sm:$0xff]
      %v458 = vld [vmem:[#allocation2 + $0x1d] sm:$0xff]
      %v459 = vld [vmem:[#allocation2 + $0x25] sm:$0xff]
      %v460 = vld [vmem:[#allocation2 + $0x2d] sm:$0xff]
      %v461 = vld [vmem:[#allocation2 + $0x35] sm:$0xff]
      %v462 = vld [vmem:[#allocation2 + $0x3d] sm:$0xff]
      %v463 = vld [vmem:[#allocation2 + $0x45] sm:$0xff]
      %v464 = vld [vmem:[#allocation2 + $0x4d] sm:$0xff]
      %v465 = vld [vmem:[#allocation2 + $0x55] sm:$0xff]
      %v466 = vld [vmem:[#allocation2 + $0x5d] sm:$0xff]
      %v467 = vld [vmem:[#allocation2 + $0x65] sm:$0xff]
      %v468 = vld [vmem:[#allocation2 + $0x6d] sm:$0xff]
      %v469 = vld [vmem:[#allocation2 + $0x75] sm:$0xff]
      %v470 = vld [vmem:[#allocation2 + $0x7d] sm:$0xff]
      %v471 = vld [vmem:[#allocation2 + $0x85] sm:$0xff]
      %v472 = vld [vmem:[#allocation2 + $0x8d] sm:$0xff]
      %v473 = vld [vmem:[#allocation2 + $0x95] sm:$0xff]
      %v474 = vld [vmem:[#allocation2 + $0x9d] sm:$0xff]
      %v475 = vld [vmem:[#allocation2 + $0xa5] sm:$0xff]
      %v476 = vld [vmem:[#allocation2 + $0xad] sm:$0xff]
      %v477 = vld [vmem:[#allocation2 + $0xb5] sm:$0xff]
      %v478 = vld [vmem:[#allocation2 + $0xbd] sm:$0xff]
      %v479 = vld [vmem:[#allocation2 + $0xc5] sm:$0xff]
      %v480 = vld [vmem:[#allocation2 + $0xcd] sm:$0xff]
      %v481 = vld [vmem:[#allocation2 + $0xd5] sm:$0xff]
      %v482 = vld [vmem:[#allocation2 + $0xdd] sm:$0xff]
      %v483 = vld [vmem:[#allocation2 + $0xe5] sm:$0xff]
      %v484 = vld [vmem:[#allocation2 + $0xed] sm:$0xff]
      %v485 = vld [vmem:[#allocation2 + $0xf5] sm:$0xff]
      %v486 = vld [vmem:[#allocation2 + $0xfd] sm:$0xff]
      %v487 = vld [vmem:[#allocation2 + $0x105] sm:$0xff]
      %v488 = vld [vmem:[#allocation2 + $0x10d] sm:$0xff]
      %v489 = vld [vmem:[#allocation2 + $0x115] sm:$0xff]
      %v490 = vld [vmem:[#allocation2 + $0x11d] sm:$0xff]
      %v491 = vld [vmem:[#allocation2 + $0x125] sm:$0xff]
      %v492 = vpack.c.bf16 %v457, %v456
      %v493 = vpack.c.bf16 %v459, %v458
      %v494 = vpack.c.bf16 %v461, %v460
      %v495 = vpack.c.bf16 %v463, %v462
      %v496 = vpack.c.bf16 %v465, %v464
      %v497 = vpack.c.bf16 %v467, %v466
      %v498 = vpack.c.bf16 %v469, %v468
      %v499 = vpack.c.bf16 %v471, %v470
      %v500 = vpack.c.bf16 %v473, %v472
      %v501 = vpack.c.bf16 %v475, %v474
      %v502 = vpack.c.bf16 %v477, %v476
      %v503 = vpack.c.bf16 %v479, %v478
      %v504 = vpack.c.bf16 %v481, %v480
      %v505 = vpack.c.bf16 %v483, %v482
      %v506 = vpack.c.bf16 %v485, %v484
      %v507 = vpack.c.bf16 %v487, %v486
      %v508 = vpack.c.bf16 %v489, %v488
      %v509 = vpack.c.bf16 %v491, %v490
      %v510 = vld [vmem:[%s1] sm:$0xf]
      %v511 = vld [vmem:[%s1 + $0x4] sm:$0xf]
      %v512 = vld [vmem:[%s1 + $0x8] sm:$0xf]
      %v513 = vld [vmem:[%s1 + $0xc] sm:$0xf]
      %v514 = vld [vmem:[%s1 + $0x10] sm:$0xf]
      %v515 = vld [vmem:[%s1 + $0x14] sm:$0xf]
      %v516 = vld [vmem:[%s1 + $0x18] sm:$0xf]
      %v517 = vld [vmem:[%s1 + $0x1c] sm:$0xf]
      %v518 = vld [vmem:[%s1 + $0x20] sm:$0xf]
      %v519 = vld [vmem:[%s1 + $0x24] sm:$0xf]
      %v520 = vld [vmem:[%s1 + $0x28] sm:$0xf]
      %v521 = vld [vmem:[%s1 + $0x2c] sm:$0xf]
      %v522 = vld [vmem:[%s1 + $0x30] sm:$0xf]
      %v523 = vld [vmem:[%s1 + $0x34] sm:$0xf]
      %v524 = vld [vmem:[%s1 + $0x38] sm:$0xf]
      %v525 = vld [vmem:[%s1 + $0x3c] sm:$0xf]
      %v542 = vunpack.c.l.b16 %v510
      %v543 = vunpack.c.l.b16 %v511
      %v544 = vunpack.c.l.b16 %v512
      %v545 = vunpack.c.l.b16 %v513
      %v546 = vunpack.c.l.b16 %v514
      %v547 = vunpack.c.l.b16 %v515
      %v548 = vunpack.c.l.b16 %v516
      %v549 = vunpack.c.l.b16 %v517
      %v550 = vunpack.c.l.b16 %v518
      %v551 = vunpack.c.l.b16 %v519
      %v552 = vunpack.c.l.b16 %v520
      %v553 = vunpack.c.l.b16 %v521
      %v554 = vunpack.c.l.b16 %v522
      %v555 = vunpack.c.l.b16 %v523
      %v556 = vunpack.c.l.b16 %v524
      %v557 = vunpack.c.l.b16 %v525
      %v558 = vpack.c.b16 %v543, %v542
      %v559 = vpack.c.b16 %v545, %v544
      %v560 = vpack.c.b16 %v547, %v546
      %v561 = vpack.c.b16 %v549, %v548
      %v562 = vpack.c.b16 %v551, %v550
      %v563 = vpack.c.b16 %v553, %v552
      %v564 = vpack.c.b16 %v555, %v554
      %v565 = vpack.c.b16 %v557, %v556
      %574 = vmatpush.bf16.msra.mxu0 %v565
      %575 = vmatpush.bf16.msra.mxu0 %v564
      %576 = vmatpush.bf16.msra.mxu0 %v563
      %577 = vmatpush.bf16.msra.mxu0 %v562
      %578 = vmatpush.bf16.msra.mxu0 %v561
      %579 = vmatpush.bf16.msra.mxu0 %v560
      %580 = vmatpush.bf16.msra.mxu0 %v559
      %581 = vmatpush.bf16.msra.mxu0 %v558
      %582 = vmatmul.bf16.gmra.mxu0 %v492
      %v583 = vpop.f32.mrf.mxu0
      %v584 = vadd.f32 0.0, %v583
      %v585 = vpop.f32.mrf.mxu0
      %v586 = vadd.f32 0.0, %v585
      %587 = vmatmul.bf16.gmra.mxu0 %v493
      %v588 = vpop.f32.mrf.mxu0
      %v589 = vadd.f32 0.0, %v588
      %v590 = vpop.f32.mrf.mxu0
      %v591 = vadd.f32 0.0, %v590
      %592 = vmatmul.bf16.gmra.mxu0 %v494
      %v593 = vpop.f32.mrf.mxu0
      %v594 = vadd.f32 0.0, %v593
      %v595 = vpop.f32.mrf.mxu0
      %v596 = vadd.f32 0.0, %v595
      %597 = vmatmul.bf16.gmra.mxu0 %v495
      %v598 = vpop.f32.mrf.mxu0
      %v599 = vadd.f32 0.0, %v598
      %v600 = vpop.f32.mrf.mxu0
      %v601 = vadd.f32 0.0, %v600
      %602 = vmatmul.bf16.gmra.mxu0 %v496
      %v603 = vpop.f32.mrf.mxu0
      %v604 = vadd.f32 0.0, %v603
      %v605 = vpop.f32.mrf.mxu0
      %v606 = vadd.f32 0.0, %v605
      %607 = vmatmul.bf16.gmra.mxu0 %v497
      %v608 = vpop.f32.mrf.mxu0
      %v609 = vadd.f32 0.0, %v608
      %v610 = vpop.f32.mrf.mxu0
      %v611 = vadd.f32 0.0, %v610
      %612 = vmatmul.bf16.gmra.mxu0 %v498
      %v613 = vpop.f32.mrf.mxu0
      %v614 = vadd.f32 0.0, %v613
      %v615 = vpop.f32.mrf.mxu0
      %v616 = vadd.f32 0.0, %v615
      %617 = vmatmul.bf16.gmra.mxu0 %v499
      %v618 = vpop.f32.mrf.mxu0
      %v619 = vadd.f32 0.0, %v618
      %v620 = vpop.f32.mrf.mxu0
      %v621 = vadd.f32 0.0, %v620
      %622 = vmatmul.bf16.gmra.mxu0 %v500
      %v623 = vpop.f32.mrf.mxu0
      %v624 = vadd.f32 0.0, %v623
      %v625 = vpop.f32.mrf.mxu0
      %v626 = vadd.f32 0.0, %v625
      %627 = vmatmul.bf16.gmra.mxu0 %v501
      %v628 = vpop.f32.mrf.mxu0
      %v629 = vadd.f32 0.0, %v628
      %v630 = vpop.f32.mrf.mxu0
      %v631 = vadd.f32 0.0, %v630
      %632 = vmatmul.bf16.gmra.mxu0 %v502
      %v633 = vpop.f32.mrf.mxu0
      %v634 = vadd.f32 0.0, %v633
      %v635 = vpop.f32.mrf.mxu0
      %v636 = vadd.f32 0.0, %v635
      %637 = vmatmul.bf16.gmra.mxu0 %v503
      %v638 = vpop.f32.mrf.mxu0
      %v639 = vadd.f32 0.0, %v638
      %v640 = vpop.f32.mrf.mxu0
      %v641 = vadd.f32 0.0, %v640
      %642 = vmatmul.bf16.gmra.mxu0 %v504
      %v643 = vpop.f32.mrf.mxu0
      %v644 = vadd.f32 0.0, %v643
      %v645 = vpop.f32.mrf.mxu0
      %v646 = vadd.f32 0.0, %v645
      %647 = vmatmul.bf16.gmra.mxu0 %v505
      %v648 = vpop.f32.mrf.mxu0
      %v649 = vadd.f32 0.0, %v648
      %v650 = vpop.f32.mrf.mxu0
      %v651 = vadd.f32 0.0, %v650
      %652 = vmatmul.bf16.gmra.mxu0 %v506
      %v653 = vpop.f32.mrf.mxu0
      %v654 = vadd.f32 0.0, %v653
      %v655 = vpop.f32.mrf.mxu0
      %v656 = vadd.f32 0.0, %v655
      %657 = vmatmul.bf16.gmra.mxu0 %v507
      %v658 = vpop.f32.mrf.mxu0
      %v659 = vadd.f32 0.0, %v658
      %v660 = vpop.f32.mrf.mxu0
      %v661 = vadd.f32 0.0, %v660
      %662 = vmatmul.bf16.gmra.mxu0 %v508
      %v663 = vpop.f32.mrf.mxu0
      %v664 = vadd.f32 0.0, %v663
      %v665 = vpop.f32.mrf.mxu0
      %v666 = vadd.f32 0.0, %v665
      %667 = vmatmul.bf16.gmra.mxu0 %v509
      %v668 = vpop.f32.mrf.mxu0
      %v669 = vadd.f32 0.0, %v668
      %v670 = vpop.f32.mrf.mxu0
      %v671 = vadd.f32 0.0, %v670
      %672 = vdwg.mxu0
      %v673 = vadd.f32 %v420, %v584
      %v674 = vadd.f32 %v421, %v586
      %v675 = vadd.f32 %v422, %v589
      %v676 = vadd.f32 %v423, %v591
      %v677 = vadd.f32 %v424, %v594
      %v678 = vadd.f32 %v425, %v596
      %v679 = vadd.f32 %v426, %v599
      %v680 = vadd.f32 %v427, %v601
      %v681 = vadd.f32 %v428, %v604
      %v682 = vadd.f32 %v429, %v606
      %v683 = vadd.f32 %v430, %v609
      %v684 = vadd.f32 %v431, %v611
      %v685 = vadd.f32 %v432, %v614
      %v686 = vadd.f32 %v433, %v616
      %v687 = vadd.f32 %v434, %v619
      %v688 = vadd.f32 %v435, %v621
      %v689 = vadd.f32 %v436, %v624
      %v690 = vadd.f32 %v437, %v626
      %v691 = vadd.f32 %v438, %v629
      %v692 = vadd.f32 %v439, %v631
      %v693 = vadd.f32 %v440, %v634
      %v694 = vadd.f32 %v441, %v636
      %v695 = vadd.f32 %v442, %v639
      %v696 = vadd.f32 %v443, %v641
      %v697 = vadd.f32 %v444, %v644
      %v698 = vadd.f32 %v445, %v646
      %v699 = vadd.f32 %v446, %v649
      %v700 = vadd.f32 %v447, %v651
      %v701 = vadd.f32 %v448, %v654
      %v702 = vadd.f32 %v449, %v656
      %v703 = vadd.f32 %v450, %v659
      %v704 = vadd.f32 %v451, %v661
      %v705 = vadd.f32 %v452, %v664
      %v706 = vadd.f32 %v453, %v666
      %v707 = vadd.f32 %v454, %v669
      %v708 = vadd.f32 %v455, %v671
      %709 = vst [vmem:[#allocation3] sm:$0xff] %v673
      %710 = vst [vmem:[#allocation3 + $0x8] sm:$0xff] %v674
      %711 = vst [vmem:[#allocation3 + $0x10] sm:$0xff] %v675
      %712 = vst [vmem:[#allocation3 + $0x18] sm:$0xff] %v676
      %713 = vst [vmem:[#allocation3 + $0x20] sm:$0xff] %v677
      %714 = vst [vmem:[#allocation3 + $0x28] sm:$0xff] %v678
      %715 = vst [vmem:[#allocation3 + $0x30] sm:$0xff] %v679
      %716 = vst [vmem:[#allocation3 + $0x38] sm:$0xff] %v680
      %717 = vst [vmem:[#allocation3 + $0x40] sm:$0xff] %v681
      %718 = vst [vmem:[#allocation3 + $0x48] sm:$0xff] %v682
      %719 = vst [vmem:[#allocation3 + $0x50] sm:$0xff] %v683
      %720 = vst [vmem:[#allocation3 + $0x58] sm:$0xff] %v684
      %721 = vst [vmem:[#allocation3 + $0x60] sm:$0xff] %v685
      %722 = vst [vmem:[#allocation3 + $0x68] sm:$0xff] %v686
      %723 = vst [vmem:[#allocation3 + $0x70] sm:$0xff] %v687
      %724 = vst [vmem:[#allocation3 + $0x78] sm:$0xff] %v688
      %725 = vst [vmem:[#allocation3 + $0x80] sm:$0xff] %v689
      %726 = vst [vmem:[#allocation3 + $0x88] sm:$0xff] %v690
      %727 = vst [vmem:[#allocation3 + $0x90] sm:$0xff] %v691
      %728 = vst [vmem:[#allocation3 + $0x98] sm:$0xff] %v692
      %729 = vst [vmem:[#allocation3 + $0xa0] sm:$0xff] %v693
      %730 = vst [vmem:[#allocation3 + $0xa8] sm:$0xff] %v694
      %731 = vst [vmem:[#allocation3 + $0xb0] sm:$0xff] %v695
      %732 = vst [vmem:[#allocation3 + $0xb8] sm:$0xff] %v696
      %733 = vst [vmem:[#allocation3 + $0xc0] sm:$0xff] %v697
      %734 = vst [vmem:[#allocation3 + $0xc8] sm:$0xff] %v698
      %735 = vst [vmem:[#allocation3 + $0xd0] sm:$0xff] %v699
      %736 = vst [vmem:[#allocation3 + $0xd8] sm:$0xff] %v700
      %737 = vst [vmem:[#allocation3 + $0xe0] sm:$0xff] %v701
      %738 = vst [vmem:[#allocation3 + $0xe8] sm:$0xff] %v702
      %739 = vst [vmem:[#allocation3 + $0xf0] sm:$0xff] %v703
      %740 = vst [vmem:[#allocation3 + $0xf8] sm:$0xff] %v704
      %741 = vst [vmem:[#allocation3 + $0x100] sm:$0xff] %v705
      %742 = vst [vmem:[#allocation3 + $0x108] sm:$0xff] %v706
      %743 = vst [vmem:[#allocation3 + $0x110] sm:$0xff] %v707
      %744 = vst [vmem:[#allocation3 + $0x118] sm:$0xff] %v708
      %v745 = vld [vmem:[#allocation3] sm:$0xff]
      %v746 = vld [vmem:[#allocation3 + $0x8] sm:$0xff]
      %v747 = vld [vmem:[#allocation3 + $0x10] sm:$0xff]
      %v748 = vld [vmem:[#allocation3 + $0x18] sm:$0xff]
      %v749 = vld [vmem:[#allocation3 + $0x20] sm:$0xff]
      %v750 = vld [vmem:[#allocation3 + $0x28] sm:$0xff]
      %v751 = vld [vmem:[#allocation3 + $0x30] sm:$0xff]
      %v752 = vld [vmem:[#allocation3 + $0x38] sm:$0xff]
      %v753 = vld [vmem:[#allocation3 + $0x40] sm:$0xff]
      %v754 = vld [vmem:[#allocation3 + $0x48] sm:$0xff]
      %v755 = vld [vmem:[#allocation3 + $0x50] sm:$0xff]
      %v756 = vld [vmem:[#allocation3 + $0x58] sm:$0xff]
      %v757 = vld [vmem:[#allocation3 + $0x60] sm:$0xff]
      %v758 = vld [vmem:[#allocation3 + $0x68] sm:$0xff]
      %v759 = vld [vmem:[#allocation3 + $0x70] sm:$0xff]
      %v760 = vld [vmem:[#allocation3 + $0x78] sm:$0xff]
      %v761 = vld [vmem:[#allocation3 + $0x80] sm:$0xff]
      %v762 = vld [vmem:[#allocation3 + $0x88] sm:$0xff]
      %v763 = vld [vmem:[#allocation3 + $0x90] sm:$0xff]
      %v764 = vld [vmem:[#allocation3 + $0x98] sm:$0xff]
      %v765 = vld [vmem:[#allocation3 + $0xa0] sm:$0xff]
      %v766 = vld [vmem:[#allocation3 + $0xa8] sm:$0xff]
      %v767 = vld [vmem:[#allocation3 + $0xb0] sm:$0xff]
      %v768 = vld [vmem:[#allocation3 + $0xb8] sm:$0xff]
      %v769 = vld [vmem:[#allocation3 + $0xc0] sm:$0xff]
      %v770 = vld [vmem:[#allocation3 + $0xc8] sm:$0xff]
      %v771 = vld [vmem:[#allocation3 + $0xd0] sm:$0xff]
      %v772 = vld [vmem:[#allocation3 + $0xd8] sm:$0xff]
      %v773 = vld [vmem:[#allocation3 + $0xe0] sm:$0xff]
      %v774 = vld [vmem:[#allocation3 + $0xe8] sm:$0xff]
      %v775 = vld [vmem:[#allocation3 + $0xf0] sm:$0xff]
      %v776 = vld [vmem:[#allocation3 + $0xf8] sm:$0xff]
      %v777 = vld [vmem:[#allocation3 + $0x100] sm:$0xff]
      %v778 = vld [vmem:[#allocation3 + $0x108] sm:$0xff]
      %v779 = vld [vmem:[#allocation3 + $0x110] sm:$0xff]
      %v780 = vld [vmem:[#allocation3 + $0x118] sm:$0xff]
      %v781 = vld [vmem:[#allocation2 + $0xe] sm:$0xff]
      %v782 = vld [vmem:[#allocation2 + $0x16] sm:$0xff]
      %v783 = vld [vmem:[#allocation2 + $0x1e] sm:$0xff]
      %v784 = vld [vmem:[#allocation2 + $0x26] sm:$0xff]
      %v785 = vld [vmem:[#allocation2 + $0x2e] sm:$0xff]
      %v786 = vld [vmem:[#allocation2 + $0x36] sm:$0xff]
      %v787 = vld [vmem:[#allocation2 + $0x3e] sm:$0xff]
      %v788 = vld [vmem:[#allocation2 + $0x46] sm:$0xff]
      %v789 = vld [vmem:[#allocation2 + $0x4e] sm:$0xff]
      %v790 = vld [vmem:[#allocation2 + $0x56] sm:$0xff]
      %v791 = vld [vmem:[#allocation2 + $0x5e] sm:$0xff]
      %v792 = vld [vmem:[#allocation2 + $0x66] sm:$0xff]
      %v793 = vld [vmem:[#allocation2 + $0x6e] sm:$0xff]
      %v794 = vld [vmem:[#allocation2 + $0x76] sm:$0xff]
      %v795 = vld [vmem:[#allocation2 + $0x7e] sm:$0xff]
      %v796 = vld [vmem:[#allocation2 + $0x86] sm:$0xff]
      %v797 = vld [vmem:[#allocation2 + $0x8e] sm:$0xff]
      %v798 = vld [vmem:[#allocation2 + $0x96] sm:$0xff]
      %v799 = vld [vmem:[#allocation2 + $0x9e] sm:$0xff]
      %v800 = vld [vmem:[#allocation2 + $0xa6] sm:$0xff]
      %v801 = vld [vmem:[#allocation2 + $0xae] sm:$0xff]
      %v802 = vld [vmem:[#allocation2 + $0xb6] sm:$0xff]
      %v803 = vld [vmem:[#allocation2 + $0xbe] sm:$0xff]
      %v804 = vld [vmem:[#allocation2 + $0xc6] sm:$0xff]
      %v805 = vld [vmem:[#allocation2 + $0xce] sm:$0xff]
      %v806 = vld [vmem:[#allocation2 + $0xd6] sm:$0xff]
      %v807 = vld [vmem:[#allocation2 + $0xde] sm:$0xff]
      %v808 = vld [vmem:[#allocation2 + $0xe6] sm:$0xff]
      %v809 = vld [vmem:[#allocation2 + $0xee] sm:$0xff]
      %v810 = vld [vmem:[#allocation2 + $0xf6] sm:$0xff]
      %v811 = vld [vmem:[#allocation2 + $0xfe] sm:$0xff]
      %v812 = vld [vmem:[#allocation2 + $0x106] sm:$0xff]
      %v813 = vld [vmem:[#allocation2 + $0x10e] sm:$0xff]
      %v814 = vld [vmem:[#allocation2 + $0x116] sm:$0xff]
      %v815 = vld [vmem:[#allocation2 + $0x11e] sm:$0xff]
      %v816 = vld [vmem:[#allocation2 + $0x126] sm:$0xff]
      %v817 = vpack.c.bf16 %v782, %v781
      %v818 = vpack.c.bf16 %v784, %v783
      %v819 = vpack.c.bf16 %v786, %v785
      %v820 = vpack.c.bf16 %v788, %v787
      %v821 = vpack.c.bf16 %v790, %v789
      %v822 = vpack.c.bf16 %v792, %v791
      %v823 = vpack.c.bf16 %v794, %v793
      %v824 = vpack.c.bf16 %v796, %v795
      %v825 = vpack.c.bf16 %v798, %v797
      %v826 = vpack.c.bf16 %v800, %v799
      %v827 = vpack.c.bf16 %v802, %v801
      %v828 = vpack.c.bf16 %v804, %v803
      %v829 = vpack.c.bf16 %v806, %v805
      %v830 = vpack.c.bf16 %v808, %v807
      %v831 = vpack.c.bf16 %v810, %v809
      %v832 = vpack.c.bf16 %v812, %v811
      %v833 = vpack.c.bf16 %v814, %v813
      %v834 = vpack.c.bf16 %v816, %v815
      %s835 = scalar_lea.vmem %s1, 64
      %v836 = vld [vmem:[%s835] sm:$0xf]
      %v837 = vld [vmem:[%s835 + $0x4] sm:$0xf]
      %v838 = vld [vmem:[%s835 + $0x8] sm:$0xf]
      %v839 = vld [vmem:[%s835 + $0xc] sm:$0xf]
      %v840 = vld [vmem:[%s835 + $0x10] sm:$0xf]
      %v841 = vld [vmem:[%s835 + $0x14] sm:$0xf]
      %v842 = vld [vmem:[%s835 + $0x18] sm:$0xf]
      %v843 = vld [vmem:[%s835 + $0x1c] sm:$0xf]
      %v844 = vld [vmem:[%s835 + $0x20] sm:$0xf]
      %v845 = vld [vmem:[%s835 + $0x24] sm:$0xf]
      %v846 = vld [vmem:[%s835 + $0x28] sm:$0xf]
      %v847 = vld [vmem:[%s835 + $0x2c] sm:$0xf]
      %v848 = vld [vmem:[%s835 + $0x30] sm:$0xf]
      %v849 = vld [vmem:[%s835 + $0x34] sm:$0xf]
      %v850 = vld [vmem:[%s835 + $0x38] sm:$0xf]
      %v851 = vld [vmem:[%s835 + $0x3c] sm:$0xf]
      %v868 = vunpack.c.l.b16 %v836
      %v869 = vunpack.c.l.b16 %v837
      %v870 = vunpack.c.l.b16 %v838
      %v871 = vunpack.c.l.b16 %v839
      %v872 = vunpack.c.l.b16 %v840
      %v873 = vunpack.c.l.b16 %v841
      %v874 = vunpack.c.l.b16 %v842
      %v875 = vunpack.c.l.b16 %v843
      %v876 = vunpack.c.l.b16 %v844
      %v877 = vunpack.c.l.b16 %v845
      %v878 = vunpack.c.l.b16 %v846
      %v879 = vunpack.c.l.b16 %v847
      %v880 = vunpack.c.l.b16 %v848
      %v881 = vunpack.c.l.b16 %v849
      %v882 = vunpack.c.l.b16 %v850
      %v883 = vunpack.c.l.b16 %v851
      %v884 = vpack.c.b16 %v869, %v868
      %v885 = vpack.c.b16 %v871, %v870
      %v886 = vpack.c.b16 %v873, %v872
      %v887 = vpack.c.b16 %v875, %v874
      %v888 = vpack.c.b16 %v877, %v876
      %v889 = vpack.c.b16 %v879, %v878
      %v890 = vpack.c.b16 %v881, %v880
      %v891 = vpack.c.b16 %v883, %v882
      %900 = vmatpush.bf16.msra.mxu0 %v891
      %901 = vmatpush.bf16.msra.mxu0 %v890
      %902 = vmatpush.bf16.msra.mxu0 %v889
      %903 = vmatpush.bf16.msra.mxu0 %v888
      %904 = vmatpush.bf16.msra.mxu0 %v887
      %905 = vmatpush.bf16.msra.mxu0 %v886
      %906 = vmatpush.bf16.msra.mxu0 %v885
      %907 = vmatpush.bf16.msra.mxu0 %v884
      %908 = vmatmul.bf16.gmra.mxu0 %v817
      %v909 = vpop.f32.mrf.mxu0
      %v910 = vadd.f32 0.0, %v909
      %v911 = vpop.f32.mrf.mxu0
      %v912 = vadd.f32 0.0, %v911
      %913 = vmatmul.bf16.gmra.mxu0 %v818
      %v914 = vpop.f32.mrf.mxu0
      %v915 = vadd.f32 0.0, %v914
      %v916 = vpop.f32.mrf.mxu0
      %v917 = vadd.f32 0.0, %v916
      %918 = vmatmul.bf16.gmra.mxu0 %v819
      %v919 = vpop.f32.mrf.mxu0
      %v920 = vadd.f32 0.0, %v919
      %v921 = vpop.f32.mrf.mxu0
      %v922 = vadd.f32 0.0, %v921
      %923 = vmatmul.bf16.gmra.mxu0 %v820
      %v924 = vpop.f32.mrf.mxu0
      %v925 = vadd.f32 0.0, %v924
      %v926 = vpop.f32.mrf.mxu0
      %v927 = vadd.f32 0.0, %v926
      %928 = vmatmul.bf16.gmra.mxu0 %v821
      %v929 = vpop.f32.mrf.mxu0
      %v930 = vadd.f32 0.0, %v929
      %v931 = vpop.f32.mrf.mxu0
      %v932 = vadd.f32 0.0, %v931
      %933 = vmatmul.bf16.gmra.mxu0 %v822
      %v934 = vpop.f32.mrf.mxu0
      %v935 = vadd.f32 0.0, %v934
      %v936 = vpop.f32.mrf.mxu0
      %v937 = vadd.f32 0.0, %v936
      %938 = vmatmul.bf16.gmra.mxu0 %v823
      %v939 = vpop.f32.mrf.mxu0
      %v940 = vadd.f32 0.0, %v939
      %v941 = vpop.f32.mrf.mxu0
      %v942 = vadd.f32 0.0, %v941
      %943 = vmatmul.bf16.gmra.mxu0 %v824
      %v944 = vpop.f32.mrf.mxu0
      %v945 = vadd.f32 0.0, %v944
      %v946 = vpop.f32.mrf.mxu0
      %v947 = vadd.f32 0.0, %v946
      %948 = vmatmul.bf16.gmra.mxu0 %v825
      %v949 = vpop.f32.mrf.mxu0
      %v950 = vadd.f32 0.0, %v949
      %v951 = vpop.f32.mrf.mxu0
      %v952 = vadd.f32 0.0, %v951
      %953 = vmatmul.bf16.gmra.mxu0 %v826
      %v954 = vpop.f32.mrf.mxu0
      %v955 = vadd.f32 0.0, %v954
      %v956 = vpop.f32.mrf.mxu0
      %v957 = vadd.f32 0.0, %v956
      %958 = vmatmul.bf16.gmra.mxu0 %v827
      %v959 = vpop.f32.mrf.mxu0
      %v960 = vadd.f32 0.0, %v959
      %v961 = vpop.f32.mrf.mxu0
      %v962 = vadd.f32 0.0, %v961
      %963 = vmatmul.bf16.gmra.mxu0 %v828
      %v964 = vpop.f32.mrf.mxu0
      %v965 = vadd.f32 0.0, %v964
      %v966 = vpop.f32.mrf.mxu0
      %v967 = vadd.f32 0.0, %v966
      %968 = vmatmul.bf16.gmra.mxu0 %v829
      %v969 = vpop.f32.mrf.mxu0
      %v970 = vadd.f32 0.0, %v969
      %v971 = vpop.f32.mrf.mxu0
      %v972 = vadd.f32 0.0, %v971
      %973 = vmatmul.bf16.gmra.mxu0 %v830
      %v974 = vpop.f32.mrf.mxu0
      %v975 = vadd.f32 0.0, %v974
      %v976 = vpop.f32.mrf.mxu0
      %v977 = vadd.f32 0.0, %v976
      %978 = vmatmul.bf16.gmra.mxu0 %v831
      %v979 = vpop.f32.mrf.mxu0
      %v980 = vadd.f32 0.0, %v979
      %v981 = vpop.f32.mrf.mxu0
      %v982 = vadd.f32 0.0, %v981
      %983 = vmatmul.bf16.gmra.mxu0 %v832
      %v984 = vpop.f32.mrf.mxu0
      %v985 = vadd.f32 0.0, %v984
      %v986 = vpop.f32.mrf.mxu0
      %v987 = vadd.f32 0.0, %v986
      %988 = vmatmul.bf16.gmra.mxu0 %v833
      %v989 = vpop.f32.mrf.mxu0
      %v990 = vadd.f32 0.0, %v989
      %v991 = vpop.f32.mrf.mxu0
      %v992 = vadd.f32 0.0, %v991
      %993 = vmatmul.bf16.gmra.mxu0 %v834
      %v994 = vpop.f32.mrf.mxu0
      %v995 = vadd.f32 0.0, %v994
      %v996 = vpop.f32.mrf.mxu0
      %v997 = vadd.f32 0.0, %v996
      %998 = vdwg.mxu0
      %v999 = vadd.f32 %v745, %v910
      %v1000 = vadd.f32 %v746, %v912
      %v1001 = vadd.f32 %v747, %v915
      %v1002 = vadd.f32 %v748, %v917
      %v1003 = vadd.f32 %v749, %v920
      %v1004 = vadd.f32 %v750, %v922
      %v1005 = vadd.f32 %v751, %v925
      %v1006 = vadd.f32 %v752, %v927
      %v1007 = vadd.f32 %v753, %v930
      %v1008 = vadd.f32 %v754, %v932
      %v1009 = vadd.f32 %v755, %v935
      %v1010 = vadd.f32 %v756, %v937
      %v1011 = vadd.f32 %v757, %v940
      %v1012 = vadd.f32 %v758, %v942
      %v1013 = vadd.f32 %v759, %v945
      %v1014 = vadd.f32 %v760, %v947
      %v1015 = vadd.f32 %v761, %v950
      %v1016 = vadd.f32 %v762, %v952
      %v1017 = vadd.f32 %v763, %v955
      %v1018 = vadd.f32 %v764, %v957
      %v1019 = vadd.f32 %v765, %v960
      %v1020 = vadd.f32 %v766, %v962
      %v1021 = vadd.f32 %v767, %v965
      %v1022 = vadd.f32 %v768, %v967
      %v1023 = vadd.f32 %v769, %v970
      %v1024 = vadd.f32 %v770, %v972
      %v1025 = vadd.f32 %v771, %v975
      %v1026 = vadd.f32 %v772, %v977
      %v1027 = vadd.f32 %v773, %v980
      %v1028 = vadd.f32 %v774, %v982
      %v1029 = vadd.f32 %v775, %v985
      %v1030 = vadd.f32 %v776, %v987
      %v1031 = vadd.f32 %v777, %v990
      %v1032 = vadd.f32 %v778, %v992
      %v1033 = vadd.f32 %v779, %v995
      %v1034 = vadd.f32 %v780, %v997
      %1035 = vst [vmem:[#allocation3] sm:$0xff] %v999
      %1036 = vst [vmem:[#allocation3 + $0x8] sm:$0xff] %v1000
      %1037 = vst [vmem:[#allocation3 + $0x10] sm:$0xff] %v1001
      %1038 = vst [vmem:[#allocation3 + $0x18] sm:$0xff] %v1002
      %1039 = vst [vmem:[#allocation3 + $0x20] sm:$0xff] %v1003
      %1040 = vst [vmem:[#allocation3 + $0x28] sm:$0xff] %v1004
      %1041 = vst [vmem:[#allocation3 + $0x30] sm:$0xff] %v1005
      %1042 = vst [vmem:[#allocation3 + $0x38] sm:$0xff] %v1006
      %1043 = vst [vmem:[#allocation3 + $0x40] sm:$0xff] %v1007
      %1044 = vst [vmem:[#allocation3 + $0x48] sm:$0xff] %v1008
      %1045 = vst [vmem:[#allocation3 + $0x50] sm:$0xff] %v1009
      %1046 = vst [vmem:[#allocation3 + $0x58] sm:$0xff] %v1010
      %1047 = vst [vmem:[#allocation3 + $0x60] sm:$0xff] %v1011
      %1048 = vst [vmem:[#allocation3 + $0x68] sm:$0xff] %v1012
      %1049 = vst [vmem:[#allocation3 + $0x70] sm:$0xff] %v1013
      %1050 = vst [vmem:[#allocation3 + $0x78] sm:$0xff] %v1014
      %1051 = vst [vmem:[#allocation3 + $0x80] sm:$0xff] %v1015
      %1052 = vst [vmem:[#allocation3 + $0x88] sm:$0xff] %v1016
      %1053 = vst [vmem:[#allocation3 + $0x90] sm:$0xff] %v1017
      %1054 = vst [vmem:[#allocation3 + $0x98] sm:$0xff] %v1018
      %1055 = vst [vmem:[#allocation3 + $0xa0] sm:$0xff] %v1019
      %1056 = vst [vmem:[#allocation3 + $0xa8] sm:$0xff] %v1020
      %1057 = vst [vmem:[#allocation3 + $0xb0] sm:$0xff] %v1021
      %1058 = vst [vmem:[#allocation3 + $0xb8] sm:$0xff] %v1022
      %1059 = vst [vmem:[#allocation3 + $0xc0] sm:$0xff] %v1023
      %1060 = vst [vmem:[#allocation3 + $0xc8] sm:$0xff] %v1024
      %1061 = vst [vmem:[#allocation3 + $0xd0] sm:$0xff] %v1025
      %1062 = vst [vmem:[#allocation3 + $0xd8] sm:$0xff] %v1026
      %1063 = vst [vmem:[#allocation3 + $0xe0] sm:$0xff] %v1027
      %1064 = vst [vmem:[#allocation3 + $0xe8] sm:$0xff] %v1028
      %1065 = vst [vmem:[#allocation3 + $0xf0] sm:$0xff] %v1029
      %1066 = vst [vmem:[#allocation3 + $0xf8] sm:$0xff] %v1030
      %1067 = vst [vmem:[#allocation3 + $0x100] sm:$0xff] %v1031
      %1068 = vst [vmem:[#allocation3 + $0x108] sm:$0xff] %v1032
      %1069 = vst [vmem:[#allocation3 + $0x110] sm:$0xff] %v1033
      %1070 = vst [vmem:[#allocation3 + $0x118] sm:$0xff] %v1034
      %v1071 = vld [vmem:[#allocation3] sm:$0xff]
      %v1072 = vld [vmem:[#allocation3 + $0x8] sm:$0xff]
      %v1073 = vld [vmem:[#allocation3 + $0x10] sm:$0xff]
      %v1074 = vld [vmem:[#allocation3 + $0x18] sm:$0xff]
      %v1075 = vld [vmem:[#allocation3 + $0x20] sm:$0xff]
      %v1076 = vld [vmem:[#allocation3 + $0x28] sm:$0xff]
      %v1077 = vld [vmem:[#allocation3 + $0x30] sm:$0xff]
      %v1078 = vld [vmem:[#allocation3 + $0x38] sm:$0xff]
      %v1079 = vld [vmem:[#allocation3 + $0x40] sm:$0xff]
      %v1080 = vld [vmem:[#allocation3 + $0x48] sm:$0xff]
      %v1081 = vld [vmem:[#allocation3 + $0x50] sm:$0xff]
      %v1082 = vld [vmem:[#allocation3 + $0x58] sm:$0xff]
      %v1083 = vld [vmem:[#allocation3 + $0x60] sm:$0xff]
      %v1084 = vld [vmem:[#allocation3 + $0x68] sm:$0xff]
      %v1085 = vld [vmem:[#allocation3 + $0x70] sm:$0xff]
      %v1086 = vld [vmem:[#allocation3 + $0x78] sm:$0xff]
      %v1087 = vld [vmem:[#allocation3 + $0x80] sm:$0xff]
      %v1088 = vld [vmem:[#allocation3 + $0x88] sm:$0xff]
      %v1089 = vld [vmem:[#allocation3 + $0x90] sm:$0xff]
      %v1090 = vld [vmem:[#allocation3 + $0x98] sm:$0xff]
      %v1091 = vld [vmem:[#allocation3 + $0xa0] sm:$0xff]
      %v1092 = vld [vmem:[#allocation3 + $0xa8] sm:$0xff]
      %v1093 = vld [vmem:[#allocation3 + $0xb0] sm:$0xff]
      %v1094 = vld [vmem:[#allocation3 + $0xb8] sm:$0xff]
      %v1095 = vld [vmem:[#allocation3 + $0xc0] sm:$0xff]
      %v1096 = vld [vmem:[#allocation3 + $0xc8] sm:$0xff]
      %v1097 = vld [vmem:[#allocation3 + $0xd0] sm:$0xff]
      %v1098 = vld [vmem:[#allocation3 + $0xd8] sm:$0xff]
      %v1099 = vld [vmem:[#allocation3 + $0xe0] sm:$0xff]
      %v1100 = vld [vmem:[#allocation3 + $0xe8] sm:$0xff]
      %v1101 = vld [vmem:[#allocation3 + $0xf0] sm:$0xff]
      %v1102 = vld [vmem:[#allocation3 + $0xf8] sm:$0xff]
      %v1103 = vld [vmem:[#allocation3 + $0x100] sm:$0xff]
      %v1104 = vld [vmem:[#allocation3 + $0x108] sm:$0xff]
      %v1105 = vld [vmem:[#allocation3 + $0x110] sm:$0xff]
      %v1106 = vld [vmem:[#allocation3 + $0x118] sm:$0xff]
      %v1107 = vld [vmem:[#allocation2 + $0xf] sm:$0xff]
      %v1108 = vld [vmem:[#allocation2 + $0x17] sm:$0xff]
      %v1109 = vld [vmem:[#allocation2 + $0x1f] sm:$0xff]
      %v1110 = vld [vmem:[#allocation2 + $0x27] sm:$0xff]
      %v1111 = vld [vmem:[#allocation2 + $0x2f] sm:$0xff]
      %v1112 = vld [vmem:[#allocation2 + $0x37] sm:$0xff]
      %v1113 = vld [vmem:[#allocation2 + $0x3f] sm:$0xff]
      %v1114 = vld [vmem:[#allocation2 + $0x47] sm:$0xff]
      %v1115 = vld [vmem:[#allocation2 + $0x4f] sm:$0xff]
      %v1116 = vld [vmem:[#allocation2 + $0x57] sm:$0xff]
      %v1117 = vld [vmem:[#allocation2 + $0x5f] sm:$0xff]
      %v1118 = vld [vmem:[#allocation2 + $0x67] sm:$0xff]
      %v1119 = vld [vmem:[#allocation2 + $0x6f] sm:$0xff]
      %v1120 = vld [vmem:[#allocation2 + $0x77] sm:$0xff]
      %v1121 = vld [vmem:[#allocation2 + $0x7f] sm:$0xff]
      %v1122 = vld [vmem:[#allocation2 + $0x87] sm:$0xff]
      %v1123 = vld [vmem:[#allocation2 + $0x8f] sm:$0xff]
      %v1124 = vld [vmem:[#allocation2 + $0x97] sm:$0xff]
      %v1125 = vld [vmem:[#allocation2 + $0x9f] sm:$0xff]
      %v1126 = vld [vmem:[#allocation2 + $0xa7] sm:$0xff]
      %v1127 = vld [vmem:[#allocation2 + $0xaf] sm:$0xff]
      %v1128 = vld [vmem:[#allocation2 + $0xb7] sm:$0xff]
      %v1129 = vld [vmem:[#allocation2 + $0xbf] sm:$0xff]
      %v1130 = vld [vmem:[#allocation2 + $0xc7] sm:$0xff]
      %v1131 = vld [vmem:[#allocation2 + $0xcf] sm:$0xff]
      %v1132 = vld [vmem:[#allocation2 + $0xd7] sm:$0xff]
      %v1133 = vld [vmem:[#allocation2 + $0xdf] sm:$0xff]
      %v1134 = vld [vmem:[#allocation2 + $0xe7] sm:$0xff]
      %v1135 = vld [vmem:[#allocation2 + $0xef] sm:$0xff]
      %v1136 = vld [vmem:[#allocation2 + $0xf7] sm:$0xff]
      %v1137 = vld [vmem:[#allocation2 + $0xff] sm:$0xff]
      %v1138 = vld [vmem:[#allocation2 + $0x107] sm:$0xff]
      %v1139 = vld [vmem:[#allocation2 + $0x10f] sm:$0xff]
      %v1140 = vld [vmem:[#allocation2 + $0x117] sm:$0xff]
      %v1141 = vld [vmem:[#allocation2 + $0x11f] sm:$0xff]
      %v1142 = vld [vmem:[#allocation2 + $0x127] sm:$0xff]
      %v1143 = vpack.c.bf16 %v1108, %v1107
      %v1144 = vpack.c.bf16 %v1110, %v1109
      %v1145 = vpack.c.bf16 %v1112, %v1111
      %v1146 = vpack.c.bf16 %v1114, %v1113
      %v1147 = vpack.c.bf16 %v1116, %v1115
      %v1148 = vpack.c.bf16 %v1118, %v1117
      %v1149 = vpack.c.bf16 %v1120, %v1119
      %v1150 = vpack.c.bf16 %v1122, %v1121
      %v1151 = vpack.c.bf16 %v1124, %v1123
      %v1152 = vpack.c.bf16 %v1126, %v1125
      %v1153 = vpack.c.bf16 %v1128, %v1127
      %v1154 = vpack.c.bf16 %v1130, %v1129
      %v1155 = vpack.c.bf16 %v1132, %v1131
      %v1156 = vpack.c.bf16 %v1134, %v1133
      %v1157 = vpack.c.bf16 %v1136, %v1135
      %v1158 = vpack.c.bf16 %v1138, %v1137
      %v1159 = vpack.c.bf16 %v1140, %v1139
      %v1160 = vpack.c.bf16 %v1142, %v1141
      %s1161 = scalar_lea.vmem %s1, 128
      %v1162 = vld [vmem:[%s1161] sm:$0xf]
      %v1163 = vld [vmem:[%s1161 + $0x4] sm:$0xf]
      %v1164 = vld [vmem:[%s1161 + $0x8] sm:$0xf]
      %v1165 = vld [vmem:[%s1161 + $0xc] sm:$0xf]
      %v1166 = vld [vmem:[%s1161 + $0x10] sm:$0xf]
      %v1167 = vld [vmem:[%s1161 + $0x14] sm:$0xf]
      %v1168 = vld [vmem:[%s1161 + $0x18] sm:$0xf]
      %v1169 = vld [vmem:[%s1161 + $0x1c] sm:$0xf]
      %v1170 = vld [vmem:[%s1161 + $0x20] sm:$0xf]
      %v1171 = vld [vmem:[%s1161 + $0x24] sm:$0xf]
      %v1172 = vld [vmem:[%s1161 + $0x28] sm:$0xf]
      %v1173 = vld [vmem:[%s1161 + $0x2c] sm:$0xf]
      %v1174 = vld [vmem:[%s1161 + $0x30] sm:$0xf]
      %v1175 = vld [vmem:[%s1161 + $0x34] sm:$0xf]
      %v1176 = vld [vmem:[%s1161 + $0x38] sm:$0xf]
      %v1177 = vld [vmem:[%s1161 + $0x3c] sm:$0xf]
      %v1194 = vunpack.c.l.b16 %v1162
      %v1195 = vunpack.c.l.b16 %v1163
      %v1196 = vunpack.c.l.b16 %v1164
      %v1197 = vunpack.c.l.b16 %v1165
      %v1198 = vunpack.c.l.b16 %v1166
      %v1199 = vunpack.c.l.b16 %v1167
      %v1200 = vunpack.c.l.b16 %v1168
      %v1201 = vunpack.c.l.b16 %v1169
      %v1202 = vunpack.c.l.b16 %v1170
      %v1203 = vunpack.c.l.b16 %v1171
      %v1204 = vunpack.c.l.b16 %v1172
      %v1205 = vunpack.c.l.b16 %v1173
      %v1206 = vunpack.c.l.b16 %v1174
      %v1207 = vunpack.c.l.b16 %v1175
      %v1208 = vunpack.c.l.b16 %v1176
      %v1209 = vunpack.c.l.b16 %v1177
      %v1210 = vpack.c.b16 %v1195, %v1194
      %v1211 = vpack.c.b16 %v1197, %v1196
      %v1212 = vpack.c.b16 %v1199, %v1198
      %v1213 = vpack.c.b16 %v1201, %v1200
      %v1214 = vpack.c.b16 %v1203, %v1202
      %v1215 = vpack.c.b16 %v1205, %v1204
      %v1216 = vpack.c.b16 %v1207, %v1206
      %v1217 = vpack.c.b16 %v1209, %v1208
      %1226 = vmatpush.bf16.msra.mxu0 %v1217
      %1227 = vmatpush.bf16.msra.mxu0 %v1216
      %1228 = vmatpush.bf16.msra.mxu0 %v1215
      %1229 = vmatpush.bf16.msra.mxu0 %v1214
      %1230 = vmatpush.bf16.msra.mxu0 %v1213
      %1231 = vmatpush.bf16.msra.mxu0 %v1212
      %1232 = vmatpush.bf16.msra.mxu0 %v1211
      %1233 = vmatpush.bf16.msra.mxu0 %v1210
      %1234 = vmatmul.bf16.gmra.mxu0 %v1143
      %v1235 = vpop.f32.mrf.mxu0
      %v1236 = vadd.f32 0.0, %v1235
      %v1237 = vpop.f32.mrf.mxu0
      %v1238 = vadd.f32 0.0, %v1237
      %1239 = vmatmul.bf16.gmra.mxu0 %v1144
      %v1240 = vpop.f32.mrf.mxu0
      %v1241 = vadd.f32 0.0, %v1240
      %v1242 = vpop.f32.mrf.mxu0
      %v1243 = vadd.f32 0.0, %v1242
      %1244 = vmatmul.bf16.gmra.mxu0 %v1145
      %v1245 = vpop.f32.mrf.mxu0
      %v1246 = vadd.f32 0.0, %v1245
      %v1247 = vpop.f32.mrf.mxu0
      %v1248 = vadd.f32 0.0, %v1247
      %1249 = vmatmul.bf16.gmra.mxu0 %v1146
      %v1250 = vpop.f32.mrf.mxu0
      %v1251 = vadd.f32 0.0, %v1250
      %v1252 = vpop.f32.mrf.mxu0
      %v1253 = vadd.f32 0.0, %v1252
      %1254 = vmatmul.bf16.gmra.mxu0 %v1147
      %v1255 = vpop.f32.mrf.mxu0
      %v1256 = vadd.f32 0.0, %v1255
      %v1257 = vpop.f32.mrf.mxu0
      %v1258 = vadd.f32 0.0, %v1257
      %1259 = vmatmul.bf16.gmra.mxu0 %v1148
      %v1260 = vpop.f32.mrf.mxu0
      %v1261 = vadd.f32 0.0, %v1260
      %v1262 = vpop.f32.mrf.mxu0
      %v1263 = vadd.f32 0.0, %v1262
      %1264 = vmatmul.bf16.gmra.mxu0 %v1149
      %v1265 = vpop.f32.mrf.mxu0
      %v1266 = vadd.f32 0.0, %v1265
      %v1267 = vpop.f32.mrf.mxu0
      %v1268 = vadd.f32 0.0, %v1267
      %1269 = vmatmul.bf16.gmra.mxu0 %v1150
      %v1270 = vpop.f32.mrf.mxu0
      %v1271 = vadd.f32 0.0, %v1270
      %v1272 = vpop.f32.mrf.mxu0
      %v1273 = vadd.f32 0.0, %v1272
      %1274 = vmatmul.bf16.gmra.mxu0 %v1151
      %v1275 = vpop.f32.mrf.mxu0
      %v1276 = vadd.f32 0.0, %v1275
      %v1277 = vpop.f32.mrf.mxu0
      %v1278 = vadd.f32 0.0, %v1277
      %1279 = vmatmul.bf16.gmra.mxu0 %v1152
      %v1280 = vpop.f32.mrf.mxu0
      %v1281 = vadd.f32 0.0, %v1280
      %v1282 = vpop.f32.mrf.mxu0
      %v1283 = vadd.f32 0.0, %v1282
      %1284 = vmatmul.bf16.gmra.mxu0 %v1153
      %v1285 = vpop.f32.mrf.mxu0
      %v1286 = vadd.f32 0.0, %v1285
      %v1287 = vpop.f32.mrf.mxu0
      %v1288 = vadd.f32 0.0, %v1287
      %1289 = vmatmul.bf16.gmra.mxu0 %v1154
      %v1290 = vpop.f32.mrf.mxu0
      %v1291 = vadd.f32 0.0, %v1290
      %v1292 = vpop.f32.mrf.mxu0
      %v1293 = vadd.f32 0.0, %v1292
      %1294 = vmatmul.bf16.gmra.mxu0 %v1155
      %v1295 = vpop.f32.mrf.mxu0
      %v1296 = vadd.f32 0.0, %v1295
      %v1297 = vpop.f32.mrf.mxu0
      %v1298 = vadd.f32 0.0, %v1297
      %1299 = vmatmul.bf16.gmra.mxu0 %v1156
      %v1300 = vpop.f32.mrf.mxu0
      %v1301 = vadd.f32 0.0, %v1300
      %v1302 = vpop.f32.mrf.mxu0
      %v1303 = vadd.f32 0.0, %v1302
      %1304 = vmatmul.bf16.gmra.mxu0 %v1157
      %v1305 = vpop.f32.mrf.mxu0
      %v1306 = vadd.f32 0.0, %v1305
      %v1307 = vpop.f32.mrf.mxu0
      %v1308 = vadd.f32 0.0, %v1307
      %1309 = vmatmul.bf16.gmra.mxu0 %v1158
      %v1310 = vpop.f32.mrf.mxu0
      %v1311 = vadd.f32 0.0, %v1310
      %v1312 = vpop.f32.mrf.mxu0
      %v1313 = vadd.f32 0.0, %v1312
      %1314 = vmatmul.bf16.gmra.mxu0 %v1159
      %v1315 = vpop.f32.mrf.mxu0
      %v1316 = vadd.f32 0.0, %v1315
      %v1317 = vpop.f32.mrf.mxu0
      %v1318 = vadd.f32 0.0, %v1317
      %1319 = vmatmul.bf16.gmra.mxu0 %v1160
      %v1320 = vpop.f32.mrf.mxu0
      %v1321 = vadd.f32 0.0, %v1320
      %v1322 = vpop.f32.mrf.mxu0
      %v1323 = vadd.f32 0.0, %v1322
      %1324 = vdwg.mxu0
      %v1325 = vadd.f32 %v1071, %v1236
      %v1326 = vadd.f32 %v1072, %v1238
      %v1327 = vadd.f32 %v1073, %v1241
      %v1328 = vadd.f32 %v1074, %v1243
      %v1329 = vadd.f32 %v1075, %v1246
      %v1330 = vadd.f32 %v1076, %v1248
      %v1331 = vadd.f32 %v1077, %v1251
      %v1332 = vadd.f32 %v1078, %v1253
      %v1333 = vadd.f32 %v1079, %v1256
      %v1334 = vadd.f32 %v1080, %v1258
      %v1335 = vadd.f32 %v1081, %v1261
      %v1336 = vadd.f32 %v1082, %v1263
      %v1337 = vadd.f32 %v1083, %v1266
      %v1338 = vadd.f32 %v1084, %v1268
      %v1339 = vadd.f32 %v1085, %v1271
      %v1340 = vadd.f32 %v1086, %v1273
      %v1341 = vadd.f32 %v1087, %v1276
      %v1342 = vadd.f32 %v1088, %v1278
      %v1343 = vadd.f32 %v1089, %v1281
      %v1344 = vadd.f32 %v1090, %v1283
      %v1345 = vadd.f32 %v1091, %v1286
      %v1346 = vadd.f32 %v1092, %v1288
      %v1347 = vadd.f32 %v1093, %v1291
      %v1348 = vadd.f32 %v1094, %v1293
      %v1349 = vadd.f32 %v1095, %v1296
      %v1350 = vadd.f32 %v1096, %v1298
      %v1351 = vadd.f32 %v1097, %v1301
      %v1352 = vadd.f32 %v1098, %v1303
      %v1353 = vadd.f32 %v1099, %v1306
      %v1354 = vadd.f32 %v1100, %v1308
      %v1355 = vadd.f32 %v1101, %v1311
      %v1356 = vadd.f32 %v1102, %v1313
      %v1357 = vadd.f32 %v1103, %v1316
      %v1358 = vadd.f32 %v1104, %v1318
      %v1359 = vadd.f32 %v1105, %v1321
      %v1360 = vadd.f32 %v1106, %v1323
      %1361 = vst [vmem:[#allocation3] sm:$0xff] %v1325
      %1362 = vst [vmem:[#allocation3 + $0x8] sm:$0xff] %v1326
      %1363 = vst [vmem:[#allocation3 + $0x10] sm:$0xff] %v1327
      %1364 = vst [vmem:[#allocation3 + $0x18] sm:$0xff] %v1328
      %1365 = vst [vmem:[#allocation3 + $0x20] sm:$0xff] %v1329
      %1366 = vst [vmem:[#allocation3 + $0x28] sm:$0xff] %v1330
      %1367 = vst [vmem:[#allocation3 + $0x30] sm:$0xff] %v1331
      %1368 = vst [vmem:[#allocation3 + $0x38] sm:$0xff] %v1332
      %1369 = vst [vmem:[#allocation3 + $0x40] sm:$0xff] %v1333
      %1370 = vst [vmem:[#allocation3 + $0x48] sm:$0xff] %v1334
      %1371 = vst [vmem:[#allocation3 + $0x50] sm:$0xff] %v1335
      %1372 = vst [vmem:[#allocation3 + $0x58] sm:$0xff] %v1336
      %1373 = vst [vmem:[#allocation3 + $0x60] sm:$0xff] %v1337
      %1374 = vst [vmem:[#allocation3 + $0x68] sm:$0xff] %v1338
      %1375 = vst [vmem:[#allocation3 + $0x70] sm:$0xff] %v1339
      %1376 = vst [vmem:[#allocation3 + $0x78] sm:$0xff] %v1340
      %1377 = vst [vmem:[#allocation3 + $0x80] sm:$0xff] %v1341
      %1378 = vst [vmem:[#allocation3 + $0x88] sm:$0xff] %v1342
      %1379 = vst [vmem:[#allocation3 + $0x90] sm:$0xff] %v1343
      %1380 = vst [vmem:[#allocation3 + $0x98] sm:$0xff] %v1344
      %1381 = vst [vmem:[#allocation3 + $0xa0] sm:$0xff] %v1345
      %1382 = vst [vmem:[#allocation3 + $0xa8] sm:$0xff] %v1346
      %1383 = vst [vmem:[#allocation3 + $0xb0] sm:$0xff] %v1347
      %1384 = vst [vmem:[#allocation3 + $0xb8] sm:$0xff] %v1348
      %1385 = vst [vmem:[#allocation3 + $0xc0] sm:$0xff] %v1349
      %1386 = vst [vmem:[#allocation3 + $0xc8] sm:$0xff] %v1350
      %1387 = vst [vmem:[#allocation3 + $0xd0] sm:$0xff] %v1351
      %1388 = vst [vmem:[#allocation3 + $0xd8] sm:$0xff] %v1352
      %1389 = vst [vmem:[#allocation3 + $0xe0] sm:$0xff] %v1353
      %1390 = vst [vmem:[#allocation3 + $0xe8] sm:$0xff] %v1354
      %1391 = vst [vmem:[#allocation3 + $0xf0] sm:$0xff] %v1355
      %1392 = vst [vmem:[#allocation3 + $0xf8] sm:$0xff] %v1356
      %1393 = vst [vmem:[#allocation3 + $0x100] sm:$0xff] %v1357
      %1394 = vst [vmem:[#allocation3 + $0x108] sm:$0xff] %v1358
      %1395 = vst [vmem:[#allocation3 + $0x110] sm:$0xff] %v1359
      %1396 = vst [vmem:[#allocation3 + $0x118] sm:$0xff] %v1360
      %v1397 = vld [vmem:[#allocation3] sm:$0xff]
      %v1398 = vld [vmem:[#allocation3 + $0x8] sm:$0xff]
      %v1399 = vld [vmem:[#allocation3 + $0x10] sm:$0xff]
      %v1400 = vld [vmem:[#allocation3 + $0x18] sm:$0xff]
      %v1401 = vld [vmem:[#allocation3 + $0x20] sm:$0xff]
      %v1402 = vld [vmem:[#allocation3 + $0x28] sm:$0xff]
      %v1403 = vld [vmem:[#allocation3 + $0x30] sm:$0xff]
      %v1404 = vld [vmem:[#allocation3 + $0x38] sm:$0xff]
      %v1405 = vld [vmem:[#allocation3 + $0x40] sm:$0xff]
      %v1406 = vld [vmem:[#allocation3 + $0x48] sm:$0xff]
      %v1407 = vld [vmem:[#allocation3 + $0x50] sm:$0xff]
      %v1408 = vld [vmem:[#allocation3 + $0x58] sm:$0xff]
      %v1409 = vld [vmem:[#allocation3 + $0x60] sm:$0xff]
      %v1410 = vld [vmem:[#allocation3 + $0x68] sm:$0xff]
      %v1411 = vld [vmem:[#allocation3 + $0x70] sm:$0xff]
      %v1412 = vld [vmem:[#allocation3 + $0x78] sm:$0xff]
      %v1413 = vld [vmem:[#allocation3 + $0x80] sm:$0xff]
      %v1414 = vld [vmem:[#allocation3 + $0x88] sm:$0xff]
      %v1415 = vld [vmem:[#allocation3 + $0x90] sm:$0xff]
      %v1416 = vld [vmem:[#allocation3 + $0x98] sm:$0xff]
      %v1417 = vld [vmem:[#allocation3 + $0xa0] sm:$0xff]
      %v1418 = vld [vmem:[#allocation3 + $0xa8] sm:$0xff]
      %v1419 = vld [vmem:[#allocation3 + $0xb0] sm:$0xff]
      %v1420 = vld [vmem:[#allocation3 + $0xb8] sm:$0xff]
      %v1421 = vld [vmem:[#allocation3 + $0xc0] sm:$0xff]
      %v1422 = vld [vmem:[#allocation3 + $0xc8] sm:$0xff]
      %v1423 = vld [vmem:[#allocation3 + $0xd0] sm:$0xff]
      %v1424 = vld [vmem:[#allocation3 + $0xd8] sm:$0xff]
      %v1425 = vld [vmem:[#allocation3 + $0xe0] sm:$0xff]
      %v1426 = vld [vmem:[#allocation3 + $0xe8] sm:$0xff]
      %v1427 = vld [vmem:[#allocation3 + $0xf0] sm:$0xff]
      %v1428 = vld [vmem:[#allocation3 + $0xf8] sm:$0xff]
      %v1429 = vld [vmem:[#allocation3 + $0x100] sm:$0xff]
      %v1430 = vld [vmem:[#allocation3 + $0x108] sm:$0xff]
      %v1431 = vld [vmem:[#allocation3 + $0x110] sm:$0xff]
      %v1432 = vld [vmem:[#allocation3 + $0x118] sm:$0xff]
      %v1433 = vld [vmem:[#allocation2 + $0x1f] sm:$0xff]
      %v1434 = vld [vmem:[#allocation2 + $0x27] sm:$0xff]
      %v1435 = vld [vmem:[#allocation2 + $0x2f] sm:$0xff]
      %v1436 = vld [vmem:[#allocation2 + $0x37] sm:$0xff]
      %v1437 = vld [vmem:[#allocation2 + $0x3f] sm:$0xff]
      %v1438 = vld [vmem:[#allocation2 + $0x47] sm:$0xff]
      %v1439 = vld [vmem:[#allocation2 + $0x4f] sm:$0xff]
      %v1440 = vld [vmem:[#allocation2 + $0x57] sm:$0xff]
      %v1441 = vld [vmem:[#allocation2 + $0x5f] sm:$0xff]
      %v1442 = vld [vmem:[#allocation2 + $0x67] sm:$0xff]
      %v1443 = vld [vmem:[#allocation2 + $0x6f] sm:$0xff]
      %v1444 = vld [vmem:[#allocation2 + $0x77] sm:$0xff]
      %v1445 = vld [vmem:[#allocation2 + $0x7f] sm:$0xff]
      %v1446 = vld [vmem:[#allocation2 + $0x87] sm:$0xff]
      %v1447 = vld [vmem:[#allocation2 + $0x8f] sm:$0xff]
      %v1448 = vld [vmem:[#allocation2 + $0x97] sm:$0xff]
      %v1449 = vld [vmem:[#allocation2 + $0x9f] sm:$0xff]
      %v1450 = vld [vmem:[#allocation2 + $0xa7] sm:$0xff]
      %v1451 = vld [vmem:[#allocation2 + $0xaf] sm:$0xff]
      %v1452 = vld [vmem:[#allocation2 + $0xb7] sm:$0xff]
      %v1453 = vld [vmem:[#allocation2 + $0xbf] sm:$0xff]
      %v1454 = vld [vmem:[#allocation2 + $0xc7] sm:$0xff]
      %v1455 = vld [vmem:[#allocation2 + $0xcf] sm:$0xff]
      %v1456 = vld [vmem:[#allocation2 + $0xd7] sm:$0xff]
      %v1457 = vld [vmem:[#allocation2 + $0xdf] sm:$0xff]
      %v1458 = vld [vmem:[#allocation2 + $0xe7] sm:$0xff]
      %v1459 = vld [vmem:[#allocation2 + $0xef] sm:$0xff]
      %v1460 = vld [vmem:[#allocation2 + $0xf7] sm:$0xff]
      %v1461 = vld [vmem:[#allocation2 + $0xff] sm:$0xff]
      %v1462 = vld [vmem:[#allocation2 + $0x107] sm:$0xff]
      %v1463 = vld [vmem:[#allocation2 + $0x10f] sm:$0xff]
      %v1464 = vld [vmem:[#allocation2 + $0x117] sm:$0xff]
      %v1465 = vld [vmem:[#allocation2 + $0x11f] sm:$0xff]
      %v1466 = vld [vmem:[#allocation2 + $0x127] sm:$0xff]
      %v1467 = vld [vmem:[#allocation2 + $0x12f] sm:$0xff]
      %v1468 = vld [vmem:[#allocation2 + $0x137] sm:$0xff]
      %v1469 = vpack.c.bf16 %v1434, %v1433
      %v1470 = vpack.c.bf16 %v1436, %v1435
      %v1471 = vpack.c.bf16 %v1438, %v1437
      %v1472 = vpack.c.bf16 %v1440, %v1439
      %v1473 = vpack.c.bf16 %v1442, %v1441
      %v1474 = vpack.c.bf16 %v1444, %v1443
      %v1475 = vpack.c.bf16 %v1446, %v1445
      %v1476 = vpack.c.bf16 %v1448, %v1447
      %v1477 = vpack.c.bf16 %v1450, %v1449
      %v1478 = vpack.c.bf16 %v1452, %v1451
      %v1479 = vpack.c.bf16 %v1454, %v1453
      %v1480 = vpack.c.bf16 %v1456, %v1455
      %v1481 = vpack.c.bf16 %v1458, %v1457
      %v1482 = vpack.c.bf16 %v1460, %v1459
      %v1483 = vpack.c.bf16 %v1462, %v1461
      %v1484 = vpack.c.bf16 %v1464, %v1463
      %v1485 = vpack.c.bf16 %v1466, %v1465
      %v1486 = vpack.c.bf16 %v1468, %v1467
      %s1487 = scalar_lea.vmem %s1, 192
      %v1488 = vld [vmem:[%s1487] sm:$0xf]
      %v1489 = vld [vmem:[%s1487 + $0x4] sm:$0xf]
      %v1490 = vld [vmem:[%s1487 + $0x8] sm:$0xf]
      %v1491 = vld [vmem:[%s1487 + $0xc] sm:$0xf]
      %v1492 = vld [vmem:[%s1487 + $0x10] sm:$0xf]
      %v1493 = vld [vmem:[%s1487 + $0x14] sm:$0xf]
      %v1494 = vld [vmem:[%s1487 + $0x18] sm:$0xf]
      %v1495 = vld [vmem:[%s1487 + $0x1c] sm:$0xf]
      %v1496 = vld [vmem:[%s1487 + $0x20] sm:$0xf]
      %v1497 = vld [vmem:[%s1487 + $0x24] sm:$0xf]
      %v1498 = vld [vmem:[%s1487 + $0x28] sm:$0xf]
      %v1499 = vld [vmem:[%s1487 + $0x2c] sm:$0xf]
      %v1500 = vld [vmem:[%s1487 + $0x30] sm:$0xf]
      %v1501 = vld [vmem:[%s1487 + $0x34] sm:$0xf]
      %v1502 = vld [vmem:[%s1487 + $0x38] sm:$0xf]
      %v1503 = vld [vmem:[%s1487 + $0x3c] sm:$0xf]
      %v1520 = vunpack.c.l.b16 %v1488
      %v1521 = vunpack.c.l.b16 %v1489
      %v1522 = vunpack.c.l.b16 %v1490
      %v1523 = vunpack.c.l.b16 %v1491
      %v1524 = vunpack.c.l.b16 %v1492
      %v1525 = vunpack.c.l.b16 %v1493
      %v1526 = vunpack.c.l.b16 %v1494
      %v1527 = vunpack.c.l.b16 %v1495
      %v1528 = vunpack.c.l.b16 %v1496
      %v1529 = vunpack.c.l.b16 %v1497
      %v1530 = vunpack.c.l.b16 %v1498
      %v1531 = vunpack.c.l.b16 %v1499
      %v1532 = vunpack.c.l.b16 %v1500
      %v1533 = vunpack.c.l.b16 %v1501
      %v1534 = vunpack.c.l.b16 %v1502
      %v1535 = vunpack.c.l.b16 %v1503
      %v1536 = vpack.c.b16 %v1521, %v1520
      %v1537 = vpack.c.b16 %v1523, %v1522
      %v1538 = vpack.c.b16 %v1525, %v1524
      %v1539 = vpack.c.b16 %v1527, %v1526
      %v1540 = vpack.c.b16 %v1529, %v1528
      %v1541 = vpack.c.b16 %v1531, %v1530
      %v1542 = vpack.c.b16 %v1533, %v1532
      %v1543 = vpack.c.b16 %v1535, %v1534
      %1552 = vmatpush.bf16.msra.mxu0 %v1543
      %1553 = vmatpush.bf16.msra.mxu0 %v1542
      %1554 = vmatpush.bf16.msra.mxu0 %v1541
      %1555 = vmatpush.bf16.msra.mxu0 %v1540
      %1556 = vmatpush.bf16.msra.mxu0 %v1539
      %1557 = vmatpush.bf16.msra.mxu0 %v1538
      %1558 = vmatpush.bf16.msra.mxu0 %v1537
      %1559 = vmatpush.bf16.msra.mxu0 %v1536
      %1560 = vmatmul.bf16.gmra.mxu0 %v1469
      %v1561 = vpop.f32.mrf.mxu0
      %v1562 = vadd.f32 0.0, %v1561
      %v1563 = vpop.f32.mrf.mxu0
      %v1564 = vadd.f32 0.0, %v1563
      %1565 = vmatmul.bf16.gmra.mxu0 %v1470
      %v1566 = vpop.f32.mrf.mxu0
      %v1567 = vadd.f32 0.0, %v1566
      %v1568 = vpop.f32.mrf.mxu0
      %v1569 = vadd.f32 0.0, %v1568
      %1570 = vmatmul.bf16.gmra.mxu0 %v1471
      %v1571 = vpop.f32.mrf.mxu0
      %v1572 = vadd.f32 0.0, %v1571
      %v1573 = vpop.f32.mrf.mxu0
      %v1574 = vadd.f32 0.0, %v1573
      %1575 = vmatmul.bf16.gmra.mxu0 %v1472
      %v1576 = vpop.f32.mrf.mxu0
      %v1577 = vadd.f32 0.0, %v1576
      %v1578 = vpop.f32.mrf.mxu0
      %v1579 = vadd.f32 0.0, %v1578
      %1580 = vmatmul.bf16.gmra.mxu0 %v1473
      %v1581 = vpop.f32.mrf.mxu0
      %v1582 = vadd.f32 0.0, %v1581
      %v1583 = vpop.f32.mrf.mxu0
      %v1584 = vadd.f32 0.0, %v1583
      %1585 = vmatmul.bf16.gmra.mxu0 %v1474
      %v1586 = vpop.f32.mrf.mxu0
      %v1587 = vadd.f32 0.0, %v1586
      %v1588 = vpop.f32.mrf.mxu0
      %v1589 = vadd.f32 0.0, %v1588
      %1590 = vmatmul.bf16.gmra.mxu0 %v1475
      %v1591 = vpop.f32.mrf.mxu0
      %v1592 = vadd.f32 0.0, %v1591
      %v1593 = vpop.f32.mrf.mxu0
      %v1594 = vadd.f32 0.0, %v1593
      %1595 = vmatmul.bf16.gmra.mxu0 %v1476
      %v1596 = vpop.f32.mrf.mxu0
      %v1597 = vadd.f32 0.0, %v1596
      %v1598 = vpop.f32.mrf.mxu0
      %v1599 = vadd.f32 0.0, %v1598
      %1600 = vmatmul.bf16.gmra.mxu0 %v1477
      %v1601 = vpop.f32.mrf.mxu0
      %v1602 = vadd.f32 0.0, %v1601
      %v1603 = vpop.f32.mrf.mxu0
      %v1604 = vadd.f32 0.0, %v1603
      %1605 = vmatmul.bf16.gmra.mxu0 %v1478
      %v1606 = vpop.f32.mrf.mxu0
      %v1607 = vadd.f32 0.0, %v1606
      %v1608 = vpop.f32.mrf.mxu0
      %v1609 = vadd.f32 0.0, %v1608
      %1610 = vmatmul.bf16.gmra.mxu0 %v1479
      %v1611 = vpop.f32.mrf.mxu0
      %v1612 = vadd.f32 0.0, %v1611
      %v1613 = vpop.f32.mrf.mxu0
      %v1614 = vadd.f32 0.0, %v1613
      %1615 = vmatmul.bf16.gmra.mxu0 %v1480
      %v1616 = vpop.f32.mrf.mxu0
      %v1617 = vadd.f32 0.0, %v1616
      %v1618 = vpop.f32.mrf.mxu0
      %v1619 = vadd.f32 0.0, %v1618
      %1620 = vmatmul.bf16.gmra.mxu0 %v1481
      %v1621 = vpop.f32.mrf.mxu0
      %v1622 = vadd.f32 0.0, %v1621
      %v1623 = vpop.f32.mrf.mxu0
      %v1624 = vadd.f32 0.0, %v1623
      %1625 = vmatmul.bf16.gmra.mxu0 %v1482
      %v1626 = vpop.f32.mrf.mxu0
      %v1627 = vadd.f32 0.0, %v1626
      %v1628 = vpop.f32.mrf.mxu0
      %v1629 = vadd.f32 0.0, %v1628
      %1630 = vmatmul.bf16.gmra.mxu0 %v1483
      %v1631 = vpop.f32.mrf.mxu0
      %v1632 = vadd.f32 0.0, %v1631
      %v1633 = vpop.f32.mrf.mxu0
      %v1634 = vadd.f32 0.0, %v1633
      %1635 = vmatmul.bf16.gmra.mxu0 %v1484
      %v1636 = vpop.f32.mrf.mxu0
      %v1637 = vadd.f32 0.0, %v1636
      %v1638 = vpop.f32.mrf.mxu0
      %v1639 = vadd.f32 0.0, %v1638
      %1640 = vmatmul.bf16.gmra.mxu0 %v1485
      %v1641 = vpop.f32.mrf.mxu0
      %v1642 = vadd.f32 0.0, %v1641
      %v1643 = vpop.f32.mrf.mxu0
      %v1644 = vadd.f32 0.0, %v1643
      %1645 = vmatmul.bf16.gmra.mxu0 %v1486
      %v1646 = vpop.f32.mrf.mxu0
      %v1647 = vadd.f32 0.0, %v1646
      %v1648 = vpop.f32.mrf.mxu0
      %v1649 = vadd.f32 0.0, %v1648
      %1650 = vdwg.mxu0
      %v1651 = vadd.f32 %v1397, %v1562
      %v1652 = vadd.f32 %v1398, %v1564
      %v1653 = vadd.f32 %v1399, %v1567
      %v1654 = vadd.f32 %v1400, %v1569
      %v1655 = vadd.f32 %v1401, %v1572
      %v1656 = vadd.f32 %v1402, %v1574
      %v1657 = vadd.f32 %v1403, %v1577
      %v1658 = vadd.f32 %v1404, %v1579
      %v1659 = vadd.f32 %v1405, %v1582
      %v1660 = vadd.f32 %v1406, %v1584
      %v1661 = vadd.f32 %v1407, %v1587
      %v1662 = vadd.f32 %v1408, %v1589
      %v1663 = vadd.f32 %v1409, %v1592
      %v1664 = vadd.f32 %v1410, %v1594
      %v1665 = vadd.f32 %v1411, %v1597
      %v1666 = vadd.f32 %v1412, %v1599
      %v1667 = vadd.f32 %v1413, %v1602
      %v1668 = vadd.f32 %v1414, %v1604
      %v1669 = vadd.f32 %v1415, %v1607
      %v1670 = vadd.f32 %v1416, %v1609
      %v1671 = vadd.f32 %v1417, %v1612
      %v1672 = vadd.f32 %v1418, %v1614
      %v1673 = vadd.f32 %v1419, %v1617
      %v1674 = vadd.f32 %v1420, %v1619
      %v1675 = vadd.f32 %v1421, %v1622
      %v1676 = vadd.f32 %v1422, %v1624
      %v1677 = vadd.f32 %v1423, %v1627
      %v1678 = vadd.f32 %v1424, %v1629
      %v1679 = vadd.f32 %v1425, %v1632
      %v1680 = vadd.f32 %v1426, %v1634
      %v1681 = vadd.f32 %v1427, %v1637
      %v1682 = vadd.f32 %v1428, %v1639
      %v1683 = vadd.f32 %v1429, %v1642
      %v1684 = vadd.f32 %v1430, %v1644
      %v1685 = vadd.f32 %v1431, %v1647
      %v1686 = vadd.f32 %v1432, %v1649
      %1687 = vst [vmem:[#allocation3] sm:$0xff] %v1651
      %1688 = vst [vmem:[#allocation3 + $0x8] sm:$0xff] %v1652
      %1689 = vst [vmem:[#allocation3 + $0x10] sm:$0xff] %v1653
      %1690 = vst [vmem:[#allocation3 + $0x18] sm:$0xff] %v1654
      %1691 = vst [vmem:[#allocation3 + $0x20] sm:$0xff] %v1655
      %1692 = vst [vmem:[#allocation3 + $0x28] sm:$0xff] %v1656
      %1693 = vst [vmem:[#allocation3 + $0x30] sm:$0xff] %v1657
      %1694 = vst [vmem:[#allocation3 + $0x38] sm:$0xff] %v1658
      %1695 = vst [vmem:[#allocation3 + $0x40] sm:$0xff] %v1659
      %1696 = vst [vmem:[#allocation3 + $0x48] sm:$0xff] %v1660
      %1697 = vst [vmem:[#allocation3 + $0x50] sm:$0xff] %v1661
      %1698 = vst [vmem:[#allocation3 + $0x58] sm:$0xff] %v1662
      %1699 = vst [vmem:[#allocation3 + $0x60] sm:$0xff] %v1663
      %1700 = vst [vmem:[#allocation3 + $0x68] sm:$0xff] %v1664
      %1701 = vst [vmem:[#allocation3 + $0x70] sm:$0xff] %v1665
      %1702 = vst [vmem:[#allocation3 + $0x78] sm:$0xff] %v1666
      %1703 = vst [vmem:[#allocation3 + $0x80] sm:$0xff] %v1667
      %1704 = vst [vmem:[#allocation3 + $0x88] sm:$0xff] %v1668
      %1705 = vst [vmem:[#allocation3 + $0x90] sm:$0xff] %v1669
      %1706 = vst [vmem:[#allocation3 + $0x98] sm:$0xff] %v1670
      %1707 = vst [vmem:[#allocation3 + $0xa0] sm:$0xff] %v1671
      %1708 = vst [vmem:[#allocation3 + $0xa8] sm:$0xff] %v1672
      %1709 = vst [vmem:[#allocation3 + $0xb0] sm:$0xff] %v1673
      %1710 = vst [vmem:[#allocation3 + $0xb8] sm:$0xff] %v1674
      %1711 = vst [vmem:[#allocation3 + $0xc0] sm:$0xff] %v1675
      %1712 = vst [vmem:[#allocation3 + $0xc8] sm:$0xff] %v1676
      %1713 = vst [vmem:[#allocation3 + $0xd0] sm:$0xff] %v1677
      %1714 = vst [vmem:[#allocation3 + $0xd8] sm:$0xff] %v1678
      %1715 = vst [vmem:[#allocation3 + $0xe0] sm:$0xff] %v1679
      %1716 = vst [vmem:[#allocation3 + $0xe8] sm:$0xff] %v1680
      %1717 = vst [vmem:[#allocation3 + $0xf0] sm:$0xff] %v1681
      %1718 = vst [vmem:[#allocation3 + $0xf8] sm:$0xff] %v1682
      %1719 = vst [vmem:[#allocation3 + $0x100] sm:$0xff] %v1683
      %1720 = vst [vmem:[#allocation3 + $0x108] sm:$0xff] %v1684
      %1721 = vst [vmem:[#allocation3 + $0x110] sm:$0xff] %v1685
      %1722 = vst [vmem:[#allocation3 + $0x118] sm:$0xff] %v1686
      %v1723 = vld [vmem:[#allocation3] sm:$0xff]
      %v1724 = vld [vmem:[#allocation3 + $0x8] sm:$0xff]
      %v1725 = vld [vmem:[#allocation3 + $0x10] sm:$0xff]
      %v1726 = vld [vmem:[#allocation3 + $0x18] sm:$0xff]
      %v1727 = vld [vmem:[#allocation3 + $0x20] sm:$0xff]
      %v1728 = vld [vmem:[#allocation3 + $0x28] sm:$0xff]
      %v1729 = vld [vmem:[#allocation3 + $0x30] sm:$0xff]
      %v1730 = vld [vmem:[#allocation3 + $0x38] sm:$0xff]
      %v1731 = vld [vmem:[#allocation3 + $0x40] sm:$0xff]
      %v1732 = vld [vmem:[#allocation3 + $0x48] sm:$0xff]
      %v1733 = vld [vmem:[#allocation3 + $0x50] sm:$0xff]
      %v1734 = vld [vmem:[#allocation3 + $0x58] sm:$0xff]
      %v1735 = vld [vmem:[#allocation3 + $0x60] sm:$0xff]
      %v1736 = vld [vmem:[#allocation3 + $0x68] sm:$0xff]
      %v1737 = vld [vmem:[#allocation3 + $0x70] sm:$0xff]
      %v1738 = vld [vmem:[#allocation3 + $0x78] sm:$0xff]
      %v1739 = vld [vmem:[#allocation3 + $0x80] sm:$0xff]
      %v1740 = vld [vmem:[#allocation3 + $0x88] sm:$0xff]
      %v1741 = vld [vmem:[#allocation3 + $0x90] sm:$0xff]
      %v1742 = vld [vmem:[#allocation3 + $0x98] sm:$0xff]
      %v1743 = vld [vmem:[#allocation3 + $0xa0] sm:$0xff]
      %v1744 = vld [vmem:[#allocation3 + $0xa8] sm:$0xff]
      %v1745 = vld [vmem:[#allocation3 + $0xb0] sm:$0xff]
      %v1746 = vld [vmem:[#allocation3 + $0xb8] sm:$0xff]
      %v1747 = vld [vmem:[#allocation3 + $0xc0] sm:$0xff]
      %v1748 = vld [vmem:[#allocation3 + $0xc8] sm:$0xff]
      %v1749 = vld [vmem:[#allocation3 + $0xd0] sm:$0xff]
      %v1750 = vld [vmem:[#allocation3 + $0xd8] sm:$0xff]
      %v1751 = vld [vmem:[#allocation3 + $0xe0] sm:$0xff]
      %v1752 = vld [vmem:[#allocation3 + $0xe8] sm:$0xff]
      %v1753 = vld [vmem:[#allocation3 + $0xf0] sm:$0xff]
      %v1754 = vld [vmem:[#allocation3 + $0xf8] sm:$0xff]
      %v1755 = vld [vmem:[#allocation3 + $0x100] sm:$0xff]
      %v1756 = vld [vmem:[#allocation3 + $0x108] sm:$0xff]
      %v1757 = vld [vmem:[#allocation3 + $0x110] sm:$0xff]
      %v1758 = vld [vmem:[#allocation3 + $0x118] sm:$0xff]
      %v1759 = vld [vmem:[#allocation2 + $0x20] sm:$0xff]
      %v1760 = vld [vmem:[#allocation2 + $0x28] sm:$0xff]
      %v1761 = vld [vmem:[#allocation2 + $0x30] sm:$0xff]
      %v1762 = vld [vmem:[#allocation2 + $0x38] sm:$0xff]
      %v1763 = vld [vmem:[#allocation2 + $0x40] sm:$0xff]
      %v1764 = vld [vmem:[#allocation2 + $0x48] sm:$0xff]
      %v1765 = vld [vmem:[#allocation2 + $0x50] sm:$0xff]
      %v1766 = vld [vmem:[#allocation2 + $0x58] sm:$0xff]
      %v1767 = vld [vmem:[#allocation2 + $0x60] sm:$0xff]
      %v1768 = vld [vmem:[#allocation2 + $0x68] sm:$0xff]
      %v1769 = vld [vmem:[#allocation2 + $0x70] sm:$0xff]
      %v1770 = vld [vmem:[#allocation2 + $0x78] sm:$0xff]
      %v1771 = vld [vmem:[#allocation2 + $0x80] sm:$0xff]
      %v1772 = vld [vmem:[#allocation2 + $0x88] sm:$0xff]
      %v1773 = vld [vmem:[#allocation2 + $0x90] sm:$0xff]
      %v1774 = vld [vmem:[#allocation2 + $0x98] sm:$0xff]
      %v1775 = vld [vmem:[#allocation2 + $0xa0] sm:$0xff]
      %v1776 = vld [vmem:[#allocation2 + $0xa8] sm:$0xff]
      %v1777 = vld [vmem:[#allocation2 + $0xb0] sm:$0xff]
      %v1778 = vld [vmem:[#allocation2 + $0xb8] sm:$0xff]
      %v1779 = vld [vmem:[#allocation2 + $0xc0] sm:$0xff]
      %v1780 = vld [vmem:[#allocation2 + $0xc8] sm:$0xff]
      %v1781 = vld [vmem:[#allocation2 + $0xd0] sm:$0xff]
      %v1782 = vld [vmem:[#allocation2 + $0xd8] sm:$0xff]
      %v1783 = vld [vmem:[#allocation2 + $0xe0] sm:$0xff]
      %v1784 = vld [vmem:[#allocation2 + $0xe8] sm:$0xff]
      %v1785 = vld [vmem:[#allocation2 + $0xf0] sm:$0xff]
      %v1786 = vld [vmem:[#allocation2 + $0xf8] sm:$0xff]
      %v1787 = vld [vmem:[#allocation2 + $0x100] sm:$0xff]
      %v1788 = vld [vmem:[#allocation2 + $0x108] sm:$0xff]
      %v1789 = vld [vmem:[#allocation2 + $0x110] sm:$0xff]
      %v1790 = vld [vmem:[#allocation2 + $0x118] sm:$0xff]
      %v1791 = vld [vmem:[#allocation2 + $0x120] sm:$0xff]
      %v1792 = vld [vmem:[#allocation2 + $0x128] sm:$0xff]
      %v1793 = vld [vmem:[#allocation2 + $0x130] sm:$0xff]
      %v1794 = vld [vmem:[#allocation2 + $0x138] sm:$0xff]
      %v1795 = vpack.c.bf16 %v1760, %v1759
      %v1796 = vpack.c.bf16 %v1762, %v1761
      %v1797 = vpack.c.bf16 %v1764, %v1763
      %v1798 = vpack.c.bf16 %v1766, %v1765
      %v1799 = vpack.c.bf16 %v1768, %v1767
      %v1800 = vpack.c.bf16 %v1770, %v1769
      %v1801 = vpack.c.bf16 %v1772, %v1771
      %v1802 = vpack.c.bf16 %v1774, %v1773
      %v1803 = vpack.c.bf16 %v1776, %v1775
      %v1804 = vpack.c.bf16 %v1778, %v1777
      %v1805 = vpack.c.bf16 %v1780, %v1779
      %v1806 = vpack.c.bf16 %v1782, %v1781
      %v1807 = vpack.c.bf16 %v1784, %v1783
      %v1808 = vpack.c.bf16 %v1786, %v1785
      %v1809 = vpack.c.bf16 %v1788, %v1787
      %v1810 = vpack.c.bf16 %v1790, %v1789
      %v1811 = vpack.c.bf16 %v1792, %v1791
      %v1812 = vpack.c.bf16 %v1794, %v1793
      %s1813 = scalar_lea.vmem %s1, 256
      %v1814 = vld [vmem:[%s1813] sm:$0xf]
      %v1815 = vld [vmem:[%s1813 + $0x4] sm:$0xf]
      %v1816 = vld [vmem:[%s1813 + $0x8] sm:$0xf]
      %v1817 = vld [vmem:[%s1813 + $0xc] sm:$0xf]
      %v1818 = vld [vmem:[%s1813 + $0x10] sm:$0xf]
      %v1819 = vld [vmem:[%s1813 + $0x14] sm:$0xf]
      %v1820 = vld [vmem:[%s1813 + $0x18] sm:$0xf]
      %v1821 = vld [vmem:[%s1813 + $0x1c] sm:$0xf]
      %v1822 = vld [vmem:[%s1813 + $0x20] sm:$0xf]
      %v1823 = vld [vmem:[%s1813 + $0x24] sm:$0xf]
      %v1824 = vld [vmem:[%s1813 + $0x28] sm:$0xf]
      %v1825 = vld [vmem:[%s1813 + $0x2c] sm:$0xf]
      %v1826 = vld [vmem:[%s1813 + $0x30] sm:$0xf]
      %v1827 = vld [vmem:[%s1813 + $0x34] sm:$0xf]
      %v1828 = vld [vmem:[%s1813 + $0x38] sm:$0xf]
      %v1829 = vld [vmem:[%s1813 + $0x3c] sm:$0xf]
      %v1846 = vunpack.c.l.b16 %v1814
      %v1847 = vunpack.c.l.b16 %v1815
      %v1848 = vunpack.c.l.b16 %v1816
      %v1849 = vunpack.c.l.b16 %v1817
      %v1850 = vunpack.c.l.b16 %v1818
      %v1851 = vunpack.c.l.b16 %v1819
      %v1852 = vunpack.c.l.b16 %v1820
      %v1853 = vunpack.c.l.b16 %v1821
      %v1854 = vunpack.c.l.b16 %v1822
      %v1855 = vunpack.c.l.b16 %v1823
      %v1856 = vunpack.c.l.b16 %v1824
      %v1857 = vunpack.c.l.b16 %v1825
      %v1858 = vunpack.c.l.b16 %v1826
      %v1859 = vunpack.c.l.b16 %v1827
      %v1860 = vunpack.c.l.b16 %v1828
      %v1861 = vunpack.c.l.b16 %v1829
      %v1862 = vpack.c.b16 %v1847, %v1846
      %v1863 = vpack.c.b16 %v1849, %v1848
      %v1864 = vpack.c.b16 %v1851, %v1850
      %v1865 = vpack.c.b16 %v1853, %v1852
      %v1866 = vpack.c.b16 %v1855, %v1854
      %v1867 = vpack.c.b16 %v1857, %v1856
      %v1868 = vpack.c.b16 %v1859, %v1858
      %v1869 = vpack.c.b16 %v1861, %v1860
      %1878 = vmatpush.bf16.msra.mxu0 %v1869
      %1879 = vmatpush.bf16.msra.mxu0 %v1868
      %1880 = vmatpush.bf16.msra.mxu0 %v1867
      %1881 = vmatpush.bf16.msra.mxu0 %v1866
      %1882 = vmatpush.bf16.msra.mxu0 %v1865
      %1883 = vmatpush.bf16.msra.mxu0 %v1864
      %1884 = vmatpush.bf16.msra.mxu0 %v1863
      %1885 = vmatpush.bf16.msra.mxu0 %v1862
      %1886 = vmatmul.bf16.gmra.mxu0 %v1795
      %v1887 = vpop.f32.mrf.mxu0
      %v1888 = vadd.f32 0.0, %v1887
      %v1889 = vpop.f32.mrf.mxu0
      %v1890 = vadd.f32 0.0, %v1889
      %1891 = vmatmul.bf16.gmra.mxu0 %v1796
      %v1892 = vpop.f32.mrf.mxu0
      %v1893 = vadd.f32 0.0, %v1892
      %v1894 = vpop.f32.mrf.mxu0
      %v1895 = vadd.f32 0.0, %v1894
      %1896 = vmatmul.bf16.gmra.mxu0 %v1797
      %v1897 = vpop.f32.mrf.mxu0
      %v1898 = vadd.f32 0.0, %v1897
      %v1899 = vpop.f32.mrf.mxu0
      %v1900 = vadd.f32 0.0, %v1899
      %1901 = vmatmul.bf16.gmra.mxu0 %v1798
      %v1902 = vpop.f32.mrf.mxu0
      %v1903 = vadd.f32 0.0, %v1902
      %v1904 = vpop.f32.mrf.mxu0
      %v1905 = vadd.f32 0.0, %v1904
      %1906 = vmatmul.bf16.gmra.mxu0 %v1799
      %v1907 = vpop.f32.mrf.mxu0
      %v1908 = vadd.f32 0.0, %v1907
      %v1909 = vpop.f32.mrf.mxu0
      %v1910 = vadd.f32 0.0, %v1909
      %1911 = vmatmul.bf16.gmra.mxu0 %v1800
      %v1912 = vpop.f32.mrf.mxu0
      %v1913 = vadd.f32 0.0, %v1912
      %v1914 = vpop.f32.mrf.mxu0
      %v1915 = vadd.f32 0.0, %v1914
      %1916 = vmatmul.bf16.gmra.mxu0 %v1801
      %v1917 = vpop.f32.mrf.mxu0
      %v1918 = vadd.f32 0.0, %v1917
      %v1919 = vpop.f32.mrf.mxu0
      %v1920 = vadd.f32 0.0, %v1919
      %1921 = vmatmul.bf16.gmra.mxu0 %v1802
      %v1922 = vpop.f32.mrf.mxu0
      %v1923 = vadd.f32 0.0, %v1922
      %v1924 = vpop.f32.mrf.mxu0
      %v1925 = vadd.f32 0.0, %v1924
      %1926 = vmatmul.bf16.gmra.mxu0 %v1803
      %v1927 = vpop.f32.mrf.mxu0
      %v1928 = vadd.f32 0.0, %v1927
      %v1929 = vpop.f32.mrf.mxu0
      %v1930 = vadd.f32 0.0, %v1929
      %1931 = vmatmul.bf16.gmra.mxu0 %v1804
      %v1932 = vpop.f32.mrf.mxu0
      %v1933 = vadd.f32 0.0, %v1932
      %v1934 = vpop.f32.mrf.mxu0
      %v1935 = vadd.f32 0.0, %v1934
      %1936 = vmatmul.bf16.gmra.mxu0 %v1805
      %v1937 = vpop.f32.mrf.mxu0
      %v1938 = vadd.f32 0.0, %v1937
      %v1939 = vpop.f32.mrf.mxu0
      %v1940 = vadd.f32 0.0, %v1939
      %1941 = vmatmul.bf16.gmra.mxu0 %v1806
      %v1942 = vpop.f32.mrf.mxu0
      %v1943 = vadd.f32 0.0, %v1942
      %v1944 = vpop.f32.mrf.mxu0
      %v1945 = vadd.f32 0.0, %v1944
      %1946 = vmatmul.bf16.gmra.mxu0 %v1807
      %v1947 = vpop.f32.mrf.mxu0
      %v1948 = vadd.f32 0.0, %v1947
      %v1949 = vpop.f32.mrf.mxu0
      %v1950 = vadd.f32 0.0, %v1949
      %1951 = vmatmul.bf16.gmra.mxu0 %v1808
      %v1952 = vpop.f32.mrf.mxu0
      %v1953 = vadd.f32 0.0, %v1952
      %v1954 = vpop.f32.mrf.mxu0
      %v1955 = vadd.f32 0.0, %v1954
      %1956 = vmatmul.bf16.gmra.mxu0 %v1809
      %v1957 = vpop.f32.mrf.mxu0
      %v1958 = vadd.f32 0.0, %v1957
      %v1959 = vpop.f32.mrf.mxu0
      %v1960 = vadd.f32 0.0, %v1959
      %1961 = vmatmul.bf16.gmra.mxu0 %v1810
      %v1962 = vpop.f32.mrf.mxu0
      %v1963 = vadd.f32 0.0, %v1962
      %v1964 = vpop.f32.mrf.mxu0
      %v1965 = vadd.f32 0.0, %v1964
      %1966 = vmatmul.bf16.gmra.mxu0 %v1811
      %v1967 = vpop.f32.mrf.mxu0
      %v1968 = vadd.f32 0.0, %v1967
      %v1969 = vpop.f32.mrf.mxu0
      %v1970 = vadd.f32 0.0, %v1969
      %1971 = vmatmul.bf16.gmra.mxu0 %v1812
      %v1972 = vpop.f32.mrf.mxu0
      %v1973 = vadd.f32 0.0, %v1972
      %v1974 = vpop.f32.mrf.mxu0
      %v1975 = vadd.f32 0.0, %v1974
      %1976 = vdwg.mxu0
      %v1977 = vadd.f32 %v1723, %v1888
      %v1978 = vadd.f32 %v1724, %v1890
      %v1979 = vadd.f32 %v1725, %v1893
      %v1980 = vadd.f32 %v1726, %v1895
      %v1981 = vadd.f32 %v1727, %v1898
      %v1982 = vadd.f32 %v1728, %v1900
      %v1983 = vadd.f32 %v1729, %v1903
      %v1984 = vadd.f32 %v1730, %v1905
      %v1985 = vadd.f32 %v1731, %v1908
      %v1986 = vadd.f32 %v1732, %v1910
      %v1987 = vadd.f32 %v1733, %v1913
      %v1988 = vadd.f32 %v1734, %v1915
      %v1989 = vadd.f32 %v1735, %v1918
      %v1990 = vadd.f32 %v1736, %v1920
      %v1991 = vadd.f32 %v1737, %v1923
      %v1992 = vadd.f32 %v1738, %v1925
      %v1993 = vadd.f32 %v1739, %v1928
      %v1994 = vadd.f32 %v1740, %v1930
      %v1995 = vadd.f32 %v1741, %v1933
      %v1996 = vadd.f32 %v1742, %v1935
      %v1997 = vadd.f32 %v1743, %v1938
      %v1998 = vadd.f32 %v1744, %v1940
      %v1999 = vadd.f32 %v1745, %v1943
      %v2000 = vadd.f32 %v1746, %v1945
      %v2001 = vadd.f32 %v1747, %v1948
      %v2002 = vadd.f32 %v1748, %v1950
      %v2003 = vadd.f32 %v1749, %v1953
      %v2004 = vadd.f32 %v1750, %v1955
      %v2005 = vadd.f32 %v1751, %v1958
      %v2006 = vadd.f32 %v1752, %v1960
      %v2007 = vadd.f32 %v1753, %v1963
      %v2008 = vadd.f32 %v1754, %v1965
      %v2009 = vadd.f32 %v1755, %v1968
      %v2010 = vadd.f32 %v1756, %v1970
      %v2011 = vadd.f32 %v1757, %v1973
      %v2012 = vadd.f32 %v1758, %v1975
      %2013 = vst [vmem:[#allocation3] sm:$0xff] %v1977
      %2014 = vst [vmem:[#allocation3 + $0x8] sm:$0xff] %v1978
      %2015 = vst [vmem:[#allocation3 + $0x10] sm:$0xff] %v1979
      %2016 = vst [vmem:[#allocation3 + $0x18] sm:$0xff] %v1980
      %2017 = vst [vmem:[#allocation3 + $0x20] sm:$0xff] %v1981
      %2018 = vst [vmem:[#allocation3 + $0x28] sm:$0xff] %v1982
      %2019 = vst [vmem:[#allocation3 + $0x30] sm:$0xff] %v1983
      %2020 = vst [vmem:[#allocation3 + $0x38] sm:$0xff] %v1984
      %2021 = vst [vmem:[#allocation3 + $0x40] sm:$0xff] %v1985
      %2022 = vst [vmem:[#allocation3 + $0x48] sm:$0xff] %v1986
      %2023 = vst [vmem:[#allocation3 + $0x50] sm:$0xff] %v1987
      %2024 = vst [vmem:[#allocation3 + $0x58] sm:$0xff] %v1988
      %2025 = vst [vmem:[#allocation3 + $0x60] sm:$0xff] %v1989
      %2026 = vst [vmem:[#allocation3 + $0x68] sm:$0xff] %v1990
      %2027 = vst [vmem:[#allocation3 + $0x70] sm:$0xff] %v1991
      %2028 = vst [vmem:[#allocation3 + $0x78] sm:$0xff] %v1992
      %2029 = vst [vmem:[#allocation3 + $0x80] sm:$0xff] %v1993
      %2030 = vst [vmem:[#allocation3 + $0x88] sm:$0xff] %v1994
      %2031 = vst [vmem:[#allocation3 + $0x90] sm:$0xff] %v1995
      %2032 = vst [vmem:[#allocation3 + $0x98] sm:$0xff] %v1996
      %2033 = vst [vmem:[#allocation3 + $0xa0] sm:$0xff] %v1997
      %2034 = vst [vmem:[#allocation3 + $0xa8] sm:$0xff] %v1998
      %2035 = vst [vmem:[#allocation3 + $0xb0] sm:$0xff] %v1999
      %2036 = vst [vmem:[#allocation3 + $0xb8] sm:$0xff] %v2000
      %2037 = vst [vmem:[#allocation3 + $0xc0] sm:$0xff] %v2001
      %2038 = vst [vmem:[#allocation3 + $0xc8] sm:$0xff] %v2002
      %2039 = vst [vmem:[#allocation3 + $0xd0] sm:$0xff] %v2003
      %2040 = vst [vmem:[#allocation3 + $0xd8] sm:$0xff] %v2004
      %2041 = vst [vmem:[#allocation3 + $0xe0] sm:$0xff] %v2005
      %2042 = vst [vmem:[#allocation3 + $0xe8] sm:$0xff] %v2006
      %2043 = vst [vmem:[#allocation3 + $0xf0] sm:$0xff] %v2007
      %2044 = vst [vmem:[#allocation3 + $0xf8] sm:$0xff] %v2008
      %2045 = vst [vmem:[#allocation3 + $0x100] sm:$0xff] %v2009
      %2046 = vst [vmem:[#allocation3 + $0x108] sm:$0xff] %v2010
      %2047 = vst [vmem:[#allocation3 + $0x110] sm:$0xff] %v2011
      %2048 = vst [vmem:[#allocation3 + $0x118] sm:$0xff] %v2012
      %v2049 = vld [vmem:[#allocation3] sm:$0xff]
      %v2050 = vld [vmem:[#allocation3 + $0x8] sm:$0xff]
      %v2051 = vld [vmem:[#allocation3 + $0x10] sm:$0xff]
      %v2052 = vld [vmem:[#allocation3 + $0x18] sm:$0xff]
      %v2053 = vld [vmem:[#allocation3 + $0x20] sm:$0xff]
      %v2054 = vld [vmem:[#allocation3 + $0x28] sm:$0xff]
      %v2055 = vld [vmem:[#allocation3 + $0x30] sm:$0xff]
      %v2056 = vld [vmem:[#allocation3 + $0x38] sm:$0xff]
      %v2057 = vld [vmem:[#allocation3 + $0x40] sm:$0xff]
      %v2058 = vld [vmem:[#allocation3 + $0x48] sm:$0xff]
      %v2059 = vld [vmem:[#allocation3 + $0x50] sm:$0xff]
      %v2060 = vld [vmem:[#allocation3 + $0x58] sm:$0xff]
      %v2061 = vld [vmem:[#allocation3 + $0x60] sm:$0xff]
      %v2062 = vld [vmem:[#allocation3 + $0x68] sm:$0xff]
      %v2063 = vld [vmem:[#allocation3 + $0x70] sm:$0xff]
      %v2064 = vld [vmem:[#allocation3 + $0x78] sm:$0xff]
      %v2065 = vld [vmem:[#allocation3 + $0x80] sm:$0xff]
      %v2066 = vld [vmem:[#allocation3 + $0x88] sm:$0xff]
      %v2067 = vld [vmem:[#allocation3 + $0x90] sm:$0xff]
      %v2068 = vld [vmem:[#allocation3 + $0x98] sm:$0xff]
      %v2069 = vld [vmem:[#allocation3 + $0xa0] sm:$0xff]
      %v2070 = vld [vmem:[#allocation3 + $0xa8] sm:$0xff]
      %v2071 = vld [vmem:[#allocation3 + $0xb0] sm:$0xff]
      %v2072 = vld [vmem:[#allocation3 + $0xb8] sm:$0xff]
      %v2073 = vld [vmem:[#allocation3 + $0xc0] sm:$0xff]
      %v2074 = vld [vmem:[#allocation3 + $0xc8] sm:$0xff]
      %v2075 = vld [vmem:[#allocation3 + $0xd0] sm:$0xff]
      %v2076 = vld [vmem:[#allocation3 + $0xd8] sm:$0xff]
      %v2077 = vld [vmem:[#allocation3 + $0xe0] sm:$0xff]
      %v2078 = vld [vmem:[#allocation3 + $0xe8] sm:$0xff]
      %v2079 = vld [vmem:[#allocation3 + $0xf0] sm:$0xff]
      %v2080 = vld [vmem:[#allocation3 + $0xf8] sm:$0xff]
      %v2081 = vld [vmem:[#allocation3 + $0x100] sm:$0xff]
      %v2082 = vld [vmem:[#allocation3 + $0x108] sm:$0xff]
      %v2083 = vld [vmem:[#allocation3 + $0x110] sm:$0xff]
      %v2084 = vld [vmem:[#allocation3 + $0x118] sm:$0xff]
      %v2085 = vld [vmem:[#allocation2 + $0x21] sm:$0xff]
      %v2086 = vld [vmem:[#allocation2 + $0x29] sm:$0xff]
      %v2087 = vld [vmem:[#allocation2 + $0x31] sm:$0xff]
      %v2088 = vld [vmem:[#allocation2 + $0x39] sm:$0xff]
      %v2089 = vld [vmem:[#allocation2 + $0x41] sm:$0xff]
      %v2090 = vld [vmem:[#allocation2 + $0x49] sm:$0xff]
      %v2091 = vld [vmem:[#allocation2 + $0x51] sm:$0xff]
      %v2092 = vld [vmem:[#allocation2 + $0x59] sm:$0xff]
      %v2093 = vld [vmem:[#allocation2 + $0x61] sm:$0xff]
      %v2094 = vld [vmem:[#allocation2 + $0x69] sm:$0xff]
      %v2095 = vld [vmem:[#allocation2 + $0x71] sm:$0xff]
      %v2096 = vld [vmem:[#allocation2 + $0x79] sm:$0xff]
      %v2097 = vld [vmem:[#allocation2 + $0x81] sm:$0xff]
      %v2098 = vld [vmem:[#allocation2 + $0x89] sm:$0xff]
      %v2099 = vld [vmem:[#allocation2 + $0x91] sm:$0xff]
      %v2100 = vld [vmem:[#allocation2 + $0x99] sm:$0xff]
      %v2101 = vld [vmem:[#allocation2 + $0xa1] sm:$0xff]
      %v2102 = vld [vmem:[#allocation2 + $0xa9] sm:$0xff]
      %v2103 = vld [vmem:[#allocation2 + $0xb1] sm:$0xff]
      %v2104 = vld [vmem:[#allocation2 + $0xb9] sm:$0xff]
      %v2105 = vld [vmem:[#allocation2 + $0xc1] sm:$0xff]
      %v2106 = vld [vmem:[#allocation2 + $0xc9] sm:$0xff]
      %v2107 = vld [vmem:[#allocation2 + $0xd1] sm:$0xff]
      %v2108 = vld [vmem:[#allocation2 + $0xd9] sm:$0xff]
      %v2109 = vld [vmem:[#allocation2 + $0xe1] sm:$0xff]
      %v2110 = vld [vmem:[#allocation2 + $0xe9] sm:$0xff]
      %v2111 = vld [vmem:[#allocation2 + $0xf1] sm:$0xff]
      %v2112 = vld [vmem:[#allocation2 + $0xf9] sm:$0xff]
      %v2113 = vld [vmem:[#allocation2 + $0x101] sm:$0xff]
      %v2114 = vld [vmem:[#allocation2 + $0x109] sm:$0xff]
      %v2115 = vld [vmem:[#allocation2 + $0x111] sm:$0xff]
      %v2116 = vld [vmem:[#allocation2 + $0x119] sm:$0xff]
      %v2117 = vld [vmem:[#allocation2 + $0x121] sm:$0xff]
      %v2118 = vld [vmem:[#allocation2 + $0x129] sm:$0xff]
      %v2119 = vld [vmem:[#allocation2 + $0x131] sm:$0xff]
      %v2120 = vld [vmem:[#allocation2 + $0x139] sm:$0xff]
      %v2121 = vpack.c.bf16 %v2086, %v2085
      %v2122 = vpack.c.bf16 %v2088, %v2087
      %v2123 = vpack.c.bf16 %v2090, %v2089
      %v2124 = vpack.c.bf16 %v2092, %v2091
      %v2125 = vpack.c.bf16 %v2094, %v2093
      %v2126 = vpack.c.bf16 %v2096, %v2095
      %v2127 = vpack.c.bf16 %v2098, %v2097
      %v2128 = vpack.c.bf16 %v2100, %v2099
      %v2129 = vpack.c.bf16 %v2102, %v2101
      %v2130 = vpack.c.bf16 %v2104, %v2103
      %v2131 = vpack.c.bf16 %v2106, %v2105
      %v2132 = vpack.c.bf16 %v2108, %v2107
      %v2133 = vpack.c.bf16 %v2110, %v2109
      %v2134 = vpack.c.bf16 %v2112, %v2111
      %v2135 = vpack.c.bf16 %v2114, %v2113
      %v2136 = vpack.c.bf16 %v2116, %v2115
      %v2137 = vpack.c.bf16 %v2118, %v2117
      %v2138 = vpack.c.bf16 %v2120, %v2119
      %s2139 = scalar_lea.vmem %s1, 320
      %v2140 = vld [vmem:[%s2139] sm:$0xf]
      %v2141 = vld [vmem:[%s2139 + $0x4] sm:$0xf]
      %v2142 = vld [vmem:[%s2139 + $0x8] sm:$0xf]
      %v2143 = vld [vmem:[%s2139 + $0xc] sm:$0xf]
      %v2144 = vld [vmem:[%s2139 + $0x10] sm:$0xf]
      %v2145 = vld [vmem:[%s2139 + $0x14] sm:$0xf]
      %v2146 = vld [vmem:[%s2139 + $0x18] sm:$0xf]
      %v2147 = vld [vmem:[%s2139 + $0x1c] sm:$0xf]
      %v2148 = vld [vmem:[%s2139 + $0x20] sm:$0xf]
      %v2149 = vld [vmem:[%s2139 + $0x24] sm:$0xf]
      %v2150 = vld [vmem:[%s2139 + $0x28] sm:$0xf]
      %v2151 = vld [vmem:[%s2139 + $0x2c] sm:$0xf]
      %v2152 = vld [vmem:[%s2139 + $0x30] sm:$0xf]
      %v2153 = vld [vmem:[%s2139 + $0x34] sm:$0xf]
      %v2154 = vld [vmem:[%s2139 + $0x38] sm:$0xf]
      %v2155 = vld [vmem:[%s2139 + $0x3c] sm:$0xf]
      %v2172 = vunpack.c.l.b16 %v2140
      %v2173 = vunpack.c.l.b16 %v2141
      %v2174 = vunpack.c.l.b16 %v2142
      %v2175 = vunpack.c.l.b16 %v2143
      %v2176 = vunpack.c.l.b16 %v2144
      %v2177 = vunpack.c.l.b16 %v2145
      %v2178 = vunpack.c.l.b16 %v2146
      %v2179 = vunpack.c.l.b16 %v2147
      %v2180 = vunpack.c.l.b16 %v2148
      %v2181 = vunpack.c.l.b16 %v2149
      %v2182 = vunpack.c.l.b16 %v2150
      %v2183 = vunpack.c.l.b16 %v2151
      %v2184 = vunpack.c.l.b16 %v2152
      %v2185 = vunpack.c.l.b16 %v2153
      %v2186 = vunpack.c.l.b16 %v2154
      %v2187 = vunpack.c.l.b16 %v2155
      %v2188 = vpack.c.b16 %v2173, %v2172
      %v2189 = vpack.c.b16 %v2175, %v2174
      %v2190 = vpack.c.b16 %v2177, %v2176
      %v2191 = vpack.c.b16 %v2179, %v2178
      %v2192 = vpack.c.b16 %v2181, %v2180
      %v2193 = vpack.c.b16 %v2183, %v2182
      %v2194 = vpack.c.b16 %v2185, %v2184
      %v2195 = vpack.c.b16 %v2187, %v2186
      %2204 = vmatpush.bf16.msra.mxu0 %v2195
      %2205 = vmatpush.bf16.msra.mxu0 %v2194
      %2206 = vmatpush.bf16.msra.mxu0 %v2193
      %2207 = vmatpush.bf16.msra.mxu0 %v2192
      %2208 = vmatpush.bf16.msra.mxu0 %v2191
      %2209 = vmatpush.bf16.msra.mxu0 %v2190
      %2210 = vmatpush.bf16.msra.mxu0 %v2189
      %2211 = vmatpush.bf16.msra.mxu0 %v2188
      %2212 = vmatmul.bf16.gmra.mxu0 %v2121
      %v2213 = vpop.f32.mrf.mxu0
      %v2214 = vadd.f32 0.0, %v2213
      %v2215 = vpop.f32.mrf.mxu0
      %v2216 = vadd.f32 0.0, %v2215
      %2217 = vmatmul.bf16.gmra.mxu0 %v2122
      %v2218 = vpop.f32.mrf.mxu0
      %v2219 = vadd.f32 0.0, %v2218
      %v2220 = vpop.f32.mrf.mxu0
      %v2221 = vadd.f32 0.0, %v2220
      %2222 = vmatmul.bf16.gmra.mxu0 %v2123
      %v2223 = vpop.f32.mrf.mxu0
      %v2224 = vadd.f32 0.0, %v2223
      %v2225 = vpop.f32.mrf.mxu0
      %v2226 = vadd.f32 0.0, %v2225
      %2227 = vmatmul.bf16.gmra.mxu0 %v2124
      %v2228 = vpop.f32.mrf.mxu0
      %v2229 = vadd.f32 0.0, %v2228
      %v2230 = vpop.f32.mrf.mxu0
      %v2231 = vadd.f32 0.0, %v2230
      %2232 = vmatmul.bf16.gmra.mxu0 %v2125
      %v2233 = vpop.f32.mrf.mxu0
      %v2234 = vadd.f32 0.0, %v2233
      %v2235 = vpop.f32.mrf.mxu0
      %v2236 = vadd.f32 0.0, %v2235
      %2237 = vmatmul.bf16.gmra.mxu0 %v2126
      %v2238 = vpop.f32.mrf.mxu0
      %v2239 = vadd.f32 0.0, %v2238
      %v2240 = vpop.f32.mrf.mxu0
      %v2241 = vadd.f32 0.0, %v2240
      %2242 = vmatmul.bf16.gmra.mxu0 %v2127
      %v2243 = vpop.f32.mrf.mxu0
      %v2244 = vadd.f32 0.0, %v2243
      %v2245 = vpop.f32.mrf.mxu0
      %v2246 = vadd.f32 0.0, %v2245
      %2247 = vmatmul.bf16.gmra.mxu0 %v2128
      %v2248 = vpop.f32.mrf.mxu0
      %v2249 = vadd.f32 0.0, %v2248
      %v2250 = vpop.f32.mrf.mxu0
      %v2251 = vadd.f32 0.0, %v2250
      %2252 = vmatmul.bf16.gmra.mxu0 %v2129
      %v2253 = vpop.f32.mrf.mxu0
      %v2254 = vadd.f32 0.0, %v2253
      %v2255 = vpop.f32.mrf.mxu0
      %v2256 = vadd.f32 0.0, %v2255
      %2257 = vmatmul.bf16.gmra.mxu0 %v2130
      %v2258 = vpop.f32.mrf.mxu0
      %v2259 = vadd.f32 0.0, %v2258
      %v2260 = vpop.f32.mrf.mxu0
      %v2261 = vadd.f32 0.0, %v2260
      %2262 = vmatmul.bf16.gmra.mxu0 %v2131
      %v2263 = vpop.f32.mrf.mxu0
      %v2264 = vadd.f32 0.0, %v2263
      %v2265 = vpop.f32.mrf.mxu0
      %v2266 = vadd.f32 0.0, %v2265
      %2267 = vmatmul.bf16.gmra.mxu0 %v2132
      %v2268 = vpop.f32.mrf.mxu0
      %v2269 = vadd.f32 0.0, %v2268
      %v2270 = vpop.f32.mrf.mxu0
      %v2271 = vadd.f32 0.0, %v2270
      %2272 = vmatmul.bf16.gmra.mxu0 %v2133
      %v2273 = vpop.f32.mrf.mxu0
      %v2274 = vadd.f32 0.0, %v2273
      %v2275 = vpop.f32.mrf.mxu0
      %v2276 = vadd.f32 0.0, %v2275
      %2277 = vmatmul.bf16.gmra.mxu0 %v2134
      %v2278 = vpop.f32.mrf.mxu0
      %v2279 = vadd.f32 0.0, %v2278
      %v2280 = vpop.f32.mrf.mxu0
      %v2281 = vadd.f32 0.0, %v2280
      %2282 = vmatmul.bf16.gmra.mxu0 %v2135
      %v2283 = vpop.f32.mrf.mxu0
      %v2284 = vadd.f32 0.0, %v2283
      %v2285 = vpop.f32.mrf.mxu0
      %v2286 = vadd.f32 0.0, %v2285
      %2287 = vmatmul.bf16.gmra.mxu0 %v2136
      %v2288 = vpop.f32.mrf.mxu0
      %v2289 = vadd.f32 0.0, %v2288
      %v2290 = vpop.f32.mrf.mxu0
      %v2291 = vadd.f32 0.0, %v2290
      %2292 = vmatmul.bf16.gmra.mxu0 %v2137
      %v2293 = vpop.f32.mrf.mxu0
      %v2294 = vadd.f32 0.0, %v2293
      %v2295 = vpop.f32.mrf.mxu0
      %v2296 = vadd.f32 0.0, %v2295
      %2297 = vmatmul.bf16.gmra.mxu0 %v2138
      %v2298 = vpop.f32.mrf.mxu0
      %v2299 = vadd.f32 0.0, %v2298
      %v2300 = vpop.f32.mrf.mxu0
      %v2301 = vadd.f32 0.0, %v2300
      %2302 = vdwg.mxu0
      %v2303 = vadd.f32 %v2049, %v2214
      %v2304 = vadd.f32 %v2050, %v2216
      %v2305 = vadd.f32 %v2051, %v2219
      %v2306 = vadd.f32 %v2052, %v2221
      %v2307 = vadd.f32 %v2053, %v2224
      %v2308 = vadd.f32 %v2054, %v2226
      %v2309 = vadd.f32 %v2055, %v2229
      %v2310 = vadd.f32 %v2056, %v2231
      %v2311 = vadd.f32 %v2057, %v2234
      %v2312 = vadd.f32 %v2058, %v2236
      %v2313 = vadd.f32 %v2059, %v2239
      %v2314 = vadd.f32 %v2060, %v2241
      %v2315 = vadd.f32 %v2061, %v2244
      %v2316 = vadd.f32 %v2062, %v2246
      %v2317 = vadd.f32 %v2063, %v2249
      %v2318 = vadd.f32 %v2064, %v2251
      %v2319 = vadd.f32 %v2065, %v2254
      %v2320 = vadd.f32 %v2066, %v2256
      %v2321 = vadd.f32 %v2067, %v2259
      %v2322 = vadd.f32 %v2068, %v2261
      %v2323 = vadd.f32 %v2069, %v2264
      %v2324 = vadd.f32 %v2070, %v2266
      %v2325 = vadd.f32 %v2071, %v2269
      %v2326 = vadd.f32 %v2072, %v2271
      %v2327 = vadd.f32 %v2073, %v2274
      %v2328 = vadd.f32 %v2074, %v2276
      %v2329 = vadd.f32 %v2075, %v2279
      %v2330 = vadd.f32 %v2076, %v2281
      %v2331 = vadd.f32 %v2077, %v2284
      %v2332 = vadd.f32 %v2078, %v2286
      %v2333 = vadd.f32 %v2079, %v2289
      %v2334 = vadd.f32 %v2080, %v2291
      %v2335 = vadd.f32 %v2081, %v2294
      %v2336 = vadd.f32 %v2082, %v2296
      %v2337 = vadd.f32 %v2083, %v2299
      %v2338 = vadd.f32 %v2084, %v2301
      %2339 = vst [vmem:[#allocation3] sm:$0xff] %v2303
      %2340 = vst [vmem:[#allocation3 + $0x8] sm:$0xff] %v2304
      %2341 = vst [vmem:[#allocation3 + $0x10] sm:$0xff] %v2305
      %2342 = vst [vmem:[#allocation3 + $0x18] sm:$0xff] %v2306
      %2343 = vst [vmem:[#allocation3 + $0x20] sm:$0xff] %v2307
      %2344 = vst [vmem:[#allocation3 + $0x28] sm:$0xff] %v2308
      %2345 = vst [vmem:[#allocation3 + $0x30] sm:$0xff] %v2309
      %2346 = vst [vmem:[#allocation3 + $0x38] sm:$0xff] %v2310
      %2347 = vst [vmem:[#allocation3 + $0x40] sm:$0xff] %v2311
      %2348 = vst [vmem:[#allocation3 + $0x48] sm:$0xff] %v2312
      %2349 = vst [vmem:[#allocation3 + $0x50] sm:$0xff] %v2313
      %2350 = vst [vmem:[#allocation3 + $0x58] sm:$0xff] %v2314
      %2351 = vst [vmem:[#allocation3 + $0x60] sm:$0xff] %v2315
      %2352 = vst [vmem:[#allocation3 + $0x68] sm:$0xff] %v2316
      %2353 = vst [vmem:[#allocation3 + $0x70] sm:$0xff] %v2317
      %2354 = vst [vmem:[#allocation3 + $0x78] sm:$0xff] %v2318
      %2355 = vst [vmem:[#allocation3 + $0x80] sm:$0xff] %v2319
      %2356 = vst [vmem:[#allocation3 + $0x88] sm:$0xff] %v2320
      %2357 = vst [vmem:[#allocation3 + $0x90] sm:$0xff] %v2321
      %2358 = vst [vmem:[#allocation3 + $0x98] sm:$0xff] %v2322
      %2359 = vst [vmem:[#allocation3 + $0xa0] sm:$0xff] %v2323
      %2360 = vst [vmem:[#allocation3 + $0xa8] sm:$0xff] %v2324
      %2361 = vst [vmem:[#allocation3 + $0xb0] sm:$0xff] %v2325
      %2362 = vst [vmem:[#allocation3 + $0xb8] sm:$0xff] %v2326
      %2363 = vst [vmem:[#allocation3 + $0xc0] sm:$0xff] %v2327
      %2364 = vst [vmem:[#allocation3 + $0xc8] sm:$0xff] %v2328
      %2365 = vst [vmem:[#allocation3 + $0xd0] sm:$0xff] %v2329
      %2366 = vst [vmem:[#allocation3 + $0xd8] sm:$0xff] %v2330
      %2367 = vst [vmem:[#allocation3 + $0xe0] sm:$0xff] %v2331
      %2368 = vst [vmem:[#allocation3 + $0xe8] sm:$0xff] %v2332
      %2369 = vst [vmem:[#allocation3 + $0xf0] sm:$0xff] %v2333
      %2370 = vst [vmem:[#allocation3 + $0xf8] sm:$0xff] %v2334
      %2371 = vst [vmem:[#allocation3 + $0x100] sm:$0xff] %v2335
      %2372 = vst [vmem:[#allocation3 + $0x108] sm:$0xff] %v2336
      %2373 = vst [vmem:[#allocation3 + $0x110] sm:$0xff] %v2337
      %2374 = vst [vmem:[#allocation3 + $0x118] sm:$0xff] %v2338
      %v2375 = vld [vmem:[#allocation3] sm:$0xff]
      %v2376 = vld [vmem:[#allocation3 + $0x8] sm:$0xff]
      %v2377 = vld [vmem:[#allocation3 + $0x10] sm:$0xff]
      %v2378 = vld [vmem:[#allocation3 + $0x18] sm:$0xff]
      %v2379 = vld [vmem:[#allocation3 + $0x20] sm:$0xff]
      %v2380 = vld [vmem:[#allocation3 + $0x28] sm:$0xff]
      %v2381 = vld [vmem:[#allocation3 + $0x30] sm:$0xff]
      %v2382 = vld [vmem:[#allocation3 + $0x38] sm:$0xff]
      %v2383 = vld [vmem:[#allocation3 + $0x40] sm:$0xff]
      %v2384 = vld [vmem:[#allocation3 + $0x48] sm:$0xff]
      %v2385 = vld [vmem:[#allocation3 + $0x50] sm:$0xff]
      %v2386 = vld [vmem:[#allocation3 + $0x58] sm:$0xff]
      %v2387 = vld [vmem:[#allocation3 + $0x60] sm:$0xff]
      %v2388 = vld [vmem:[#allocation3 + $0x68] sm:$0xff]
      %v2389 = vld [vmem:[#allocation3 + $0x70] sm:$0xff]
      %v2390 = vld [vmem:[#allocation3 + $0x78] sm:$0xff]
      %v2391 = vld [vmem:[#allocation3 + $0x80] sm:$0xff]
      %v2392 = vld [vmem:[#allocation3 + $0x88] sm:$0xff]
      %v2393 = vld [vmem:[#allocation3 + $0x90] sm:$0xff]
      %v2394 = vld [vmem:[#allocation3 + $0x98] sm:$0xff]
      %v2395 = vld [vmem:[#allocation3 + $0xa0] sm:$0xff]
      %v2396 = vld [vmem:[#allocation3 + $0xa8] sm:$0xff]
      %v2397 = vld [vmem:[#allocation3 + $0xb0] sm:$0xff]
      %v2398 = vld [vmem:[#allocation3 + $0xb8] sm:$0xff]
      %v2399 = vld [vmem:[#allocation3 + $0xc0] sm:$0xff]
      %v2400 = vld [vmem:[#allocation3 + $0xc8] sm:$0xff]
      %v2401 = vld [vmem:[#allocation3 + $0xd0] sm:$0xff]
      %v2402 = vld [vmem:[#allocation3 + $0xd8] sm:$0xff]
      %v2403 = vld [vmem:[#allocation3 + $0xe0] sm:$0xff]
      %v2404 = vld [vmem:[#allocation3 + $0xe8] sm:$0xff]
      %v2405 = vld [vmem:[#allocation3 + $0xf0] sm:$0xff]
      %v2406 = vld [vmem:[#allocation3 + $0xf8] sm:$0xff]
      %v2407 = vld [vmem:[#allocation3 + $0x100] sm:$0xff]
      %v2408 = vld [vmem:[#allocation3 + $0x108] sm:$0xff]
      %v2409 = vld [vmem:[#allocation3 + $0x110] sm:$0xff]
      %v2410 = vld [vmem:[#allocation3 + $0x118] sm:$0xff]
      %v2411 = vld [vmem:[#allocation2 + $0x31] sm:$0xff]
      %v2412 = vld [vmem:[#allocation2 + $0x39] sm:$0xff]
      %v2413 = vld [vmem:[#allocation2 + $0x41] sm:$0xff]
      %v2414 = vld [vmem:[#allocation2 + $0x49] sm:$0xff]
      %v2415 = vld [vmem:[#allocation2 + $0x51] sm:$0xff]
      %v2416 = vld [vmem:[#allocation2 + $0x59] sm:$0xff]
      %v2417 = vld [vmem:[#allocation2 + $0x61] sm:$0xff]
      %v2418 = vld [vmem:[#allocation2 + $0x69] sm:$0xff]
      %v2419 = vld [vmem:[#allocation2 + $0x71] sm:$0xff]
      %v2420 = vld [vmem:[#allocation2 + $0x79] sm:$0xff]
      %v2421 = vld [vmem:[#allocation2 + $0x81] sm:$0xff]
      %v2422 = vld [vmem:[#allocation2 + $0x89] sm:$0xff]
      %v2423 = vld [vmem:[#allocation2 + $0x91] sm:$0xff]
      %v2424 = vld [vmem:[#allocation2 + $0x99] sm:$0xff]
      %v2425 = vld [vmem:[#allocation2 + $0xa1] sm:$0xff]
      %v2426 = vld [vmem:[#allocation2 + $0xa9] sm:$0xff]
      %v2427 = vld [vmem:[#allocation2 + $0xb1] sm:$0xff]
      %v2428 = vld [vmem:[#allocation2 + $0xb9] sm:$0xff]
      %v2429 = vld [vmem:[#allocation2 + $0xc1] sm:$0xff]
      %v2430 = vld [vmem:[#allocation2 + $0xc9] sm:$0xff]
      %v2431 = vld [vmem:[#allocation2 + $0xd1] sm:$0xff]
      %v2432 = vld [vmem:[#allocation2 + $0xd9] sm:$0xff]
      %v2433 = vld [vmem:[#allocation2 + $0xe1] sm:$0xff]
      %v2434 = vld [vmem:[#allocation2 + $0xe9] sm:$0xff]
      %v2435 = vld [vmem:[#allocation2 + $0xf1] sm:$0xff]
      %v2436 = vld [vmem:[#allocation2 + $0xf9] sm:$0xff]
      %v2437 = vld [vmem:[#allocation2 + $0x101] sm:$0xff]
      %v2438 = vld [vmem:[#allocation2 + $0x109] sm:$0xff]
      %v2439 = vld [vmem:[#allocation2 + $0x111] sm:$0xff]
      %v2440 = vld [vmem:[#allocation2 + $0x119] sm:$0xff]
      %v2441 = vld [vmem:[#allocation2 + $0x121] sm:$0xff]
      %v2442 = vld [vmem:[#allocation2 + $0x129] sm:$0xff]
      %v2443 = vld [vmem:[#allocation2 + $0x131] sm:$0xff]
      %v2444 = vld [vmem:[#allocation2 + $0x139] sm:$0xff]
      %v2445 = vld [vmem:[#allocation2 + $0x141] sm:$0xff]
      %v2446 = vld [vmem:[#allocation2 + $0x149] sm:$0xff]
      %v2447 = vpack.c.bf16 %v2412, %v2411
      %v2448 = vpack.c.bf16 %v2414, %v2413
      %v2449 = vpack.c.bf16 %v2416, %v2415
      %v2450 = vpack.c.bf16 %v2418, %v2417
      %v2451 = vpack.c.bf16 %v2420, %v2419
      %v2452 = vpack.c.bf16 %v2422, %v2421
      %v2453 = vpack.c.bf16 %v2424, %v2423
      %v2454 = vpack.c.bf16 %v2426, %v2425
      %v2455 = vpack.c.bf16 %v2428, %v2427
      %v2456 = vpack.c.bf16 %v2430, %v2429
      %v2457 = vpack.c.bf16 %v2432, %v2431
      %v2458 = vpack.c.bf16 %v2434, %v2433
      %v2459 = vpack.c.bf16 %v2436, %v2435
      %v2460 = vpack.c.bf16 %v2438, %v2437
      %v2461 = vpack.c.bf16 %v2440, %v2439
      %v2462 = vpack.c.bf16 %v2442, %v2441
      %v2463 = vpack.c.bf16 %v2444, %v2443
      %v2464 = vpack.c.bf16 %v2446, %v2445
      %s2465 = scalar_lea.vmem %s1, 384
      %v2466 = vld [vmem:[%s2465] sm:$0xf]
      %v2467 = vld [vmem:[%s2465 + $0x4] sm:$0xf]
      %v2468 = vld [vmem:[%s2465 + $0x8] sm:$0xf]
      %v2469 = vld [vmem:[%s2465 + $0xc] sm:$0xf]
      %v2470 = vld [vmem:[%s2465 + $0x10] sm:$0xf]
      %v2471 = vld [vmem:[%s2465 + $0x14] sm:$0xf]
      %v2472 = vld [vmem:[%s2465 + $0x18] sm:$0xf]
      %v2473 = vld [vmem:[%s2465 + $0x1c] sm:$0xf]
      %v2474 = vld [vmem:[%s2465 + $0x20] sm:$0xf]
      %v2475 = vld [vmem:[%s2465 + $0x24] sm:$0xf]
      %v2476 = vld [vmem:[%s2465 + $0x28] sm:$0xf]
      %v2477 = vld [vmem:[%s2465 + $0x2c] sm:$0xf]
      %v2478 = vld [vmem:[%s2465 + $0x30] sm:$0xf]
      %v2479 = vld [vmem:[%s2465 + $0x34] sm:$0xf]
      %v2480 = vld [vmem:[%s2465 + $0x38] sm:$0xf]
      %v2481 = vld [vmem:[%s2465 + $0x3c] sm:$0xf]
      %v2498 = vunpack.c.l.b16 %v2466
      %v2499 = vunpack.c.l.b16 %v2467
      %v2500 = vunpack.c.l.b16 %v2468
      %v2501 = vunpack.c.l.b16 %v2469
      %v2502 = vunpack.c.l.b16 %v2470
      %v2503 = vunpack.c.l.b16 %v2471
      %v2504 = vunpack.c.l.b16 %v2472
      %v2505 = vunpack.c.l.b16 %v2473
      %v2506 = vunpack.c.l.b16 %v2474
      %v2507 = vunpack.c.l.b16 %v2475
      %v2508 = vunpack.c.l.b16 %v2476
      %v2509 = vunpack.c.l.b16 %v2477
      %v2510 = vunpack.c.l.b16 %v2478
      %v2511 = vunpack.c.l.b16 %v2479
      %v2512 = vunpack.c.l.b16 %v2480
      %v2513 = vunpack.c.l.b16 %v2481
      %v2514 = vpack.c.b16 %v2499, %v2498
      %v2515 = vpack.c.b16 %v2501, %v2500
      %v2516 = vpack.c.b16 %v2503, %v2502
      %v2517 = vpack.c.b16 %v2505, %v2504
      %v2518 = vpack.c.b16 %v2507, %v2506
      %v2519 = vpack.c.b16 %v2509, %v2508
      %v2520 = vpack.c.b16 %v2511, %v2510
      %v2521 = vpack.c.b16 %v2513, %v2512
      %2530 = vmatpush.bf16.msra.mxu0 %v2521
      %2531 = vmatpush.bf16.msra.mxu0 %v2520
      %2532 = vmatpush.bf16.msra.mxu0 %v2519
      %2533 = vmatpush.bf16.msra.mxu0 %v2518
      %2534 = vmatpush.bf16.msra.mxu0 %v2517
      %2535 = vmatpush.bf16.msra.mxu0 %v2516
      %2536 = vmatpush.bf16.msra.mxu0 %v2515
      %2537 = vmatpush.bf16.msra.mxu0 %v2514
      %2538 = vmatmul.bf16.gmra.mxu0 %v2447
      %v2539 = vpop.f32.mrf.mxu0
      %v2540 = vadd.f32 0.0, %v2539
      %v2541 = vpop.f32.mrf.mxu0
      %v2542 = vadd.f32 0.0, %v2541
      %2543 = vmatmul.bf16.gmra.mxu0 %v2448
      %v2544 = vpop.f32.mrf.mxu0
      %v2545 = vadd.f32 0.0, %v2544
      %v2546 = vpop.f32.mrf.mxu0
      %v2547 = vadd.f32 0.0, %v2546
      %2548 = vmatmul.bf16.gmra.mxu0 %v2449
      %v2549 = vpop.f32.mrf.mxu0
      %v2550 = vadd.f32 0.0, %v2549
      %v2551 = vpop.f32.mrf.mxu0
      %v2552 = vadd.f32 0.0, %v2551
      %2553 = vmatmul.bf16.gmra.mxu0 %v2450
      %v2554 = vpop.f32.mrf.mxu0
      %v2555 = vadd.f32 0.0, %v2554
      %v2556 = vpop.f32.mrf.mxu0
      %v2557 = vadd.f32 0.0, %v2556
      %2558 = vmatmul.bf16.gmra.mxu0 %v2451
      %v2559 = vpop.f32.mrf.mxu0
      %v2560 = vadd.f32 0.0, %v2559
      %v2561 = vpop.f32.mrf.mxu0
      %v2562 = vadd.f32 0.0, %v2561
      %2563 = vmatmul.bf16.gmra.mxu0 %v2452
      %v2564 = vpop.f32.mrf.mxu0
      %v2565 = vadd.f32 0.0, %v2564
      %v2566 = vpop.f32.mrf.mxu0
      %v2567 = vadd.f32 0.0, %v2566
      %2568 = vmatmul.bf16.gmra.mxu0 %v2453
      %v2569 = vpop.f32.mrf.mxu0
      %v2570 = vadd.f32 0.0, %v2569
      %v2571 = vpop.f32.mrf.mxu0
      %v2572 = vadd.f32 0.0, %v2571
      %2573 = vmatmul.bf16.gmra.mxu0 %v2454
      %v2574 = vpop.f32.mrf.mxu0
      %v2575 = vadd.f32 0.0, %v2574
      %v2576 = vpop.f32.mrf.mxu0
      %v2577 = vadd.f32 0.0, %v2576
      %2578 = vmatmul.bf16.gmra.mxu0 %v2455
      %v2579 = vpop.f32.mrf.mxu0
      %v2580 = vadd.f32 0.0, %v2579
      %v2581 = vpop.f32.mrf.mxu0
      %v2582 = vadd.f32 0.0, %v2581
      %2583 = vmatmul.bf16.gmra.mxu0 %v2456
      %v2584 = vpop.f32.mrf.mxu0
      %v2585 = vadd.f32 0.0, %v2584
      %v2586 = vpop.f32.mrf.mxu0
      %v2587 = vadd.f32 0.0, %v2586
      %2588 = vmatmul.bf16.gmra.mxu0 %v2457
      %v2589 = vpop.f32.mrf.mxu0
      %v2590 = vadd.f32 0.0, %v2589
      %v2591 = vpop.f32.mrf.mxu0
      %v2592 = vadd.f32 0.0, %v2591
      %2593 = vmatmul.bf16.gmra.mxu0 %v2458
      %v2594 = vpop.f32.mrf.mxu0
      %v2595 = vadd.f32 0.0, %v2594
      %v2596 = vpop.f32.mrf.mxu0
      %v2597 = vadd.f32 0.0, %v2596
      %2598 = vmatmul.bf16.gmra.mxu0 %v2459
      %v2599 = vpop.f32.mrf.mxu0
      %v2600 = vadd.f32 0.0, %v2599
      %v2601 = vpop.f32.mrf.mxu0
      %v2602 = vadd.f32 0.0, %v2601
      %2603 = vmatmul.bf16.gmra.mxu0 %v2460
      %v2604 = vpop.f32.mrf.mxu0
      %v2605 = vadd.f32 0.0, %v2604
      %v2606 = vpop.f32.mrf.mxu0
      %v2607 = vadd.f32 0.0, %v2606
      %2608 = vmatmul.bf16.gmra.mxu0 %v2461
      %v2609 = vpop.f32.mrf.mxu0
      %v2610 = vadd.f32 0.0, %v2609
      %v2611 = vpop.f32.mrf.mxu0
      %v2612 = vadd.f32 0.0, %v2611
      %2613 = vmatmul.bf16.gmra.mxu0 %v2462
      %v2614 = vpop.f32.mrf.mxu0
      %v2615 = vadd.f32 0.0, %v2614
      %v2616 = vpop.f32.mrf.mxu0
      %v2617 = vadd.f32 0.0, %v2616
      %2618 = vmatmul.bf16.gmra.mxu0 %v2463
      %v2619 = vpop.f32.mrf.mxu0
      %v2620 = vadd.f32 0.0, %v2619
      %v2621 = vpop.f32.mrf.mxu0
      %v2622 = vadd.f32 0.0, %v2621
      %2623 = vmatmul.bf16.gmra.mxu0 %v2464
      %v2624 = vpop.f32.mrf.mxu0
      %v2625 = vadd.f32 0.0, %v2624
      %v2626 = vpop.f32.mrf.mxu0
      %v2627 = vadd.f32 0.0, %v2626
      %2628 = vdwg.mxu0
      %v2629 = vadd.f32 %v2375, %v2540
      %v2630 = vadd.f32 %v2376, %v2542
      %v2631 = vadd.f32 %v2377, %v2545
      %v2632 = vadd.f32 %v2378, %v2547
      %v2633 = vadd.f32 %v2379, %v2550
      %v2634 = vadd.f32 %v2380, %v2552
      %v2635 = vadd.f32 %v2381, %v2555
      %v2636 = vadd.f32 %v2382, %v2557
      %v2637 = vadd.f32 %v2383, %v2560
      %v2638 = vadd.f32 %v2384, %v2562
      %v2639 = vadd.f32 %v2385, %v2565
      %v2640 = vadd.f32 %v2386, %v2567
      %v2641 = vadd.f32 %v2387, %v2570
      %v2642 = vadd.f32 %v2388, %v2572
      %v2643 = vadd.f32 %v2389, %v2575
      %v2644 = vadd.f32 %v2390, %v2577
      %v2645 = vadd.f32 %v2391, %v2580
      %v2646 = vadd.f32 %v2392, %v2582
      %v2647 = vadd.f32 %v2393, %v2585
      %v2648 = vadd.f32 %v2394, %v2587
      %v2649 = vadd.f32 %v2395, %v2590
      %v2650 = vadd.f32 %v2396, %v2592
      %v2651 = vadd.f32 %v2397, %v2595
      %v2652 = vadd.f32 %v2398, %v2597
      %v2653 = vadd.f32 %v2399, %v2600
      %v2654 = vadd.f32 %v2400, %v2602
      %v2655 = vadd.f32 %v2401, %v2605
      %v2656 = vadd.f32 %v2402, %v2607
      %v2657 = vadd.f32 %v2403, %v2610
      %v2658 = vadd.f32 %v2404, %v2612
      %v2659 = vadd.f32 %v2405, %v2615
      %v2660 = vadd.f32 %v2406, %v2617
      %v2661 = vadd.f32 %v2407, %v2620
      %v2662 = vadd.f32 %v2408, %v2622
      %v2663 = vadd.f32 %v2409, %v2625
      %v2664 = vadd.f32 %v2410, %v2627
      %2665 = vst [vmem:[#allocation3] sm:$0xff] %v2629
      %2666 = vst [vmem:[#allocation3 + $0x8] sm:$0xff] %v2630
      %2667 = vst [vmem:[#allocation3 + $0x10] sm:$0xff] %v2631
      %2668 = vst [vmem:[#allocation3 + $0x18] sm:$0xff] %v2632
      %2669 = vst [vmem:[#allocation3 + $0x20] sm:$0xff] %v2633
      %2670 = vst [vmem:[#allocation3 + $0x28] sm:$0xff] %v2634
      %2671 = vst [vmem:[#allocation3 + $0x30] sm:$0xff] %v2635
      %2672 = vst [vmem:[#allocation3 + $0x38] sm:$0xff] %v2636
      %2673 = vst [vmem:[#allocation3 + $0x40] sm:$0xff] %v2637
      %2674 = vst [vmem:[#allocation3 + $0x48] sm:$0xff] %v2638
      %2675 = vst [vmem:[#allocation3 + $0x50] sm:$0xff] %v2639
      %2676 = vst [vmem:[#allocation3 + $0x58] sm:$0xff] %v2640
      %2677 = vst [vmem:[#allocation3 + $0x60] sm:$0xff] %v2641
      %2678 = vst [vmem:[#allocation3 + $0x68] sm:$0xff] %v2642
      %2679 = vst [vmem:[#allocation3 + $0x70] sm:$0xff] %v2643
      %2680 = vst [vmem:[#allocation3 + $0x78] sm:$0xff] %v2644
      %2681 = vst [vmem:[#allocation3 + $0x80] sm:$0xff] %v2645
      %2682 = vst [vmem:[#allocation3 + $0x88] sm:$0xff] %v2646
      %2683 = vst [vmem:[#allocation3 + $0x90] sm:$0xff] %v2647
      %2684 = vst [vmem:[#allocation3 + $0x98] sm:$0xff] %v2648
      %2685 = vst [vmem:[#allocation3 + $0xa0] sm:$0xff] %v2649
      %2686 = vst [vmem:[#allocation3 + $0xa8] sm:$0xff] %v2650
      %2687 = vst [vmem:[#allocation3 + $0xb0] sm:$0xff] %v2651
      %2688 = vst [vmem:[#allocation3 + $0xb8] sm:$0xff] %v2652
      %2689 = vst [vmem:[#allocation3 + $0xc0] sm:$0xff] %v2653
      %2690 = vst [vmem:[#allocation3 + $0xc8] sm:$0xff] %v2654
      %2691 = vst [vmem:[#allocation3 + $0xd0] sm:$0xff] %v2655
      %2692 = vst [vmem:[#allocation3 + $0xd8] sm:$0xff] %v2656
      %2693 = vst [vmem:[#allocation3 + $0xe0] sm:$0xff] %v2657
      %2694 = vst [vmem:[#allocation3 + $0xe8] sm:$0xff] %v2658
      %2695 = vst [vmem:[#allocation3 + $0xf0] sm:$0xff] %v2659
      %2696 = vst [vmem:[#allocation3 + $0xf8] sm:$0xff] %v2660
      %2697 = vst [vmem:[#allocation3 + $0x100] sm:$0xff] %v2661
      %2698 = vst [vmem:[#allocation3 + $0x108] sm:$0xff] %v2662
      %2699 = vst [vmem:[#allocation3 + $0x110] sm:$0xff] %v2663
      %2700 = vst [vmem:[#allocation3 + $0x118] sm:$0xff] %v2664
      %v2701 = vld [vmem:[#allocation3] sm:$0xff]
      %v2702 = vld [vmem:[#allocation3 + $0x8] sm:$0xff]
      %v2703 = vld [vmem:[#allocation3 + $0x10] sm:$0xff]
      %v2704 = vld [vmem:[#allocation3 + $0x18] sm:$0xff]
      %v2705 = vld [vmem:[#allocation3 + $0x20] sm:$0xff]
      %v2706 = vld [vmem:[#allocation3 + $0x28] sm:$0xff]
      %v2707 = vld [vmem:[#allocation3 + $0x30] sm:$0xff]
      %v2708 = vld [vmem:[#allocation3 + $0x38] sm:$0xff]
      %v2709 = vld [vmem:[#allocation3 + $0x40] sm:$0xff]
      %v2710 = vld [vmem:[#allocation3 + $0x48] sm:$0xff]
      %v2711 = vld [vmem:[#allocation3 + $0x50] sm:$0xff]
      %v2712 = vld [vmem:[#allocation3 + $0x58] sm:$0xff]
      %v2713 = vld [vmem:[#allocation3 + $0x60] sm:$0xff]
      %v2714 = vld [vmem:[#allocation3 + $0x68] sm:$0xff]
      %v2715 = vld [vmem:[#allocation3 + $0x70] sm:$0xff]
      %v2716 = vld [vmem:[#allocation3 + $0x78] sm:$0xff]
      %v2717 = vld [vmem:[#allocation3 + $0x80] sm:$0xff]
      %v2718 = vld [vmem:[#allocation3 + $0x88] sm:$0xff]
      %v2719 = vld [vmem:[#allocation3 + $0x90] sm:$0xff]
      %v2720 = vld [vmem:[#allocation3 + $0x98] sm:$0xff]
      %v2721 = vld [vmem:[#allocation3 + $0xa0] sm:$0xff]
      %v2722 = vld [vmem:[#allocation3 + $0xa8] sm:$0xff]
      %v2723 = vld [vmem:[#allocation3 + $0xb0] sm:$0xff]
      %v2724 = vld [vmem:[#allocation3 + $0xb8] sm:$0xff]
      %v2725 = vld [vmem:[#allocation3 + $0xc0] sm:$0xff]
      %v2726 = vld [vmem:[#allocation3 + $0xc8] sm:$0xff]
      %v2727 = vld [vmem:[#allocation3 + $0xd0] sm:$0xff]
      %v2728 = vld [vmem:[#allocation3 + $0xd8] sm:$0xff]
      %v2729 = vld [vmem:[#allocation3 + $0xe0] sm:$0xff]
      %v2730 = vld [vmem:[#allocation3 + $0xe8] sm:$0xff]
      %v2731 = vld [vmem:[#allocation3 + $0xf0] sm:$0xff]
      %v2732 = vld [vmem:[#allocation3 + $0xf8] sm:$0xff]
      %v2733 = vld [vmem:[#allocation3 + $0x100] sm:$0xff]
      %v2734 = vld [vmem:[#allocation3 + $0x108] sm:$0xff]
      %v2735 = vld [vmem:[#allocation3 + $0x110] sm:$0xff]
      %v2736 = vld [vmem:[#allocation3 + $0x118] sm:$0xff]
      %v2737 = vld [vmem:[#allocation2 + $0x32] sm:$0xff]
      %v2738 = vld [vmem:[#allocation2 + $0x3a] sm:$0xff]
      %v2739 = vld [vmem:[#allocation2 + $0x42] sm:$0xff]
      %v2740 = vld [vmem:[#allocation2 + $0x4a] sm:$0xff]
      %v2741 = vld [vmem:[#allocation2 + $0x52] sm:$0xff]
      %v2742 = vld [vmem:[#allocation2 + $0x5a] sm:$0xff]
      %v2743 = vld [vmem:[#allocation2 + $0x62] sm:$0xff]
      %v2744 = vld [vmem:[#allocation2 + $0x6a] sm:$0xff]
      %v2745 = vld [vmem:[#allocation2 + $0x72] sm:$0xff]
      %v2746 = vld [vmem:[#allocation2 + $0x7a] sm:$0xff]
      %v2747 = vld [vmem:[#allocation2 + $0x82] sm:$0xff]
      %v2748 = vld [vmem:[#allocation2 + $0x8a] sm:$0xff]
      %v2749 = vld [vmem:[#allocation2 + $0x92] sm:$0xff]
      %v2750 = vld [vmem:[#allocation2 + $0x9a] sm:$0xff]
      %v2751 = vld [vmem:[#allocation2 + $0xa2] sm:$0xff]
      %v2752 = vld [vmem:[#allocation2 + $0xaa] sm:$0xff]
      %v2753 = vld [vmem:[#allocation2 + $0xb2] sm:$0xff]
      %v2754 = vld [vmem:[#allocation2 + $0xba] sm:$0xff]
      %v2755 = vld [vmem:[#allocation2 + $0xc2] sm:$0xff]
      %v2756 = vld [vmem:[#allocation2 + $0xca] sm:$0xff]
      %v2757 = vld [vmem:[#allocation2 + $0xd2] sm:$0xff]
      %v2758 = vld [vmem:[#allocation2 + $0xda] sm:$0xff]
      %v2759 = vld [vmem:[#allocation2 + $0xe2] sm:$0xff]
      %v2760 = vld [vmem:[#allocation2 + $0xea] sm:$0xff]
      %v2761 = vld [vmem:[#allocation2 + $0xf2] sm:$0xff]
      %v2762 = vld [vmem:[#allocation2 + $0xfa] sm:$0xff]
      %v2763 = vld [vmem:[#allocation2 + $0x102] sm:$0xff]
      %v2764 = vld [vmem:[#allocation2 + $0x10a] sm:$0xff]
      %v2765 = vld [vmem:[#allocation2 + $0x112] sm:$0xff]
      %v2766 = vld [vmem:[#allocation2 + $0x11a] sm:$0xff]
      %v2767 = vld [vmem:[#allocation2 + $0x122] sm:$0xff]
      %v2768 = vld [vmem:[#allocation2 + $0x12a] sm:$0xff]
      %v2769 = vld [vmem:[#allocation2 + $0x132] sm:$0xff]
      %v2770 = vld [vmem:[#allocation2 + $0x13a] sm:$0xff]
      %v2771 = vld [vmem:[#allocation2 + $0x142] sm:$0xff]
      %v2772 = vld [vmem:[#allocation2 + $0x14a] sm:$0xff]
      %v2773 = vpack.c.bf16 %v2738, %v2737
      %v2774 = vpack.c.bf16 %v2740, %v2739
      %v2775 = vpack.c.bf16 %v2742, %v2741
      %v2776 = vpack.c.bf16 %v2744, %v2743
      %v2777 = vpack.c.bf16 %v2746, %v2745
      %v2778 = vpack.c.bf16 %v2748, %v2747
      %v2779 = vpack.c.bf16 %v2750, %v2749
      %v2780 = vpack.c.bf16 %v2752, %v2751
      %v2781 = vpack.c.bf16 %v2754, %v2753
      %v2782 = vpack.c.bf16 %v2756, %v2755
      %v2783 = vpack.c.bf16 %v2758, %v2757
      %v2784 = vpack.c.bf16 %v2760, %v2759
      %v2785 = vpack.c.bf16 %v2762, %v2761
      %v2786 = vpack.c.bf16 %v2764, %v2763
      %v2787 = vpack.c.bf16 %v2766, %v2765
      %v2788 = vpack.c.bf16 %v2768, %v2767
      %v2789 = vpack.c.bf16 %v2770, %v2769
      %v2790 = vpack.c.bf16 %v2772, %v2771
      %s2791 = scalar_lea.vmem %s1, 448
      %v2792 = vld [vmem:[%s2791] sm:$0xf]
      %v2793 = vld [vmem:[%s2791 + $0x4] sm:$0xf]
      %v2794 = vld [vmem:[%s2791 + $0x8] sm:$0xf]
      %v2795 = vld [vmem:[%s2791 + $0xc] sm:$0xf]
      %v2796 = vld [vmem:[%s2791 + $0x10] sm:$0xf]
      %v2797 = vld [vmem:[%s2791 + $0x14] sm:$0xf]
      %v2798 = vld [vmem:[%s2791 + $0x18] sm:$0xf]
      %v2799 = vld [vmem:[%s2791 + $0x1c] sm:$0xf]
      %v2800 = vld [vmem:[%s2791 + $0x20] sm:$0xf]
      %v2801 = vld [vmem:[%s2791 + $0x24] sm:$0xf]
      %v2802 = vld [vmem:[%s2791 + $0x28] sm:$0xf]
      %v2803 = vld [vmem:[%s2791 + $0x2c] sm:$0xf]
      %v2804 = vld [vmem:[%s2791 + $0x30] sm:$0xf]
      %v2805 = vld [vmem:[%s2791 + $0x34] sm:$0xf]
      %v2806 = vld [vmem:[%s2791 + $0x38] sm:$0xf]
      %v2807 = vld [vmem:[%s2791 + $0x3c] sm:$0xf]
      %v2824 = vunpack.c.l.b16 %v2792
      %v2825 = vunpack.c.l.b16 %v2793
      %v2826 = vunpack.c.l.b16 %v2794
      %v2827 = vunpack.c.l.b16 %v2795
      %v2828 = vunpack.c.l.b16 %v2796
      %v2829 = vunpack.c.l.b16 %v2797
      %v2830 = vunpack.c.l.b16 %v2798
      %v2831 = vunpack.c.l.b16 %v2799
      %v2832 = vunpack.c.l.b16 %v2800
      %v2833 = vunpack.c.l.b16 %v2801
      %v2834 = vunpack.c.l.b16 %v2802
      %v2835 = vunpack.c.l.b16 %v2803
      %v2836 = vunpack.c.l.b16 %v2804
      %v2837 = vunpack.c.l.b16 %v2805
      %v2838 = vunpack.c.l.b16 %v2806
      %v2839 = vunpack.c.l.b16 %v2807
      %v2840 = vpack.c.b16 %v2825, %v2824
      %v2841 = vpack.c.b16 %v2827, %v2826
      %v2842 = vpack.c.b16 %v2829, %v2828
      %v2843 = vpack.c.b16 %v2831, %v2830
      %v2844 = vpack.c.b16 %v2833, %v2832
      %v2845 = vpack.c.b16 %v2835, %v2834
      %v2846 = vpack.c.b16 %v2837, %v2836
      %v2847 = vpack.c.b16 %v2839, %v2838
      %2856 = vmatpush.bf16.msra.mxu0 %v2847
      %2857 = vmatpush.bf16.msra.mxu0 %v2846
      %2858 = vmatpush.bf16.msra.mxu0 %v2845
      %2859 = vmatpush.bf16.msra.mxu0 %v2844
      %2860 = vmatpush.bf16.msra.mxu0 %v2843
      %2861 = vmatpush.bf16.msra.mxu0 %v2842
      %2862 = vmatpush.bf16.msra.mxu0 %v2841
      %2863 = vmatpush.bf16.msra.mxu0 %v2840
      %2864 = vmatmul.bf16.gmra.mxu0 %v2773
      %v2865 = vpop.f32.mrf.mxu0
      %v2866 = vadd.f32 0.0, %v2865
      %v2867 = vpop.f32.mrf.mxu0
      %v2868 = vadd.f32 0.0, %v2867
      %2869 = vmatmul.bf16.gmra.mxu0 %v2774
      %v2870 = vpop.f32.mrf.mxu0
      %v2871 = vadd.f32 0.0, %v2870
      %v2872 = vpop.f32.mrf.mxu0
      %v2873 = vadd.f32 0.0, %v2872
      %2874 = vmatmul.bf16.gmra.mxu0 %v2775
      %v2875 = vpop.f32.mrf.mxu0
      %v2876 = vadd.f32 0.0, %v2875
      %v2877 = vpop.f32.mrf.mxu0
      %v2878 = vadd.f32 0.0, %v2877
      %2879 = vmatmul.bf16.gmra.mxu0 %v2776
      %v2880 = vpop.f32.mrf.mxu0
      %v2881 = vadd.f32 0.0, %v2880
      %v2882 = vpop.f32.mrf.mxu0
      %v2883 = vadd.f32 0.0, %v2882
      %2884 = vmatmul.bf16.gmra.mxu0 %v2777
      %v2885 = vpop.f32.mrf.mxu0
      %v2886 = vadd.f32 0.0, %v2885
      %v2887 = vpop.f32.mrf.mxu0
      %v2888 = vadd.f32 0.0, %v2887
      %2889 = vmatmul.bf16.gmra.mxu0 %v2778
      %v2890 = vpop.f32.mrf.mxu0
      %v2891 = vadd.f32 0.0, %v2890
      %v2892 = vpop.f32.mrf.mxu0
      %v2893 = vadd.f32 0.0, %v2892
      %2894 = vmatmul.bf16.gmra.mxu0 %v2779
      %v2895 = vpop.f32.mrf.mxu0
      %v2896 = vadd.f32 0.0, %v2895
      %v2897 = vpop.f32.mrf.mxu0
      %v2898 = vadd.f32 0.0, %v2897
      %2899 = vmatmul.bf16.gmra.mxu0 %v2780
      %v2900 = vpop.f32.mrf.mxu0
      %v2901 = vadd.f32 0.0, %v2900
      %v2902 = vpop.f32.mrf.mxu0
      %v2903 = vadd.f32 0.0, %v2902
      %2904 = vmatmul.bf16.gmra.mxu0 %v2781
      %v2905 = vpop.f32.mrf.mxu0
      %v2906 = vadd.f32 0.0, %v2905
      %v2907 = vpop.f32.mrf.mxu0
      %v2908 = vadd.f32 0.0, %v2907
      %2909 = vmatmul.bf16.gmra.mxu0 %v2782
      %v2910 = vpop.f32.mrf.mxu0
      %v2911 = vadd.f32 0.0, %v2910
      %v2912 = vpop.f32.mrf.mxu0
      %v2913 = vadd.f32 0.0, %v2912
      %2914 = vmatmul.bf16.gmra.mxu0 %v2783
      %v2915 = vpop.f32.mrf.mxu0
      %v2916 = vadd.f32 0.0, %v2915
      %v2917 = vpop.f32.mrf.mxu0
      %v2918 = vadd.f32 0.0, %v2917
      %2919 = vmatmul.bf16.gmra.mxu0 %v2784
      %v2920 = vpop.f32.mrf.mxu0
      %v2921 = vadd.f32 0.0, %v2920
      %v2922 = vpop.f32.mrf.mxu0
      %v2923 = vadd.f32 0.0, %v2922
      %2924 = vmatmul.bf16.gmra.mxu0 %v2785
      %v2925 = vpop.f32.mrf.mxu0
      %v2926 = vadd.f32 0.0, %v2925
      %v2927 = vpop.f32.mrf.mxu0
      %v2928 = vadd.f32 0.0, %v2927
      %2929 = vmatmul.bf16.gmra.mxu0 %v2786
      %v2930 = vpop.f32.mrf.mxu0
      %v2931 = vadd.f32 0.0, %v2930
      %v2932 = vpop.f32.mrf.mxu0
      %v2933 = vadd.f32 0.0, %v2932
      %2934 = vmatmul.bf16.gmra.mxu0 %v2787
      %v2935 = vpop.f32.mrf.mxu0
      %v2936 = vadd.f32 0.0, %v2935
      %v2937 = vpop.f32.mrf.mxu0
      %v2938 = vadd.f32 0.0, %v2937
      %2939 = vmatmul.bf16.gmra.mxu0 %v2788
      %v2940 = vpop.f32.mrf.mxu0
      %v2941 = vadd.f32 0.0, %v2940
      %v2942 = vpop.f32.mrf.mxu0
      %v2943 = vadd.f32 0.0, %v2942
      %2944 = vmatmul.bf16.gmra.mxu0 %v2789
      %v2945 = vpop.f32.mrf.mxu0
      %v2946 = vadd.f32 0.0, %v2945
      %v2947 = vpop.f32.mrf.mxu0
      %v2948 = vadd.f32 0.0, %v2947
      %2949 = vmatmul.bf16.gmra.mxu0 %v2790
      %v2950 = vpop.f32.mrf.mxu0
      %v2951 = vadd.f32 0.0, %v2950
      %v2952 = vpop.f32.mrf.mxu0
      %v2953 = vadd.f32 0.0, %v2952
      %2954 = vdwg.mxu0
      %v2955 = vadd.f32 %v2701, %v2866
      %v2956 = vadd.f32 %v2702, %v2868
      %v2957 = vadd.f32 %v2703, %v2871
      %v2958 = vadd.f32 %v2704, %v2873
      %v2959 = vadd.f32 %v2705, %v2876
      %v2960 = vadd.f32 %v2706, %v2878
      %v2961 = vadd.f32 %v2707, %v2881
      %v2962 = vadd.f32 %v2708, %v2883
      %v2963 = vadd.f32 %v2709, %v2886
      %v2964 = vadd.f32 %v2710, %v2888
      %v2965 = vadd.f32 %v2711, %v2891
      %v2966 = vadd.f32 %v2712, %v2893
      %v2967 = vadd.f32 %v2713, %v2896
      %v2968 = vadd.f32 %v2714, %v2898
      %v2969 = vadd.f32 %v2715, %v2901
      %v2970 = vadd.f32 %v2716, %v2903
      %v2971 = vadd.f32 %v2717, %v2906
      %v2972 = vadd.f32 %v2718, %v2908
      %v2973 = vadd.f32 %v2719, %v2911
      %v2974 = vadd.f32 %v2720, %v2913
      %v2975 = vadd.f32 %v2721, %v2916
      %v2976 = vadd.f32 %v2722, %v2918
      %v2977 = vadd.f32 %v2723, %v2921
      %v2978 = vadd.f32 %v2724, %v2923
      %v2979 = vadd.f32 %v2725, %v2926
      %v2980 = vadd.f32 %v2726, %v2928
      %v2981 = vadd.f32 %v2727, %v2931
      %v2982 = vadd.f32 %v2728, %v2933
      %v2983 = vadd.f32 %v2729, %v2936
      %v2984 = vadd.f32 %v2730, %v2938
      %v2985 = vadd.f32 %v2731, %v2941
      %v2986 = vadd.f32 %v2732, %v2943
      %v2987 = vadd.f32 %v2733, %v2946
      %v2988 = vadd.f32 %v2734, %v2948
      %v2989 = vadd.f32 %v2735, %v2951
      %v2990 = vadd.f32 %v2736, %v2953
      %2991 = vst [vmem:[#allocation3] sm:$0xff] %v2955
      %2992 = vst [vmem:[#allocation3 + $0x8] sm:$0xff] %v2956
      %2993 = vst [vmem:[#allocation3 + $0x10] sm:$0xff] %v2957
      %2994 = vst [vmem:[#allocation3 + $0x18] sm:$0xff] %v2958
      %2995 = vst [vmem:[#allocation3 + $0x20] sm:$0xff] %v2959
      %2996 = vst [vmem:[#allocation3 + $0x28] sm:$0xff] %v2960
      %2997 = vst [vmem:[#allocation3 + $0x30] sm:$0xff] %v2961
      %2998 = vst [vmem:[#allocation3 + $0x38] sm:$0xff] %v2962
      %2999 = vst [vmem:[#allocation3 + $0x40] sm:$0xff] %v2963
      %3000 = vst [vmem:[#allocation3 + $0x48] sm:$0xff] %v2964
      %3001 = vst [vmem:[#allocation3 + $0x50] sm:$0xff] %v2965
      %3002 = vst [vmem:[#allocation3 + $0x58] sm:$0xff] %v2966
      %3003 = vst [vmem:[#allocation3 + $0x60] sm:$0xff] %v2967
      %3004 = vst [vmem:[#allocation3 + $0x68] sm:$0xff] %v2968
      %3005 = vst [vmem:[#allocation3 + $0x70] sm:$0xff] %v2969
      %3006 = vst [vmem:[#allocation3 + $0x78] sm:$0xff] %v2970
      %3007 = vst [vmem:[#allocation3 + $0x80] sm:$0xff] %v2971
      %3008 = vst [vmem:[#allocation3 + $0x88] sm:$0xff] %v2972
      %3009 = vst [vmem:[#allocation3 + $0x90] sm:$0xff] %v2973
      %3010 = vst [vmem:[#allocation3 + $0x98] sm:$0xff] %v2974
      %3011 = vst [vmem:[#allocation3 + $0xa0] sm:$0xff] %v2975
      %3012 = vst [vmem:[#allocation3 + $0xa8] sm:$0xff] %v2976
      %3013 = vst [vmem:[#allocation3 + $0xb0] sm:$0xff] %v2977
      %3014 = vst [vmem:[#allocation3 + $0xb8] sm:$0xff] %v2978
      %3015 = vst [vmem:[#allocation3 + $0xc0] sm:$0xff] %v2979
      %3016 = vst [vmem:[#allocation3 + $0xc8] sm:$0xff] %v2980
      %3017 = vst [vmem:[#allocation3 + $0xd0] sm:$0xff] %v2981
      %3018 = vst [vmem:[#allocation3 + $0xd8] sm:$0xff] %v2982
      %3019 = vst [vmem:[#allocation3 + $0xe0] sm:$0xff] %v2983
      %3020 = vst [vmem:[#allocation3 + $0xe8] sm:$0xff] %v2984
      %3021 = vst [vmem:[#allocation3 + $0xf0] sm:$0xff] %v2985
      %3022 = vst [vmem:[#allocation3 + $0xf8] sm:$0xff] %v2986
      %3023 = vst [vmem:[#allocation3 + $0x100] sm:$0xff] %v2987
      %3024 = vst [vmem:[#allocation3 + $0x108] sm:$0xff] %v2988
      %3025 = vst [vmem:[#allocation3 + $0x110] sm:$0xff] %v2989
      %3026 = vst [vmem:[#allocation3 + $0x118] sm:$0xff] %v2990
      %v3027 = vld [vmem:[#allocation3] sm:$0xff]
      %v3028 = vld [vmem:[#allocation3 + $0x8] sm:$0xff]
      %v3029 = vld [vmem:[#allocation3 + $0x10] sm:$0xff]
      %v3030 = vld [vmem:[#allocation3 + $0x18] sm:$0xff]
      %v3031 = vld [vmem:[#allocation3 + $0x20] sm:$0xff]
      %v3032 = vld [vmem:[#allocation3 + $0x28] sm:$0xff]
      %v3033 = vld [vmem:[#allocation3 + $0x30] sm:$0xff]
      %v3034 = vld [vmem:[#allocation3 + $0x38] sm:$0xff]
      %v3035 = vld [vmem:[#allocation3 + $0x40] sm:$0xff]
      %v3036 = vld [vmem:[#allocation3 + $0x48] sm:$0xff]
      %v3037 = vld [vmem:[#allocation3 + $0x50] sm:$0xff]
      %v3038 = vld [vmem:[#allocation3 + $0x58] sm:$0xff]
      %v3039 = vld [vmem:[#allocation3 + $0x60] sm:$0xff]
      %v3040 = vld [vmem:[#allocation3 + $0x68] sm:$0xff]
      %v3041 = vld [vmem:[#allocation3 + $0x70] sm:$0xff]
      %v3042 = vld [vmem:[#allocation3 + $0x78] sm:$0xff]
      %v3043 = vld [vmem:[#allocation3 + $0x80] sm:$0xff]
      %v3044 = vld [vmem:[#allocation3 + $0x88] sm:$0xff]
      %v3045 = vld [vmem:[#allocation3 + $0x90] sm:$0xff]
      %v3046 = vld [vmem:[#allocation3 + $0x98] sm:$0xff]
      %v3047 = vld [vmem:[#allocation3 + $0xa0] sm:$0xff]
      %v3048 = vld [vmem:[#allocation3 + $0xa8] sm:$0xff]
      %v3049 = vld [vmem:[#allocation3 + $0xb0] sm:$0xff]
      %v3050 = vld [vmem:[#allocation3 + $0xb8] sm:$0xff]
      %v3051 = vld [vmem:[#allocation3 + $0xc0] sm:$0xff]
      %v3052 = vld [vmem:[#allocation3 + $0xc8] sm:$0xff]
      %v3053 = vld [vmem:[#allocation3 + $0xd0] sm:$0xff]
      %v3054 = vld [vmem:[#allocation3 + $0xd8] sm:$0xff]
      %v3055 = vld [vmem:[#allocation3 + $0xe0] sm:$0xff]
      %v3056 = vld [vmem:[#allocation3 + $0xe8] sm:$0xff]
      %v3057 = vld [vmem:[#allocation3 + $0xf0] sm:$0xff]
      %v3058 = vld [vmem:[#allocation3 + $0xf8] sm:$0xff]
      %v3059 = vld [vmem:[#allocation3 + $0x100] sm:$0xff]
      %v3060 = vld [vmem:[#allocation3 + $0x108] sm:$0xff]
      %v3061 = vld [vmem:[#allocation3 + $0x110] sm:$0xff]
      %v3062 = vld [vmem:[#allocation3 + $0x118] sm:$0xff]
      %v3063 = vld [vmem:[#allocation2 + $0x33] sm:$0xff]
      %v3064 = vld [vmem:[#allocation2 + $0x3b] sm:$0xff]
      %v3065 = vld [vmem:[#allocation2 + $0x43] sm:$0xff]
      %v3066 = vld [vmem:[#allocation2 + $0x4b] sm:$0xff]
      %v3067 = vld [vmem:[#allocation2 + $0x53] sm:$0xff]
      %v3068 = vld [vmem:[#allocation2 + $0x5b] sm:$0xff]
      %v3069 = vld [vmem:[#allocation2 + $0x63] sm:$0xff]
      %v3070 = vld [vmem:[#allocation2 + $0x6b] sm:$0xff]
      %v3071 = vld [vmem:[#allocation2 + $0x73] sm:$0xff]
      %v3072 = vld [vmem:[#allocation2 + $0x7b] sm:$0xff]
      %v3073 = vld [vmem:[#allocation2 + $0x83] sm:$0xff]
      %v3074 = vld [vmem:[#allocation2 + $0x8b] sm:$0xff]
      %v3075 = vld [vmem:[#allocation2 + $0x93] sm:$0xff]
      %v3076 = vld [vmem:[#allocation2 + $0x9b] sm:$0xff]
      %v3077 = vld [vmem:[#allocation2 + $0xa3] sm:$0xff]
      %v3078 = vld [vmem:[#allocation2 + $0xab] sm:$0xff]
      %v3079 = vld [vmem:[#allocation2 + $0xb3] sm:$0xff]
      %v3080 = vld [vmem:[#allocation2 + $0xbb] sm:$0xff]
      %v3081 = vld [vmem:[#allocation2 + $0xc3] sm:$0xff]
      %v3082 = vld [vmem:[#allocation2 + $0xcb] sm:$0xff]
      %v3083 = vld [vmem:[#allocation2 + $0xd3] sm:$0xff]
      %v3084 = vld [vmem:[#allocation2 + $0xdb] sm:$0xff]
      %v3085 = vld [vmem:[#allocation2 + $0xe3] sm:$0xff]
      %v3086 = vld [vmem:[#allocation2 + $0xeb] sm:$0xff]
      %v3087 = vld [vmem:[#allocation2 + $0xf3] sm:$0xff]
      %v3088 = vld [vmem:[#allocation2 + $0xfb] sm:$0xff]
      %v3089 = vld [vmem:[#allocation2 + $0x103] sm:$0xff]
      %v3090 = vld [vmem:[#allocation2 + $0x10b] sm:$0xff]
      %v3091 = vld [vmem:[#allocation2 + $0x113] sm:$0xff]
      %v3092 = vld [vmem:[#allocation2 + $0x11b] sm:$0xff]
      %v3093 = vld [vmem:[#allocation2 + $0x123] sm:$0xff]
      %v3094 = vld [vmem:[#allocation2 + $0x12b] sm:$0xff]
      %v3095 = vld [vmem:[#allocation2 + $0x133] sm:$0xff]
      %v3096 = vld [vmem:[#allocation2 + $0x13b] sm:$0xff]
      %v3097 = vld [vmem:[#allocation2 + $0x143] sm:$0xff]
      %v3098 = vld [vmem:[#allocation2 + $0x14b] sm:$0xff]
      %v3099 = vpack.c.bf16 %v3064, %v3063
      %v3100 = vpack.c.bf16 %v3066, %v3065
      %v3101 = vpack.c.bf16 %v3068, %v3067
      %v3102 = vpack.c.bf16 %v3070, %v3069
      %v3103 = vpack.c.bf16 %v3072, %v3071
      %v3104 = vpack.c.bf16 %v3074, %v3073
      %v3105 = vpack.c.bf16 %v3076, %v3075
      %v3106 = vpack.c.bf16 %v3078, %v3077
      %v3107 = vpack.c.bf16 %v3080, %v3079
      %v3108 = vpack.c.bf16 %v3082, %v3081
      %v3109 = vpack.c.bf16 %v3084, %v3083
      %v3110 = vpack.c.bf16 %v3086, %v3085
      %v3111 = vpack.c.bf16 %v3088, %v3087
      %v3112 = vpack.c.bf16 %v3090, %v3089
      %v3113 = vpack.c.bf16 %v3092, %v3091
      %v3114 = vpack.c.bf16 %v3094, %v3093
      %v3115 = vpack.c.bf16 %v3096, %v3095
      %v3116 = vpack.c.bf16 %v3098, %v3097
      %s3117 = scalar_lea.vmem %s1, 512
      %v3118 = vld [vmem:[%s3117] sm:$0xf]
      %v3119 = vld [vmem:[%s3117 + $0x4] sm:$0xf]
      %v3120 = vld [vmem:[%s3117 + $0x8] sm:$0xf]
      %v3121 = vld [vmem:[%s3117 + $0xc] sm:$0xf]
      %v3122 = vld [vmem:[%s3117 + $0x10] sm:$0xf]
      %v3123 = vld [vmem:[%s3117 + $0x14] sm:$0xf]
      %v3124 = vld [vmem:[%s3117 + $0x18] sm:$0xf]
      %v3125 = vld [vmem:[%s3117 + $0x1c] sm:$0xf]
      %v3126 = vld [vmem:[%s3117 + $0x20] sm:$0xf]
      %v3127 = vld [vmem:[%s3117 + $0x24] sm:$0xf]
      %v3128 = vld [vmem:[%s3117 + $0x28] sm:$0xf]
      %v3129 = vld [vmem:[%s3117 + $0x2c] sm:$0xf]
      %v3130 = vld [vmem:[%s3117 + $0x30] sm:$0xf]
      %v3131 = vld [vmem:[%s3117 + $0x34] sm:$0xf]
      %v3132 = vld [vmem:[%s3117 + $0x38] sm:$0xf]
      %v3133 = vld [vmem:[%s3117 + $0x3c] sm:$0xf]
      %v3150 = vunpack.c.l.b16 %v3118
      %v3151 = vunpack.c.l.b16 %v3119
      %v3152 = vunpack.c.l.b16 %v3120
      %v3153 = vunpack.c.l.b16 %v3121
      %v3154 = vunpack.c.l.b16 %v3122
      %v3155 = vunpack.c.l.b16 %v3123
      %v3156 = vunpack.c.l.b16 %v3124
      %v3157 = vunpack.c.l.b16 %v3125
      %v3158 = vunpack.c.l.b16 %v3126
      %v3159 = vunpack.c.l.b16 %v3127
      %v3160 = vunpack.c.l.b16 %v3128
      %v3161 = vunpack.c.l.b16 %v3129
      %v3162 = vunpack.c.l.b16 %v3130
      %v3163 = vunpack.c.l.b16 %v3131
      %v3164 = vunpack.c.l.b16 %v3132
      %v3165 = vunpack.c.l.b16 %v3133
      %v3166 = vpack.c.b16 %v3151, %v3150
      %v3167 = vpack.c.b16 %v3153, %v3152
      %v3168 = vpack.c.b16 %v3155, %v3154
      %v3169 = vpack.c.b16 %v3157, %v3156
      %v3170 = vpack.c.b16 %v3159, %v3158
      %v3171 = vpack.c.b16 %v3161, %v3160
      %v3172 = vpack.c.b16 %v3163, %v3162
      %v3173 = vpack.c.b16 %v3165, %v3164
      %3182 = vmatpush.bf16.msra.mxu0 %v3173
      %3183 = vmatpush.bf16.msra.mxu0 %v3172
      %3184 = vmatpush.bf16.msra.mxu0 %v3171
      %3185 = vmatpush.bf16.msra.mxu0 %v3170
      %3186 = vmatpush.bf16.msra.mxu0 %v3169
      %3187 = vmatpush.bf16.msra.mxu0 %v3168
      %3188 = vmatpush.bf16.msra.mxu0 %v3167
      %3189 = vmatpush.bf16.msra.mxu0 %v3166
      %3190 = vmatmul.bf16.gmra.mxu0 %v3099
      %v3191 = vpop.f32.mrf.mxu0
      %v3192 = vadd.f32 0.0, %v3191
      %v3193 = vpop.f32.mrf.mxu0
      %v3194 = vadd.f32 0.0, %v3193
      %3195 = vmatmul.bf16.gmra.mxu0 %v3100
      %v3196 = vpop.f32.mrf.mxu0
      %v3197 = vadd.f32 0.0, %v3196
      %v3198 = vpop.f32.mrf.mxu0
      %v3199 = vadd.f32 0.0, %v3198
      %3200 = vmatmul.bf16.gmra.mxu0 %v3101
      %v3201 = vpop.f32.mrf.mxu0
      %v3202 = vadd.f32 0.0, %v3201
      %v3203 = vpop.f32.mrf.mxu0
      %v3204 = vadd.f32 0.0, %v3203
      %3205 = vmatmul.bf16.gmra.mxu0 %v3102
      %v3206 = vpop.f32.mrf.mxu0
      %v3207 = vadd.f32 0.0, %v3206
      %v3208 = vpop.f32.mrf.mxu0
      %v3209 = vadd.f32 0.0, %v3208
      %3210 = vmatmul.bf16.gmra.mxu0 %v3103
      %v3211 = vpop.f32.mrf.mxu0
      %v3212 = vadd.f32 0.0, %v3211
      %v3213 = vpop.f32.mrf.mxu0
      %v3214 = vadd.f32 0.0, %v3213
      %3215 = vmatmul.bf16.gmra.mxu0 %v3104
      %v3216 = vpop.f32.mrf.mxu0
      %v3217 = vadd.f32 0.0, %v3216
      %v3218 = vpop.f32.mrf.mxu0
      %v3219 = vadd.f32 0.0, %v3218
      %3220 = vmatmul.bf16.gmra.mxu0 %v3105
      %v3221 = vpop.f32.mrf.mxu0
      %v3222 = vadd.f32 0.0, %v3221
      %v3223 = vpop.f32.mrf.mxu0
      %v3224 = vadd.f32 0.0, %v3223
      %3225 = vmatmul.bf16.gmra.mxu0 %v3106
      %v3226 = vpop.f32.mrf.mxu0
      %v3227 = vadd.f32 0.0, %v3226
      %v3228 = vpop.f32.mrf.mxu0
      %v3229 = vadd.f32 0.0, %v3228
      %3230 = vmatmul.bf16.gmra.mxu0 %v3107
      %v3231 = vpop.f32.mrf.mxu0
      %v3232 = vadd.f32 0.0, %v3231
      %v3233 = vpop.f32.mrf.mxu0
      %v3234 = vadd.f32 0.0, %v3233
      %3235 = vmatmul.bf16.gmra.mxu0 %v3108
      %v3236 = vpop.f32.mrf.mxu0
      %v3237 = vadd.f32 0.0, %v3236
      %v3238 = vpop.f32.mrf.mxu0
      %v3239 = vadd.f32 0.0, %v3238
      %3240 = vmatmul.bf16.gmra.mxu0 %v3109
      %v3241 = vpop.f32.mrf.mxu0
      %v3242 = vadd.f32 0.0, %v3241
      %v3243 = vpop.f32.mrf.mxu0
      %v3244 = vadd.f32 0.0, %v3243
      %3245 = vmatmul.bf16.gmra.mxu0 %v3110
      %v3246 = vpop.f32.mrf.mxu0
      %v3247 = vadd.f32 0.0, %v3246
      %v3248 = vpop.f32.mrf.mxu0
      %v3249 = vadd.f32 0.0, %v3248
      %3250 = vmatmul.bf16.gmra.mxu0 %v3111
      %v3251 = vpop.f32.mrf.mxu0
      %v3252 = vadd.f32 0.0, %v3251
      %v3253 = vpop.f32.mrf.mxu0
      %v3254 = vadd.f32 0.0, %v3253
      %3255 = vmatmul.bf16.gmra.mxu0 %v3112
      %v3256 = vpop.f32.mrf.mxu0
      %v3257 = vadd.f32 0.0, %v3256
      %v3258 = vpop.f32.mrf.mxu0
      %v3259 = vadd.f32 0.0, %v3258
      %3260 = vmatmul.bf16.gmra.mxu0 %v3113
      %v3261 = vpop.f32.mrf.mxu0
      %v3262 = vadd.f32 0.0, %v3261
      %v3263 = vpop.f32.mrf.mxu0
      %v3264 = vadd.f32 0.0, %v3263
      %3265 = vmatmul.bf16.gmra.mxu0 %v3114
      %v3266 = vpop.f32.mrf.mxu0
      %v3267 = vadd.f32 0.0, %v3266
      %v3268 = vpop.f32.mrf.mxu0
      %v3269 = vadd.f32 0.0, %v3268
      %3270 = vmatmul.bf16.gmra.mxu0 %v3115
      %v3271 = vpop.f32.mrf.mxu0
      %v3272 = vadd.f32 0.0, %v3271
      %v3273 = vpop.f32.mrf.mxu0
      %v3274 = vadd.f32 0.0, %v3273
      %3275 = vmatmul.bf16.gmra.mxu0 %v3116
      %v3276 = vpop.f32.mrf.mxu0
      %v3277 = vadd.f32 0.0, %v3276
      %v3278 = vpop.f32.mrf.mxu0
      %v3279 = vadd.f32 0.0, %v3278
      %3280 = vdwg.mxu0
      %v3281 = vadd.f32 %v3027, %v3192
      %v3282 = vadd.f32 %v3028, %v3194
      %v3283 = vadd.f32 %v3029, %v3197
      %v3284 = vadd.f32 %v3030, %v3199
      %v3285 = vadd.f32 %v3031, %v3202
      %v3286 = vadd.f32 %v3032, %v3204
      %v3287 = vadd.f32 %v3033, %v3207
      %v3288 = vadd.f32 %v3034, %v3209
      %v3289 = vadd.f32 %v3035, %v3212
      %v3290 = vadd.f32 %v3036, %v3214
      %v3291 = vadd.f32 %v3037, %v3217
      %v3292 = vadd.f32 %v3038, %v3219
      %v3293 = vadd.f32 %v3039, %v3222
      %v3294 = vadd.f32 %v3040, %v3224
      %v3295 = vadd.f32 %v3041, %v3227
      %v3296 = vadd.f32 %v3042, %v3229
      %v3297 = vadd.f32 %v3043, %v3232
      %v3298 = vadd.f32 %v3044, %v3234
      %v3299 = vadd.f32 %v3045, %v3237
      %v3300 = vadd.f32 %v3046, %v3239
      %v3301 = vadd.f32 %v3047, %v3242
      %v3302 = vadd.f32 %v3048, %v3244
      %v3303 = vadd.f32 %v3049, %v3247
      %v3304 = vadd.f32 %v3050, %v3249
      %v3305 = vadd.f32 %v3051, %v3252
      %v3306 = vadd.f32 %v3052, %v3254
      %v3307 = vadd.f32 %v3053, %v3257
      %v3308 = vadd.f32 %v3054, %v3259
      %v3309 = vadd.f32 %v3055, %v3262
      %v3310 = vadd.f32 %v3056, %v3264
      %v3311 = vadd.f32 %v3057, %v3267
      %v3312 = vadd.f32 %v3058, %v3269
      %v3313 = vadd.f32 %v3059, %v3272
      %v3314 = vadd.f32 %v3060, %v3274
      %v3315 = vadd.f32 %v3061, %v3277
      %v3316 = vadd.f32 %v3062, %v3279
      %3317 = vst [vmem:[#allocation3] sm:$0xff] %v3281
      %3318 = vst [vmem:[#allocation3 + $0x8] sm:$0xff] %v3282
      %3319 = vst [vmem:[#allocation3 + $0x10] sm:$0xff] %v3283
      %3320 = vst [vmem:[#allocation3 + $0x18] sm:$0xff] %v3284
      %3321 = vst [vmem:[#allocation3 + $0x20] sm:$0xff] %v3285
      %3322 = vst [vmem:[#allocation3 + $0x28] sm:$0xff] %v3286
      %3323 = vst [vmem:[#allocation3 + $0x30] sm:$0xff] %v3287
      %3324 = vst [vmem:[#allocation3 + $0x38] sm:$0xff] %v3288
      %3325 = vst [vmem:[#allocation3 + $0x40] sm:$0xff] %v3289
      %3326 = vst [vmem:[#allocation3 + $0x48] sm:$0xff] %v3290
      %3327 = vst [vmem:[#allocation3 + $0x50] sm:$0xff] %v3291
      %3328 = vst [vmem:[#allocation3 + $0x58] sm:$0xff] %v3292
      %3329 = vst [vmem:[#allocation3 + $0x60] sm:$0xff] %v3293
      %3330 = vst [vmem:[#allocation3 + $0x68] sm:$0xff] %v3294
      %3331 = vst [vmem:[#allocation3 + $0x70] sm:$0xff] %v3295
      %3332 = vst [vmem:[#allocation3 + $0x78] sm:$0xff] %v3296
      %3333 = vst [vmem:[#allocation3 + $0x80] sm:$0xff] %v3297
      %3334 = vst [vmem:[#allocation3 + $0x88] sm:$0xff] %v3298
      %3335 = vst [vmem:[#allocation3 + $0x90] sm:$0xff] %v3299
      %3336 = vst [vmem:[#allocation3 + $0x98] sm:$0xff] %v3300
      %3337 = vst [vmem:[#allocation3 + $0xa0] sm:$0xff] %v3301
      %3338 = vst [vmem:[#allocation3 + $0xa8] sm:$0xff] %v3302
      %3339 = vst [vmem:[#allocation3 + $0xb0] sm:$0xff] %v3303
      %3340 = vst [vmem:[#allocation3 + $0xb8] sm:$0xff] %v3304
      %3341 = vst [vmem:[#allocation3 + $0xc0] sm:$0xff] %v3305
      %3342 = vst [vmem:[#allocation3 + $0xc8] sm:$0xff] %v3306
      %3343 = vst [vmem:[#allocation3 + $0xd0] sm:$0xff] %v3307
      %3344 = vst [vmem:[#allocation3 + $0xd8] sm:$0xff] %v3308
      %3345 = vst [vmem:[#allocation3 + $0xe0] sm:$0xff] %v3309
      %3346 = vst [vmem:[#allocation3 + $0xe8] sm:$0xff] %v3310
      %3347 = vst [vmem:[#allocation3 + $0xf0] sm:$0xff] %v3311
      %3348 = vst [vmem:[#allocation3 + $0xf8] sm:$0xff] %v3312
      %3349 = vst [vmem:[#allocation3 + $0x100] sm:$0xff] %v3313
      %3350 = vst [vmem:[#allocation3 + $0x108] sm:$0xff] %v3314
      %3351 = vst [vmem:[#allocation3 + $0x110] sm:$0xff] %v3315
      %3352 = vst [vmem:[#allocation3 + $0x118] sm:$0xff] %v3316
      %v3353 = vld [vmem:[#allocation3] sm:$0xff]
      %v3354 = vld [vmem:[#allocation3 + $0x8] sm:$0xff]
      %v3355 = vld [vmem:[#allocation3 + $0x10] sm:$0xff]
      %v3356 = vld [vmem:[#allocation3 + $0x18] sm:$0xff]
      %v3357 = vld [vmem:[#allocation3 + $0x20] sm:$0xff]
      %v3358 = vld [vmem:[#allocation3 + $0x28] sm:$0xff]
      %v3359 = vld [vmem:[#allocation3 + $0x30] sm:$0xff]
      %v3360 = vld [vmem:[#allocation3 + $0x38] sm:$0xff]
      %v3361 = vld [vmem:[#allocation3 + $0x40] sm:$0xff]
      %v3362 = vld [vmem:[#allocation3 + $0x48] sm:$0xff]
      %v3363 = vld [vmem:[#allocation3 + $0x50] sm:$0xff]
      %v3364 = vld [vmem:[#allocation3 + $0x58] sm:$0xff]
      %v3365 = vld [vmem:[#allocation3 + $0x60] sm:$0xff]
      %v3366 = vld [vmem:[#allocation3 + $0x68] sm:$0xff]
      %v3367 = vld [vmem:[#allocation3 + $0x70] sm:$0xff]
      %v3368 = vld [vmem:[#allocation3 + $0x78] sm:$0xff]
      %v3369 = vld [vmem:[#allocation3 + $0x80] sm:$0xff]
      %v3370 = vld [vmem:[#allocation3 + $0x88] sm:$0xff]
      %v3371 = vld [vmem:[#allocation3 + $0x90] sm:$0xff]
      %v3372 = vld [vmem:[#allocation3 + $0x98] sm:$0xff]
      %v3373 = vld [vmem:[#allocation3 + $0xa0] sm:$0xff]
      %v3374 = vld [vmem:[#allocation3 + $0xa8] sm:$0xff]
      %v3375 = vld [vmem:[#allocation3 + $0xb0] sm:$0xff]
      %v3376 = vld [vmem:[#allocation3 + $0xb8] sm:$0xff]
      %v3377 = vld [vmem:[#allocation3 + $0xc0] sm:$0xff]
      %v3378 = vld [vmem:[#allocation3 + $0xc8] sm:$0xff]
      %v3379 = vld [vmem:[#allocation3 + $0xd0] sm:$0xff]
      %v3380 = vld [vmem:[#allocation3 + $0xd8] sm:$0xff]
      %v3381 = vld [vmem:[#allocation3 + $0xe0] sm:$0xff]
      %v3382 = vld [vmem:[#allocation3 + $0xe8] sm:$0xff]
      %v3383 = vld [vmem:[#allocation3 + $0xf0] sm:$0xff]
      %v3384 = vld [vmem:[#allocation3 + $0xf8] sm:$0xff]
      %v3385 = vld [vmem:[#allocation3 + $0x100] sm:$0xff]
      %v3386 = vld [vmem:[#allocation3 + $0x108] sm:$0xff]
      %v3387 = vld [vmem:[#allocation3 + $0x110] sm:$0xff]
      %v3388 = vld [vmem:[#allocation3 + $0x118] sm:$0xff]
      %v3389 = vld [vmem:[%s2] sm:$0x1]
      %v3391 = vperm.slane %v3389, 0
      %v3393 = vadd.f32 %v3353, %v3391
      %v3394 = vadd.f32 %v3354, %v3391
      %v3395 = vadd.f32 %v3355, %v3391
      %v3396 = vadd.f32 %v3356, %v3391
      %v3397 = vadd.f32 %v3357, %v3391
      %v3398 = vadd.f32 %v3358, %v3391
      %v3399 = vadd.f32 %v3359, %v3391
      %v3400 = vadd.f32 %v3360, %v3391
      %v3401 = vadd.f32 %v3361, %v3391
      %v3402 = vadd.f32 %v3362, %v3391
      %v3403 = vadd.f32 %v3363, %v3391
      %v3404 = vadd.f32 %v3364, %v3391
      %v3405 = vadd.f32 %v3365, %v3391
      %v3406 = vadd.f32 %v3366, %v3391
      %v3407 = vadd.f32 %v3367, %v3391
      %v3408 = vadd.f32 %v3368, %v3391
      %v3409 = vadd.f32 %v3369, %v3391
      %v3410 = vadd.f32 %v3370, %v3391
      %v3411 = vadd.f32 %v3371, %v3391
      %v3412 = vadd.f32 %v3372, %v3391
      %v3413 = vadd.f32 %v3373, %v3391
      %v3414 = vadd.f32 %v3374, %v3391
      %v3415 = vadd.f32 %v3375, %v3391
      %v3416 = vadd.f32 %v3376, %v3391
      %v3417 = vadd.f32 %v3377, %v3391
      %v3418 = vadd.f32 %v3378, %v3391
      %v3419 = vadd.f32 %v3379, %v3391
      %v3420 = vadd.f32 %v3380, %v3391
      %v3421 = vadd.f32 %v3381, %v3391
      %v3422 = vadd.f32 %v3382, %v3391
      %v3423 = vadd.f32 %v3383, %v3391
      %v3424 = vadd.f32 %v3384, %v3391
      %v3425 = vadd.f32 %v3385, %v3391
      %v3426 = vadd.f32 %v3386, %v3391
      %v3427 = vadd.f32 %v3387, %v3391
      %v3428 = vadd.f32 %v3388, %v3391
      %v3429 = vmax.f32 %v3393, 0.0
      %v3430 = vmax.f32 %v3394, 0.0
      %v3431 = vmax.f32 %v3395, 0.0
      %v3432 = vmax.f32 %v3396, 0.0
      %v3433 = vmax.f32 %v3397, 0.0
      %v3434 = vmax.f32 %v3398, 0.0
      %v3435 = vmax.f32 %v3399, 0.0
      %v3436 = vmax.f32 %v3400, 0.0
      %v3437 = vmax.f32 %v3401, 0.0
      %v3438 = vmax.f32 %v3402, 0.0
      %v3439 = vmax.f32 %v3403, 0.0
      %v3440 = vmax.f32 %v3404, 0.0
      %v3441 = vmax.f32 %v3405, 0.0
      %v3442 = vmax.f32 %v3406, 0.0
      %v3443 = vmax.f32 %v3407, 0.0
      %v3444 = vmax.f32 %v3408, 0.0
      %v3445 = vmax.f32 %v3409, 0.0
      %v3446 = vmax.f32 %v3410, 0.0
      %v3447 = vmax.f32 %v3411, 0.0
      %v3448 = vmax.f32 %v3412, 0.0
      %v3449 = vmax.f32 %v3413, 0.0
      %v3450 = vmax.f32 %v3414, 0.0
      %v3451 = vmax.f32 %v3415, 0.0
      %v3452 = vmax.f32 %v3416, 0.0
      %v3453 = vmax.f32 %v3417, 0.0
      %v3454 = vmax.f32 %v3418, 0.0
      %v3455 = vmax.f32 %v3419, 0.0
      %v3456 = vmax.f32 %v3420, 0.0
      %v3457 = vmax.f32 %v3421, 0.0
      %v3458 = vmax.f32 %v3422, 0.0
      %v3459 = vmax.f32 %v3423, 0.0
      %v3460 = vmax.f32 %v3424, 0.0
      %v3461 = vmax.f32 %v3425, 0.0
      %v3462 = vmax.f32 %v3426, 0.0
      %v3463 = vmax.f32 %v3427, 0.0
      %v3464 = vmax.f32 %v3428, 0.0
      %v3465 = vld [vmem:[%s5] sm:$0xff]
      %v3466 = vld [vmem:[%s5 + $0x8] sm:$0xff]
      %v3467 = vld [vmem:[%s5 + $0x10] sm:$0xff]
      %v3468 = vld [vmem:[%s5 + $0x18] sm:$0xff]
      %v3469 = vld [vmem:[%s5 + $0x20] sm:$0xff]
      %v3470 = vld [vmem:[%s5 + $0x28] sm:$0xff]
      %v3471 = vld [vmem:[%s5 + $0x30] sm:$0xff]
      %v3472 = vld [vmem:[%s5 + $0x38] sm:$0xff]
      %v3473 = vld [vmem:[%s5 + $0x40] sm:$0xff]
      %v3474 = vld [vmem:[%s5 + $0x48] sm:$0xff]
      %v3475 = vld [vmem:[%s5 + $0x50] sm:$0xff]
      %v3476 = vld [vmem:[%s5 + $0x58] sm:$0xff]
      %v3477 = vld [vmem:[%s5 + $0x60] sm:$0xff]
      %v3478 = vld [vmem:[%s5 + $0x68] sm:$0xff]
      %v3479 = vld [vmem:[%s5 + $0x70] sm:$0xff]
      %v3480 = vld [vmem:[%s5 + $0x78] sm:$0xff]
      %v3481 = vld [vmem:[%s5 + $0x80] sm:$0xff]
      %v3482 = vld [vmem:[%s5 + $0x88] sm:$0xff]
      %v3483 = vld [vmem:[%s5 + $0x90] sm:$0xff]
      %v3484 = vld [vmem:[%s5 + $0x98] sm:$0xff]
      %v3485 = vld [vmem:[%s5 + $0xa0] sm:$0xff]
      %v3486 = vld [vmem:[%s5 + $0xa8] sm:$0xff]
      %v3487 = vld [vmem:[%s5 + $0xb0] sm:$0xff]
      %v3488 = vld [vmem:[%s5 + $0xb8] sm:$0xff]
      %v3489 = vld [vmem:[%s5 + $0xc0] sm:$0xff]
      %v3490 = vld [vmem:[%s5 + $0xc8] sm:$0xff]
      %v3491 = vld [vmem:[%s5 + $0xd0] sm:$0xff]
      %v3492 = vld [vmem:[%s5 + $0xd8] sm:$0xff]
      %v3493 = vld [vmem:[%s5 + $0xe0] sm:$0xff]
      %v3494 = vld [vmem:[%s5 + $0xe8] sm:$0xff]
      %v3495 = vld [vmem:[%s5 + $0xf0] sm:$0xff]
      %v3496 = vld [vmem:[%s5 + $0xf8] sm:$0xff]
      %v3497 = vld [vmem:[%s5 + $0x100] sm:$0xff]
      %v3498 = vld [vmem:[%s5 + $0x108] sm:$0xff]
      %v3499 = vld [vmem:[%s5 + $0x110] sm:$0xff]
      %v3500 = vld [vmem:[%s5 + $0x118] sm:$0xff]
      %3502 = vset.pattern.permute.xlu0 0
      %3503 = vperm.xlu0 %3502, %v3465
      %v3504 = vpop.permute.xlu0 %3503
      %3507 = vset.pattern.permute.xlu0 0
      %3508 = vperm.xlu0 %3507, %v3466
      %v3509 = vpop.permute.xlu0 %3508
      %3512 = vset.pattern.permute.xlu0 0
      %3513 = vperm.xlu0 %3512, %v3467
      %v3514 = vpop.permute.xlu0 %3513
      %3517 = vset.pattern.permute.xlu0 0
      %3518 = vperm.xlu0 %3517, %v3468
      %v3519 = vpop.permute.xlu0 %3518
      %3522 = vset.pattern.permute.xlu0 0
      %3523 = vperm.xlu0 %3522, %v3469
      %v3524 = vpop.permute.xlu0 %3523
      %3527 = vset.pattern.permute.xlu0 0
      %3528 = vperm.xlu0 %3527, %v3470
      %v3529 = vpop.permute.xlu0 %3528
      %3532 = vset.pattern.permute.xlu0 0
      %3533 = vperm.xlu0 %3532, %v3471
      %v3534 = vpop.permute.xlu0 %3533
      %3537 = vset.pattern.permute.xlu0 0
      %3538 = vperm.xlu0 %3537, %v3472
      %v3539 = vpop.permute.xlu0 %3538
      %3542 = vset.pattern.permute.xlu0 0
      %3543 = vperm.xlu0 %3542, %v3473
      %v3544 = vpop.permute.xlu0 %3543
      %3547 = vset.pattern.permute.xlu0 0
      %3548 = vperm.xlu0 %3547, %v3474
      %v3549 = vpop.permute.xlu0 %3548
      %3552 = vset.pattern.permute.xlu0 0
      %3553 = vperm.xlu0 %3552, %v3475
      %v3554 = vpop.permute.xlu0 %3553
      %3557 = vset.pattern.permute.xlu0 0
      %3558 = vperm.xlu0 %3557, %v3476
      %v3559 = vpop.permute.xlu0 %3558
      %3562 = vset.pattern.permute.xlu0 0
      %3563 = vperm.xlu0 %3562, %v3477
      %v3564 = vpop.permute.xlu0 %3563
      %3567 = vset.pattern.permute.xlu0 0
      %3568 = vperm.xlu0 %3567, %v3478
      %v3569 = vpop.permute.xlu0 %3568
      %3572 = vset.pattern.permute.xlu0 0
      %3573 = vperm.xlu0 %3572, %v3479
      %v3574 = vpop.permute.xlu0 %3573
      %3577 = vset.pattern.permute.xlu0 0
      %3578 = vperm.xlu0 %3577, %v3480
      %v3579 = vpop.permute.xlu0 %3578
      %3582 = vset.pattern.permute.xlu0 0
      %3583 = vperm.xlu0 %3582, %v3481
      %v3584 = vpop.permute.xlu0 %3583
      %3587 = vset.pattern.permute.xlu0 0
      %3588 = vperm.xlu0 %3587, %v3482
      %v3589 = vpop.permute.xlu0 %3588
      %3592 = vset.pattern.permute.xlu0 0
      %3593 = vperm.xlu0 %3592, %v3483
      %v3594 = vpop.permute.xlu0 %3593
      %3597 = vset.pattern.permute.xlu0 0
      %3598 = vperm.xlu0 %3597, %v3484
      %v3599 = vpop.permute.xlu0 %3598
      %3602 = vset.pattern.permute.xlu0 0
      %3603 = vperm.xlu0 %3602, %v3485
      %v3604 = vpop.permute.xlu0 %3603
      %3607 = vset.pattern.permute.xlu0 0
      %3608 = vperm.xlu0 %3607, %v3486
      %v3609 = vpop.permute.xlu0 %3608
      %3612 = vset.pattern.permute.xlu0 0
      %3613 = vperm.xlu0 %3612, %v3487
      %v3614 = vpop.permute.xlu0 %3613
      %3617 = vset.pattern.permute.xlu0 0
      %3618 = vperm.xlu0 %3617, %v3488
      %v3619 = vpop.permute.xlu0 %3618
      %3622 = vset.pattern.permute.xlu0 0
      %3623 = vperm.xlu0 %3622, %v3489
      %v3624 = vpop.permute.xlu0 %3623
      %3627 = vset.pattern.permute.xlu0 0
      %3628 = vperm.xlu0 %3627, %v3490
      %v3629 = vpop.permute.xlu0 %3628
      %3632 = vset.pattern.permute.xlu0 0
      %3633 = vperm.xlu0 %3632, %v3491
      %v3634 = vpop.permute.xlu0 %3633
      %3637 = vset.pattern.permute.xlu0 0
      %3638 = vperm.xlu0 %3637, %v3492
      %v3639 = vpop.permute.xlu0 %3638
      %3642 = vset.pattern.permute.xlu0 0
      %3643 = vperm.xlu0 %3642, %v3493
      %v3644 = vpop.permute.xlu0 %3643
      %3647 = vset.pattern.permute.xlu0 0
      %3648 = vperm.xlu0 %3647, %v3494
      %v3649 = vpop.permute.xlu0 %3648
      %3652 = vset.pattern.permute.xlu0 0
      %3653 = vperm.xlu0 %3652, %v3495
      %v3654 = vpop.permute.xlu0 %3653
      %3657 = vset.pattern.permute.xlu0 0
      %3658 = vperm.xlu0 %3657, %v3496
      %v3659 = vpop.permute.xlu0 %3658
      %3662 = vset.pattern.permute.xlu0 0
      %3663 = vperm.xlu0 %3662, %v3497
      %v3664 = vpop.permute.xlu0 %3663
      %3667 = vset.pattern.permute.xlu0 0
      %3668 = vperm.xlu0 %3667, %v3498
      %v3669 = vpop.permute.xlu0 %3668
      %3672 = vset.pattern.permute.xlu0 0
      %3673 = vperm.xlu0 %3672, %v3499
      %v3674 = vpop.permute.xlu0 %3673
      %3677 = vset.pattern.permute.xlu0 0
      %3678 = vperm.xlu0 %3677, %v3500
      %v3679 = vpop.permute.xlu0 %3678
      %v3681 = vmul.f32 %v3429, %v3504
      %v3682 = vmul.f32 %v3430, %v3509
      %v3683 = vmul.f32 %v3431, %v3514
      %v3684 = vmul.f32 %v3432, %v3519
      %v3685 = vmul.f32 %v3433, %v3524
      %v3686 = vmul.f32 %v3434, %v3529
      %v3687 = vmul.f32 %v3435, %v3534
      %v3688 = vmul.f32 %v3436, %v3539
      %v3689 = vmul.f32 %v3437, %v3544
      %v3690 = vmul.f32 %v3438, %v3549
      %v3691 = vmul.f32 %v3439, %v3554
      %v3692 = vmul.f32 %v3440, %v3559
      %v3693 = vmul.f32 %v3441, %v3564
      %v3694 = vmul.f32 %v3442, %v3569
      %v3695 = vmul.f32 %v3443, %v3574
      %v3696 = vmul.f32 %v3444, %v3579
      %v3697 = vmul.f32 %v3445, %v3584
      %v3698 = vmul.f32 %v3446, %v3589
      %v3699 = vmul.f32 %v3447, %v3594
      %v3700 = vmul.f32 %v3448, %v3599
      %v3701 = vmul.f32 %v3449, %v3604
      %v3702 = vmul.f32 %v3450, %v3609
      %v3703 = vmul.f32 %v3451, %v3614
      %v3704 = vmul.f32 %v3452, %v3619
      %v3705 = vmul.f32 %v3453, %v3624
      %v3706 = vmul.f32 %v3454, %v3629
      %v3707 = vmul.f32 %v3455, %v3634
      %v3708 = vmul.f32 %v3456, %v3639
      %v3709 = vmul.f32 %v3457, %v3644
      %v3710 = vmul.f32 %v3458, %v3649
      %v3711 = vmul.f32 %v3459, %v3654
      %v3712 = vmul.f32 %v3460, %v3659
      %v3713 = vmul.f32 %v3461, %v3664
      %v3714 = vmul.f32 %v3462, %v3669
      %v3715 = vmul.f32 %v3463, %v3674
      %v3716 = vmul.f32 %v3464, %v3679
      %3717 = vst [vmem:[#allocation4] sm:$0xff] 0.0
      %3718 = vst [vmem:[#allocation4 + $0x8] sm:$0xff] 0.0
      %3719 = vst [vmem:[#allocation4 + $0x10] sm:$0xff] 0.0
      %3720 = vst [vmem:[#allocation4 + $0x18] sm:$0xff] 0.0
      %3721 = vst [vmem:[#allocation4 + $0x20] sm:$0xff] 0.0
      %3722 = vst [vmem:[#allocation4 + $0x28] sm:$0xff] 0.0
      %3723 = vst [vmem:[#allocation4 + $0x30] sm:$0xff] 0.0
      %3724 = vst [vmem:[#allocation4 + $0x38] sm:$0xff] 0.0
      %3725 = vst [vmem:[#allocation4 + $0x40] sm:$0xff] 0.0
      %3726 = vst [vmem:[#allocation4 + $0x48] sm:$0xff] 0.0
      %3727 = vst [vmem:[#allocation4 + $0x50] sm:$0xff] 0.0
      %3728 = vst [vmem:[#allocation4 + $0x58] sm:$0xff] 0.0
      %3729 = vst [vmem:[#allocation4 + $0x60] sm:$0xff] 0.0
      %3730 = vst [vmem:[#allocation4 + $0x68] sm:$0xff] 0.0
      %3731 = vst [vmem:[#allocation4 + $0x70] sm:$0xff] 0.0
      %3732 = vst [vmem:[#allocation4 + $0x78] sm:$0xff] 0.0
      %3733 = vst [vmem:[#allocation4 + $0x80] sm:$0xff] 0.0
      %3734 = vst [vmem:[#allocation4 + $0x88] sm:$0xff] 0.0
      %3735 = vst [vmem:[#allocation4 + $0x90] sm:$0xff] 0.0
      %3736 = vst [vmem:[#allocation4 + $0x98] sm:$0xff] 0.0
      %3737 = vst [vmem:[#allocation4 + $0xa0] sm:$0xff] 0.0
      %3738 = vst [vmem:[#allocation4 + $0xa8] sm:$0xff] 0.0
      %3739 = vst [vmem:[#allocation4 + $0xb0] sm:$0xff] 0.0
      %3740 = vst [vmem:[#allocation4 + $0xb8] sm:$0xff] 0.0
      %3741 = vst [vmem:[#allocation4 + $0xc0] sm:$0xff] 0.0
      %3742 = vst [vmem:[#allocation4 + $0xc8] sm:$0xff] 0.0
      %3743 = vst [vmem:[#allocation4 + $0xd0] sm:$0xff] 0.0
      %3744 = vst [vmem:[#allocation4 + $0xd8] sm:$0xff] 0.0
      %3745 = vst [vmem:[#allocation4 + $0xe0] sm:$0xff] 0.0
      %3746 = vst [vmem:[#allocation4 + $0xe8] sm:$0xff] 0.0
      %3747 = vst [vmem:[#allocation4 + $0xf0] sm:$0xff] 0.0
      %3748 = vst [vmem:[#allocation4 + $0xf8] sm:$0xff] 0.0
      %3749 = vst [vmem:[#allocation4 + $0x100] sm:$0xff] 0.0
      %3750 = vst [vmem:[#allocation4 + $0x108] sm:$0xff] 0.0
      %3751 = vst [vmem:[#allocation4 + $0x110] sm:$0xff] 0.0
      %3752 = vst [vmem:[#allocation4 + $0x118] sm:$0xff] 0.0
      %3753 = vst [vmem:[#allocation4 + $0x120] sm:$0xff] 0.0
      %3754 = vst [vmem:[#allocation4 + $0x128] sm:$0xff] 0.0
      %3755 = vst [vmem:[#allocation4 + $0x130] sm:$0xff] 0.0
      %3756 = vst [vmem:[#allocation4 + $0x138] sm:$0xff] 0.0
      %3757 = vst [vmem:[#allocation4 + $0x140] sm:$0xff] 0.0
      %3758 = vst [vmem:[#allocation4 + $0x148] sm:$0xff] 0.0
      %3759 = vst [vmem:[#allocation4 + $0x150] sm:$0xff] 0.0
      %3760 = vst [vmem:[#allocation4 + $0x158] sm:$0x3] 0.0
      %3761 = vst [vmem:[#allocation4 + $0x20] sm:$0xff] %v3681
      %3762 = vst [vmem:[#allocation4 + $0x28] sm:$0xff] %v3682
      %3763 = vst [vmem:[#allocation4 + $0x30] sm:$0xff] %v3683
      %3764 = vst [vmem:[#allocation4 + $0x38] sm:$0xff] %v3684
      %3765 = vst [vmem:[#allocation4 + $0x40] sm:$0xff] %v3685
      %3766 = vst [vmem:[#allocation4 + $0x48] sm:$0xff] %v3686
      %3767 = vst [vmem:[#allocation4 + $0x50] sm:$0xff] %v3687
      %3768 = vst [vmem:[#allocation4 + $0x58] sm:$0xff] %v3688
      %3769 = vst [vmem:[#allocation4 + $0x60] sm:$0xff] %v3689
      %3770 = vst [vmem:[#allocation4 + $0x68] sm:$0xff] %v3690
      %3771 = vst [vmem:[#allocation4 + $0x70] sm:$0xff] %v3691
      %3772 = vst [vmem:[#allocation4 + $0x78] sm:$0xff] %v3692
      %3773 = vst [vmem:[#allocation4 + $0x80] sm:$0xff] %v3693
      %3774 = vst [vmem:[#allocation4 + $0x88] sm:$0xff] %v3694
      %3775 = vst [vmem:[#allocation4 + $0x90] sm:$0xff] %v3695
      %3776 = vst [vmem:[#allocation4 + $0x98] sm:$0xff] %v3696
      %3777 = vst [vmem:[#allocation4 + $0xa0] sm:$0xff] %v3697
      %3778 = vst [vmem:[#allocation4 + $0xa8] sm:$0xff] %v3698
      %3779 = vst [vmem:[#allocation4 + $0xb0] sm:$0xff] %v3699
      %3780 = vst [vmem:[#allocation4 + $0xb8] sm:$0xff] %v3700
      %3781 = vst [vmem:[#allocation4 + $0xc0] sm:$0xff] %v3701
      %3782 = vst [vmem:[#allocation4 + $0xc8] sm:$0xff] %v3702
      %3783 = vst [vmem:[#allocation4 + $0xd0] sm:$0xff] %v3703
      %3784 = vst [vmem:[#allocation4 + $0xd8] sm:$0xff] %v3704
      %3785 = vst [vmem:[#allocation4 + $0xe0] sm:$0xff] %v3705
      %3786 = vst [vmem:[#allocation4 + $0xe8] sm:$0xff] %v3706
      %3787 = vst [vmem:[#allocation4 + $0xf0] sm:$0xff] %v3707
      %3788 = vst [vmem:[#allocation4 + $0xf8] sm:$0xff] %v3708
      %3789 = vst [vmem:[#allocation4 + $0x100] sm:$0xff] %v3709
      %3790 = vst [vmem:[#allocation4 + $0x108] sm:$0xff] %v3710
      %3791 = vst [vmem:[#allocation4 + $0x110] sm:$0xff] %v3711
      %3792 = vst [vmem:[#allocation4 + $0x118] sm:$0xff] %v3712
      %3793 = vst [vmem:[#allocation4 + $0x120] sm:$0xff] %v3713
      %3794 = vst [vmem:[#allocation4 + $0x128] sm:$0xff] %v3714
      %3795 = vst [vmem:[#allocation4 + $0x130] sm:$0xff] %v3715
      %3796 = vst [vmem:[#allocation4 + $0x138] sm:$0xff] %v3716
      %3797 = vst [vmem:[#allocation3] sm:$0xff] 0.0
      %3798 = vst [vmem:[#allocation3 + $0x8] sm:$0xff] 0.0
      %3799 = vst [vmem:[#allocation3 + $0x10] sm:$0xff] 0.0
      %3800 = vst [vmem:[#allocation3 + $0x18] sm:$0xff] 0.0
      %3801 = vst [vmem:[#allocation3 + $0x20] sm:$0xff] 0.0
      %3802 = vst [vmem:[#allocation3 + $0x28] sm:$0xff] 0.0
      %3803 = vst [vmem:[#allocation3 + $0x30] sm:$0xff] 0.0
      %3804 = vst [vmem:[#allocation3 + $0x38] sm:$0xff] 0.0
      %3805 = vst [vmem:[#allocation3 + $0x40] sm:$0xff] 0.0
      %3806 = vst [vmem:[#allocation3 + $0x48] sm:$0xff] 0.0
      %3807 = vst [vmem:[#allocation3 + $0x50] sm:$0xff] 0.0
      %3808 = vst [vmem:[#allocation3 + $0x58] sm:$0xff] 0.0
      %3809 = vst [vmem:[#allocation3 + $0x60] sm:$0xff] 0.0
      %3810 = vst [vmem:[#allocation3 + $0x68] sm:$0xff] 0.0
      %3811 = vst [vmem:[#allocation3 + $0x70] sm:$0xff] 0.0
      %3812 = vst [vmem:[#allocation3 + $0x78] sm:$0xff] 0.0
      %3813 = vst [vmem:[#allocation3 + $0x80] sm:$0xff] 0.0
      %3814 = vst [vmem:[#allocation3 + $0x88] sm:$0xff] 0.0
      %3815 = vst [vmem:[#allocation3 + $0x90] sm:$0xff] 0.0
      %3816 = vst [vmem:[#allocation3 + $0x98] sm:$0xff] 0.0
      %3817 = vst [vmem:[#allocation3 + $0xa0] sm:$0xff] 0.0
      %3818 = vst [vmem:[#allocation3 + $0xa8] sm:$0xff] 0.0
      %3819 = vst [vmem:[#allocation3 + $0xb0] sm:$0xff] 0.0
      %3820 = vst [vmem:[#allocation3 + $0xb8] sm:$0xff] 0.0
      %3821 = vst [vmem:[#allocation3 + $0xc0] sm:$0xff] 0.0
      %3822 = vst [vmem:[#allocation3 + $0xc8] sm:$0xff] 0.0
      %3823 = vst [vmem:[#allocation3 + $0xd0] sm:$0xff] 0.0
      %3824 = vst [vmem:[#allocation3 + $0xd8] sm:$0xff] 0.0
      %3825 = vst [vmem:[#allocation3 + $0xe0] sm:$0xff] 0.0
      %3826 = vst [vmem:[#allocation3 + $0xe8] sm:$0xff] 0.0
      %3827 = vst [vmem:[#allocation3 + $0xf0] sm:$0xff] 0.0
      %3828 = vst [vmem:[#allocation3 + $0xf8] sm:$0xff] 0.0
      %3829 = vst [vmem:[#allocation3 + $0x100] sm:$0xff] 0.0
      %3830 = vst [vmem:[#allocation3 + $0x108] sm:$0xff] 0.0
      %3831 = vst [vmem:[#allocation3 + $0x110] sm:$0xff] 0.0
      %3832 = vst [vmem:[#allocation3 + $0x118] sm:$0xff] 0.0
      %v3833 = vld [vmem:[#allocation3] sm:$0xff]
      %v3834 = vld [vmem:[#allocation3 + $0x8] sm:$0xff]
      %v3835 = vld [vmem:[#allocation3 + $0x10] sm:$0xff]
      %v3836 = vld [vmem:[#allocation3 + $0x18] sm:$0xff]
      %v3837 = vld [vmem:[#allocation3 + $0x20] sm:$0xff]
      %v3838 = vld [vmem:[#allocation3 + $0x28] sm:$0xff]
      %v3839 = vld [vmem:[#allocation3 + $0x30] sm:$0xff]
      %v3840 = vld [vmem:[#allocation3 + $0x38] sm:$0xff]
      %v3841 = vld [vmem:[#allocation3 + $0x40] sm:$0xff]
      %v3842 = vld [vmem:[#allocation3 + $0x48] sm:$0xff]
      %v3843 = vld [vmem:[#allocation3 + $0x50] sm:$0xff]
      %v3844 = vld [vmem:[#allocation3 + $0x58] sm:$0xff]
      %v3845 = vld [vmem:[#allocation3 + $0x60] sm:$0xff]
      %v3846 = vld [vmem:[#allocation3 + $0x68] sm:$0xff]
      %v3847 = vld [vmem:[#allocation3 + $0x70] sm:$0xff]
      %v3848 = vld [vmem:[#allocation3 + $0x78] sm:$0xff]
      %v3849 = vld [vmem:[#allocation3 + $0x80] sm:$0xff]
      %v3850 = vld [vmem:[#allocation3 + $0x88] sm:$0xff]
      %v3851 = vld [vmem:[#allocation3 + $0x90] sm:$0xff]
      %v3852 = vld [vmem:[#allocation3 + $0x98] sm:$0xff]
      %v3853 = vld [vmem:[#allocation3 + $0xa0] sm:$0xff]
      %v3854 = vld [vmem:[#allocation3 + $0xa8] sm:$0xff]
      %v3855 = vld [vmem:[#allocation3 + $0xb0] sm:$0xff]
      %v3856 = vld [vmem:[#allocation3 + $0xb8] sm:$0xff]
      %v3857 = vld [vmem:[#allocation3 + $0xc0] sm:$0xff]
      %v3858 = vld [vmem:[#allocation3 + $0xc8] sm:$0xff]
      %v3859 = vld [vmem:[#allocation3 + $0xd0] sm:$0xff]
      %v3860 = vld [vmem:[#allocation3 + $0xd8] sm:$0xff]
      %v3861 = vld [vmem:[#allocation3 + $0xe0] sm:$0xff]
      %v3862 = vld [vmem:[#allocation3 + $0xe8] sm:$0xff]
      %v3863 = vld [vmem:[#allocation3 + $0xf0] sm:$0xff]
      %v3864 = vld [vmem:[#allocation3 + $0xf8] sm:$0xff]
      %v3865 = vld [vmem:[#allocation3 + $0x100] sm:$0xff]
      %v3866 = vld [vmem:[#allocation3 + $0x108] sm:$0xff]
      %v3867 = vld [vmem:[#allocation3 + $0x110] sm:$0xff]
      %v3868 = vld [vmem:[#allocation3 + $0x118] sm:$0xff]
      %v3869 = vld [vmem:[#allocation4 + $0xd] sm:$0xff]
      %v3870 = vld [vmem:[#allocation4 + $0x15] sm:$0xff]
      %v3871 = vld [vmem:[#allocation4 + $0x1d] sm:$0xff]
      %v3872 = vld [vmem:[#allocation4 + $0x25] sm:$0xff]
      %v3873 = vld [vmem:[#allocation4 + $0x2d] sm:$0xff]
      %v3874 = vld [vmem:[#allocation4 + $0x35] sm:$0xff]
      %v3875 = vld [vmem:[#allocation4 + $0x3d] sm:$0xff]
      %v3876 = vld [vmem:[#allocation4 + $0x45] sm:$0xff]
      %v3877 = vld [vmem:[#allocation4 + $0x4d] sm:$0xff]
      %v3878 = vld [vmem:[#allocation4 + $0x55] sm:$0xff]
      %v3879 = vld [vmem:[#allocation4 + $0x5d] sm:$0xff]
      %v3880 = vld [vmem:[#allocation4 + $0x65] sm:$0xff]
      %v3881 = vld [vmem:[#allocation4 + $0x6d] sm:$0xff]
      %v3882 = vld [vmem:[#allocation4 + $0x75] sm:$0xff]
      %v3883 = vld [vmem:[#allocation4 + $0x7d] sm:$0xff]
      %v3884 = vld [vmem:[#allocation4 + $0x85] sm:$0xff]
      %v3885 = vld [vmem:[#allocation4 + $0x8d] sm:$0xff]
      %v3886 = vld [vmem:[#allocation4 + $0x95] sm:$0xff]
      %v3887 = vld [vmem:[#allocation4 + $0x9d] sm:$0xff]
      %v3888 = vld [vmem:[#allocation4 + $0xa5] sm:$0xff]
      %v3889 = vld [vmem:[#allocation4 + $0xad] sm:$0xff]
      %v3890 = vld [vmem:[#allocation4 + $0xb5] sm:$0xff]
      %v3891 = vld [vmem:[#allocation4 + $0xbd] sm:$0xff]
      %v3892 = vld [vmem:[#allocation4 + $0xc5] sm:$0xff]
      %v3893 = vld [vmem:[#allocation4 + $0xcd] sm:$0xff]
      %v3894 = vld [vmem:[#allocation4 + $0xd5] sm:$0xff]
      %v3895 = vld [vmem:[#allocation4 + $0xdd] sm:$0xff]
      %v3896 = vld [vmem:[#allocation4 + $0xe5] sm:$0xff]
      %v3897 = vld [vmem:[#allocation4 + $0xed] sm:$0xff]
      %v3898 = vld [vmem:[#allocation4 + $0xf5] sm:$0xff]
      %v3899 = vld [vmem:[#allocation4 + $0xfd] sm:$0xff]
      %v3900 = vld [vmem:[#allocation4 + $0x105] sm:$0xff]
      %v3901 = vld [vmem:[#allocation4 + $0x10d] sm:$0xff]
      %v3902 = vld [vmem:[#allocation4 + $0x115] sm:$0xff]
      %v3903 = vld [vmem:[#allocation4 + $0x11d] sm:$0xff]
      %v3904 = vld [vmem:[#allocation4 + $0x125] sm:$0xff]
      %v3905 = vpack.c.bf16 %v3870, %v3869
      %v3906 = vpack.c.bf16 %v3872, %v3871
      %v3907 = vpack.c.bf16 %v3874, %v3873
      %v3908 = vpack.c.bf16 %v3876, %v3875
      %v3909 = vpack.c.bf16 %v3878, %v3877
      %v3910 = vpack.c.bf16 %v3880, %v3879
      %v3911 = vpack.c.bf16 %v3882, %v3881
      %v3912 = vpack.c.bf16 %v3884, %v3883
      %v3913 = vpack.c.bf16 %v3886, %v3885
      %v3914 = vpack.c.bf16 %v3888, %v3887
      %v3915 = vpack.c.bf16 %v3890, %v3889
      %v3916 = vpack.c.bf16 %v3892, %v3891
      %v3917 = vpack.c.bf16 %v3894, %v3893
      %v3918 = vpack.c.bf16 %v3896, %v3895
      %v3919 = vpack.c.bf16 %v3898, %v3897
      %v3920 = vpack.c.bf16 %v3900, %v3899
      %v3921 = vpack.c.bf16 %v3902, %v3901
      %v3922 = vpack.c.bf16 %v3904, %v3903
      %v3923 = vld [vmem:[%s3] sm:$0xf]
      %v3924 = vld [vmem:[%s3 + $0x4] sm:$0xf]
      %v3925 = vld [vmem:[%s3 + $0x8] sm:$0xf]
      %v3926 = vld [vmem:[%s3 + $0xc] sm:$0xf]
      %v3927 = vld [vmem:[%s3 + $0x10] sm:$0xf]
      %v3928 = vld [vmem:[%s3 + $0x14] sm:$0xf]
      %v3929 = vld [vmem:[%s3 + $0x18] sm:$0xf]
      %v3930 = vld [vmem:[%s3 + $0x1c] sm:$0xf]
      %v3931 = vld [vmem:[%s3 + $0x20] sm:$0xf]
      %v3932 = vld [vmem:[%s3 + $0x24] sm:$0xf]
      %v3933 = vld [vmem:[%s3 + $0x28] sm:$0xf]
      %v3934 = vld [vmem:[%s3 + $0x2c] sm:$0xf]
      %v3935 = vld [vmem:[%s3 + $0x30] sm:$0xf]
      %v3936 = vld [vmem:[%s3 + $0x34] sm:$0xf]
      %v3937 = vld [vmem:[%s3 + $0x38] sm:$0xf]
      %v3938 = vld [vmem:[%s3 + $0x3c] sm:$0xf]
      %v3955 = vunpack.c.l.b16 %v3923
      %v3956 = vunpack.c.l.b16 %v3924
      %v3957 = vunpack.c.l.b16 %v3925
      %v3958 = vunpack.c.l.b16 %v3926
      %v3959 = vunpack.c.l.b16 %v3927
      %v3960 = vunpack.c.l.b16 %v3928
      %v3961 = vunpack.c.l.b16 %v3929
      %v3962 = vunpack.c.l.b16 %v3930
      %v3963 = vunpack.c.l.b16 %v3931
      %v3964 = vunpack.c.l.b16 %v3932
      %v3965 = vunpack.c.l.b16 %v3933
      %v3966 = vunpack.c.l.b16 %v3934
      %v3967 = vunpack.c.l.b16 %v3935
      %v3968 = vunpack.c.l.b16 %v3936
      %v3969 = vunpack.c.l.b16 %v3937
      %v3970 = vunpack.c.l.b16 %v3938
      %v3971 = vpack.c.b16 %v3956, %v3955
      %v3972 = vpack.c.b16 %v3958, %v3957
      %v3973 = vpack.c.b16 %v3960, %v3959
      %v3974 = vpack.c.b16 %v3962, %v3961
      %v3975 = vpack.c.b16 %v3964, %v3963
      %v3976 = vpack.c.b16 %v3966, %v3965
      %v3977 = vpack.c.b16 %v3968, %v3967
      %v3978 = vpack.c.b16 %v3970, %v3969
      %3987 = vmatpush.bf16.msra.mxu0 %v3978
      %3988 = vmatpush.bf16.msra.mxu0 %v3977
      %3989 = vmatpush.bf16.msra.mxu0 %v3976
      %3990 = vmatpush.bf16.msra.mxu0 %v3975
      %3991 = vmatpush.bf16.msra.mxu0 %v3974
      %3992 = vmatpush.bf16.msra.mxu0 %v3973
      %3993 = vmatpush.bf16.msra.mxu0 %v3972
      %3994 = vmatpush.bf16.msra.mxu0 %v3971
      %3995 = vmatmul.bf16.gmra.mxu0 %v3905
      %v3996 = vpop.f32.mrf.mxu0
      %v3997 = vadd.f32 0.0, %v3996
      %v3998 = vpop.f32.mrf.mxu0
      %v3999 = vadd.f32 0.0, %v3998
      %4000 = vmatmul.bf16.gmra.mxu0 %v3906
      %v4001 = vpop.f32.mrf.mxu0
      %v4002 = vadd.f32 0.0, %v4001
      %v4003 = vpop.f32.mrf.mxu0
      %v4004 = vadd.f32 0.0, %v4003
      %4005 = vmatmul.bf16.gmra.mxu0 %v3907
      %v4006 = vpop.f32.mrf.mxu0
      %v4007 = vadd.f32 0.0, %v4006
      %v4008 = vpop.f32.mrf.mxu0
      %v4009 = vadd.f32 0.0, %v4008
      %4010 = vmatmul.bf16.gmra.mxu0 %v3908
      %v4011 = vpop.f32.mrf.mxu0
      %v4012 = vadd.f32 0.0, %v4011
      %v4013 = vpop.f32.mrf.mxu0
      %v4014 = vadd.f32 0.0, %v4013
      %4015 = vmatmul.bf16.gmra.mxu0 %v3909
      %v4016 = vpop.f32.mrf.mxu0
      %v4017 = vadd.f32 0.0, %v4016
      %v4018 = vpop.f32.mrf.mxu0
      %v4019 = vadd.f32 0.0, %v4018
      %4020 = vmatmul.bf16.gmra.mxu0 %v3910
      %v4021 = vpop.f32.mrf.mxu0
      %v4022 = vadd.f32 0.0, %v4021
      %v4023 = vpop.f32.mrf.mxu0
      %v4024 = vadd.f32 0.0, %v4023
      %4025 = vmatmul.bf16.gmra.mxu0 %v3911
      %v4026 = vpop.f32.mrf.mxu0
      %v4027 = vadd.f32 0.0, %v4026
      %v4028 = vpop.f32.mrf.mxu0
      %v4029 = vadd.f32 0.0, %v4028
      %4030 = vmatmul.bf16.gmra.mxu0 %v3912
      %v4031 = vpop.f32.mrf.mxu0
      %v4032 = vadd.f32 0.0, %v4031
      %v4033 = vpop.f32.mrf.mxu0
      %v4034 = vadd.f32 0.0, %v4033
      %4035 = vmatmul.bf16.gmra.mxu0 %v3913
      %v4036 = vpop.f32.mrf.mxu0
      %v4037 = vadd.f32 0.0, %v4036
      %v4038 = vpop.f32.mrf.mxu0
      %v4039 = vadd.f32 0.0, %v4038
      %4040 = vmatmul.bf16.gmra.mxu0 %v3914
      %v4041 = vpop.f32.mrf.mxu0
      %v4042 = vadd.f32 0.0, %v4041
      %v4043 = vpop.f32.mrf.mxu0
      %v4044 = vadd.f32 0.0, %v4043
      %4045 = vmatmul.bf16.gmra.mxu0 %v3915
      %v4046 = vpop.f32.mrf.mxu0
      %v4047 = vadd.f32 0.0, %v4046
      %v4048 = vpop.f32.mrf.mxu0
      %v4049 = vadd.f32 0.0, %v4048
      %4050 = vmatmul.bf16.gmra.mxu0 %v3916
      %v4051 = vpop.f32.mrf.mxu0
      %v4052 = vadd.f32 0.0, %v4051
      %v4053 = vpop.f32.mrf.mxu0
      %v4054 = vadd.f32 0.0, %v4053
      %4055 = vmatmul.bf16.gmra.mxu0 %v3917
      %v4056 = vpop.f32.mrf.mxu0
      %v4057 = vadd.f32 0.0, %v4056
      %v4058 = vpop.f32.mrf.mxu0
      %v4059 = vadd.f32 0.0, %v4058
      %4060 = vmatmul.bf16.gmra.mxu0 %v3918
      %v4061 = vpop.f32.mrf.mxu0
      %v4062 = vadd.f32 0.0, %v4061
      %v4063 = vpop.f32.mrf.mxu0
      %v4064 = vadd.f32 0.0, %v4063
      %4065 = vmatmul.bf16.gmra.mxu0 %v3919
      %v4066 = vpop.f32.mrf.mxu0
      %v4067 = vadd.f32 0.0, %v4066
      %v4068 = vpop.f32.mrf.mxu0
      %v4069 = vadd.f32 0.0, %v4068
      %4070 = vmatmul.bf16.gmra.mxu0 %v3920
      %v4071 = vpop.f32.mrf.mxu0
      %v4072 = vadd.f32 0.0, %v4071
      %v4073 = vpop.f32.mrf.mxu0
      %v4074 = vadd.f32 0.0, %v4073
      %4075 = vmatmul.bf16.gmra.mxu0 %v3921
      %v4076 = vpop.f32.mrf.mxu0
      %v4077 = vadd.f32 0.0, %v4076
      %v4078 = vpop.f32.mrf.mxu0
      %v4079 = vadd.f32 0.0, %v4078
      %4080 = vmatmul.bf16.gmra.mxu0 %v3922
      %v4081 = vpop.f32.mrf.mxu0
      %v4082 = vadd.f32 0.0, %v4081
      %v4083 = vpop.f32.mrf.mxu0
      %v4084 = vadd.f32 0.0, %v4083
      %4085 = vdwg.mxu0
      %v4086 = vadd.f32 %v3833, %v3997
      %v4087 = vadd.f32 %v3834, %v3999
      %v4088 = vadd.f32 %v3835, %v4002
      %v4089 = vadd.f32 %v3836, %v4004
      %v4090 = vadd.f32 %v3837, %v4007
      %v4091 = vadd.f32 %v3838, %v4009
      %v4092 = vadd.f32 %v3839, %v4012
      %v4093 = vadd.f32 %v3840, %v4014
      %v4094 = vadd.f32 %v3841, %v4017
      %v4095 = vadd.f32 %v3842, %v4019
      %v4096 = vadd.f32 %v3843, %v4022
      %v4097 = vadd.f32 %v3844, %v4024
      %v4098 = vadd.f32 %v3845, %v4027
      %v4099 = vadd.f32 %v3846, %v4029
      %v4100 = vadd.f32 %v3847, %v4032
      %v4101 = vadd.f32 %v3848, %v4034
      %v4102 = vadd.f32 %v3849, %v4037
      %v4103 = vadd.f32 %v3850, %v4039
      %v4104 = vadd.f32 %v3851, %v4042
      %v4105 = vadd.f32 %v3852, %v4044
      %v4106 = vadd.f32 %v3853, %v4047
      %v4107 = vadd.f32 %v3854, %v4049
      %v4108 = vadd.f32 %v3855, %v4052
      %v4109 = vadd.f32 %v3856, %v4054
      %v4110 = vadd.f32 %v3857, %v4057
      %v4111 = vadd.f32 %v3858, %v4059
      %v4112 = vadd.f32 %v3859, %v4062
      %v4113 = vadd.f32 %v3860, %v4064
      %v4114 = vadd.f32 %v3861, %v4067
      %v4115 = vadd.f32 %v3862, %v4069
      %v4116 = vadd.f32 %v3863, %v4072
      %v4117 = vadd.f32 %v3864, %v4074
      %v4118 = vadd.f32 %v3865, %v4077
      %v4119 = vadd.f32 %v3866, %v4079
      %v4120 = vadd.f32 %v3867, %v4082
      %v4121 = vadd.f32 %v3868, %v4084
      %4122 = vst [vmem:[#allocation3] sm:$0xff] %v4086
      %4123 = vst [vmem:[#allocation3 + $0x8] sm:$0xff] %v4087
      %4124 = vst [vmem:[#allocation3 + $0x10] sm:$0xff] %v4088
      %4125 = vst [vmem:[#allocation3 + $0x18] sm:$0xff] %v4089
      %4126 = vst [vmem:[#allocation3 + $0x20] sm:$0xff] %v4090
      %4127 = vst [vmem:[#allocation3 + $0x28] sm:$0xff] %v4091
      %4128 = vst [vmem:[#allocation3 + $0x30] sm:$0xff] %v4092
      %4129 = vst [vmem:[#allocation3 + $0x38] sm:$0xff] %v4093
      %4130 = vst [vmem:[#allocation3 + $0x40] sm:$0xff] %v4094
      %4131 = vst [vmem:[#allocation3 + $0x48] sm:$0xff] %v4095
      %4132 = vst [vmem:[#allocation3 + $0x50] sm:$0xff] %v4096
      %4133 = vst [vmem:[#allocation3 + $0x58] sm:$0xff] %v4097
      %4134 = vst [vmem:[#allocation3 + $0x60] sm:$0xff] %v4098
      %4135 = vst [vmem:[#allocation3 + $0x68] sm:$0xff] %v4099
      %4136 = vst [vmem:[#allocation3 + $0x70] sm:$0xff] %v4100
      %4137 = vst [vmem:[#allocation3 + $0x78] sm:$0xff] %v4101
      %4138 = vst [vmem:[#allocation3 + $0x80] sm:$0xff] %v4102
      %4139 = vst [vmem:[#allocation3 + $0x88] sm:$0xff] %v4103
      %4140 = vst [vmem:[#allocation3 + $0x90] sm:$0xff] %v4104
      %4141 = vst [vmem:[#allocation3 + $0x98] sm:$0xff] %v4105
      %4142 = vst [vmem:[#allocation3 + $0xa0] sm:$0xff] %v4106
      %4143 = vst [vmem:[#allocation3 + $0xa8] sm:$0xff] %v4107
      %4144 = vst [vmem:[#allocation3 + $0xb0] sm:$0xff] %v4108
      %4145 = vst [vmem:[#allocation3 + $0xb8] sm:$0xff] %v4109
      %4146 = vst [vmem:[#allocation3 + $0xc0] sm:$0xff] %v4110
      %4147 = vst [vmem:[#allocation3 + $0xc8] sm:$0xff] %v4111
      %4148 = vst [vmem:[#allocation3 + $0xd0] sm:$0xff] %v4112
      %4149 = vst [vmem:[#allocation3 + $0xd8] sm:$0xff] %v4113
      %4150 = vst [vmem:[#allocation3 + $0xe0] sm:$0xff] %v4114
      %4151 = vst [vmem:[#allocation3 + $0xe8] sm:$0xff] %v4115
      %4152 = vst [vmem:[#allocation3 + $0xf0] sm:$0xff] %v4116
      %4153 = vst [vmem:[#allocation3 + $0xf8] sm:$0xff] %v4117
      %4154 = vst [vmem:[#allocation3 + $0x100] sm:$0xff] %v4118
      %4155 = vst [vmem:[#allocation3 + $0x108] sm:$0xff] %v4119
      %4156 = vst [vmem:[#allocation3 + $0x110] sm:$0xff] %v4120
      %4157 = vst [vmem:[#allocation3 + $0x118] sm:$0xff] %v4121
      %v4158 = vld [vmem:[#allocation3] sm:$0xff]
      %v4159 = vld [vmem:[#allocation3 + $0x8] sm:$0xff]
      %v4160 = vld [vmem:[#allocation3 + $0x10] sm:$0xff]
      %v4161 = vld [vmem:[#allocation3 + $0x18] sm:$0xff]
      %v4162 = vld [vmem:[#allocation3 + $0x20] sm:$0xff]
      %v4163 = vld [vmem:[#allocation3 + $0x28] sm:$0xff]
      %v4164 = vld [vmem:[#allocation3 + $0x30] sm:$0xff]
      %v4165 = vld [vmem:[#allocation3 + $0x38] sm:$0xff]
      %v4166 = vld [vmem:[#allocation3 + $0x40] sm:$0xff]
      %v4167 = vld [vmem:[#allocation3 + $0x48] sm:$0xff]
      %v4168 = vld [vmem:[#allocation3 + $0x50] sm:$0xff]
      %v4169 = vld [vmem:[#allocation3 + $0x58] sm:$0xff]
      %v4170 = vld [vmem:[#allocation3 + $0x60] sm:$0xff]
      %v4171 = vld [vmem:[#allocation3 + $0x68] sm:$0xff]
      %v4172 = vld [vmem:[#allocation3 + $0x70] sm:$0xff]
      %v4173 = vld [vmem:[#allocation3 + $0x78] sm:$0xff]
      %v4174 = vld [vmem:[#allocation3 + $0x80] sm:$0xff]
      %v4175 = vld [vmem:[#allocation3 + $0x88] sm:$0xff]
      %v4176 = vld [vmem:[#allocation3 + $0x90] sm:$0xff]
      %v4177 = vld [vmem:[#allocation3 + $0x98] sm:$0xff]
      %v4178 = vld [vmem:[#allocation3 + $0xa0] sm:$0xff]
      %v4179 = vld [vmem:[#allocation3 + $0xa8] sm:$0xff]
      %v4180 = vld [vmem:[#allocation3 + $0xb0] sm:$0xff]
      %v4181 = vld [vmem:[#allocation3 + $0xb8] sm:$0xff]
      %v4182 = vld [vmem:[#allocation3 + $0xc0] sm:$0xff]
      %v4183 = vld [vmem:[#allocation3 + $0xc8] sm:$0xff]
      %v4184 = vld [vmem:[#allocation3 + $0xd0] sm:$0xff]
      %v4185 = vld [vmem:[#allocation3 + $0xd8] sm:$0xff]
      %v4186 = vld [vmem:[#allocation3 + $0xe0] sm:$0xff]
      %v4187 = vld [vmem:[#allocation3 + $0xe8] sm:$0xff]
      %v4188 = vld [vmem:[#allocation3 + $0xf0] sm:$0xff]
      %v4189 = vld [vmem:[#allocation3 + $0xf8] sm:$0xff]
      %v4190 = vld [vmem:[#allocation3 + $0x100] sm:$0xff]
      %v4191 = vld [vmem:[#allocation3 + $0x108] sm:$0xff]
      %v4192 = vld [vmem:[#allocation3 + $0x110] sm:$0xff]
      %v4193 = vld [vmem:[#allocation3 + $0x118] sm:$0xff]
      %v4194 = vld [vmem:[#allocation4 + $0xe] sm:$0xff]
      %v4195 = vld [vmem:[#allocation4 + $0x16] sm:$0xff]
      %v4196 = vld [vmem:[#allocation4 + $0x1e] sm:$0xff]
      %v4197 = vld [vmem:[#allocation4 + $0x26] sm:$0xff]
      %v4198 = vld [vmem:[#allocation4 + $0x2e] sm:$0xff]
      %v4199 = vld [vmem:[#allocation4 + $0x36] sm:$0xff]
      %v4200 = vld [vmem:[#allocation4 + $0x3e] sm:$0xff]
      %v4201 = vld [vmem:[#allocation4 + $0x46] sm:$0xff]
      %v4202 = vld [vmem:[#allocation4 + $0x4e] sm:$0xff]
      %v4203 = vld [vmem:[#allocation4 + $0x56] sm:$0xff]
      %v4204 = vld [vmem:[#allocation4 + $0x5e] sm:$0xff]
      %v4205 = vld [vmem:[#allocation4 + $0x66] sm:$0xff]
      %v4206 = vld [vmem:[#allocation4 + $0x6e] sm:$0xff]
      %v4207 = vld [vmem:[#allocation4 + $0x76] sm:$0xff]
      %v4208 = vld [vmem:[#allocation4 + $0x7e] sm:$0xff]
      %v4209 = vld [vmem:[#allocation4 + $0x86] sm:$0xff]
      %v4210 = vld [vmem:[#allocation4 + $0x8e] sm:$0xff]
      %v4211 = vld [vmem:[#allocation4 + $0x96] sm:$0xff]
      %v4212 = vld [vmem:[#allocation4 + $0x9e] sm:$0xff]
      %v4213 = vld [vmem:[#allocation4 + $0xa6] sm:$0xff]
      %v4214 = vld [vmem:[#allocation4 + $0xae] sm:$0xff]
      %v4215 = vld [vmem:[#allocation4 + $0xb6] sm:$0xff]
      %v4216 = vld [vmem:[#allocation4 + $0xbe] sm:$0xff]
      %v4217 = vld [vmem:[#allocation4 + $0xc6] sm:$0xff]
      %v4218 = vld [vmem:[#allocation4 + $0xce] sm:$0xff]
      %v4219 = vld [vmem:[#allocation4 + $0xd6] sm:$0xff]
      %v4220 = vld [vmem:[#allocation4 + $0xde] sm:$0xff]
      %v4221 = vld [vmem:[#allocation4 + $0xe6] sm:$0xff]
      %v4222 = vld [vmem:[#allocation4 + $0xee] sm:$0xff]
      %v4223 = vld [vmem:[#allocation4 + $0xf6] sm:$0xff]
      %v4224 = vld [vmem:[#allocation4 + $0xfe] sm:$0xff]
      %v4225 = vld [vmem:[#allocation4 + $0x106] sm:$0xff]
      %v4226 = vld [vmem:[#allocation4 + $0x10e] sm:$0xff]
      %v4227 = vld [vmem:[#allocation4 + $0x116] sm:$0xff]
      %v4228 = vld [vmem:[#allocation4 + $0x11e] sm:$0xff]
      %v4229 = vld [vmem:[#allocation4 + $0x126] sm:$0xff]
      %v4230 = vpack.c.bf16 %v4195, %v4194
      %v4231 = vpack.c.bf16 %v4197, %v4196
      %v4232 = vpack.c.bf16 %v4199, %v4198
      %v4233 = vpack.c.bf16 %v4201, %v4200
      %v4234 = vpack.c.bf16 %v4203, %v4202
      %v4235 = vpack.c.bf16 %v4205, %v4204
      %v4236 = vpack.c.bf16 %v4207, %v4206
      %v4237 = vpack.c.bf16 %v4209, %v4208
      %v4238 = vpack.c.bf16 %v4211, %v4210
      %v4239 = vpack.c.bf16 %v4213, %v4212
      %v4240 = vpack.c.bf16 %v4215, %v4214
      %v4241 = vpack.c.bf16 %v4217, %v4216
      %v4242 = vpack.c.bf16 %v4219, %v4218
      %v4243 = vpack.c.bf16 %v4221, %v4220
      %v4244 = vpack.c.bf16 %v4223, %v4222
      %v4245 = vpack.c.bf16 %v4225, %v4224
      %v4246 = vpack.c.bf16 %v4227, %v4226
      %v4247 = vpack.c.bf16 %v4229, %v4228
      %s4248 = scalar_lea.vmem %s3, 64
      %v4249 = vld [vmem:[%s4248] sm:$0xf]
      %v4250 = vld [vmem:[%s4248 + $0x4] sm:$0xf]
      %v4251 = vld [vmem:[%s4248 + $0x8] sm:$0xf]
      %v4252 = vld [vmem:[%s4248 + $0xc] sm:$0xf]
      %v4253 = vld [vmem:[%s4248 + $0x10] sm:$0xf]
      %v4254 = vld [vmem:[%s4248 + $0x14] sm:$0xf]
      %v4255 = vld [vmem:[%s4248 + $0x18] sm:$0xf]
      %v4256 = vld [vmem:[%s4248 + $0x1c] sm:$0xf]
      %v4257 = vld [vmem:[%s4248 + $0x20] sm:$0xf]
      %v4258 = vld [vmem:[%s4248 + $0x24] sm:$0xf]
      %v4259 = vld [vmem:[%s4248 + $0x28] sm:$0xf]
      %v4260 = vld [vmem:[%s4248 + $0x2c] sm:$0xf]
      %v4261 = vld [vmem:[%s4248 + $0x30] sm:$0xf]
      %v4262 = vld [vmem:[%s4248 + $0x34] sm:$0xf]
      %v4263 = vld [vmem:[%s4248 + $0x38] sm:$0xf]
      %v4264 = vld [vmem:[%s4248 + $0x3c] sm:$0xf]
      %v4281 = vunpack.c.l.b16 %v4249
      %v4282 = vunpack.c.l.b16 %v4250
      %v4283 = vunpack.c.l.b16 %v4251
      %v4284 = vunpack.c.l.b16 %v4252
      %v4285 = vunpack.c.l.b16 %v4253
      %v4286 = vunpack.c.l.b16 %v4254
      %v4287 = vunpack.c.l.b16 %v4255
      %v4288 = vunpack.c.l.b16 %v4256
      %v4289 = vunpack.c.l.b16 %v4257
      %v4290 = vunpack.c.l.b16 %v4258
      %v4291 = vunpack.c.l.b16 %v4259
      %v4292 = vunpack.c.l.b16 %v4260
      %v4293 = vunpack.c.l.b16 %v4261
      %v4294 = vunpack.c.l.b16 %v4262
      %v4295 = vunpack.c.l.b16 %v4263
      %v4296 = vunpack.c.l.b16 %v4264
      %v4297 = vpack.c.b16 %v4282, %v4281
      %v4298 = vpack.c.b16 %v4284, %v4283
      %v4299 = vpack.c.b16 %v4286, %v4285
      %v4300 = vpack.c.b16 %v4288, %v4287
      %v4301 = vpack.c.b16 %v4290, %v4289
      %v4302 = vpack.c.b16 %v4292, %v4291
      %v4303 = vpack.c.b16 %v4294, %v4293
      %v4304 = vpack.c.b16 %v4296, %v4295
      %4313 = vmatpush.bf16.msra.mxu0 %v4304
      %4314 = vmatpush.bf16.msra.mxu0 %v4303
      %4315 = vmatpush.bf16.msra.mxu0 %v4302
      %4316 = vmatpush.bf16.msra.mxu0 %v4301
      %4317 = vmatpush.bf16.msra.mxu0 %v4300
      %4318 = vmatpush.bf16.msra.mxu0 %v4299
      %4319 = vmatpush.bf16.msra.mxu0 %v4298
      %4320 = vmatpush.bf16.msra.mxu0 %v4297
      %4321 = vmatmul.bf16.gmra.mxu0 %v4230
      %v4322 = vpop.f32.mrf.mxu0
      %v4323 = vadd.f32 0.0, %v4322
      %v4324 = vpop.f32.mrf.mxu0
      %v4325 = vadd.f32 0.0, %v4324
      %4326 = vmatmul.bf16.gmra.mxu0 %v4231
      %v4327 = vpop.f32.mrf.mxu0
      %v4328 = vadd.f32 0.0, %v4327
      %v4329 = vpop.f32.mrf.mxu0
      %v4330 = vadd.f32 0.0, %v4329
      %4331 = vmatmul.bf16.gmra.mxu0 %v4232
      %v4332 = vpop.f32.mrf.mxu0
      %v4333 = vadd.f32 0.0, %v4332
      %v4334 = vpop.f32.mrf.mxu0
      %v4335 = vadd.f32 0.0, %v4334
      %4336 = vmatmul.bf16.gmra.mxu0 %v4233
      %v4337 = vpop.f32.mrf.mxu0
      %v4338 = vadd.f32 0.0, %v4337
      %v4339 = vpop.f32.mrf.mxu0
      %v4340 = vadd.f32 0.0, %v4339
      %4341 = vmatmul.bf16.gmra.mxu0 %v4234
      %v4342 = vpop.f32.mrf.mxu0
      %v4343 = vadd.f32 0.0, %v4342
      %v4344 = vpop.f32.mrf.mxu0
      %v4345 = vadd.f32 0.0, %v4344
      %4346 = vmatmul.bf16.gmra.mxu0 %v4235
      %v4347 = vpop.f32.mrf.mxu0
      %v4348 = vadd.f32 0.0, %v4347
      %v4349 = vpop.f32.mrf.mxu0
      %v4350 = vadd.f32 0.0, %v4349
      %4351 = vmatmul.bf16.gmra.mxu0 %v4236
      %v4352 = vpop.f32.mrf.mxu0
      %v4353 = vadd.f32 0.0, %v4352
      %v4354 = vpop.f32.mrf.mxu0
      %v4355 = vadd.f32 0.0, %v4354
      %4356 = vmatmul.bf16.gmra.mxu0 %v4237
      %v4357 = vpop.f32.mrf.mxu0
      %v4358 = vadd.f32 0.0, %v4357
      %v4359 = vpop.f32.mrf.mxu0
      %v4360 = vadd.f32 0.0, %v4359
      %4361 = vmatmul.bf16.gmra.mxu0 %v4238
      %v4362 = vpop.f32.mrf.mxu0
      %v4363 = vadd.f32 0.0, %v4362
      %v4364 = vpop.f32.mrf.mxu0
      %v4365 = vadd.f32 0.0, %v4364
      %4366 = vmatmul.bf16.gmra.mxu0 %v4239
      %v4367 = vpop.f32.mrf.mxu0
      %v4368 = vadd.f32 0.0, %v4367
      %v4369 = vpop.f32.mrf.mxu0
      %v4370 = vadd.f32 0.0, %v4369
      %4371 = vmatmul.bf16.gmra.mxu0 %v4240
      %v4372 = vpop.f32.mrf.mxu0
      %v4373 = vadd.f32 0.0, %v4372
      %v4374 = vpop.f32.mrf.mxu0
      %v4375 = vadd.f32 0.0, %v4374
      %4376 = vmatmul.bf16.gmra.mxu0 %v4241
      %v4377 = vpop.f32.mrf.mxu0
      %v4378 = vadd.f32 0.0, %v4377
      %v4379 = vpop.f32.mrf.mxu0
      %v4380 = vadd.f32 0.0, %v4379
      %4381 = vmatmul.bf16.gmra.mxu0 %v4242
      %v4382 = vpop.f32.mrf.mxu0
      %v4383 = vadd.f32 0.0, %v4382
      %v4384 = vpop.f32.mrf.mxu0
      %v4385 = vadd.f32 0.0, %v4384
      %4386 = vmatmul.bf16.gmra.mxu0 %v4243
      %v4387 = vpop.f32.mrf.mxu0
      %v4388 = vadd.f32 0.0, %v4387
      %v4389 = vpop.f32.mrf.mxu0
      %v4390 = vadd.f32 0.0, %v4389
      %4391 = vmatmul.bf16.gmra.mxu0 %v4244
      %v4392 = vpop.f32.mrf.mxu0
      %v4393 = vadd.f32 0.0, %v4392
      %v4394 = vpop.f32.mrf.mxu0
      %v4395 = vadd.f32 0.0, %v4394
      %4396 = vmatmul.bf16.gmra.mxu0 %v4245
      %v4397 = vpop.f32.mrf.mxu0
      %v4398 = vadd.f32 0.0, %v4397
      %v4399 = vpop.f32.mrf.mxu0
      %v4400 = vadd.f32 0.0, %v4399
      %4401 = vmatmul.bf16.gmra.mxu0 %v4246
      %v4402 = vpop.f32.mrf.mxu0
      %v4403 = vadd.f32 0.0, %v4402
      %v4404 = vpop.f32.mrf.mxu0
      %v4405 = vadd.f32 0.0, %v4404
      %4406 = vmatmul.bf16.gmra.mxu0 %v4247
      %v4407 = vpop.f32.mrf.mxu0
      %v4408 = vadd.f32 0.0, %v4407
      %v4409 = vpop.f32.mrf.mxu0
      %v4410 = vadd.f32 0.0, %v4409
      %4411 = vdwg.mxu0
      %v4412 = vadd.f32 %v4158, %v4323
      %v4413 = vadd.f32 %v4159, %v4325
      %v4414 = vadd.f32 %v4160, %v4328
      %v4415 = vadd.f32 %v4161, %v4330
      %v4416 = vadd.f32 %v4162, %v4333
      %v4417 = vadd.f32 %v4163, %v4335
      %v4418 = vadd.f32 %v4164, %v4338
      %v4419 = vadd.f32 %v4165, %v4340
      %v4420 = vadd.f32 %v4166, %v4343
      %v4421 = vadd.f32 %v4167, %v4345
      %v4422 = vadd.f32 %v4168, %v4348
      %v4423 = vadd.f32 %v4169, %v4350
      %v4424 = vadd.f32 %v4170, %v4353
      %v4425 = vadd.f32 %v4171, %v4355
      %v4426 = vadd.f32 %v4172, %v4358
      %v4427 = vadd.f32 %v4173, %v4360
      %v4428 = vadd.f32 %v4174, %v4363
      %v4429 = vadd.f32 %v4175, %v4365
      %v4430 = vadd.f32 %v4176, %v4368
      %v4431 = vadd.f32 %v4177, %v4370
      %v4432 = vadd.f32 %v4178, %v4373
      %v4433 = vadd.f32 %v4179, %v4375
      %v4434 = vadd.f32 %v4180, %v4378
      %v4435 = vadd.f32 %v4181, %v4380
      %v4436 = vadd.f32 %v4182, %v4383
      %v4437 = vadd.f32 %v4183, %v4385
      %v4438 = vadd.f32 %v4184, %v4388
      %v4439 = vadd.f32 %v4185, %v4390
      %v4440 = vadd.f32 %v4186, %v4393
      %v4441 = vadd.f32 %v4187, %v4395
      %v4442 = vadd.f32 %v4188, %v4398
      %v4443 = vadd.f32 %v4189, %v4400
      %v4444 = vadd.f32 %v4190, %v4403
      %v4445 = vadd.f32 %v4191, %v4405
      %v4446 = vadd.f32 %v4192, %v4408
      %v4447 = vadd.f32 %v4193, %v4410
      %4448 = vst [vmem:[#allocation3] sm:$0xff] %v4412
      %4449 = vst [vmem:[#allocation3 + $0x8] sm:$0xff] %v4413
      %4450 = vst [vmem:[#allocation3 + $0x10] sm:$0xff] %v4414
      %4451 = vst [vmem:[#allocation3 + $0x18] sm:$0xff] %v4415
      %4452 = vst [vmem:[#allocation3 + $0x20] sm:$0xff] %v4416
      %4453 = vst [vmem:[#allocation3 + $0x28] sm:$0xff] %v4417
      %4454 = vst [vmem:[#allocation3 + $0x30] sm:$0xff] %v4418
      %4455 = vst [vmem:[#allocation3 + $0x38] sm:$0xff] %v4419
      %4456 = vst [vmem:[#allocation3 + $0x40] sm:$0xff] %v4420
      %4457 = vst [vmem:[#allocation3 + $0x48] sm:$0xff] %v4421
      %4458 = vst [vmem:[#allocation3 + $0x50] sm:$0xff] %v4422
      %4459 = vst [vmem:[#allocation3 + $0x58] sm:$0xff] %v4423
      %4460 = vst [vmem:[#allocation3 + $0x60] sm:$0xff] %v4424
      %4461 = vst [vmem:[#allocation3 + $0x68] sm:$0xff] %v4425
      %4462 = vst [vmem:[#allocation3 + $0x70] sm:$0xff] %v4426
      %4463 = vst [vmem:[#allocation3 + $0x78] sm:$0xff] %v4427
      %4464 = vst [vmem:[#allocation3 + $0x80] sm:$0xff] %v4428
      %4465 = vst [vmem:[#allocation3 + $0x88] sm:$0xff] %v4429
      %4466 = vst [vmem:[#allocation3 + $0x90] sm:$0xff] %v4430
      %4467 = vst [vmem:[#allocation3 + $0x98] sm:$0xff] %v4431
      %4468 = vst [vmem:[#allocation3 + $0xa0] sm:$0xff] %v4432
      %4469 = vst [vmem:[#allocation3 + $0xa8] sm:$0xff] %v4433
      %4470 = vst [vmem:[#allocation3 + $0xb0] sm:$0xff] %v4434
      %4471 = vst [vmem:[#allocation3 + $0xb8] sm:$0xff] %v4435
      %4472 = vst [vmem:[#allocation3 + $0xc0] sm:$0xff] %v4436
      %4473 = vst [vmem:[#allocation3 + $0xc8] sm:$0xff] %v4437
      %4474 = vst [vmem:[#allocation3 + $0xd0] sm:$0xff] %v4438
      %4475 = vst [vmem:[#allocation3 + $0xd8] sm:$0xff] %v4439
      %4476 = vst [vmem:[#allocation3 + $0xe0] sm:$0xff] %v4440
      %4477 = vst [vmem:[#allocation3 + $0xe8] sm:$0xff] %v4441
      %4478 = vst [vmem:[#allocation3 + $0xf0] sm:$0xff] %v4442
      %4479 = vst [vmem:[#allocation3 + $0xf8] sm:$0xff] %v4443
      %4480 = vst [vmem:[#allocation3 + $0x100] sm:$0xff] %v4444
      %4481 = vst [vmem:[#allocation3 + $0x108] sm:$0xff] %v4445
      %4482 = vst [vmem:[#allocation3 + $0x110] sm:$0xff] %v4446
      %4483 = vst [vmem:[#allocation3 + $0x118] sm:$0xff] %v4447
      %v4484 = vld [vmem:[#allocation3] sm:$0xff]
      %v4485 = vld [vmem:[#allocation3 + $0x8] sm:$0xff]
      %v4486 = vld [vmem:[#allocation3 + $0x10] sm:$0xff]
      %v4487 = vld [vmem:[#allocation3 + $0x18] sm:$0xff]
      %v4488 = vld [vmem:[#allocation3 + $0x20] sm:$0xff]
      %v4489 = vld [vmem:[#allocation3 + $0x28] sm:$0xff]
      %v4490 = vld [vmem:[#allocation3 + $0x30] sm:$0xff]
      %v4491 = vld [vmem:[#allocation3 + $0x38] sm:$0xff]
      %v4492 = vld [vmem:[#allocation3 + $0x40] sm:$0xff]
      %v4493 = vld [vmem:[#allocation3 + $0x48] sm:$0xff]
      %v4494 = vld [vmem:[#allocation3 + $0x50] sm:$0xff]
      %v4495 = vld [vmem:[#allocation3 + $0x58] sm:$0xff]
      %v4496 = vld [vmem:[#allocation3 + $0x60] sm:$0xff]
      %v4497 = vld [vmem:[#allocation3 + $0x68] sm:$0xff]
      %v4498 = vld [vmem:[#allocation3 + $0x70] sm:$0xff]
      %v4499 = vld [vmem:[#allocation3 + $0x78] sm:$0xff]
      %v4500 = vld [vmem:[#allocation3 + $0x80] sm:$0xff]
      %v4501 = vld [vmem:[#allocation3 + $0x88] sm:$0xff]
      %v4502 = vld [vmem:[#allocation3 + $0x90] sm:$0xff]
      %v4503 = vld [vmem:[#allocation3 + $0x98] sm:$0xff]
      %v4504 = vld [vmem:[#allocation3 + $0xa0] sm:$0xff]
      %v4505 = vld [vmem:[#allocation3 + $0xa8] sm:$0xff]
      %v4506 = vld [vmem:[#allocation3 + $0xb0] sm:$0xff]
      %v4507 = vld [vmem:[#allocation3 + $0xb8] sm:$0xff]
      %v4508 = vld [vmem:[#allocation3 + $0xc0] sm:$0xff]
      %v4509 = vld [vmem:[#allocation3 + $0xc8] sm:$0xff]
      %v4510 = vld [vmem:[#allocation3 + $0xd0] sm:$0xff]
      %v4511 = vld [vmem:[#allocation3 + $0xd8] sm:$0xff]
      %v4512 = vld [vmem:[#allocation3 + $0xe0] sm:$0xff]
      %v4513 = vld [vmem:[#allocation3 + $0xe8] sm:$0xff]
      %v4514 = vld [vmem:[#allocation3 + $0xf0] sm:$0xff]
      %v4515 = vld [vmem:[#allocation3 + $0xf8] sm:$0xff]
      %v4516 = vld [vmem:[#allocation3 + $0x100] sm:$0xff]
      %v4517 = vld [vmem:[#allocation3 + $0x108] sm:$0xff]
      %v4518 = vld [vmem:[#allocation3 + $0x110] sm:$0xff]
      %v4519 = vld [vmem:[#allocation3 + $0x118] sm:$0xff]
      %v4520 = vld [vmem:[#allocation4 + $0xf] sm:$0xff]
      %v4521 = vld [vmem:[#allocation4 + $0x17] sm:$0xff]
      %v4522 = vld [vmem:[#allocation4 + $0x1f] sm:$0xff]
      %v4523 = vld [vmem:[#allocation4 + $0x27] sm:$0xff]
      %v4524 = vld [vmem:[#allocation4 + $0x2f] sm:$0xff]
      %v4525 = vld [vmem:[#allocation4 + $0x37] sm:$0xff]
      %v4526 = vld [vmem:[#allocation4 + $0x3f] sm:$0xff]
      %v4527 = vld [vmem:[#allocation4 + $0x47] sm:$0xff]
      %v4528 = vld [vmem:[#allocation4 + $0x4f] sm:$0xff]
      %v4529 = vld [vmem:[#allocation4 + $0x57] sm:$0xff]
      %v4530 = vld [vmem:[#allocation4 + $0x5f] sm:$0xff]
      %v4531 = vld [vmem:[#allocation4 + $0x67] sm:$0xff]
      %v4532 = vld [vmem:[#allocation4 + $0x6f] sm:$0xff]
      %v4533 = vld [vmem:[#allocation4 + $0x77] sm:$0xff]
      %v4534 = vld [vmem:[#allocation4 + $0x7f] sm:$0xff]
      %v4535 = vld [vmem:[#allocation4 + $0x87] sm:$0xff]
      %v4536 = vld [vmem:[#allocation4 + $0x8f] sm:$0xff]
      %v4537 = vld [vmem:[#allocation4 + $0x97] sm:$0xff]
      %v4538 = vld [vmem:[#allocation4 + $0x9f] sm:$0xff]
      %v4539 = vld [vmem:[#allocation4 + $0xa7] sm:$0xff]
      %v4540 = vld [vmem:[#allocation4 + $0xaf] sm:$0xff]
      %v4541 = vld [vmem:[#allocation4 + $0xb7] sm:$0xff]
      %v4542 = vld [vmem:[#allocation4 + $0xbf] sm:$0xff]
      %v4543 = vld [vmem:[#allocation4 + $0xc7] sm:$0xff]
      %v4544 = vld [vmem:[#allocation4 + $0xcf] sm:$0xff]
      %v4545 = vld [vmem:[#allocation4 + $0xd7] sm:$0xff]
      %v4546 = vld [vmem:[#allocation4 + $0xdf] sm:$0xff]
      %v4547 = vld [vmem:[#allocation4 + $0xe7] sm:$0xff]
      %v4548 = vld [vmem:[#allocation4 + $0xef] sm:$0xff]
      %v4549 = vld [vmem:[#allocation4 + $0xf7] sm:$0xff]
      %v4550 = vld [vmem:[#allocation4 + $0xff] sm:$0xff]
      %v4551 = vld [vmem:[#allocation4 + $0x107] sm:$0xff]
      %v4552 = vld [vmem:[#allocation4 + $0x10f] sm:$0xff]
      %v4553 = vld [vmem:[#allocation4 + $0x117] sm:$0xff]
      %v4554 = vld [vmem:[#allocation4 + $0x11f] sm:$0xff]
      %v4555 = vld [vmem:[#allocation4 + $0x127] sm:$0xff]
      %v4556 = vpack.c.bf16 %v4521, %v4520
      %v4557 = vpack.c.bf16 %v4523, %v4522
      %v4558 = vpack.c.bf16 %v4525, %v4524
      %v4559 = vpack.c.bf16 %v4527, %v4526
      %v4560 = vpack.c.bf16 %v4529, %v4528
      %v4561 = vpack.c.bf16 %v4531, %v4530
      %v4562 = vpack.c.bf16 %v4533, %v4532
      %v4563 = vpack.c.bf16 %v4535, %v4534
      %v4564 = vpack.c.bf16 %v4537, %v4536
      %v4565 = vpack.c.bf16 %v4539, %v4538
      %v4566 = vpack.c.bf16 %v4541, %v4540
      %v4567 = vpack.c.bf16 %v4543, %v4542
      %v4568 = vpack.c.bf16 %v4545, %v4544
      %v4569 = vpack.c.bf16 %v4547, %v4546
      %v4570 = vpack.c.bf16 %v4549, %v4548
      %v4571 = vpack.c.bf16 %v4551, %v4550
      %v4572 = vpack.c.bf16 %v4553, %v4552
      %v4573 = vpack.c.bf16 %v4555, %v4554
      %s4574 = scalar_lea.vmem %s3, 128
      %v4575 = vld [vmem:[%s4574] sm:$0xf]
      %v4576 = vld [vmem:[%s4574 + $0x4] sm:$0xf]
      %v4577 = vld [vmem:[%s4574 + $0x8] sm:$0xf]
      %v4578 = vld [vmem:[%s4574 + $0xc] sm:$0xf]
      %v4579 = vld [vmem:[%s4574 + $0x10] sm:$0xf]
      %v4580 = vld [vmem:[%s4574 + $0x14] sm:$0xf]
      %v4581 = vld [vmem:[%s4574 + $0x18] sm:$0xf]
      %v4582 = vld [vmem:[%s4574 + $0x1c] sm:$0xf]
      %v4583 = vld [vmem:[%s4574 + $0x20] sm:$0xf]
      %v4584 = vld [vmem:[%s4574 + $0x24] sm:$0xf]
      %v4585 = vld [vmem:[%s4574 + $0x28] sm:$0xf]
      %v4586 = vld [vmem:[%s4574 + $0x2c] sm:$0xf]
      %v4587 = vld [vmem:[%s4574 + $0x30] sm:$0xf]
      %v4588 = vld [vmem:[%s4574 + $0x34] sm:$0xf]
      %v4589 = vld [vmem:[%s4574 + $0x38] sm:$0xf]
      %v4590 = vld [vmem:[%s4574 + $0x3c] sm:$0xf]
      %v4607 = vunpack.c.l.b16 %v4575
      %v4608 = vunpack.c.l.b16 %v4576
      %v4609 = vunpack.c.l.b16 %v4577
      %v4610 = vunpack.c.l.b16 %v4578
      %v4611 = vunpack.c.l.b16 %v4579
      %v4612 = vunpack.c.l.b16 %v4580
      %v4613 = vunpack.c.l.b16 %v4581
      %v4614 = vunpack.c.l.b16 %v4582
      %v4615 = vunpack.c.l.b16 %v4583
      %v4616 = vunpack.c.l.b16 %v4584
      %v4617 = vunpack.c.l.b16 %v4585
      %v4618 = vunpack.c.l.b16 %v4586
      %v4619 = vunpack.c.l.b16 %v4587
      %v4620 = vunpack.c.l.b16 %v4588
      %v4621 = vunpack.c.l.b16 %v4589
      %v4622 = vunpack.c.l.b16 %v4590
      %v4623 = vpack.c.b16 %v4608, %v4607
      %v4624 = vpack.c.b16 %v4610, %v4609
      %v4625 = vpack.c.b16 %v4612, %v4611
      %v4626 = vpack.c.b16 %v4614, %v4613
      %v4627 = vpack.c.b16 %v4616, %v4615
      %v4628 = vpack.c.b16 %v4618, %v4617
      %v4629 = vpack.c.b16 %v4620, %v4619
      %v4630 = vpack.c.b16 %v4622, %v4621
      %4639 = vmatpush.bf16.msra.mxu0 %v4630
      %4640 = vmatpush.bf16.msra.mxu0 %v4629
      %4641 = vmatpush.bf16.msra.mxu0 %v4628
      %4642 = vmatpush.bf16.msra.mxu0 %v4627
      %4643 = vmatpush.bf16.msra.mxu0 %v4626
      %4644 = vmatpush.bf16.msra.mxu0 %v4625
      %4645 = vmatpush.bf16.msra.mxu0 %v4624
      %4646 = vmatpush.bf16.msra.mxu0 %v4623
      %4647 = vmatmul.bf16.gmra.mxu0 %v4556
      %v4648 = vpop.f32.mrf.mxu0
      %v4649 = vadd.f32 0.0, %v4648
      %v4650 = vpop.f32.mrf.mxu0
      %v4651 = vadd.f32 0.0, %v4650
      %4652 = vmatmul.bf16.gmra.mxu0 %v4557
      %v4653 = vpop.f32.mrf.mxu0
      %v4654 = vadd.f32 0.0, %v4653
      %v4655 = vpop.f32.mrf.mxu0
      %v4656 = vadd.f32 0.0, %v4655
      %4657 = vmatmul.bf16.gmra.mxu0 %v4558
      %v4658 = vpop.f32.mrf.mxu0
      %v4659 = vadd.f32 0.0, %v4658
      %v4660 = vpop.f32.mrf.mxu0
      %v4661 = vadd.f32 0.0, %v4660
      %4662 = vmatmul.bf16.gmra.mxu0 %v4559
      %v4663 = vpop.f32.mrf.mxu0
      %v4664 = vadd.f32 0.0, %v4663
      %v4665 = vpop.f32.mrf.mxu0
      %v4666 = vadd.f32 0.0, %v4665
      %4667 = vmatmul.bf16.gmra.mxu0 %v4560
      %v4668 = vpop.f32.mrf.mxu0
      %v4669 = vadd.f32 0.0, %v4668
      %v4670 = vpop.f32.mrf.mxu0
      %v4671 = vadd.f32 0.0, %v4670
      %4672 = vmatmul.bf16.gmra.mxu0 %v4561
      %v4673 = vpop.f32.mrf.mxu0
      %v4674 = vadd.f32 0.0, %v4673
      %v4675 = vpop.f32.mrf.mxu0
      %v4676 = vadd.f32 0.0, %v4675
      %4677 = vmatmul.bf16.gmra.mxu0 %v4562
      %v4678 = vpop.f32.mrf.mxu0
      %v4679 = vadd.f32 0.0, %v4678
      %v4680 = vpop.f32.mrf.mxu0
      %v4681 = vadd.f32 0.0, %v4680
      %4682 = vmatmul.bf16.gmra.mxu0 %v4563
      %v4683 = vpop.f32.mrf.mxu0
      %v4684 = vadd.f32 0.0, %v4683
      %v4685 = vpop.f32.mrf.mxu0
      %v4686 = vadd.f32 0.0, %v4685
      %4687 = vmatmul.bf16.gmra.mxu0 %v4564
      %v4688 = vpop.f32.mrf.mxu0
      %v4689 = vadd.f32 0.0, %v4688
      %v4690 = vpop.f32.mrf.mxu0
      %v4691 = vadd.f32 0.0, %v4690
      %4692 = vmatmul.bf16.gmra.mxu0 %v4565
      %v4693 = vpop.f32.mrf.mxu0
      %v4694 = vadd.f32 0.0, %v4693
      %v4695 = vpop.f32.mrf.mxu0
      %v4696 = vadd.f32 0.0, %v4695
      %4697 = vmatmul.bf16.gmra.mxu0 %v4566
      %v4698 = vpop.f32.mrf.mxu0
      %v4699 = vadd.f32 0.0, %v4698
      %v4700 = vpop.f32.mrf.mxu0
      %v4701 = vadd.f32 0.0, %v4700
      %4702 = vmatmul.bf16.gmra.mxu0 %v4567
      %v4703 = vpop.f32.mrf.mxu0
      %v4704 = vadd.f32 0.0, %v4703
      %v4705 = vpop.f32.mrf.mxu0
      %v4706 = vadd.f32 0.0, %v4705
      %4707 = vmatmul.bf16.gmra.mxu0 %v4568
      %v4708 = vpop.f32.mrf.mxu0
      %v4709 = vadd.f32 0.0, %v4708
      %v4710 = vpop.f32.mrf.mxu0
      %v4711 = vadd.f32 0.0, %v4710
      %4712 = vmatmul.bf16.gmra.mxu0 %v4569
      %v4713 = vpop.f32.mrf.mxu0
      %v4714 = vadd.f32 0.0, %v4713
      %v4715 = vpop.f32.mrf.mxu0
      %v4716 = vadd.f32 0.0, %v4715
      %4717 = vmatmul.bf16.gmra.mxu0 %v4570
      %v4718 = vpop.f32.mrf.mxu0
      %v4719 = vadd.f32 0.0, %v4718
      %v4720 = vpop.f32.mrf.mxu0
      %v4721 = vadd.f32 0.0, %v4720
      %4722 = vmatmul.bf16.gmra.mxu0 %v4571
      %v4723 = vpop.f32.mrf.mxu0
      %v4724 = vadd.f32 0.0, %v4723
      %v4725 = vpop.f32.mrf.mxu0
      %v4726 = vadd.f32 0.0, %v4725
      %4727 = vmatmul.bf16.gmra.mxu0 %v4572
      %v4728 = vpop.f32.mrf.mxu0
      %v4729 = vadd.f32 0.0, %v4728
      %v4730 = vpop.f32.mrf.mxu0
      %v4731 = vadd.f32 0.0, %v4730
      %4732 = vmatmul.bf16.gmra.mxu0 %v4573
      %v4733 = vpop.f32.mrf.mxu0
      %v4734 = vadd.f32 0.0, %v4733
      %v4735 = vpop.f32.mrf.mxu0
      %v4736 = vadd.f32 0.0, %v4735
      %4737 = vdwg.mxu0
      %v4738 = vadd.f32 %v4484, %v4649
      %v4739 = vadd.f32 %v4485, %v4651
      %v4740 = vadd.f32 %v4486, %v4654
      %v4741 = vadd.f32 %v4487, %v4656
      %v4742 = vadd.f32 %v4488, %v4659
      %v4743 = vadd.f32 %v4489, %v4661
      %v4744 = vadd.f32 %v4490, %v4664
      %v4745 = vadd.f32 %v4491, %v4666
      %v4746 = vadd.f32 %v4492, %v4669
      %v4747 = vadd.f32 %v4493, %v4671
      %v4748 = vadd.f32 %v4494, %v4674
      %v4749 = vadd.f32 %v4495, %v4676
      %v4750 = vadd.f32 %v4496, %v4679
      %v4751 = vadd.f32 %v4497, %v4681
      %v4752 = vadd.f32 %v4498, %v4684
      %v4753 = vadd.f32 %v4499, %v4686
      %v4754 = vadd.f32 %v4500, %v4689
      %v4755 = vadd.f32 %v4501, %v4691
      %v4756 = vadd.f32 %v4502, %v4694
      %v4757 = vadd.f32 %v4503, %v4696
      %v4758 = vadd.f32 %v4504, %v4699
      %v4759 = vadd.f32 %v4505, %v4701
      %v4760 = vadd.f32 %v4506, %v4704
      %v4761 = vadd.f32 %v4507, %v4706
      %v4762 = vadd.f32 %v4508, %v4709
      %v4763 = vadd.f32 %v4509, %v4711
      %v4764 = vadd.f32 %v4510, %v4714
      %v4765 = vadd.f32 %v4511, %v4716
      %v4766 = vadd.f32 %v4512, %v4719
      %v4767 = vadd.f32 %v4513, %v4721
      %v4768 = vadd.f32 %v4514, %v4724
      %v4769 = vadd.f32 %v4515, %v4726
      %v4770 = vadd.f32 %v4516, %v4729
      %v4771 = vadd.f32 %v4517, %v4731
      %v4772 = vadd.f32 %v4518, %v4734
      %v4773 = vadd.f32 %v4519, %v4736
      %4774 = vst [vmem:[#allocation3] sm:$0xff] %v4738
      %4775 = vst [vmem:[#allocation3 + $0x8] sm:$0xff] %v4739
      %4776 = vst [vmem:[#allocation3 + $0x10] sm:$0xff] %v4740
      %4777 = vst [vmem:[#allocation3 + $0x18] sm:$0xff] %v4741
      %4778 = vst [vmem:[#allocation3 + $0x20] sm:$0xff] %v4742
      %4779 = vst [vmem:[#allocation3 + $0x28] sm:$0xff] %v4743
      %4780 = vst [vmem:[#allocation3 + $0x30] sm:$0xff] %v4744
      %4781 = vst [vmem:[#allocation3 + $0x38] sm:$0xff] %v4745
      %4782 = vst [vmem:[#allocation3 + $0x40] sm:$0xff] %v4746
      %4783 = vst [vmem:[#allocation3 + $0x48] sm:$0xff] %v4747
      %4784 = vst [vmem:[#allocation3 + $0x50] sm:$0xff] %v4748
      %4785 = vst [vmem:[#allocation3 + $0x58] sm:$0xff] %v4749
      %4786 = vst [vmem:[#allocation3 + $0x60] sm:$0xff] %v4750
      %4787 = vst [vmem:[#allocation3 + $0x68] sm:$0xff] %v4751
      %4788 = vst [vmem:[#allocation3 + $0x70] sm:$0xff] %v4752
      %4789 = vst [vmem:[#allocation3 + $0x78] sm:$0xff] %v4753
      %4790 = vst [vmem:[#allocation3 + $0x80] sm:$0xff] %v4754
      %4791 = vst [vmem:[#allocation3 + $0x88] sm:$0xff] %v4755
      %4792 = vst [vmem:[#allocation3 + $0x90] sm:$0xff] %v4756
      %4793 = vst [vmem:[#allocation3 + $0x98] sm:$0xff] %v4757
      %4794 = vst [vmem:[#allocation3 + $0xa0] sm:$0xff] %v4758
      %4795 = vst [vmem:[#allocation3 + $0xa8] sm:$0xff] %v4759
      %4796 = vst [vmem:[#allocation3 + $0xb0] sm:$0xff] %v4760
      %4797 = vst [vmem:[#allocation3 + $0xb8] sm:$0xff] %v4761
      %4798 = vst [vmem:[#allocation3 + $0xc0] sm:$0xff] %v4762
      %4799 = vst [vmem:[#allocation3 + $0xc8] sm:$0xff] %v4763
      %4800 = vst [vmem:[#allocation3 + $0xd0] sm:$0xff] %v4764
      %4801 = vst [vmem:[#allocation3 + $0xd8] sm:$0xff] %v4765
      %4802 = vst [vmem:[#allocation3 + $0xe0] sm:$0xff] %v4766
      %4803 = vst [vmem:[#allocation3 + $0xe8] sm:$0xff] %v4767
      %4804 = vst [vmem:[#allocation3 + $0xf0] sm:$0xff] %v4768
      %4805 = vst [vmem:[#allocation3 + $0xf8] sm:$0xff] %v4769
      %4806 = vst [vmem:[#allocation3 + $0x100] sm:$0xff] %v4770
      %4807 = vst [vmem:[#allocation3 + $0x108] sm:$0xff] %v4771
      %4808 = vst [vmem:[#allocation3 + $0x110] sm:$0xff] %v4772
      %4809 = vst [vmem:[#allocation3 + $0x118] sm:$0xff] %v4773
      %v4810 = vld [vmem:[#allocation3] sm:$0xff]
      %v4811 = vld [vmem:[#allocation3 + $0x8] sm:$0xff]
      %v4812 = vld [vmem:[#allocation3 + $0x10] sm:$0xff]
      %v4813 = vld [vmem:[#allocation3 + $0x18] sm:$0xff]
      %v4814 = vld [vmem:[#allocation3 + $0x20] sm:$0xff]
      %v4815 = vld [vmem:[#allocation3 + $0x28] sm:$0xff]
      %v4816 = vld [vmem:[#allocation3 + $0x30] sm:$0xff]
      %v4817 = vld [vmem:[#allocation3 + $0x38] sm:$0xff]
      %v4818 = vld [vmem:[#allocation3 + $0x40] sm:$0xff]
      %v4819 = vld [vmem:[#allocation3 + $0x48] sm:$0xff]
      %v4820 = vld [vmem:[#allocation3 + $0x50] sm:$0xff]
      %v4821 = vld [vmem:[#allocation3 + $0x58] sm:$0xff]
      %v4822 = vld [vmem:[#allocation3 + $0x60] sm:$0xff]
      %v4823 = vld [vmem:[#allocation3 + $0x68] sm:$0xff]
      %v4824 = vld [vmem:[#allocation3 + $0x70] sm:$0xff]
      %v4825 = vld [vmem:[#allocation3 + $0x78] sm:$0xff]
      %v4826 = vld [vmem:[#allocation3 + $0x80] sm:$0xff]
      %v4827 = vld [vmem:[#allocation3 + $0x88] sm:$0xff]
      %v4828 = vld [vmem:[#allocation3 + $0x90] sm:$0xff]
      %v4829 = vld [vmem:[#allocation3 + $0x98] sm:$0xff]
      %v4830 = vld [vmem:[#allocation3 + $0xa0] sm:$0xff]
      %v4831 = vld [vmem:[#allocation3 + $0xa8] sm:$0xff]
      %v4832 = vld [vmem:[#allocation3 + $0xb0] sm:$0xff]
      %v4833 = vld [vmem:[#allocation3 + $0xb8] sm:$0xff]
      %v4834 = vld [vmem:[#allocation3 + $0xc0] sm:$0xff]
      %v4835 = vld [vmem:[#allocation3 + $0xc8] sm:$0xff]
      %v4836 = vld [vmem:[#allocation3 + $0xd0] sm:$0xff]
      %v4837 = vld [vmem:[#allocation3 + $0xd8] sm:$0xff]
      %v4838 = vld [vmem:[#allocation3 + $0xe0] sm:$0xff]
      %v4839 = vld [vmem:[#allocation3 + $0xe8] sm:$0xff]
      %v4840 = vld [vmem:[#allocation3 + $0xf0] sm:$0xff]
      %v4841 = vld [vmem:[#allocation3 + $0xf8] sm:$0xff]
      %v4842 = vld [vmem:[#allocation3 + $0x100] sm:$0xff]
      %v4843 = vld [vmem:[#allocation3 + $0x108] sm:$0xff]
      %v4844 = vld [vmem:[#allocation3 + $0x110] sm:$0xff]
      %v4845 = vld [vmem:[#allocation3 + $0x118] sm:$0xff]
      %v4846 = vld [vmem:[#allocation4 + $0x1f] sm:$0xff]
      %v4847 = vld [vmem:[#allocation4 + $0x27] sm:$0xff]
      %v4848 = vld [vmem:[#allocation4 + $0x2f] sm:$0xff]
      %v4849 = vld [vmem:[#allocation4 + $0x37] sm:$0xff]
      %v4850 = vld [vmem:[#allocation4 + $0x3f] sm:$0xff]
      %v4851 = vld [vmem:[#allocation4 + $0x47] sm:$0xff]
      %v4852 = vld [vmem:[#allocation4 + $0x4f] sm:$0xff]
      %v4853 = vld [vmem:[#allocation4 + $0x57] sm:$0xff]
      %v4854 = vld [vmem:[#allocation4 + $0x5f] sm:$0xff]
      %v4855 = vld [vmem:[#allocation4 + $0x67] sm:$0xff]
      %v4856 = vld [vmem:[#allocation4 + $0x6f] sm:$0xff]
      %v4857 = vld [vmem:[#allocation4 + $0x77] sm:$0xff]
      %v4858 = vld [vmem:[#allocation4 + $0x7f] sm:$0xff]
      %v4859 = vld [vmem:[#allocation4 + $0x87] sm:$0xff]
      %v4860 = vld [vmem:[#allocation4 + $0x8f] sm:$0xff]
      %v4861 = vld [vmem:[#allocation4 + $0x97] sm:$0xff]
      %v4862 = vld [vmem:[#allocation4 + $0x9f] sm:$0xff]
      %v4863 = vld [vmem:[#allocation4 + $0xa7] sm:$0xff]
      %v4864 = vld [vmem:[#allocation4 + $0xaf] sm:$0xff]
      %v4865 = vld [vmem:[#allocation4 + $0xb7] sm:$0xff]
      %v4866 = vld [vmem:[#allocation4 + $0xbf] sm:$0xff]
      %v4867 = vld [vmem:[#allocation4 + $0xc7] sm:$0xff]
      %v4868 = vld [vmem:[#allocation4 + $0xcf] sm:$0xff]
      %v4869 = vld [vmem:[#allocation4 + $0xd7] sm:$0xff]
      %v4870 = vld [vmem:[#allocation4 + $0xdf] sm:$0xff]
      %v4871 = vld [vmem:[#allocation4 + $0xe7] sm:$0xff]
      %v4872 = vld [vmem:[#allocation4 + $0xef] sm:$0xff]
      %v4873 = vld [vmem:[#allocation4 + $0xf7] sm:$0xff]
      %v4874 = vld [vmem:[#allocation4 + $0xff] sm:$0xff]
      %v4875 = vld [vmem:[#allocation4 + $0x107] sm:$0xff]
      %v4876 = vld [vmem:[#allocation4 + $0x10f] sm:$0xff]
      %v4877 = vld [vmem:[#allocation4 + $0x117] sm:$0xff]
      %v4878 = vld [vmem:[#allocation4 + $0x11f] sm:$0xff]
      %v4879 = vld [vmem:[#allocation4 + $0x127] sm:$0xff]
      %v4880 = vld [vmem:[#allocation4 + $0x12f] sm:$0xff]
      %v4881 = vld [vmem:[#allocation4 + $0x137] sm:$0xff]
      %v4882 = vpack.c.bf16 %v4847, %v4846
      %v4883 = vpack.c.bf16 %v4849, %v4848
      %v4884 = vpack.c.bf16 %v4851, %v4850
      %v4885 = vpack.c.bf16 %v4853, %v4852
      %v4886 = vpack.c.bf16 %v4855, %v4854
      %v4887 = vpack.c.bf16 %v4857, %v4856
      %v4888 = vpack.c.bf16 %v4859, %v4858
      %v4889 = vpack.c.bf16 %v4861, %v4860
      %v4890 = vpack.c.bf16 %v4863, %v4862
      %v4891 = vpack.c.bf16 %v4865, %v4864
      %v4892 = vpack.c.bf16 %v4867, %v4866
      %v4893 = vpack.c.bf16 %v4869, %v4868
      %v4894 = vpack.c.bf16 %v4871, %v4870
      %v4895 = vpack.c.bf16 %v4873, %v4872
      %v4896 = vpack.c.bf16 %v4875, %v4874
      %v4897 = vpack.c.bf16 %v4877, %v4876
      %v4898 = vpack.c.bf16 %v4879, %v4878
      %v4899 = vpack.c.bf16 %v4881, %v4880
      %s4900 = scalar_lea.vmem %s3, 192
      %v4901 = vld [vmem:[%s4900] sm:$0xf]
      %v4902 = vld [vmem:[%s4900 + $0x4] sm:$0xf]
      %v4903 = vld [vmem:[%s4900 + $0x8] sm:$0xf]
      %v4904 = vld [vmem:[%s4900 + $0xc] sm:$0xf]
      %v4905 = vld [vmem:[%s4900 + $0x10] sm:$0xf]
      %v4906 = vld [vmem:[%s4900 + $0x14] sm:$0xf]
      %v4907 = vld [vmem:[%s4900 + $0x18] sm:$0xf]
      %v4908 = vld [vmem:[%s4900 + $0x1c] sm:$0xf]
      %v4909 = vld [vmem:[%s4900 + $0x20] sm:$0xf]
      %v4910 = vld [vmem:[%s4900 + $0x24] sm:$0xf]
      %v4911 = vld [vmem:[%s4900 + $0x28] sm:$0xf]
      %v4912 = vld [vmem:[%s4900 + $0x2c] sm:$0xf]
      %v4913 = vld [vmem:[%s4900 + $0x30] sm:$0xf]
      %v4914 = vld [vmem:[%s4900 + $0x34] sm:$0xf]
      %v4915 = vld [vmem:[%s4900 + $0x38] sm:$0xf]
      %v4916 = vld [vmem:[%s4900 + $0x3c] sm:$0xf]
      %v4933 = vunpack.c.l.b16 %v4901
      %v4934 = vunpack.c.l.b16 %v4902
      %v4935 = vunpack.c.l.b16 %v4903
      %v4936 = vunpack.c.l.b16 %v4904
      %v4937 = vunpack.c.l.b16 %v4905
      %v4938 = vunpack.c.l.b16 %v4906
      %v4939 = vunpack.c.l.b16 %v4907
      %v4940 = vunpack.c.l.b16 %v4908
      %v4941 = vunpack.c.l.b16 %v4909
      %v4942 = vunpack.c.l.b16 %v4910
      %v4943 = vunpack.c.l.b16 %v4911
      %v4944 = vunpack.c.l.b16 %v4912
      %v4945 = vunpack.c.l.b16 %v4913
      %v4946 = vunpack.c.l.b16 %v4914
      %v4947 = vunpack.c.l.b16 %v4915
      %v4948 = vunpack.c.l.b16 %v4916
      %v4949 = vpack.c.b16 %v4934, %v4933
      %v4950 = vpack.c.b16 %v4936, %v4935
      %v4951 = vpack.c.b16 %v4938, %v4937
      %v4952 = vpack.c.b16 %v4940, %v4939
      %v4953 = vpack.c.b16 %v4942, %v4941
      %v4954 = vpack.c.b16 %v4944, %v4943
      %v4955 = vpack.c.b16 %v4946, %v4945
      %v4956 = vpack.c.b16 %v4948, %v4947
      %4965 = vmatpush.bf16.msra.mxu0 %v4956
      %4966 = vmatpush.bf16.msra.mxu0 %v4955
      %4967 = vmatpush.bf16.msra.mxu0 %v4954
      %4968 = vmatpush.bf16.msra.mxu0 %v4953
      %4969 = vmatpush.bf16.msra.mxu0 %v4952
      %4970 = vmatpush.bf16.msra.mxu0 %v4951
      %4971 = vmatpush.bf16.msra.mxu0 %v4950
      %4972 = vmatpush.bf16.msra.mxu0 %v4949
      %4973 = vmatmul.bf16.gmra.mxu0 %v4882
      %v4974 = vpop.f32.mrf.mxu0
      %v4975 = vadd.f32 0.0, %v4974
      %v4976 = vpop.f32.mrf.mxu0
      %v4977 = vadd.f32 0.0, %v4976
      %4978 = vmatmul.bf16.gmra.mxu0 %v4883
      %v4979 = vpop.f32.mrf.mxu0
      %v4980 = vadd.f32 0.0, %v4979
      %v4981 = vpop.f32.mrf.mxu0
      %v4982 = vadd.f32 0.0, %v4981
      %4983 = vmatmul.bf16.gmra.mxu0 %v4884
      %v4984 = vpop.f32.mrf.mxu0
      %v4985 = vadd.f32 0.0, %v4984
      %v4986 = vpop.f32.mrf.mxu0
      %v4987 = vadd.f32 0.0, %v4986
      %4988 = vmatmul.bf16.gmra.mxu0 %v4885
      %v4989 = vpop.f32.mrf.mxu0
      %v4990 = vadd.f32 0.0, %v4989
      %v4991 = vpop.f32.mrf.mxu0
      %v4992 = vadd.f32 0.0, %v4991
      %4993 = vmatmul.bf16.gmra.mxu0 %v4886
      %v4994 = vpop.f32.mrf.mxu0
      %v4995 = vadd.f32 0.0, %v4994
      %v4996 = vpop.f32.mrf.mxu0
      %v4997 = vadd.f32 0.0, %v4996
      %4998 = vmatmul.bf16.gmra.mxu0 %v4887
      %v4999 = vpop.f32.mrf.mxu0
      %v5000 = vadd.f32 0.0, %v4999
      %v5001 = vpop.f32.mrf.mxu0
      %v5002 = vadd.f32 0.0, %v5001
      %5003 = vmatmul.bf16.gmra.mxu0 %v4888
      %v5004 = vpop.f32.mrf.mxu0
      %v5005 = vadd.f32 0.0, %v5004
      %v5006 = vpop.f32.mrf.mxu0
      %v5007 = vadd.f32 0.0, %v5006
      %5008 = vmatmul.bf16.gmra.mxu0 %v4889
      %v5009 = vpop.f32.mrf.mxu0
      %v5010 = vadd.f32 0.0, %v5009
      %v5011 = vpop.f32.mrf.mxu0
      %v5012 = vadd.f32 0.0, %v5011
      %5013 = vmatmul.bf16.gmra.mxu0 %v4890
      %v5014 = vpop.f32.mrf.mxu0
      %v5015 = vadd.f32 0.0, %v5014
      %v5016 = vpop.f32.mrf.mxu0
      %v5017 = vadd.f32 0.0, %v5016
      %5018 = vmatmul.bf16.gmra.mxu0 %v4891
      %v5019 = vpop.f32.mrf.mxu0
      %v5020 = vadd.f32 0.0, %v5019
      %v5021 = vpop.f32.mrf.mxu0
      %v5022 = vadd.f32 0.0, %v5021
      %5023 = vmatmul.bf16.gmra.mxu0 %v4892
      %v5024 = vpop.f32.mrf.mxu0
      %v5025 = vadd.f32 0.0, %v5024
      %v5026 = vpop.f32.mrf.mxu0
      %v5027 = vadd.f32 0.0, %v5026
      %5028 = vmatmul.bf16.gmra.mxu0 %v4893
      %v5029 = vpop.f32.mrf.mxu0
      %v5030 = vadd.f32 0.0, %v5029
      %v5031 = vpop.f32.mrf.mxu0
      %v5032 = vadd.f32 0.0, %v5031
      %5033 = vmatmul.bf16.gmra.mxu0 %v4894
      %v5034 = vpop.f32.mrf.mxu0
      %v5035 = vadd.f32 0.0, %v5034
      %v5036 = vpop.f32.mrf.mxu0
      %v5037 = vadd.f32 0.0, %v5036
      %5038 = vmatmul.bf16.gmra.mxu0 %v4895
      %v5039 = vpop.f32.mrf.mxu0
      %v5040 = vadd.f32 0.0, %v5039
      %v5041 = vpop.f32.mrf.mxu0
      %v5042 = vadd.f32 0.0, %v5041
      %5043 = vmatmul.bf16.gmra.mxu0 %v4896
      %v5044 = vpop.f32.mrf.mxu0
      %v5045 = vadd.f32 0.0, %v5044
      %v5046 = vpop.f32.mrf.mxu0
      %v5047 = vadd.f32 0.0, %v5046
      %5048 = vmatmul.bf16.gmra.mxu0 %v4897
      %v5049 = vpop.f32.mrf.mxu0
      %v5050 = vadd.f32 0.0, %v5049
      %v5051 = vpop.f32.mrf.mxu0
      %v5052 = vadd.f32 0.0, %v5051
      %5053 = vmatmul.bf16.gmra.mxu0 %v4898
      %v5054 = vpop.f32.mrf.mxu0
      %v5055 = vadd.f32 0.0, %v5054
      %v5056 = vpop.f32.mrf.mxu0
      %v5057 = vadd.f32 0.0, %v5056
      %5058 = vmatmul.bf16.gmra.mxu0 %v4899
      %v5059 = vpop.f32.mrf.mxu0
      %v5060 = vadd.f32 0.0, %v5059
      %v5061 = vpop.f32.mrf.mxu0
      %v5062 = vadd.f32 0.0, %v5061
      %5063 = vdwg.mxu0
      %v5064 = vadd.f32 %v4810, %v4975
      %v5065 = vadd.f32 %v4811, %v4977
      %v5066 = vadd.f32 %v4812, %v4980
      %v5067 = vadd.f32 %v4813, %v4982
      %v5068 = vadd.f32 %v4814, %v4985
      %v5069 = vadd.f32 %v4815, %v4987
      %v5070 = vadd.f32 %v4816, %v4990
      %v5071 = vadd.f32 %v4817, %v4992
      %v5072 = vadd.f32 %v4818, %v4995
      %v5073 = vadd.f32 %v4819, %v4997
      %v5074 = vadd.f32 %v4820, %v5000
      %v5075 = vadd.f32 %v4821, %v5002
      %v5076 = vadd.f32 %v4822, %v5005
      %v5077 = vadd.f32 %v4823, %v5007
      %v5078 = vadd.f32 %v4824, %v5010
      %v5079 = vadd.f32 %v4825, %v5012
      %v5080 = vadd.f32 %v4826, %v5015
      %v5081 = vadd.f32 %v4827, %v5017
      %v5082 = vadd.f32 %v4828, %v5020
      %v5083 = vadd.f32 %v4829, %v5022
      %v5084 = vadd.f32 %v4830, %v5025
      %v5085 = vadd.f32 %v4831, %v5027
      %v5086 = vadd.f32 %v4832, %v5030
      %v5087 = vadd.f32 %v4833, %v5032
      %v5088 = vadd.f32 %v4834, %v5035
      %v5089 = vadd.f32 %v4835, %v5037
      %v5090 = vadd.f32 %v4836, %v5040
      %v5091 = vadd.f32 %v4837, %v5042
      %v5092 = vadd.f32 %v4838, %v5045
      %v5093 = vadd.f32 %v4839, %v5047
      %v5094 = vadd.f32 %v4840, %v5050
      %v5095 = vadd.f32 %v4841, %v5052
      %v5096 = vadd.f32 %v4842, %v5055
      %v5097 = vadd.f32 %v4843, %v5057
      %v5098 = vadd.f32 %v4844, %v5060
      %v5099 = vadd.f32 %v4845, %v5062
      %5100 = vst [vmem:[#allocation3] sm:$0xff] %v5064
      %5101 = vst [vmem:[#allocation3 + $0x8] sm:$0xff] %v5065
      %5102 = vst [vmem:[#allocation3 + $0x10] sm:$0xff] %v5066
      %5103 = vst [vmem:[#allocation3 + $0x18] sm:$0xff] %v5067
      %5104 = vst [vmem:[#allocation3 + $0x20] sm:$0xff] %v5068
      %5105 = vst [vmem:[#allocation3 + $0x28] sm:$0xff] %v5069
      %5106 = vst [vmem:[#allocation3 + $0x30] sm:$0xff] %v5070
      %5107 = vst [vmem:[#allocation3 + $0x38] sm:$0xff] %v5071
      %5108 = vst [vmem:[#allocation3 + $0x40] sm:$0xff] %v5072
      %5109 = vst [vmem:[#allocation3 + $0x48] sm:$0xff] %v5073
      %5110 = vst [vmem:[#allocation3 + $0x50] sm:$0xff] %v5074
      %5111 = vst [vmem:[#allocation3 + $0x58] sm:$0xff] %v5075
      %5112 = vst [vmem:[#allocation3 + $0x60] sm:$0xff] %v5076
      %5113 = vst [vmem:[#allocation3 + $0x68] sm:$0xff] %v5077
      %5114 = vst [vmem:[#allocation3 + $0x70] sm:$0xff] %v5078
      %5115 = vst [vmem:[#allocation3 + $0x78] sm:$0xff] %v5079
      %5116 = vst [vmem:[#allocation3 + $0x80] sm:$0xff] %v5080
      %5117 = vst [vmem:[#allocation3 + $0x88] sm:$0xff] %v5081
      %5118 = vst [vmem:[#allocation3 + $0x90] sm:$0xff] %v5082
      %5119 = vst [vmem:[#allocation3 + $0x98] sm:$0xff] %v5083
      %5120 = vst [vmem:[#allocation3 + $0xa0] sm:$0xff] %v5084
      %5121 = vst [vmem:[#allocation3 + $0xa8] sm:$0xff] %v5085
      %5122 = vst [vmem:[#allocation3 + $0xb0] sm:$0xff] %v5086
      %5123 = vst [vmem:[#allocation3 + $0xb8] sm:$0xff] %v5087
      %5124 = vst [vmem:[#allocation3 + $0xc0] sm:$0xff] %v5088
      %5125 = vst [vmem:[#allocation3 + $0xc8] sm:$0xff] %v5089
      %5126 = vst [vmem:[#allocation3 + $0xd0] sm:$0xff] %v5090
      %5127 = vst [vmem:[#allocation3 + $0xd8] sm:$0xff] %v5091
      %5128 = vst [vmem:[#allocation3 + $0xe0] sm:$0xff] %v5092
      %5129 = vst [vmem:[#allocation3 + $0xe8] sm:$0xff] %v5093
      %5130 = vst [vmem:[#allocation3 + $0xf0] sm:$0xff] %v5094
      %5131 = vst [vmem:[#allocation3 + $0xf8] sm:$0xff] %v5095
      %5132 = vst [vmem:[#allocation3 + $0x100] sm:$0xff] %v5096
      %5133 = vst [vmem:[#allocation3 + $0x108] sm:$0xff] %v5097
      %5134 = vst [vmem:[#allocation3 + $0x110] sm:$0xff] %v5098
      %5135 = vst [vmem:[#allocation3 + $0x118] sm:$0xff] %v5099
      %v5136 = vld [vmem:[#allocation3] sm:$0xff]
      %v5137 = vld [vmem:[#allocation3 + $0x8] sm:$0xff]
      %v5138 = vld [vmem:[#allocation3 + $0x10] sm:$0xff]
      %v5139 = vld [vmem:[#allocation3 + $0x18] sm:$0xff]
      %v5140 = vld [vmem:[#allocation3 + $0x20] sm:$0xff]
      %v5141 = vld [vmem:[#allocation3 + $0x28] sm:$0xff]
      %v5142 = vld [vmem:[#allocation3 + $0x30] sm:$0xff]
      %v5143 = vld [vmem:[#allocation3 + $0x38] sm:$0xff]
      %v5144 = vld [vmem:[#allocation3 + $0x40] sm:$0xff]
      %v5145 = vld [vmem:[#allocation3 + $0x48] sm:$0xff]
      %v5146 = vld [vmem:[#allocation3 + $0x50] sm:$0xff]
      %v5147 = vld [vmem:[#allocation3 + $0x58] sm:$0xff]
      %v5148 = vld [vmem:[#allocation3 + $0x60] sm:$0xff]
      %v5149 = vld [vmem:[#allocation3 + $0x68] sm:$0xff]
      %v5150 = vld [vmem:[#allocation3 + $0x70] sm:$0xff]
      %v5151 = vld [vmem:[#allocation3 + $0x78] sm:$0xff]
      %v5152 = vld [vmem:[#allocation3 + $0x80] sm:$0xff]
      %v5153 = vld [vmem:[#allocation3 + $0x88] sm:$0xff]
      %v5154 = vld [vmem:[#allocation3 + $0x90] sm:$0xff]
      %v5155 = vld [vmem:[#allocation3 + $0x98] sm:$0xff]
      %v5156 = vld [vmem:[#allocation3 + $0xa0] sm:$0xff]
      %v5157 = vld [vmem:[#allocation3 + $0xa8] sm:$0xff]
      %v5158 = vld [vmem:[#allocation3 + $0xb0] sm:$0xff]
      %v5159 = vld [vmem:[#allocation3 + $0xb8] sm:$0xff]
      %v5160 = vld [vmem:[#allocation3 + $0xc0] sm:$0xff]
      %v5161 = vld [vmem:[#allocation3 + $0xc8] sm:$0xff]
      %v5162 = vld [vmem:[#allocation3 + $0xd0] sm:$0xff]
      %v5163 = vld [vmem:[#allocation3 + $0xd8] sm:$0xff]
      %v5164 = vld [vmem:[#allocation3 + $0xe0] sm:$0xff]
      %v5165 = vld [vmem:[#allocation3 + $0xe8] sm:$0xff]
      %v5166 = vld [vmem:[#allocation3 + $0xf0] sm:$0xff]
      %v5167 = vld [vmem:[#allocation3 + $0xf8] sm:$0xff]
      %v5168 = vld [vmem:[#allocation3 + $0x100] sm:$0xff]
      %v5169 = vld [vmem:[#allocation3 + $0x108] sm:$0xff]
      %v5170 = vld [vmem:[#allocation3 + $0x110] sm:$0xff]
      %v5171 = vld [vmem:[#allocation3 + $0x118] sm:$0xff]
      %v5172 = vld [vmem:[#allocation4 + $0x20] sm:$0xff]
      %v5173 = vld [vmem:[#allocation4 + $0x28] sm:$0xff]
      %v5174 = vld [vmem:[#allocation4 + $0x30] sm:$0xff]
      %v5175 = vld [vmem:[#allocation4 + $0x38] sm:$0xff]
      %v5176 = vld [vmem:[#allocation4 + $0x40] sm:$0xff]
      %v5177 = vld [vmem:[#allocation4 + $0x48] sm:$0xff]
      %v5178 = vld [vmem:[#allocation4 + $0x50] sm:$0xff]
      %v5179 = vld [vmem:[#allocation4 + $0x58] sm:$0xff]
      %v5180 = vld [vmem:[#allocation4 + $0x60] sm:$0xff]
      %v5181 = vld [vmem:[#allocation4 + $0x68] sm:$0xff]
      %v5182 = vld [vmem:[#allocation4 + $0x70] sm:$0xff]
      %v5183 = vld [vmem:[#allocation4 + $0x78] sm:$0xff]
      %v5184 = vld [vmem:[#allocation4 + $0x80] sm:$0xff]
      %v5185 = vld [vmem:[#allocation4 + $0x88] sm:$0xff]
      %v5186 = vld [vmem:[#allocation4 + $0x90] sm:$0xff]
      %v5187 = vld [vmem:[#allocation4 + $0x98] sm:$0xff]
      %v5188 = vld [vmem:[#allocation4 + $0xa0] sm:$0xff]
      %v5189 = vld [vmem:[#allocation4 + $0xa8] sm:$0xff]
      %v5190 = vld [vmem:[#allocation4 + $0xb0] sm:$0xff]
      %v5191 = vld [vmem:[#allocation4 + $0xb8] sm:$0xff]
      %v5192 = vld [vmem:[#allocation4 + $0xc0] sm:$0xff]
      %v5193 = vld [vmem:[#allocation4 + $0xc8] sm:$0xff]
      %v5194 = vld [vmem:[#allocation4 + $0xd0] sm:$0xff]
      %v5195 = vld [vmem:[#allocation4 + $0xd8] sm:$0xff]
      %v5196 = vld [vmem:[#allocation4 + $0xe0] sm:$0xff]
      %v5197 = vld [vmem:[#allocation4 + $0xe8] sm:$0xff]
      %v5198 = vld [vmem:[#allocation4 + $0xf0] sm:$0xff]
      %v5199 = vld [vmem:[#allocation4 + $0xf8] sm:$0xff]
      %v5200 = vld [vmem:[#allocation4 + $0x100] sm:$0xff]
      %v5201 = vld [vmem:[#allocation4 + $0x108] sm:$0xff]
      %v5202 = vld [vmem:[#allocation4 + $0x110] sm:$0xff]
      %v5203 = vld [vmem:[#allocation4 + $0x118] sm:$0xff]
      %v5204 = vld [vmem:[#allocation4 + $0x120] sm:$0xff]
      %v5205 = vld [vmem:[#allocation4 + $0x128] sm:$0xff]
      %v5206 = vld [vmem:[#allocation4 + $0x130] sm:$0xff]
      %v5207 = vld [vmem:[#allocation4 + $0x138] sm:$0xff]
      %v5208 = vpack.c.bf16 %v5173, %v5172
      %v5209 = vpack.c.bf16 %v5175, %v5174
      %v5210 = vpack.c.bf16 %v5177, %v5176
      %v5211 = vpack.c.bf16 %v5179, %v5178
      %v5212 = vpack.c.bf16 %v5181, %v5180
      %v5213 = vpack.c.bf16 %v5183, %v5182
      %v5214 = vpack.c.bf16 %v5185, %v5184
      %v5215 = vpack.c.bf16 %v5187, %v5186
      %v5216 = vpack.c.bf16 %v5189, %v5188
      %v5217 = vpack.c.bf16 %v5191, %v5190
      %v5218 = vpack.c.bf16 %v5193, %v5192
      %v5219 = vpack.c.bf16 %v5195, %v5194
      %v5220 = vpack.c.bf16 %v5197, %v5196
      %v5221 = vpack.c.bf16 %v5199, %v5198
      %v5222 = vpack.c.bf16 %v5201, %v5200
      %v5223 = vpack.c.bf16 %v5203, %v5202
      %v5224 = vpack.c.bf16 %v5205, %v5204
      %v5225 = vpack.c.bf16 %v5207, %v5206
      %s5226 = scalar_lea.vmem %s3, 256
      %v5227 = vld [vmem:[%s5226] sm:$0xf]
      %v5228 = vld [vmem:[%s5226 + $0x4] sm:$0xf]
      %v5229 = vld [vmem:[%s5226 + $0x8] sm:$0xf]
      %v5230 = vld [vmem:[%s5226 + $0xc] sm:$0xf]
      %v5231 = vld [vmem:[%s5226 + $0x10] sm:$0xf]
      %v5232 = vld [vmem:[%s5226 + $0x14] sm:$0xf]
      %v5233 = vld [vmem:[%s5226 + $0x18] sm:$0xf]
      %v5234 = vld [vmem:[%s5226 + $0x1c] sm:$0xf]
      %v5235 = vld [vmem:[%s5226 + $0x20] sm:$0xf]
      %v5236 = vld [vmem:[%s5226 + $0x24] sm:$0xf]
      %v5237 = vld [vmem:[%s5226 + $0x28] sm:$0xf]
      %v5238 = vld [vmem:[%s5226 + $0x2c] sm:$0xf]
      %v5239 = vld [vmem:[%s5226 + $0x30] sm:$0xf]
      %v5240 = vld [vmem:[%s5226 + $0x34] sm:$0xf]
      %v5241 = vld [vmem:[%s5226 + $0x38] sm:$0xf]
      %v5242 = vld [vmem:[%s5226 + $0x3c] sm:$0xf]
      %v5259 = vunpack.c.l.b16 %v5227
      %v5260 = vunpack.c.l.b16 %v5228
      %v5261 = vunpack.c.l.b16 %v5229
      %v5262 = vunpack.c.l.b16 %v5230
      %v5263 = vunpack.c.l.b16 %v5231
      %v5264 = vunpack.c.l.b16 %v5232
      %v5265 = vunpack.c.l.b16 %v5233
      %v5266 = vunpack.c.l.b16 %v5234
      %v5267 = vunpack.c.l.b16 %v5235
      %v5268 = vunpack.c.l.b16 %v5236
      %v5269 = vunpack.c.l.b16 %v5237
      %v5270 = vunpack.c.l.b16 %v5238
      %v5271 = vunpack.c.l.b16 %v5239
      %v5272 = vunpack.c.l.b16 %v5240
      %v5273 = vunpack.c.l.b16 %v5241
      %v5274 = vunpack.c.l.b16 %v5242
      %v5275 = vpack.c.b16 %v5260, %v5259
      %v5276 = vpack.c.b16 %v5262, %v5261
      %v5277 = vpack.c.b16 %v5264, %v5263
      %v5278 = vpack.c.b16 %v5266, %v5265
      %v5279 = vpack.c.b16 %v5268, %v5267
      %v5280 = vpack.c.b16 %v5270, %v5269
      %v5281 = vpack.c.b16 %v5272, %v5271
      %v5282 = vpack.c.b16 %v5274, %v5273
      %5291 = vmatpush.bf16.msra.mxu0 %v5282
      %5292 = vmatpush.bf16.msra.mxu0 %v5281
      %5293 = vmatpush.bf16.msra.mxu0 %v5280
      %5294 = vmatpush.bf16.msra.mxu0 %v5279
      %5295 = vmatpush.bf16.msra.mxu0 %v5278
      %5296 = vmatpush.bf16.msra.mxu0 %v5277
      %5297 = vmatpush.bf16.msra.mxu0 %v5276
      %5298 = vmatpush.bf16.msra.mxu0 %v5275
      %5299 = vmatmul.bf16.gmra.mxu0 %v5208
      %v5300 = vpop.f32.mrf.mxu0
      %v5301 = vadd.f32 0.0, %v5300
      %v5302 = vpop.f32.mrf.mxu0
      %v5303 = vadd.f32 0.0, %v5302
      %5304 = vmatmul.bf16.gmra.mxu0 %v5209
      %v5305 = vpop.f32.mrf.mxu0
      %v5306 = vadd.f32 0.0, %v5305
      %v5307 = vpop.f32.mrf.mxu0
      %v5308 = vadd.f32 0.0, %v5307
      %5309 = vmatmul.bf16.gmra.mxu0 %v5210
      %v5310 = vpop.f32.mrf.mxu0
      %v5311 = vadd.f32 0.0, %v5310
      %v5312 = vpop.f32.mrf.mxu0
      %v5313 = vadd.f32 0.0, %v5312
      %5314 = vmatmul.bf16.gmra.mxu0 %v5211
      %v5315 = vpop.f32.mrf.mxu0
      %v5316 = vadd.f32 0.0, %v5315
      %v5317 = vpop.f32.mrf.mxu0
      %v5318 = vadd.f32 0.0, %v5317
      %5319 = vmatmul.bf16.gmra.mxu0 %v5212
      %v5320 = vpop.f32.mrf.mxu0
      %v5321 = vadd.f32 0.0, %v5320
      %v5322 = vpop.f32.mrf.mxu0
      %v5323 = vadd.f32 0.0, %v5322
      %5324 = vmatmul.bf16.gmra.mxu0 %v5213
      %v5325 = vpop.f32.mrf.mxu0
      %v5326 = vadd.f32 0.0, %v5325
      %v5327 = vpop.f32.mrf.mxu0
      %v5328 = vadd.f32 0.0, %v5327
      %5329 = vmatmul.bf16.gmra.mxu0 %v5214
      %v5330 = vpop.f32.mrf.mxu0
      %v5331 = vadd.f32 0.0, %v5330
      %v5332 = vpop.f32.mrf.mxu0
      %v5333 = vadd.f32 0.0, %v5332
      %5334 = vmatmul.bf16.gmra.mxu0 %v5215
      %v5335 = vpop.f32.mrf.mxu0
      %v5336 = vadd.f32 0.0, %v5335
      %v5337 = vpop.f32.mrf.mxu0
      %v5338 = vadd.f32 0.0, %v5337
      %5339 = vmatmul.bf16.gmra.mxu0 %v5216
      %v5340 = vpop.f32.mrf.mxu0
      %v5341 = vadd.f32 0.0, %v5340
      %v5342 = vpop.f32.mrf.mxu0
      %v5343 = vadd.f32 0.0, %v5342
      %5344 = vmatmul.bf16.gmra.mxu0 %v5217
      %v5345 = vpop.f32.mrf.mxu0
      %v5346 = vadd.f32 0.0, %v5345
      %v5347 = vpop.f32.mrf.mxu0
      %v5348 = vadd.f32 0.0, %v5347
      %5349 = vmatmul.bf16.gmra.mxu0 %v5218
      %v5350 = vpop.f32.mrf.mxu0
      %v5351 = vadd.f32 0.0, %v5350
      %v5352 = vpop.f32.mrf.mxu0
      %v5353 = vadd.f32 0.0, %v5352
      %5354 = vmatmul.bf16.gmra.mxu0 %v5219
      %v5355 = vpop.f32.mrf.mxu0
      %v5356 = vadd.f32 0.0, %v5355
      %v5357 = vpop.f32.mrf.mxu0
      %v5358 = vadd.f32 0.0, %v5357
      %5359 = vmatmul.bf16.gmra.mxu0 %v5220
      %v5360 = vpop.f32.mrf.mxu0
      %v5361 = vadd.f32 0.0, %v5360
      %v5362 = vpop.f32.mrf.mxu0
      %v5363 = vadd.f32 0.0, %v5362
      %5364 = vmatmul.bf16.gmra.mxu0 %v5221
      %v5365 = vpop.f32.mrf.mxu0
      %v5366 = vadd.f32 0.0, %v5365
      %v5367 = vpop.f32.mrf.mxu0
      %v5368 = vadd.f32 0.0, %v5367
      %5369 = vmatmul.bf16.gmra.mxu0 %v5222
      %v5370 = vpop.f32.mrf.mxu0
      %v5371 = vadd.f32 0.0, %v5370
      %v5372 = vpop.f32.mrf.mxu0
      %v5373 = vadd.f32 0.0, %v5372
      %5374 = vmatmul.bf16.gmra.mxu0 %v5223
      %v5375 = vpop.f32.mrf.mxu0
      %v5376 = vadd.f32 0.0, %v5375
      %v5377 = vpop.f32.mrf.mxu0
      %v5378 = vadd.f32 0.0, %v5377
      %5379 = vmatmul.bf16.gmra.mxu0 %v5224
      %v5380 = vpop.f32.mrf.mxu0
      %v5381 = vadd.f32 0.0, %v5380
      %v5382 = vpop.f32.mrf.mxu0
      %v5383 = vadd.f32 0.0, %v5382
      %5384 = vmatmul.bf16.gmra.mxu0 %v5225
      %v5385 = vpop.f32.mrf.mxu0
      %v5386 = vadd.f32 0.0, %v5385
      %v5387 = vpop.f32.mrf.mxu0
      %v5388 = vadd.f32 0.0, %v5387
      %5389 = vdwg.mxu0
      %v5390 = vadd.f32 %v5136, %v5301
      %v5391 = vadd.f32 %v5137, %v5303
      %v5392 = vadd.f32 %v5138, %v5306
      %v5393 = vadd.f32 %v5139, %v5308
      %v5394 = vadd.f32 %v5140, %v5311
      %v5395 = vadd.f32 %v5141, %v5313
      %v5396 = vadd.f32 %v5142, %v5316
      %v5397 = vadd.f32 %v5143, %v5318
      %v5398 = vadd.f32 %v5144, %v5321
      %v5399 = vadd.f32 %v5145, %v5323
      %v5400 = vadd.f32 %v5146, %v5326
      %v5401 = vadd.f32 %v5147, %v5328
      %v5402 = vadd.f32 %v5148, %v5331
      %v5403 = vadd.f32 %v5149, %v5333
      %v5404 = vadd.f32 %v5150, %v5336
      %v5405 = vadd.f32 %v5151, %v5338
      %v5406 = vadd.f32 %v5152, %v5341
      %v5407 = vadd.f32 %v5153, %v5343
      %v5408 = vadd.f32 %v5154, %v5346
      %v5409 = vadd.f32 %v5155, %v5348
      %v5410 = vadd.f32 %v5156, %v5351
      %v5411 = vadd.f32 %v5157, %v5353
      %v5412 = vadd.f32 %v5158, %v5356
      %v5413 = vadd.f32 %v5159, %v5358
      %v5414 = vadd.f32 %v5160, %v5361
      %v5415 = vadd.f32 %v5161, %v5363
      %v5416 = vadd.f32 %v5162, %v5366
      %v5417 = vadd.f32 %v5163, %v5368
      %v5418 = vadd.f32 %v5164, %v5371
      %v5419 = vadd.f32 %v5165, %v5373
      %v5420 = vadd.f32 %v5166, %v5376
      %v5421 = vadd.f32 %v5167, %v5378
      %v5422 = vadd.f32 %v5168, %v5381
      %v5423 = vadd.f32 %v5169, %v5383
      %v5424 = vadd.f32 %v5170, %v5386
      %v5425 = vadd.f32 %v5171, %v5388
      %5426 = vst [vmem:[#allocation3] sm:$0xff] %v5390
      %5427 = vst [vmem:[#allocation3 + $0x8] sm:$0xff] %v5391
      %5428 = vst [vmem:[#allocation3 + $0x10] sm:$0xff] %v5392
      %5429 = vst [vmem:[#allocation3 + $0x18] sm:$0xff] %v5393
      %5430 = vst [vmem:[#allocation3 + $0x20] sm:$0xff] %v5394
      %5431 = vst [vmem:[#allocation3 + $0x28] sm:$0xff] %v5395
      %5432 = vst [vmem:[#allocation3 + $0x30] sm:$0xff] %v5396
      %5433 = vst [vmem:[#allocation3 + $0x38] sm:$0xff] %v5397
      %5434 = vst [vmem:[#allocation3 + $0x40] sm:$0xff] %v5398
      %5435 = vst [vmem:[#allocation3 + $0x48] sm:$0xff] %v5399
      %5436 = vst [vmem:[#allocation3 + $0x50] sm:$0xff] %v5400
      %5437 = vst [vmem:[#allocation3 + $0x58] sm:$0xff] %v5401
      %5438 = vst [vmem:[#allocation3 + $0x60] sm:$0xff] %v5402
      %5439 = vst [vmem:[#allocation3 + $0x68] sm:$0xff] %v5403
      %5440 = vst [vmem:[#allocation3 + $0x70] sm:$0xff] %v5404
      %5441 = vst [vmem:[#allocation3 + $0x78] sm:$0xff] %v5405
      %5442 = vst [vmem:[#allocation3 + $0x80] sm:$0xff] %v5406
      %5443 = vst [vmem:[#allocation3 + $0x88] sm:$0xff] %v5407
      %5444 = vst [vmem:[#allocation3 + $0x90] sm:$0xff] %v5408
      %5445 = vst [vmem:[#allocation3 + $0x98] sm:$0xff] %v5409
      %5446 = vst [vmem:[#allocation3 + $0xa0] sm:$0xff] %v5410
      %5447 = vst [vmem:[#allocation3 + $0xa8] sm:$0xff] %v5411
      %5448 = vst [vmem:[#allocation3 + $0xb0] sm:$0xff] %v5412
      %5449 = vst [vmem:[#allocation3 + $0xb8] sm:$0xff] %v5413
      %5450 = vst [vmem:[#allocation3 + $0xc0] sm:$0xff] %v5414
      %5451 = vst [vmem:[#allocation3 + $0xc8] sm:$0xff] %v5415
      %5452 = vst [vmem:[#allocation3 + $0xd0] sm:$0xff] %v5416
      %5453 = vst [vmem:[#allocation3 + $0xd8] sm:$0xff] %v5417
      %5454 = vst [vmem:[#allocation3 + $0xe0] sm:$0xff] %v5418
      %5455 = vst [vmem:[#allocation3 + $0xe8] sm:$0xff] %v5419
      %5456 = vst [vmem:[#allocation3 + $0xf0] sm:$0xff] %v5420
      %5457 = vst [vmem:[#allocation3 + $0xf8] sm:$0xff] %v5421
      %5458 = vst [vmem:[#allocation3 + $0x100] sm:$0xff] %v5422
      %5459 = vst [vmem:[#allocation3 + $0x108] sm:$0xff] %v5423
      %5460 = vst [vmem:[#allocation3 + $0x110] sm:$0xff] %v5424
      %5461 = vst [vmem:[#allocation3 + $0x118] sm:$0xff] %v5425
      %v5462 = vld [vmem:[#allocation3] sm:$0xff]
      %v5463 = vld [vmem:[#allocation3 + $0x8] sm:$0xff]
      %v5464 = vld [vmem:[#allocation3 + $0x10] sm:$0xff]
      %v5465 = vld [vmem:[#allocation3 + $0x18] sm:$0xff]
      %v5466 = vld [vmem:[#allocation3 + $0x20] sm:$0xff]
      %v5467 = vld [vmem:[#allocation3 + $0x28] sm:$0xff]
      %v5468 = vld [vmem:[#allocation3 + $0x30] sm:$0xff]
      %v5469 = vld [vmem:[#allocation3 + $0x38] sm:$0xff]
      %v5470 = vld [vmem:[#allocation3 + $0x40] sm:$0xff]
      %v5471 = vld [vmem:[#allocation3 + $0x48] sm:$0xff]
      %v5472 = vld [vmem:[#allocation3 + $0x50] sm:$0xff]
      %v5473 = vld [vmem:[#allocation3 + $0x58] sm:$0xff]
      %v5474 = vld [vmem:[#allocation3 + $0x60] sm:$0xff]
      %v5475 = vld [vmem:[#allocation3 + $0x68] sm:$0xff]
      %v5476 = vld [vmem:[#allocation3 + $0x70] sm:$0xff]
      %v5477 = vld [vmem:[#allocation3 + $0x78] sm:$0xff]
      %v5478 = vld [vmem:[#allocation3 + $0x80] sm:$0xff]
      %v5479 = vld [vmem:[#allocation3 + $0x88] sm:$0xff]
      %v5480 = vld [vmem:[#allocation3 + $0x90] sm:$0xff]
      %v5481 = vld [vmem:[#allocation3 + $0x98] sm:$0xff]
      %v5482 = vld [vmem:[#allocation3 + $0xa0] sm:$0xff]
      %v5483 = vld [vmem:[#allocation3 + $0xa8] sm:$0xff]
      %v5484 = vld [vmem:[#allocation3 + $0xb0] sm:$0xff]
      %v5485 = vld [vmem:[#allocation3 + $0xb8] sm:$0xff]
      %v5486 = vld [vmem:[#allocation3 + $0xc0] sm:$0xff]
      %v5487 = vld [vmem:[#allocation3 + $0xc8] sm:$0xff]
      %v5488 = vld [vmem:[#allocation3 + $0xd0] sm:$0xff]
      %v5489 = vld [vmem:[#allocation3 + $0xd8] sm:$0xff]
      %v5490 = vld [vmem:[#allocation3 + $0xe0] sm:$0xff]
      %v5491 = vld [vmem:[#allocation3 + $0xe8] sm:$0xff]
      %v5492 = vld [vmem:[#allocation3 + $0xf0] sm:$0xff]
      %v5493 = vld [vmem:[#allocation3 + $0xf8] sm:$0xff]
      %v5494 = vld [vmem:[#allocation3 + $0x100] sm:$0xff]
      %v5495 = vld [vmem:[#allocation3 + $0x108] sm:$0xff]
      %v5496 = vld [vmem:[#allocation3 + $0x110] sm:$0xff]
      %v5497 = vld [vmem:[#allocation3 + $0x118] sm:$0xff]
      %v5498 = vld [vmem:[#allocation4 + $0x21] sm:$0xff]
      %v5499 = vld [vmem:[#allocation4 + $0x29] sm:$0xff]
      %v5500 = vld [vmem:[#allocation4 + $0x31] sm:$0xff]
      %v5501 = vld [vmem:[#allocation4 + $0x39] sm:$0xff]
      %v5502 = vld [vmem:[#allocation4 + $0x41] sm:$0xff]
      %v5503 = vld [vmem:[#allocation4 + $0x49] sm:$0xff]
      %v5504 = vld [vmem:[#allocation4 + $0x51] sm:$0xff]
      %v5505 = vld [vmem:[#allocation4 + $0x59] sm:$0xff]
      %v5506 = vld [vmem:[#allocation4 + $0x61] sm:$0xff]
      %v5507 = vld [vmem:[#allocation4 + $0x69] sm:$0xff]
      %v5508 = vld [vmem:[#allocation4 + $0x71] sm:$0xff]
      %v5509 = vld [vmem:[#allocation4 + $0x79] sm:$0xff]
      %v5510 = vld [vmem:[#allocation4 + $0x81] sm:$0xff]
      %v5511 = vld [vmem:[#allocation4 + $0x89] sm:$0xff]
      %v5512 = vld [vmem:[#allocation4 + $0x91] sm:$0xff]
      %v5513 = vld [vmem:[#allocation4 + $0x99] sm:$0xff]
      %v5514 = vld [vmem:[#allocation4 + $0xa1] sm:$0xff]
      %v5515 = vld [vmem:[#allocation4 + $0xa9] sm:$0xff]
      %v5516 = vld [vmem:[#allocation4 + $0xb1] sm:$0xff]
      %v5517 = vld [vmem:[#allocation4 + $0xb9] sm:$0xff]
      %v5518 = vld [vmem:[#allocation4 + $0xc1] sm:$0xff]
      %v5519 = vld [vmem:[#allocation4 + $0xc9] sm:$0xff]
      %v5520 = vld [vmem:[#allocation4 + $0xd1] sm:$0xff]
      %v5521 = vld [vmem:[#allocation4 + $0xd9] sm:$0xff]
      %v5522 = vld [vmem:[#allocation4 + $0xe1] sm:$0xff]
      %v5523 = vld [vmem:[#allocation4 + $0xe9] sm:$0xff]
      %v5524 = vld [vmem:[#allocation4 + $0xf1] sm:$0xff]
      %v5525 = vld [vmem:[#allocation4 + $0xf9] sm:$0xff]
      %v5526 = vld [vmem:[#allocation4 + $0x101] sm:$0xff]
      %v5527 = vld [vmem:[#allocation4 + $0x109] sm:$0xff]
      %v5528 = vld [vmem:[#allocation4 + $0x111] sm:$0xff]
      %v5529 = vld [vmem:[#allocation4 + $0x119] sm:$0xff]
      %v5530 = vld [vmem:[#allocation4 + $0x121] sm:$0xff]
      %v5531 = vld [vmem:[#allocation4 + $0x129] sm:$0xff]
      %v5532 = vld [vmem:[#allocation4 + $0x131] sm:$0xff]
      %v5533 = vld [vmem:[#allocation4 + $0x139] sm:$0xff]
      %v5534 = vpack.c.bf16 %v5499, %v5498
      %v5535 = vpack.c.bf16 %v5501, %v5500
      %v5536 = vpack.c.bf16 %v5503, %v5502
      %v5537 = vpack.c.bf16 %v5505, %v5504
      %v5538 = vpack.c.bf16 %v5507, %v5506
      %v5539 = vpack.c.bf16 %v5509, %v5508
      %v5540 = vpack.c.bf16 %v5511, %v5510
      %v5541 = vpack.c.bf16 %v5513, %v5512
      %v5542 = vpack.c.bf16 %v5515, %v5514
      %v5543 = vpack.c.bf16 %v5517, %v5516
      %v5544 = vpack.c.bf16 %v5519, %v5518
      %v5545 = vpack.c.bf16 %v5521, %v5520
      %v5546 = vpack.c.bf16 %v5523, %v5522
      %v5547 = vpack.c.bf16 %v5525, %v5524
      %v5548 = vpack.c.bf16 %v5527, %v5526
      %v5549 = vpack.c.bf16 %v5529, %v5528
      %v5550 = vpack.c.bf16 %v5531, %v5530
      %v5551 = vpack.c.bf16 %v5533, %v5532
      %s5552 = scalar_lea.vmem %s3, 320
      %v5553 = vld [vmem:[%s5552] sm:$0xf]
      %v5554 = vld [vmem:[%s5552 + $0x4] sm:$0xf]
      %v5555 = vld [vmem:[%s5552 + $0x8] sm:$0xf]
      %v5556 = vld [vmem:[%s5552 + $0xc] sm:$0xf]
      %v5557 = vld [vmem:[%s5552 + $0x10] sm:$0xf]
      %v5558 = vld [vmem:[%s5552 + $0x14] sm:$0xf]
      %v5559 = vld [vmem:[%s5552 + $0x18] sm:$0xf]
      %v5560 = vld [vmem:[%s5552 + $0x1c] sm:$0xf]
      %v5561 = vld [vmem:[%s5552 + $0x20] sm:$0xf]
      %v5562 = vld [vmem:[%s5552 + $0x24] sm:$0xf]
      %v5563 = vld [vmem:[%s5552 + $0x28] sm:$0xf]
      %v5564 = vld [vmem:[%s5552 + $0x2c] sm:$0xf]
      %v5565 = vld [vmem:[%s5552 + $0x30] sm:$0xf]
      %v5566 = vld [vmem:[%s5552 + $0x34] sm:$0xf]
      %v5567 = vld [vmem:[%s5552 + $0x38] sm:$0xf]
      %v5568 = vld [vmem:[%s5552 + $0x3c] sm:$0xf]
      %v5585 = vunpack.c.l.b16 %v5553
      %v5586 = vunpack.c.l.b16 %v5554
      %v5587 = vunpack.c.l.b16 %v5555
      %v5588 = vunpack.c.l.b16 %v5556
      %v5589 = vunpack.c.l.b16 %v5557
      %v5590 = vunpack.c.l.b16 %v5558
      %v5591 = vunpack.c.l.b16 %v5559
      %v5592 = vunpack.c.l.b16 %v5560
      %v5593 = vunpack.c.l.b16 %v5561
      %v5594 = vunpack.c.l.b16 %v5562
      %v5595 = vunpack.c.l.b16 %v5563
      %v5596 = vunpack.c.l.b16 %v5564
      %v5597 = vunpack.c.l.b16 %v5565
      %v5598 = vunpack.c.l.b16 %v5566
      %v5599 = vunpack.c.l.b16 %v5567
      %v5600 = vunpack.c.l.b16 %v5568
      %v5601 = vpack.c.b16 %v5586, %v5585
      %v5602 = vpack.c.b16 %v5588, %v5587
      %v5603 = vpack.c.b16 %v5590, %v5589
      %v5604 = vpack.c.b16 %v5592, %v5591
      %v5605 = vpack.c.b16 %v5594, %v5593
      %v5606 = vpack.c.b16 %v5596, %v5595
      %v5607 = vpack.c.b16 %v5598, %v5597
      %v5608 = vpack.c.b16 %v5600, %v5599
      %5617 = vmatpush.bf16.msra.mxu0 %v5608
      %5618 = vmatpush.bf16.msra.mxu0 %v5607
      %5619 = vmatpush.bf16.msra.mxu0 %v5606
      %5620 = vmatpush.bf16.msra.mxu0 %v5605
      %5621 = vmatpush.bf16.msra.mxu0 %v5604
      %5622 = vmatpush.bf16.msra.mxu0 %v5603
      %5623 = vmatpush.bf16.msra.mxu0 %v5602
      %5624 = vmatpush.bf16.msra.mxu0 %v5601
      %5625 = vmatmul.bf16.gmra.mxu0 %v5534
      %v5626 = vpop.f32.mrf.mxu0
      %v5627 = vadd.f32 0.0, %v5626
      %v5628 = vpop.f32.mrf.mxu0
      %v5629 = vadd.f32 0.0, %v5628
      %5630 = vmatmul.bf16.gmra.mxu0 %v5535
      %v5631 = vpop.f32.mrf.mxu0
      %v5632 = vadd.f32 0.0, %v5631
      %v5633 = vpop.f32.mrf.mxu0
      %v5634 = vadd.f32 0.0, %v5633
      %5635 = vmatmul.bf16.gmra.mxu0 %v5536
      %v5636 = vpop.f32.mrf.mxu0
      %v5637 = vadd.f32 0.0, %v5636
      %v5638 = vpop.f32.mrf.mxu0
      %v5639 = vadd.f32 0.0, %v5638
      %5640 = vmatmul.bf16.gmra.mxu0 %v5537
      %v5641 = vpop.f32.mrf.mxu0
      %v5642 = vadd.f32 0.0, %v5641
      %v5643 = vpop.f32.mrf.mxu0
      %v5644 = vadd.f32 0.0, %v5643
      %5645 = vmatmul.bf16.gmra.mxu0 %v5538
      %v5646 = vpop.f32.mrf.mxu0
      %v5647 = vadd.f32 0.0, %v5646
      %v5648 = vpop.f32.mrf.mxu0
      %v5649 = vadd.f32 0.0, %v5648
      %5650 = vmatmul.bf16.gmra.mxu0 %v5539
      %v5651 = vpop.f32.mrf.mxu0
      %v5652 = vadd.f32 0.0, %v5651
      %v5653 = vpop.f32.mrf.mxu0
      %v5654 = vadd.f32 0.0, %v5653
      %5655 = vmatmul.bf16.gmra.mxu0 %v5540
      %v5656 = vpop.f32.mrf.mxu0
      %v5657 = vadd.f32 0.0, %v5656
      %v5658 = vpop.f32.mrf.mxu0
      %v5659 = vadd.f32 0.0, %v5658
      %5660 = vmatmul.bf16.gmra.mxu0 %v5541
      %v5661 = vpop.f32.mrf.mxu0
      %v5662 = vadd.f32 0.0, %v5661
      %v5663 = vpop.f32.mrf.mxu0
      %v5664 = vadd.f32 0.0, %v5663
      %5665 = vmatmul.bf16.gmra.mxu0 %v5542
      %v5666 = vpop.f32.mrf.mxu0
      %v5667 = vadd.f32 0.0, %v5666
      %v5668 = vpop.f32.mrf.mxu0
      %v5669 = vadd.f32 0.0, %v5668
      %5670 = vmatmul.bf16.gmra.mxu0 %v5543
      %v5671 = vpop.f32.mrf.mxu0
      %v5672 = vadd.f32 0.0, %v5671
      %v5673 = vpop.f32.mrf.mxu0
      %v5674 = vadd.f32 0.0, %v5673
      %5675 = vmatmul.bf16.gmra.mxu0 %v5544
      %v5676 = vpop.f32.mrf.mxu0
      %v5677 = vadd.f32 0.0, %v5676
      %v5678 = vpop.f32.mrf.mxu0
      %v5679 = vadd.f32 0.0, %v5678
      %5680 = vmatmul.bf16.gmra.mxu0 %v5545
      %v5681 = vpop.f32.mrf.mxu0
      %v5682 = vadd.f32 0.0, %v5681
      %v5683 = vpop.f32.mrf.mxu0
      %v5684 = vadd.f32 0.0, %v5683
      %5685 = vmatmul.bf16.gmra.mxu0 %v5546
      %v5686 = vpop.f32.mrf.mxu0
      %v5687 = vadd.f32 0.0, %v5686
      %v5688 = vpop.f32.mrf.mxu0
      %v5689 = vadd.f32 0.0, %v5688
      %5690 = vmatmul.bf16.gmra.mxu0 %v5547
      %v5691 = vpop.f32.mrf.mxu0
      %v5692 = vadd.f32 0.0, %v5691
      %v5693 = vpop.f32.mrf.mxu0
      %v5694 = vadd.f32 0.0, %v5693
      %5695 = vmatmul.bf16.gmra.mxu0 %v5548
      %v5696 = vpop.f32.mrf.mxu0
      %v5697 = vadd.f32 0.0, %v5696
      %v5698 = vpop.f32.mrf.mxu0
      %v5699 = vadd.f32 0.0, %v5698
      %5700 = vmatmul.bf16.gmra.mxu0 %v5549
      %v5701 = vpop.f32.mrf.mxu0
      %v5702 = vadd.f32 0.0, %v5701
      %v5703 = vpop.f32.mrf.mxu0
      %v5704 = vadd.f32 0.0, %v5703
      %5705 = vmatmul.bf16.gmra.mxu0 %v5550
      %v5706 = vpop.f32.mrf.mxu0
      %v5707 = vadd.f32 0.0, %v5706
      %v5708 = vpop.f32.mrf.mxu0
      %v5709 = vadd.f32 0.0, %v5708
      %5710 = vmatmul.bf16.gmra.mxu0 %v5551
      %v5711 = vpop.f32.mrf.mxu0
      %v5712 = vadd.f32 0.0, %v5711
      %v5713 = vpop.f32.mrf.mxu0
      %v5714 = vadd.f32 0.0, %v5713
      %5715 = vdwg.mxu0
      %v5716 = vadd.f32 %v5462, %v5627
      %v5717 = vadd.f32 %v5463, %v5629
      %v5718 = vadd.f32 %v5464, %v5632
      %v5719 = vadd.f32 %v5465, %v5634
      %v5720 = vadd.f32 %v5466, %v5637
      %v5721 = vadd.f32 %v5467, %v5639
      %v5722 = vadd.f32 %v5468, %v5642
      %v5723 = vadd.f32 %v5469, %v5644
      %v5724 = vadd.f32 %v5470, %v5647
      %v5725 = vadd.f32 %v5471, %v5649
      %v5726 = vadd.f32 %v5472, %v5652
      %v5727 = vadd.f32 %v5473, %v5654
      %v5728 = vadd.f32 %v5474, %v5657
      %v5729 = vadd.f32 %v5475, %v5659
      %v5730 = vadd.f32 %v5476, %v5662
      %v5731 = vadd.f32 %v5477, %v5664
      %v5732 = vadd.f32 %v5478, %v5667
      %v5733 = vadd.f32 %v5479, %v5669
      %v5734 = vadd.f32 %v5480, %v5672
      %v5735 = vadd.f32 %v5481, %v5674
      %v5736 = vadd.f32 %v5482, %v5677
      %v5737 = vadd.f32 %v5483, %v5679
      %v5738 = vadd.f32 %v5484, %v5682
      %v5739 = vadd.f32 %v5485, %v5684
      %v5740 = vadd.f32 %v5486, %v5687
      %v5741 = vadd.f32 %v5487, %v5689
      %v5742 = vadd.f32 %v5488, %v5692
      %v5743 = vadd.f32 %v5489, %v5694
      %v5744 = vadd.f32 %v5490, %v5697
      %v5745 = vadd.f32 %v5491, %v5699
      %v5746 = vadd.f32 %v5492, %v5702
      %v5747 = vadd.f32 %v5493, %v5704
      %v5748 = vadd.f32 %v5494, %v5707
      %v5749 = vadd.f32 %v5495, %v5709
      %v5750 = vadd.f32 %v5496, %v5712
      %v5751 = vadd.f32 %v5497, %v5714
      %5752 = vst [vmem:[#allocation3] sm:$0xff] %v5716
      %5753 = vst [vmem:[#allocation3 + $0x8] sm:$0xff] %v5717
      %5754 = vst [vmem:[#allocation3 + $0x10] sm:$0xff] %v5718
      %5755 = vst [vmem:[#allocation3 + $0x18] sm:$0xff] %v5719
      %5756 = vst [vmem:[#allocation3 + $0x20] sm:$0xff] %v5720
      %5757 = vst [vmem:[#allocation3 + $0x28] sm:$0xff] %v5721
      %5758 = vst [vmem:[#allocation3 + $0x30] sm:$0xff] %v5722
      %5759 = vst [vmem:[#allocation3 + $0x38] sm:$0xff] %v5723
      %5760 = vst [vmem:[#allocation3 + $0x40] sm:$0xff] %v5724
      %5761 = vst [vmem:[#allocation3 + $0x48] sm:$0xff] %v5725
      %5762 = vst [vmem:[#allocation3 + $0x50] sm:$0xff] %v5726
      %5763 = vst [vmem:[#allocation3 + $0x58] sm:$0xff] %v5727
      %5764 = vst [vmem:[#allocation3 + $0x60] sm:$0xff] %v5728
      %5765 = vst [vmem:[#allocation3 + $0x68] sm:$0xff] %v5729
      %5766 = vst [vmem:[#allocation3 + $0x70] sm:$0xff] %v5730
      %5767 = vst [vmem:[#allocation3 + $0x78] sm:$0xff] %v5731
      %5768 = vst [vmem:[#allocation3 + $0x80] sm:$0xff] %v5732
      %5769 = vst [vmem:[#allocation3 + $0x88] sm:$0xff] %v5733
      %5770 = vst [vmem:[#allocation3 + $0x90] sm:$0xff] %v5734
      %5771 = vst [vmem:[#allocation3 + $0x98] sm:$0xff] %v5735
      %5772 = vst [vmem:[#allocation3 + $0xa0] sm:$0xff] %v5736
      %5773 = vst [vmem:[#allocation3 + $0xa8] sm:$0xff] %v5737
      %5774 = vst [vmem:[#allocation3 + $0xb0] sm:$0xff] %v5738
      %5775 = vst [vmem:[#allocation3 + $0xb8] sm:$0xff] %v5739
      %5776 = vst [vmem:[#allocation3 + $0xc0] sm:$0xff] %v5740
      %5777 = vst [vmem:[#allocation3 + $0xc8] sm:$0xff] %v5741
      %5778 = vst [vmem:[#allocation3 + $0xd0] sm:$0xff] %v5742
      %5779 = vst [vmem:[#allocation3 + $0xd8] sm:$0xff] %v5743
      %5780 = vst [vmem:[#allocation3 + $0xe0] sm:$0xff] %v5744
      %5781 = vst [vmem:[#allocation3 + $0xe8] sm:$0xff] %v5745
      %5782 = vst [vmem:[#allocation3 + $0xf0] sm:$0xff] %v5746
      %5783 = vst [vmem:[#allocation3 + $0xf8] sm:$0xff] %v5747
      %5784 = vst [vmem:[#allocation3 + $0x100] sm:$0xff] %v5748
      %5785 = vst [vmem:[#allocation3 + $0x108] sm:$0xff] %v5749
      %5786 = vst [vmem:[#allocation3 + $0x110] sm:$0xff] %v5750
      %5787 = vst [vmem:[#allocation3 + $0x118] sm:$0xff] %v5751
      %v5788 = vld [vmem:[#allocation3] sm:$0xff]
      %v5789 = vld [vmem:[#allocation3 + $0x8] sm:$0xff]
      %v5790 = vld [vmem:[#allocation3 + $0x10] sm:$0xff]
      %v5791 = vld [vmem:[#allocation3 + $0x18] sm:$0xff]
      %v5792 = vld [vmem:[#allocation3 + $0x20] sm:$0xff]
      %v5793 = vld [vmem:[#allocation3 + $0x28] sm:$0xff]
      %v5794 = vld [vmem:[#allocation3 + $0x30] sm:$0xff]
      %v5795 = vld [vmem:[#allocation3 + $0x38] sm:$0xff]
      %v5796 = vld [vmem:[#allocation3 + $0x40] sm:$0xff]
      %v5797 = vld [vmem:[#allocation3 + $0x48] sm:$0xff]
      %v5798 = vld [vmem:[#allocation3 + $0x50] sm:$0xff]
      %v5799 = vld [vmem:[#allocation3 + $0x58] sm:$0xff]
      %v5800 = vld [vmem:[#allocation3 + $0x60] sm:$0xff]
      %v5801 = vld [vmem:[#allocation3 + $0x68] sm:$0xff]
      %v5802 = vld [vmem:[#allocation3 + $0x70] sm:$0xff]
      %v5803 = vld [vmem:[#allocation3 + $0x78] sm:$0xff]
      %v5804 = vld [vmem:[#allocation3 + $0x80] sm:$0xff]
      %v5805 = vld [vmem:[#allocation3 + $0x88] sm:$0xff]
      %v5806 = vld [vmem:[#allocation3 + $0x90] sm:$0xff]
      %v5807 = vld [vmem:[#allocation3 + $0x98] sm:$0xff]
      %v5808 = vld [vmem:[#allocation3 + $0xa0] sm:$0xff]
      %v5809 = vld [vmem:[#allocation3 + $0xa8] sm:$0xff]
      %v5810 = vld [vmem:[#allocation3 + $0xb0] sm:$0xff]
      %v5811 = vld [vmem:[#allocation3 + $0xb8] sm:$0xff]
      %v5812 = vld [vmem:[#allocation3 + $0xc0] sm:$0xff]
      %v5813 = vld [vmem:[#allocation3 + $0xc8] sm:$0xff]
      %v5814 = vld [vmem:[#allocation3 + $0xd0] sm:$0xff]
      %v5815 = vld [vmem:[#allocation3 + $0xd8] sm:$0xff]
      %v5816 = vld [vmem:[#allocation3 + $0xe0] sm:$0xff]
      %v5817 = vld [vmem:[#allocation3 + $0xe8] sm:$0xff]
      %v5818 = vld [vmem:[#allocation3 + $0xf0] sm:$0xff]
      %v5819 = vld [vmem:[#allocation3 + $0xf8] sm:$0xff]
      %v5820 = vld [vmem:[#allocation3 + $0x100] sm:$0xff]
      %v5821 = vld [vmem:[#allocation3 + $0x108] sm:$0xff]
      %v5822 = vld [vmem:[#allocation3 + $0x110] sm:$0xff]
      %v5823 = vld [vmem:[#allocation3 + $0x118] sm:$0xff]
      %v5824 = vld [vmem:[#allocation4 + $0x31] sm:$0xff]
      %v5825 = vld [vmem:[#allocation4 + $0x39] sm:$0xff]
      %v5826 = vld [vmem:[#allocation4 + $0x41] sm:$0xff]
      %v5827 = vld [vmem:[#allocation4 + $0x49] sm:$0xff]
      %v5828 = vld [vmem:[#allocation4 + $0x51] sm:$0xff]
      %v5829 = vld [vmem:[#allocation4 + $0x59] sm:$0xff]
      %v5830 = vld [vmem:[#allocation4 + $0x61] sm:$0xff]
      %v5831 = vld [vmem:[#allocation4 + $0x69] sm:$0xff]
      %v5832 = vld [vmem:[#allocation4 + $0x71] sm:$0xff]
      %v5833 = vld [vmem:[#allocation4 + $0x79] sm:$0xff]
      %v5834 = vld [vmem:[#allocation4 + $0x81] sm:$0xff]
      %v5835 = vld [vmem:[#allocation4 + $0x89] sm:$0xff]
      %v5836 = vld [vmem:[#allocation4 + $0x91] sm:$0xff]
      %v5837 = vld [vmem:[#allocation4 + $0x99] sm:$0xff]
      %v5838 = vld [vmem:[#allocation4 + $0xa1] sm:$0xff]
      %v5839 = vld [vmem:[#allocation4 + $0xa9] sm:$0xff]
      %v5840 = vld [vmem:[#allocation4 + $0xb1] sm:$0xff]
      %v5841 = vld [vmem:[#allocation4 + $0xb9] sm:$0xff]
      %v5842 = vld [vmem:[#allocation4 + $0xc1] sm:$0xff]
      %v5843 = vld [vmem:[#allocation4 + $0xc9] sm:$0xff]
      %v5844 = vld [vmem:[#allocation4 + $0xd1] sm:$0xff]
      %v5845 = vld [vmem:[#allocation4 + $0xd9] sm:$0xff]
      %v5846 = vld [vmem:[#allocation4 + $0xe1] sm:$0xff]
      %v5847 = vld [vmem:[#allocation4 + $0xe9] sm:$0xff]
      %v5848 = vld [vmem:[#allocation4 + $0xf1] sm:$0xff]
      %v5849 = vld [vmem:[#allocation4 + $0xf9] sm:$0xff]
      %v5850 = vld [vmem:[#allocation4 + $0x101] sm:$0xff]
      %v5851 = vld [vmem:[#allocation4 + $0x109] sm:$0xff]
      %v5852 = vld [vmem:[#allocation4 + $0x111] sm:$0xff]
      %v5853 = vld [vmem:[#allocation4 + $0x119] sm:$0xff]
      %v5854 = vld [vmem:[#allocation4 + $0x121] sm:$0xff]
      %v5855 = vld [vmem:[#allocation4 + $0x129] sm:$0xff]
      %v5856 = vld [vmem:[#allocation4 + $0x131] sm:$0xff]
      %v5857 = vld [vmem:[#allocation4 + $0x139] sm:$0xff]
      %v5858 = vld [vmem:[#allocation4 + $0x141] sm:$0xff]
      %v5859 = vld [vmem:[#allocation4 + $0x149] sm:$0xff]
      %v5860 = vpack.c.bf16 %v5825, %v5824
      %v5861 = vpack.c.bf16 %v5827, %v5826
      %v5862 = vpack.c.bf16 %v5829, %v5828
      %v5863 = vpack.c.bf16 %v5831, %v5830
      %v5864 = vpack.c.bf16 %v5833, %v5832
      %v5865 = vpack.c.bf16 %v5835, %v5834
      %v5866 = vpack.c.bf16 %v5837, %v5836
      %v5867 = vpack.c.bf16 %v5839, %v5838
      %v5868 = vpack.c.bf16 %v5841, %v5840
      %v5869 = vpack.c.bf16 %v5843, %v5842
      %v5870 = vpack.c.bf16 %v5845, %v5844
      %v5871 = vpack.c.bf16 %v5847, %v5846
      %v5872 = vpack.c.bf16 %v5849, %v5848
      %v5873 = vpack.c.bf16 %v5851, %v5850
      %v5874 = vpack.c.bf16 %v5853, %v5852
      %v5875 = vpack.c.bf16 %v5855, %v5854
      %v5876 = vpack.c.bf16 %v5857, %v5856
      %v5877 = vpack.c.bf16 %v5859, %v5858
      %s5878 = scalar_lea.vmem %s3, 384
      %v5879 = vld [vmem:[%s5878] sm:$0xf]
      %v5880 = vld [vmem:[%s5878 + $0x4] sm:$0xf]
      %v5881 = vld [vmem:[%s5878 + $0x8] sm:$0xf]
      %v5882 = vld [vmem:[%s5878 + $0xc] sm:$0xf]
      %v5883 = vld [vmem:[%s5878 + $0x10] sm:$0xf]
      %v5884 = vld [vmem:[%s5878 + $0x14] sm:$0xf]
      %v5885 = vld [vmem:[%s5878 + $0x18] sm:$0xf]
      %v5886 = vld [vmem:[%s5878 + $0x1c] sm:$0xf]
      %v5887 = vld [vmem:[%s5878 + $0x20] sm:$0xf]
      %v5888 = vld [vmem:[%s5878 + $0x24] sm:$0xf]
      %v5889 = vld [vmem:[%s5878 + $0x28] sm:$0xf]
      %v5890 = vld [vmem:[%s5878 + $0x2c] sm:$0xf]
      %v5891 = vld [vmem:[%s5878 + $0x30] sm:$0xf]
      %v5892 = vld [vmem:[%s5878 + $0x34] sm:$0xf]
      %v5893 = vld [vmem:[%s5878 + $0x38] sm:$0xf]
      %v5894 = vld [vmem:[%s5878 + $0x3c] sm:$0xf]
      %v5911 = vunpack.c.l.b16 %v5879
      %v5912 = vunpack.c.l.b16 %v5880
      %v5913 = vunpack.c.l.b16 %v5881
      %v5914 = vunpack.c.l.b16 %v5882
      %v5915 = vunpack.c.l.b16 %v5883
      %v5916 = vunpack.c.l.b16 %v5884
      %v5917 = vunpack.c.l.b16 %v5885
      %v5918 = vunpack.c.l.b16 %v5886
      %v5919 = vunpack.c.l.b16 %v5887
      %v5920 = vunpack.c.l.b16 %v5888
      %v5921 = vunpack.c.l.b16 %v5889
      %v5922 = vunpack.c.l.b16 %v5890
      %v5923 = vunpack.c.l.b16 %v5891
      %v5924 = vunpack.c.l.b16 %v5892
      %v5925 = vunpack.c.l.b16 %v5893
      %v5926 = vunpack.c.l.b16 %v5894
      %v5927 = vpack.c.b16 %v5912, %v5911
      %v5928 = vpack.c.b16 %v5914, %v5913
      %v5929 = vpack.c.b16 %v5916, %v5915
      %v5930 = vpack.c.b16 %v5918, %v5917
      %v5931 = vpack.c.b16 %v5920, %v5919
      %v5932 = vpack.c.b16 %v5922, %v5921
      %v5933 = vpack.c.b16 %v5924, %v5923
      %v5934 = vpack.c.b16 %v5926, %v5925
      %5943 = vmatpush.bf16.msra.mxu0 %v5934
      %5944 = vmatpush.bf16.msra.mxu0 %v5933
      %5945 = vmatpush.bf16.msra.mxu0 %v5932
      %5946 = vmatpush.bf16.msra.mxu0 %v5931
      %5947 = vmatpush.bf16.msra.mxu0 %v5930
      %5948 = vmatpush.bf16.msra.mxu0 %v5929
      %5949 = vmatpush.bf16.msra.mxu0 %v5928
      %5950 = vmatpush.bf16.msra.mxu0 %v5927
      %5951 = vmatmul.bf16.gmra.mxu0 %v5860
      %v5952 = vpop.f32.mrf.mxu0
      %v5953 = vadd.f32 0.0, %v5952
      %v5954 = vpop.f32.mrf.mxu0
      %v5955 = vadd.f32 0.0, %v5954
      %5956 = vmatmul.bf16.gmra.mxu0 %v5861
      %v5957 = vpop.f32.mrf.mxu0
      %v5958 = vadd.f32 0.0, %v5957
      %v5959 = vpop.f32.mrf.mxu0
      %v5960 = vadd.f32 0.0, %v5959
      %5961 = vmatmul.bf16.gmra.mxu0 %v5862
      %v5962 = vpop.f32.mrf.mxu0
      %v5963 = vadd.f32 0.0, %v5962
      %v5964 = vpop.f32.mrf.mxu0
      %v5965 = vadd.f32 0.0, %v5964
      %5966 = vmatmul.bf16.gmra.mxu0 %v5863
      %v5967 = vpop.f32.mrf.mxu0
      %v5968 = vadd.f32 0.0, %v5967
      %v5969 = vpop.f32.mrf.mxu0
      %v5970 = vadd.f32 0.0, %v5969
      %5971 = vmatmul.bf16.gmra.mxu0 %v5864
      %v5972 = vpop.f32.mrf.mxu0
      %v5973 = vadd.f32 0.0, %v5972
      %v5974 = vpop.f32.mrf.mxu0
      %v5975 = vadd.f32 0.0, %v5974
      %5976 = vmatmul.bf16.gmra.mxu0 %v5865
      %v5977 = vpop.f32.mrf.mxu0
      %v5978 = vadd.f32 0.0, %v5977
      %v5979 = vpop.f32.mrf.mxu0
      %v5980 = vadd.f32 0.0, %v5979
      %5981 = vmatmul.bf16.gmra.mxu0 %v5866
      %v5982 = vpop.f32.mrf.mxu0
      %v5983 = vadd.f32 0.0, %v5982
      %v5984 = vpop.f32.mrf.mxu0
      %v5985 = vadd.f32 0.0, %v5984
      %5986 = vmatmul.bf16.gmra.mxu0 %v5867
      %v5987 = vpop.f32.mrf.mxu0
      %v5988 = vadd.f32 0.0, %v5987
      %v5989 = vpop.f32.mrf.mxu0
      %v5990 = vadd.f32 0.0, %v5989
      %5991 = vmatmul.bf16.gmra.mxu0 %v5868
      %v5992 = vpop.f32.mrf.mxu0
      %v5993 = vadd.f32 0.0, %v5992
      %v5994 = vpop.f32.mrf.mxu0
      %v5995 = vadd.f32 0.0, %v5994
      %5996 = vmatmul.bf16.gmra.mxu0 %v5869
      %v5997 = vpop.f32.mrf.mxu0
      %v5998 = vadd.f32 0.0, %v5997
      %v5999 = vpop.f32.mrf.mxu0
      %v6000 = vadd.f32 0.0, %v5999
      %6001 = vmatmul.bf16.gmra.mxu0 %v5870
      %v6002 = vpop.f32.mrf.mxu0
      %v6003 = vadd.f32 0.0, %v6002
      %v6004 = vpop.f32.mrf.mxu0
      %v6005 = vadd.f32 0.0, %v6004
      %6006 = vmatmul.bf16.gmra.mxu0 %v5871
      %v6007 = vpop.f32.mrf.mxu0
      %v6008 = vadd.f32 0.0, %v6007
      %v6009 = vpop.f32.mrf.mxu0
      %v6010 = vadd.f32 0.0, %v6009
      %6011 = vmatmul.bf16.gmra.mxu0 %v5872
      %v6012 = vpop.f32.mrf.mxu0
      %v6013 = vadd.f32 0.0, %v6012
      %v6014 = vpop.f32.mrf.mxu0
      %v6015 = vadd.f32 0.0, %v6014
      %6016 = vmatmul.bf16.gmra.mxu0 %v5873
      %v6017 = vpop.f32.mrf.mxu0
      %v6018 = vadd.f32 0.0, %v6017
      %v6019 = vpop.f32.mrf.mxu0
      %v6020 = vadd.f32 0.0, %v6019
      %6021 = vmatmul.bf16.gmra.mxu0 %v5874
      %v6022 = vpop.f32.mrf.mxu0
      %v6023 = vadd.f32 0.0, %v6022
      %v6024 = vpop.f32.mrf.mxu0
      %v6025 = vadd.f32 0.0, %v6024
      %6026 = vmatmul.bf16.gmra.mxu0 %v5875
      %v6027 = vpop.f32.mrf.mxu0
      %v6028 = vadd.f32 0.0, %v6027
      %v6029 = vpop.f32.mrf.mxu0
      %v6030 = vadd.f32 0.0, %v6029
      %6031 = vmatmul.bf16.gmra.mxu0 %v5876
      %v6032 = vpop.f32.mrf.mxu0
      %v6033 = vadd.f32 0.0, %v6032
      %v6034 = vpop.f32.mrf.mxu0
      %v6035 = vadd.f32 0.0, %v6034
      %6036 = vmatmul.bf16.gmra.mxu0 %v5877
      %v6037 = vpop.f32.mrf.mxu0
      %v6038 = vadd.f32 0.0, %v6037
      %v6039 = vpop.f32.mrf.mxu0
      %v6040 = vadd.f32 0.0, %v6039
      %6041 = vdwg.mxu0
      %v6042 = vadd.f32 %v5788, %v5953
      %v6043 = vadd.f32 %v5789, %v5955
      %v6044 = vadd.f32 %v5790, %v5958
      %v6045 = vadd.f32 %v5791, %v5960
      %v6046 = vadd.f32 %v5792, %v5963
      %v6047 = vadd.f32 %v5793, %v5965
      %v6048 = vadd.f32 %v5794, %v5968
      %v6049 = vadd.f32 %v5795, %v5970
      %v6050 = vadd.f32 %v5796, %v5973
      %v6051 = vadd.f32 %v5797, %v5975
      %v6052 = vadd.f32 %v5798, %v5978
      %v6053 = vadd.f32 %v5799, %v5980
      %v6054 = vadd.f32 %v5800, %v5983
      %v6055 = vadd.f32 %v5801, %v5985
      %v6056 = vadd.f32 %v5802, %v5988
      %v6057 = vadd.f32 %v5803, %v5990
      %v6058 = vadd.f32 %v5804, %v5993
      %v6059 = vadd.f32 %v5805, %v5995
      %v6060 = vadd.f32 %v5806, %v5998
      %v6061 = vadd.f32 %v5807, %v6000
      %v6062 = vadd.f32 %v5808, %v6003
      %v6063 = vadd.f32 %v5809, %v6005
      %v6064 = vadd.f32 %v5810, %v6008
      %v6065 = vadd.f32 %v5811, %v6010
      %v6066 = vadd.f32 %v5812, %v6013
      %v6067 = vadd.f32 %v5813, %v6015
      %v6068 = vadd.f32 %v5814, %v6018
      %v6069 = vadd.f32 %v5815, %v6020
      %v6070 = vadd.f32 %v5816, %v6023
      %v6071 = vadd.f32 %v5817, %v6025
      %v6072 = vadd.f32 %v5818, %v6028
      %v6073 = vadd.f32 %v5819, %v6030
      %v6074 = vadd.f32 %v5820, %v6033
      %v6075 = vadd.f32 %v5821, %v6035
      %v6076 = vadd.f32 %v5822, %v6038
      %v6077 = vadd.f32 %v5823, %v6040
      %6078 = vst [vmem:[#allocation3] sm:$0xff] %v6042
      %6079 = vst [vmem:[#allocation3 + $0x8] sm:$0xff] %v6043
      %6080 = vst [vmem:[#allocation3 + $0x10] sm:$0xff] %v6044
      %6081 = vst [vmem:[#allocation3 + $0x18] sm:$0xff] %v6045
      %6082 = vst [vmem:[#allocation3 + $0x20] sm:$0xff] %v6046
      %6083 = vst [vmem:[#allocation3 + $0x28] sm:$0xff] %v6047
      %6084 = vst [vmem:[#allocation3 + $0x30] sm:$0xff] %v6048
      %6085 = vst [vmem:[#allocation3 + $0x38] sm:$0xff] %v6049
      %6086 = vst [vmem:[#allocation3 + $0x40] sm:$0xff] %v6050
      %6087 = vst [vmem:[#allocation3 + $0x48] sm:$0xff] %v6051
      %6088 = vst [vmem:[#allocation3 + $0x50] sm:$0xff] %v6052
      %6089 = vst [vmem:[#allocation3 + $0x58] sm:$0xff] %v6053
      %6090 = vst [vmem:[#allocation3 + $0x60] sm:$0xff] %v6054
      %6091 = vst [vmem:[#allocation3 + $0x68] sm:$0xff] %v6055
      %6092 = vst [vmem:[#allocation3 + $0x70] sm:$0xff] %v6056
      %6093 = vst [vmem:[#allocation3 + $0x78] sm:$0xff] %v6057
      %6094 = vst [vmem:[#allocation3 + $0x80] sm:$0xff] %v6058
      %6095 = vst [vmem:[#allocation3 + $0x88] sm:$0xff] %v6059
      %6096 = vst [vmem:[#allocation3 + $0x90] sm:$0xff] %v6060
      %6097 = vst [vmem:[#allocation3 + $0x98] sm:$0xff] %v6061
      %6098 = vst [vmem:[#allocation3 + $0xa0] sm:$0xff] %v6062
      %6099 = vst [vmem:[#allocation3 + $0xa8] sm:$0xff] %v6063
      %6100 = vst [vmem:[#allocation3 + $0xb0] sm:$0xff] %v6064
      %6101 = vst [vmem:[#allocation3 + $0xb8] sm:$0xff] %v6065
      %6102 = vst [vmem:[#allocation3 + $0xc0] sm:$0xff] %v6066
      %6103 = vst [vmem:[#allocation3 + $0xc8] sm:$0xff] %v6067
      %6104 = vst [vmem:[#allocation3 + $0xd0] sm:$0xff] %v6068
      %6105 = vst [vmem:[#allocation3 + $0xd8] sm:$0xff] %v6069
      %6106 = vst [vmem:[#allocation3 + $0xe0] sm:$0xff] %v6070
      %6107 = vst [vmem:[#allocation3 + $0xe8] sm:$0xff] %v6071
      %6108 = vst [vmem:[#allocation3 + $0xf0] sm:$0xff] %v6072
      %6109 = vst [vmem:[#allocation3 + $0xf8] sm:$0xff] %v6073
      %6110 = vst [vmem:[#allocation3 + $0x100] sm:$0xff] %v6074
      %6111 = vst [vmem:[#allocation3 + $0x108] sm:$0xff] %v6075
      %6112 = vst [vmem:[#allocation3 + $0x110] sm:$0xff] %v6076
      %6113 = vst [vmem:[#allocation3 + $0x118] sm:$0xff] %v6077
      %v6114 = vld [vmem:[#allocation3] sm:$0xff]
      %v6115 = vld [vmem:[#allocation3 + $0x8] sm:$0xff]
      %v6116 = vld [vmem:[#allocation3 + $0x10] sm:$0xff]
      %v6117 = vld [vmem:[#allocation3 + $0x18] sm:$0xff]
      %v6118 = vld [vmem:[#allocation3 + $0x20] sm:$0xff]
      %v6119 = vld [vmem:[#allocation3 + $0x28] sm:$0xff]
      %v6120 = vld [vmem:[#allocation3 + $0x30] sm:$0xff]
      %v6121 = vld [vmem:[#allocation3 + $0x38] sm:$0xff]
      %v6122 = vld [vmem:[#allocation3 + $0x40] sm:$0xff]
      %v6123 = vld [vmem:[#allocation3 + $0x48] sm:$0xff]
      %v6124 = vld [vmem:[#allocation3 + $0x50] sm:$0xff]
      %v6125 = vld [vmem:[#allocation3 + $0x58] sm:$0xff]
      %v6126 = vld [vmem:[#allocation3 + $0x60] sm:$0xff]
      %v6127 = vld [vmem:[#allocation3 + $0x68] sm:$0xff]
      %v6128 = vld [vmem:[#allocation3 + $0x70] sm:$0xff]
      %v6129 = vld [vmem:[#allocation3 + $0x78] sm:$0xff]
      %v6130 = vld [vmem:[#allocation3 + $0x80] sm:$0xff]
      %v6131 = vld [vmem:[#allocation3 + $0x88] sm:$0xff]
      %v6132 = vld [vmem:[#allocation3 + $0x90] sm:$0xff]
      %v6133 = vld [vmem:[#allocation3 + $0x98] sm:$0xff]
      %v6134 = vld [vmem:[#allocation3 + $0xa0] sm:$0xff]
      %v6135 = vld [vmem:[#allocation3 + $0xa8] sm:$0xff]
      %v6136 = vld [vmem:[#allocation3 + $0xb0] sm:$0xff]
      %v6137 = vld [vmem:[#allocation3 + $0xb8] sm:$0xff]
      %v6138 = vld [vmem:[#allocation3 + $0xc0] sm:$0xff]
      %v6139 = vld [vmem:[#allocation3 + $0xc8] sm:$0xff]
      %v6140 = vld [vmem:[#allocation3 + $0xd0] sm:$0xff]
      %v6141 = vld [vmem:[#allocation3 + $0xd8] sm:$0xff]
      %v6142 = vld [vmem:[#allocation3 + $0xe0] sm:$0xff]
      %v6143 = vld [vmem:[#allocation3 + $0xe8] sm:$0xff]
      %v6144 = vld [vmem:[#allocation3 + $0xf0] sm:$0xff]
      %v6145 = vld [vmem:[#allocation3 + $0xf8] sm:$0xff]
      %v6146 = vld [vmem:[#allocation3 + $0x100] sm:$0xff]
      %v6147 = vld [vmem:[#allocation3 + $0x108] sm:$0xff]
      %v6148 = vld [vmem:[#allocation3 + $0x110] sm:$0xff]
      %v6149 = vld [vmem:[#allocation3 + $0x118] sm:$0xff]
      %v6150 = vld [vmem:[#allocation4 + $0x32] sm:$0xff]
      %v6151 = vld [vmem:[#allocation4 + $0x3a] sm:$0xff]
      %v6152 = vld [vmem:[#allocation4 + $0x42] sm:$0xff]
      %v6153 = vld [vmem:[#allocation4 + $0x4a] sm:$0xff]
      %v6154 = vld [vmem:[#allocation4 + $0x52] sm:$0xff]
      %v6155 = vld [vmem:[#allocation4 + $0x5a] sm:$0xff]
      %v6156 = vld [vmem:[#allocation4 + $0x62] sm:$0xff]
      %v6157 = vld [vmem:[#allocation4 + $0x6a] sm:$0xff]
      %v6158 = vld [vmem:[#allocation4 + $0x72] sm:$0xff]
      %v6159 = vld [vmem:[#allocation4 + $0x7a] sm:$0xff]
      %v6160 = vld [vmem:[#allocation4 + $0x82] sm:$0xff]
      %v6161 = vld [vmem:[#allocation4 + $0x8a] sm:$0xff]
      %v6162 = vld [vmem:[#allocation4 + $0x92] sm:$0xff]
      %v6163 = vld [vmem:[#allocation4 + $0x9a] sm:$0xff]
      %v6164 = vld [vmem:[#allocation4 + $0xa2] sm:$0xff]
      %v6165 = vld [vmem:[#allocation4 + $0xaa] sm:$0xff]
      %v6166 = vld [vmem:[#allocation4 + $0xb2] sm:$0xff]
      %v6167 = vld [vmem:[#allocation4 + $0xba] sm:$0xff]
      %v6168 = vld [vmem:[#allocation4 + $0xc2] sm:$0xff]
      %v6169 = vld [vmem:[#allocation4 + $0xca] sm:$0xff]
      %v6170 = vld [vmem:[#allocation4 + $0xd2] sm:$0xff]
      %v6171 = vld [vmem:[#allocation4 + $0xda] sm:$0xff]
      %v6172 = vld [vmem:[#allocation4 + $0xe2] sm:$0xff]
      %v6173 = vld [vmem:[#allocation4 + $0xea] sm:$0xff]
      %v6174 = vld [vmem:[#allocation4 + $0xf2] sm:$0xff]
      %v6175 = vld [vmem:[#allocation4 + $0xfa] sm:$0xff]
      %v6176 = vld [vmem:[#allocation4 + $0x102] sm:$0xff]
      %v6177 = vld [vmem:[#allocation4 + $0x10a] sm:$0xff]
      %v6178 = vld [vmem:[#allocation4 + $0x112] sm:$0xff]
      %v6179 = vld [vmem:[#allocation4 + $0x11a] sm:$0xff]
      %v6180 = vld [vmem:[#allocation4 + $0x122] sm:$0xff]
      %v6181 = vld [vmem:[#allocation4 + $0x12a] sm:$0xff]
      %v6182 = vld [vmem:[#allocation4 + $0x132] sm:$0xff]
      %v6183 = vld [vmem:[#allocation4 + $0x13a] sm:$0xff]
      %v6184 = vld [vmem:[#allocation4 + $0x142] sm:$0xff]
      %v6185 = vld [vmem:[#allocation4 + $0x14a] sm:$0xff]
      %v6186 = vpack.c.bf16 %v6151, %v6150
      %v6187 = vpack.c.bf16 %v6153, %v6152
      %v6188 = vpack.c.bf16 %v6155, %v6154
      %v6189 = vpack.c.bf16 %v6157, %v6156
      %v6190 = vpack.c.bf16 %v6159, %v6158
      %v6191 = vpack.c.bf16 %v6161, %v6160
      %v6192 = vpack.c.bf16 %v6163, %v6162
      %v6193 = vpack.c.bf16 %v6165, %v6164
      %v6194 = vpack.c.bf16 %v6167, %v6166
      %v6195 = vpack.c.bf16 %v6169, %v6168
      %v6196 = vpack.c.bf16 %v6171, %v6170
      %v6197 = vpack.c.bf16 %v6173, %v6172
      %v6198 = vpack.c.bf16 %v6175, %v6174
      %v6199 = vpack.c.bf16 %v6177, %v6176
      %v6200 = vpack.c.bf16 %v6179, %v6178
      %v6201 = vpack.c.bf16 %v6181, %v6180
      %v6202 = vpack.c.bf16 %v6183, %v6182
      %v6203 = vpack.c.bf16 %v6185, %v6184
      %s6204 = scalar_lea.vmem %s3, 448
      %v6205 = vld [vmem:[%s6204] sm:$0xf]
      %v6206 = vld [vmem:[%s6204 + $0x4] sm:$0xf]
      %v6207 = vld [vmem:[%s6204 + $0x8] sm:$0xf]
      %v6208 = vld [vmem:[%s6204 + $0xc] sm:$0xf]
      %v6209 = vld [vmem:[%s6204 + $0x10] sm:$0xf]
      %v6210 = vld [vmem:[%s6204 + $0x14] sm:$0xf]
      %v6211 = vld [vmem:[%s6204 + $0x18] sm:$0xf]
      %v6212 = vld [vmem:[%s6204 + $0x1c] sm:$0xf]
      %v6213 = vld [vmem:[%s6204 + $0x20] sm:$0xf]
      %v6214 = vld [vmem:[%s6204 + $0x24] sm:$0xf]
      %v6215 = vld [vmem:[%s6204 + $0x28] sm:$0xf]
      %v6216 = vld [vmem:[%s6204 + $0x2c] sm:$0xf]
      %v6217 = vld [vmem:[%s6204 + $0x30] sm:$0xf]
      %v6218 = vld [vmem:[%s6204 + $0x34] sm:$0xf]
      %v6219 = vld [vmem:[%s6204 + $0x38] sm:$0xf]
      %v6220 = vld [vmem:[%s6204 + $0x3c] sm:$0xf]
      %v6237 = vunpack.c.l.b16 %v6205
      %v6238 = vunpack.c.l.b16 %v6206
      %v6239 = vunpack.c.l.b16 %v6207
      %v6240 = vunpack.c.l.b16 %v6208
      %v6241 = vunpack.c.l.b16 %v6209
      %v6242 = vunpack.c.l.b16 %v6210
      %v6243 = vunpack.c.l.b16 %v6211
      %v6244 = vunpack.c.l.b16 %v6212
      %v6245 = vunpack.c.l.b16 %v6213
      %v6246 = vunpack.c.l.b16 %v6214
      %v6247 = vunpack.c.l.b16 %v6215
      %v6248 = vunpack.c.l.b16 %v6216
      %v6249 = vunpack.c.l.b16 %v6217
      %v6250 = vunpack.c.l.b16 %v6218
      %v6251 = vunpack.c.l.b16 %v6219
      %v6252 = vunpack.c.l.b16 %v6220
      %v6253 = vpack.c.b16 %v6238, %v6237
      %v6254 = vpack.c.b16 %v6240, %v6239
      %v6255 = vpack.c.b16 %v6242, %v6241
      %v6256 = vpack.c.b16 %v6244, %v6243
      %v6257 = vpack.c.b16 %v6246, %v6245
      %v6258 = vpack.c.b16 %v6248, %v6247
      %v6259 = vpack.c.b16 %v6250, %v6249
      %v6260 = vpack.c.b16 %v6252, %v6251
      %6269 = vmatpush.bf16.msra.mxu0 %v6260
      %6270 = vmatpush.bf16.msra.mxu0 %v6259
      %6271 = vmatpush.bf16.msra.mxu0 %v6258
      %6272 = vmatpush.bf16.msra.mxu0 %v6257
      %6273 = vmatpush.bf16.msra.mxu0 %v6256
      %6274 = vmatpush.bf16.msra.mxu0 %v6255
      %6275 = vmatpush.bf16.msra.mxu0 %v6254
      %6276 = vmatpush.bf16.msra.mxu0 %v6253
      %6277 = vmatmul.bf16.gmra.mxu0 %v6186
      %v6278 = vpop.f32.mrf.mxu0
      %v6279 = vadd.f32 0.0, %v6278
      %v6280 = vpop.f32.mrf.mxu0
      %v6281 = vadd.f32 0.0, %v6280
      %6282 = vmatmul.bf16.gmra.mxu0 %v6187
      %v6283 = vpop.f32.mrf.mxu0
      %v6284 = vadd.f32 0.0, %v6283
      %v6285 = vpop.f32.mrf.mxu0
      %v6286 = vadd.f32 0.0, %v6285
      %6287 = vmatmul.bf16.gmra.mxu0 %v6188
      %v6288 = vpop.f32.mrf.mxu0
      %v6289 = vadd.f32 0.0, %v6288
      %v6290 = vpop.f32.mrf.mxu0
      %v6291 = vadd.f32 0.0, %v6290
      %6292 = vmatmul.bf16.gmra.mxu0 %v6189
      %v6293 = vpop.f32.mrf.mxu0
      %v6294 = vadd.f32 0.0, %v6293
      %v6295 = vpop.f32.mrf.mxu0
      %v6296 = vadd.f32 0.0, %v6295
      %6297 = vmatmul.bf16.gmra.mxu0 %v6190
      %v6298 = vpop.f32.mrf.mxu0
      %v6299 = vadd.f32 0.0, %v6298
      %v6300 = vpop.f32.mrf.mxu0
      %v6301 = vadd.f32 0.0, %v6300
      %6302 = vmatmul.bf16.gmra.mxu0 %v6191
      %v6303 = vpop.f32.mrf.mxu0
      %v6304 = vadd.f32 0.0, %v6303
      %v6305 = vpop.f32.mrf.mxu0
      %v6306 = vadd.f32 0.0, %v6305
      %6307 = vmatmul.bf16.gmra.mxu0 %v6192
      %v6308 = vpop.f32.mrf.mxu0
      %v6309 = vadd.f32 0.0, %v6308
      %v6310 = vpop.f32.mrf.mxu0
      %v6311 = vadd.f32 0.0, %v6310
      %6312 = vmatmul.bf16.gmra.mxu0 %v6193
      %v6313 = vpop.f32.mrf.mxu0
      %v6314 = vadd.f32 0.0, %v6313
      %v6315 = vpop.f32.mrf.mxu0
      %v6316 = vadd.f32 0.0, %v6315
      %6317 = vmatmul.bf16.gmra.mxu0 %v6194
      %v6318 = vpop.f32.mrf.mxu0
      %v6319 = vadd.f32 0.0, %v6318
      %v6320 = vpop.f32.mrf.mxu0
      %v6321 = vadd.f32 0.0, %v6320
      %6322 = vmatmul.bf16.gmra.mxu0 %v6195
      %v6323 = vpop.f32.mrf.mxu0
      %v6324 = vadd.f32 0.0, %v6323
      %v6325 = vpop.f32.mrf.mxu0
      %v6326 = vadd.f32 0.0, %v6325
      %6327 = vmatmul.bf16.gmra.mxu0 %v6196
      %v6328 = vpop.f32.mrf.mxu0
      %v6329 = vadd.f32 0.0, %v6328
      %v6330 = vpop.f32.mrf.mxu0
      %v6331 = vadd.f32 0.0, %v6330
      %6332 = vmatmul.bf16.gmra.mxu0 %v6197
      %v6333 = vpop.f32.mrf.mxu0
      %v6334 = vadd.f32 0.0, %v6333
      %v6335 = vpop.f32.mrf.mxu0
      %v6336 = vadd.f32 0.0, %v6335
      %6337 = vmatmul.bf16.gmra.mxu0 %v6198
      %v6338 = vpop.f32.mrf.mxu0
      %v6339 = vadd.f32 0.0, %v6338
      %v6340 = vpop.f32.mrf.mxu0
      %v6341 = vadd.f32 0.0, %v6340
      %6342 = vmatmul.bf16.gmra.mxu0 %v6199
      %v6343 = vpop.f32.mrf.mxu0
      %v6344 = vadd.f32 0.0, %v6343
      %v6345 = vpop.f32.mrf.mxu0
      %v6346 = vadd.f32 0.0, %v6345
      %6347 = vmatmul.bf16.gmra.mxu0 %v6200
      %v6348 = vpop.f32.mrf.mxu0
      %v6349 = vadd.f32 0.0, %v6348
      %v6350 = vpop.f32.mrf.mxu0
      %v6351 = vadd.f32 0.0, %v6350
      %6352 = vmatmul.bf16.gmra.mxu0 %v6201
      %v6353 = vpop.f32.mrf.mxu0
      %v6354 = vadd.f32 0.0, %v6353
      %v6355 = vpop.f32.mrf.mxu0
      %v6356 = vadd.f32 0.0, %v6355
      %6357 = vmatmul.bf16.gmra.mxu0 %v6202
      %v6358 = vpop.f32.mrf.mxu0
      %v6359 = vadd.f32 0.0, %v6358
      %v6360 = vpop.f32.mrf.mxu0
      %v6361 = vadd.f32 0.0, %v6360
      %6362 = vmatmul.bf16.gmra.mxu0 %v6203
      %v6363 = vpop.f32.mrf.mxu0
      %v6364 = vadd.f32 0.0, %v6363
      %v6365 = vpop.f32.mrf.mxu0
      %v6366 = vadd.f32 0.0, %v6365
      %6367 = vdwg.mxu0
      %v6368 = vadd.f32 %v6114, %v6279
      %v6369 = vadd.f32 %v6115, %v6281
      %v6370 = vadd.f32 %v6116, %v6284
      %v6371 = vadd.f32 %v6117, %v6286
      %v6372 = vadd.f32 %v6118, %v6289
      %v6373 = vadd.f32 %v6119, %v6291
      %v6374 = vadd.f32 %v6120, %v6294
      %v6375 = vadd.f32 %v6121, %v6296
      %v6376 = vadd.f32 %v6122, %v6299
      %v6377 = vadd.f32 %v6123, %v6301
      %v6378 = vadd.f32 %v6124, %v6304
      %v6379 = vadd.f32 %v6125, %v6306
      %v6380 = vadd.f32 %v6126, %v6309
      %v6381 = vadd.f32 %v6127, %v6311
      %v6382 = vadd.f32 %v6128, %v6314
      %v6383 = vadd.f32 %v6129, %v6316
      %v6384 = vadd.f32 %v6130, %v6319
      %v6385 = vadd.f32 %v6131, %v6321
      %v6386 = vadd.f32 %v6132, %v6324
      %v6387 = vadd.f32 %v6133, %v6326
      %v6388 = vadd.f32 %v6134, %v6329
      %v6389 = vadd.f32 %v6135, %v6331
      %v6390 = vadd.f32 %v6136, %v6334
      %v6391 = vadd.f32 %v6137, %v6336
      %v6392 = vadd.f32 %v6138, %v6339
      %v6393 = vadd.f32 %v6139, %v6341
      %v6394 = vadd.f32 %v6140, %v6344
      %v6395 = vadd.f32 %v6141, %v6346
      %v6396 = vadd.f32 %v6142, %v6349
      %v6397 = vadd.f32 %v6143, %v6351
      %v6398 = vadd.f32 %v6144, %v6354
      %v6399 = vadd.f32 %v6145, %v6356
      %v6400 = vadd.f32 %v6146, %v6359
      %v6401 = vadd.f32 %v6147, %v6361
      %v6402 = vadd.f32 %v6148, %v6364
      %v6403 = vadd.f32 %v6149, %v6366
      %6404 = vst [vmem:[#allocation3] sm:$0xff] %v6368
      %6405 = vst [vmem:[#allocation3 + $0x8] sm:$0xff] %v6369
      %6406 = vst [vmem:[#allocation3 + $0x10] sm:$0xff] %v6370
      %6407 = vst [vmem:[#allocation3 + $0x18] sm:$0xff] %v6371
      %6408 = vst [vmem:[#allocation3 + $0x20] sm:$0xff] %v6372
      %6409 = vst [vmem:[#allocation3 + $0x28] sm:$0xff] %v6373
      %6410 = vst [vmem:[#allocation3 + $0x30] sm:$0xff] %v6374
      %6411 = vst [vmem:[#allocation3 + $0x38] sm:$0xff] %v6375
      %6412 = vst [vmem:[#allocation3 + $0x40] sm:$0xff] %v6376
      %6413 = vst [vmem:[#allocation3 + $0x48] sm:$0xff] %v6377
      %6414 = vst [vmem:[#allocation3 + $0x50] sm:$0xff] %v6378
      %6415 = vst [vmem:[#allocation3 + $0x58] sm:$0xff] %v6379
      %6416 = vst [vmem:[#allocation3 + $0x60] sm:$0xff] %v6380
      %6417 = vst [vmem:[#allocation3 + $0x68] sm:$0xff] %v6381
      %6418 = vst [vmem:[#allocation3 + $0x70] sm:$0xff] %v6382
      %6419 = vst [vmem:[#allocation3 + $0x78] sm:$0xff] %v6383
      %6420 = vst [vmem:[#allocation3 + $0x80] sm:$0xff] %v6384
      %6421 = vst [vmem:[#allocation3 + $0x88] sm:$0xff] %v6385
      %6422 = vst [vmem:[#allocation3 + $0x90] sm:$0xff] %v6386
      %6423 = vst [vmem:[#allocation3 + $0x98] sm:$0xff] %v6387
      %6424 = vst [vmem:[#allocation3 + $0xa0] sm:$0xff] %v6388
      %6425 = vst [vmem:[#allocation3 + $0xa8] sm:$0xff] %v6389
      %6426 = vst [vmem:[#allocation3 + $0xb0] sm:$0xff] %v6390
      %6427 = vst [vmem:[#allocation3 + $0xb8] sm:$0xff] %v6391
      %6428 = vst [vmem:[#allocation3 + $0xc0] sm:$0xff] %v6392
      %6429 = vst [vmem:[#allocation3 + $0xc8] sm:$0xff] %v6393
      %6430 = vst [vmem:[#allocation3 + $0xd0] sm:$0xff] %v6394
      %6431 = vst [vmem:[#allocation3 + $0xd8] sm:$0xff] %v6395
      %6432 = vst [vmem:[#allocation3 + $0xe0] sm:$0xff] %v6396
      %6433 = vst [vmem:[#allocation3 + $0xe8] sm:$0xff] %v6397
      %6434 = vst [vmem:[#allocation3 + $0xf0] sm:$0xff] %v6398
      %6435 = vst [vmem:[#allocation3 + $0xf8] sm:$0xff] %v6399
      %6436 = vst [vmem:[#allocation3 + $0x100] sm:$0xff] %v6400
      %6437 = vst [vmem:[#allocation3 + $0x108] sm:$0xff] %v6401
      %6438 = vst [vmem:[#allocation3 + $0x110] sm:$0xff] %v6402
      %6439 = vst [vmem:[#allocation3 + $0x118] sm:$0xff] %v6403
      %v6440 = vld [vmem:[#allocation3] sm:$0xff]
      %v6441 = vld [vmem:[#allocation3 + $0x8] sm:$0xff]
      %v6442 = vld [vmem:[#allocation3 + $0x10] sm:$0xff]
      %v6443 = vld [vmem:[#allocation3 + $0x18] sm:$0xff]
      %v6444 = vld [vmem:[#allocation3 + $0x20] sm:$0xff]
      %v6445 = vld [vmem:[#allocation3 + $0x28] sm:$0xff]
      %v6446 = vld [vmem:[#allocation3 + $0x30] sm:$0xff]
      %v6447 = vld [vmem:[#allocation3 + $0x38] sm:$0xff]
      %v6448 = vld [vmem:[#allocation3 + $0x40] sm:$0xff]
      %v6449 = vld [vmem:[#allocation3 + $0x48] sm:$0xff]
      %v6450 = vld [vmem:[#allocation3 + $0x50] sm:$0xff]
      %v6451 = vld [vmem:[#allocation3 + $0x58] sm:$0xff]
      %v6452 = vld [vmem:[#allocation3 + $0x60] sm:$0xff]
      %v6453 = vld [vmem:[#allocation3 + $0x68] sm:$0xff]
      %v6454 = vld [vmem:[#allocation3 + $0x70] sm:$0xff]
      %v6455 = vld [vmem:[#allocation3 + $0x78] sm:$0xff]
      %v6456 = vld [vmem:[#allocation3 + $0x80] sm:$0xff]
      %v6457 = vld [vmem:[#allocation3 + $0x88] sm:$0xff]
      %v6458 = vld [vmem:[#allocation3 + $0x90] sm:$0xff]
      %v6459 = vld [vmem:[#allocation3 + $0x98] sm:$0xff]
      %v6460 = vld [vmem:[#allocation3 + $0xa0] sm:$0xff]
      %v6461 = vld [vmem:[#allocation3 + $0xa8] sm:$0xff]
      %v6462 = vld [vmem:[#allocation3 + $0xb0] sm:$0xff]
      %v6463 = vld [vmem:[#allocation3 + $0xb8] sm:$0xff]
      %v6464 = vld [vmem:[#allocation3 + $0xc0] sm:$0xff]
      %v6465 = vld [vmem:[#allocation3 + $0xc8] sm:$0xff]
      %v6466 = vld [vmem:[#allocation3 + $0xd0] sm:$0xff]
      %v6467 = vld [vmem:[#allocation3 + $0xd8] sm:$0xff]
      %v6468 = vld [vmem:[#allocation3 + $0xe0] sm:$0xff]
      %v6469 = vld [vmem:[#allocation3 + $0xe8] sm:$0xff]
      %v6470 = vld [vmem:[#allocation3 + $0xf0] sm:$0xff]
      %v6471 = vld [vmem:[#allocation3 + $0xf8] sm:$0xff]
      %v6472 = vld [vmem:[#allocation3 + $0x100] sm:$0xff]
      %v6473 = vld [vmem:[#allocation3 + $0x108] sm:$0xff]
      %v6474 = vld [vmem:[#allocation3 + $0x110] sm:$0xff]
      %v6475 = vld [vmem:[#allocation3 + $0x118] sm:$0xff]
      %v6476 = vld [vmem:[#allocation4 + $0x33] sm:$0xff]
      %v6477 = vld [vmem:[#allocation4 + $0x3b] sm:$0xff]
      %v6478 = vld [vmem:[#allocation4 + $0x43] sm:$0xff]
      %v6479 = vld [vmem:[#allocation4 + $0x4b] sm:$0xff]
      %v6480 = vld [vmem:[#allocation4 + $0x53] sm:$0xff]
      %v6481 = vld [vmem:[#allocation4 + $0x5b] sm:$0xff]
      %v6482 = vld [vmem:[#allocation4 + $0x63] sm:$0xff]
      %v6483 = vld [vmem:[#allocation4 + $0x6b] sm:$0xff]
      %v6484 = vld [vmem:[#allocation4 + $0x73] sm:$0xff]
      %v6485 = vld [vmem:[#allocation4 + $0x7b] sm:$0xff]
      %v6486 = vld [vmem:[#allocation4 + $0x83] sm:$0xff]
      %v6487 = vld [vmem:[#allocation4 + $0x8b] sm:$0xff]
      %v6488 = vld [vmem:[#allocation4 + $0x93] sm:$0xff]
      %v6489 = vld [vmem:[#allocation4 + $0x9b] sm:$0xff]
      %v6490 = vld [vmem:[#allocation4 + $0xa3] sm:$0xff]
      %v6491 = vld [vmem:[#allocation4 + $0xab] sm:$0xff]
      %v6492 = vld [vmem:[#allocation4 + $0xb3] sm:$0xff]
      %v6493 = vld [vmem:[#allocation4 + $0xbb] sm:$0xff]
      %v6494 = vld [vmem:[#allocation4 + $0xc3] sm:$0xff]
      %v6495 = vld [vmem:[#allocation4 + $0xcb] sm:$0xff]
      %v6496 = vld [vmem:[#allocation4 + $0xd3] sm:$0xff]
      %v6497 = vld [vmem:[#allocation4 + $0xdb] sm:$0xff]
      %v6498 = vld [vmem:[#allocation4 + $0xe3] sm:$0xff]
      %v6499 = vld [vmem:[#allocation4 + $0xeb] sm:$0xff]
      %v6500 = vld [vmem:[#allocation4 + $0xf3] sm:$0xff]
      %v6501 = vld [vmem:[#allocation4 + $0xfb] sm:$0xff]
      %v6502 = vld [vmem:[#allocation4 + $0x103] sm:$0xff]
      %v6503 = vld [vmem:[#allocation4 + $0x10b] sm:$0xff]
      %v6504 = vld [vmem:[#allocation4 + $0x113] sm:$0xff]
      %v6505 = vld [vmem:[#allocation4 + $0x11b] sm:$0xff]
      %v6506 = vld [vmem:[#allocation4 + $0x123] sm:$0xff]
      %v6507 = vld [vmem:[#allocation4 + $0x12b] sm:$0xff]
      %v6508 = vld [vmem:[#allocation4 + $0x133] sm:$0xff]
      %v6509 = vld [vmem:[#allocation4 + $0x13b] sm:$0xff]
      %v6510 = vld [vmem:[#allocation4 + $0x143] sm:$0xff]
      %v6511 = vld [vmem:[#allocation4 + $0x14b] sm:$0xff]
      %v6512 = vpack.c.bf16 %v6477, %v6476
      %v6513 = vpack.c.bf16 %v6479, %v6478
      %v6514 = vpack.c.bf16 %v6481, %v6480
      %v6515 = vpack.c.bf16 %v6483, %v6482
      %v6516 = vpack.c.bf16 %v6485, %v6484
      %v6517 = vpack.c.bf16 %v6487, %v6486
      %v6518 = vpack.c.bf16 %v6489, %v6488
      %v6519 = vpack.c.bf16 %v6491, %v6490
      %v6520 = vpack.c.bf16 %v6493, %v6492
      %v6521 = vpack.c.bf16 %v6495, %v6494
      %v6522 = vpack.c.bf16 %v6497, %v6496
      %v6523 = vpack.c.bf16 %v6499, %v6498
      %v6524 = vpack.c.bf16 %v6501, %v6500
      %v6525 = vpack.c.bf16 %v6503, %v6502
      %v6526 = vpack.c.bf16 %v6505, %v6504
      %v6527 = vpack.c.bf16 %v6507, %v6506
      %v6528 = vpack.c.bf16 %v6509, %v6508
      %v6529 = vpack.c.bf16 %v6511, %v6510
      %s6530 = scalar_lea.vmem %s3, 512
      %v6531 = vld [vmem:[%s6530] sm:$0xf]
      %v6532 = vld [vmem:[%s6530 + $0x4] sm:$0xf]
      %v6533 = vld [vmem:[%s6530 + $0x8] sm:$0xf]
      %v6534 = vld [vmem:[%s6530 + $0xc] sm:$0xf]
      %v6535 = vld [vmem:[%s6530 + $0x10] sm:$0xf]
      %v6536 = vld [vmem:[%s6530 + $0x14] sm:$0xf]
      %v6537 = vld [vmem:[%s6530 + $0x18] sm:$0xf]
      %v6538 = vld [vmem:[%s6530 + $0x1c] sm:$0xf]
      %v6539 = vld [vmem:[%s6530 + $0x20] sm:$0xf]
      %v6540 = vld [vmem:[%s6530 + $0x24] sm:$0xf]
      %v6541 = vld [vmem:[%s6530 + $0x28] sm:$0xf]
      %v6542 = vld [vmem:[%s6530 + $0x2c] sm:$0xf]
      %v6543 = vld [vmem:[%s6530 + $0x30] sm:$0xf]
      %v6544 = vld [vmem:[%s6530 + $0x34] sm:$0xf]
      %v6545 = vld [vmem:[%s6530 + $0x38] sm:$0xf]
      %v6546 = vld [vmem:[%s6530 + $0x3c] sm:$0xf]
      %v6563 = vunpack.c.l.b16 %v6531
      %v6564 = vunpack.c.l.b16 %v6532
      %v6565 = vunpack.c.l.b16 %v6533
      %v6566 = vunpack.c.l.b16 %v6534
      %v6567 = vunpack.c.l.b16 %v6535
      %v6568 = vunpack.c.l.b16 %v6536
      %v6569 = vunpack.c.l.b16 %v6537
      %v6570 = vunpack.c.l.b16 %v6538
      %v6571 = vunpack.c.l.b16 %v6539
      %v6572 = vunpack.c.l.b16 %v6540
      %v6573 = vunpack.c.l.b16 %v6541
      %v6574 = vunpack.c.l.b16 %v6542
      %v6575 = vunpack.c.l.b16 %v6543
      %v6576 = vunpack.c.l.b16 %v6544
      %v6577 = vunpack.c.l.b16 %v6545
      %v6578 = vunpack.c.l.b16 %v6546
      %v6579 = vpack.c.b16 %v6564, %v6563
      %v6580 = vpack.c.b16 %v6566, %v6565
      %v6581 = vpack.c.b16 %v6568, %v6567
      %v6582 = vpack.c.b16 %v6570, %v6569
      %v6583 = vpack.c.b16 %v6572, %v6571
      %v6584 = vpack.c.b16 %v6574, %v6573
      %v6585 = vpack.c.b16 %v6576, %v6575
      %v6586 = vpack.c.b16 %v6578, %v6577
      %6595 = vmatpush.bf16.msra.mxu0 %v6586
      %6596 = vmatpush.bf16.msra.mxu0 %v6585
      %6597 = vmatpush.bf16.msra.mxu0 %v6584
      %6598 = vmatpush.bf16.msra.mxu0 %v6583
      %6599 = vmatpush.bf16.msra.mxu0 %v6582
      %6600 = vmatpush.bf16.msra.mxu0 %v6581
      %6601 = vmatpush.bf16.msra.mxu0 %v6580
      %6602 = vmatpush.bf16.msra.mxu0 %v6579
      %6603 = vmatmul.bf16.gmra.mxu0 %v6512
      %v6604 = vpop.f32.mrf.mxu0
      %v6605 = vadd.f32 0.0, %v6604
      %v6606 = vpop.f32.mrf.mxu0
      %v6607 = vadd.f32 0.0, %v6606
      %6608 = vmatmul.bf16.gmra.mxu0 %v6513
      %v6609 = vpop.f32.mrf.mxu0
      %v6610 = vadd.f32 0.0, %v6609
      %v6611 = vpop.f32.mrf.mxu0
      %v6612 = vadd.f32 0.0, %v6611
      %6613 = vmatmul.bf16.gmra.mxu0 %v6514
      %v6614 = vpop.f32.mrf.mxu0
      %v6615 = vadd.f32 0.0, %v6614
      %v6616 = vpop.f32.mrf.mxu0
      %v6617 = vadd.f32 0.0, %v6616
      %6618 = vmatmul.bf16.gmra.mxu0 %v6515
      %v6619 = vpop.f32.mrf.mxu0
      %v6620 = vadd.f32 0.0, %v6619
      %v6621 = vpop.f32.mrf.mxu0
      %v6622 = vadd.f32 0.0, %v6621
      %6623 = vmatmul.bf16.gmra.mxu0 %v6516
      %v6624 = vpop.f32.mrf.mxu0
      %v6625 = vadd.f32 0.0, %v6624
      %v6626 = vpop.f32.mrf.mxu0
      %v6627 = vadd.f32 0.0, %v6626
      %6628 = vmatmul.bf16.gmra.mxu0 %v6517
      %v6629 = vpop.f32.mrf.mxu0
      %v6630 = vadd.f32 0.0, %v6629
      %v6631 = vpop.f32.mrf.mxu0
      %v6632 = vadd.f32 0.0, %v6631
      %6633 = vmatmul.bf16.gmra.mxu0 %v6518
      %v6634 = vpop.f32.mrf.mxu0
      %v6635 = vadd.f32 0.0, %v6634
      %v6636 = vpop.f32.mrf.mxu0
      %v6637 = vadd.f32 0.0, %v6636
      %6638 = vmatmul.bf16.gmra.mxu0 %v6519
      %v6639 = vpop.f32.mrf.mxu0
      %v6640 = vadd.f32 0.0, %v6639
      %v6641 = vpop.f32.mrf.mxu0
      %v6642 = vadd.f32 0.0, %v6641
      %6643 = vmatmul.bf16.gmra.mxu0 %v6520
      %v6644 = vpop.f32.mrf.mxu0
      %v6645 = vadd.f32 0.0, %v6644
      %v6646 = vpop.f32.mrf.mxu0
      %v6647 = vadd.f32 0.0, %v6646
      %6648 = vmatmul.bf16.gmra.mxu0 %v6521
      %v6649 = vpop.f32.mrf.mxu0
      %v6650 = vadd.f32 0.0, %v6649
      %v6651 = vpop.f32.mrf.mxu0
      %v6652 = vadd.f32 0.0, %v6651
      %6653 = vmatmul.bf16.gmra.mxu0 %v6522
      %v6654 = vpop.f32.mrf.mxu0
      %v6655 = vadd.f32 0.0, %v6654
      %v6656 = vpop.f32.mrf.mxu0
      %v6657 = vadd.f32 0.0, %v6656
      %6658 = vmatmul.bf16.gmra.mxu0 %v6523
      %v6659 = vpop.f32.mrf.mxu0
      %v6660 = vadd.f32 0.0, %v6659
      %v6661 = vpop.f32.mrf.mxu0
      %v6662 = vadd.f32 0.0, %v6661
      %6663 = vmatmul.bf16.gmra.mxu0 %v6524
      %v6664 = vpop.f32.mrf.mxu0
      %v6665 = vadd.f32 0.0, %v6664
      %v6666 = vpop.f32.mrf.mxu0
      %v6667 = vadd.f32 0.0, %v6666
      %6668 = vmatmul.bf16.gmra.mxu0 %v6525
      %v6669 = vpop.f32.mrf.mxu0
      %v6670 = vadd.f32 0.0, %v6669
      %v6671 = vpop.f32.mrf.mxu0
      %v6672 = vadd.f32 0.0, %v6671
      %6673 = vmatmul.bf16.gmra.mxu0 %v6526
      %v6674 = vpop.f32.mrf.mxu0
      %v6675 = vadd.f32 0.0, %v6674
      %v6676 = vpop.f32.mrf.mxu0
      %v6677 = vadd.f32 0.0, %v6676
      %6678 = vmatmul.bf16.gmra.mxu0 %v6527
      %v6679 = vpop.f32.mrf.mxu0
      %v6680 = vadd.f32 0.0, %v6679
      %v6681 = vpop.f32.mrf.mxu0
      %v6682 = vadd.f32 0.0, %v6681
      %6683 = vmatmul.bf16.gmra.mxu0 %v6528
      %v6684 = vpop.f32.mrf.mxu0
      %v6685 = vadd.f32 0.0, %v6684
      %v6686 = vpop.f32.mrf.mxu0
      %v6687 = vadd.f32 0.0, %v6686
      %6688 = vmatmul.bf16.gmra.mxu0 %v6529
      %v6689 = vpop.f32.mrf.mxu0
      %v6690 = vadd.f32 0.0, %v6689
      %v6691 = vpop.f32.mrf.mxu0
      %v6692 = vadd.f32 0.0, %v6691
      %6693 = vdwg.mxu0
      %v6694 = vadd.f32 %v6440, %v6605
      %v6695 = vadd.f32 %v6441, %v6607
      %v6696 = vadd.f32 %v6442, %v6610
      %v6697 = vadd.f32 %v6443, %v6612
      %v6698 = vadd.f32 %v6444, %v6615
      %v6699 = vadd.f32 %v6445, %v6617
      %v6700 = vadd.f32 %v6446, %v6620
      %v6701 = vadd.f32 %v6447, %v6622
      %v6702 = vadd.f32 %v6448, %v6625
      %v6703 = vadd.f32 %v6449, %v6627
      %v6704 = vadd.f32 %v6450, %v6630
      %v6705 = vadd.f32 %v6451, %v6632
      %v6706 = vadd.f32 %v6452, %v6635
      %v6707 = vadd.f32 %v6453, %v6637
      %v6708 = vadd.f32 %v6454, %v6640
      %v6709 = vadd.f32 %v6455, %v6642
      %v6710 = vadd.f32 %v6456, %v6645
      %v6711 = vadd.f32 %v6457, %v6647
      %v6712 = vadd.f32 %v6458, %v6650
      %v6713 = vadd.f32 %v6459, %v6652
      %v6714 = vadd.f32 %v6460, %v6655
      %v6715 = vadd.f32 %v6461, %v6657
      %v6716 = vadd.f32 %v6462, %v6660
      %v6717 = vadd.f32 %v6463, %v6662
      %v6718 = vadd.f32 %v6464, %v6665
      %v6719 = vadd.f32 %v6465, %v6667
      %v6720 = vadd.f32 %v6466, %v6670
      %v6721 = vadd.f32 %v6467, %v6672
      %v6722 = vadd.f32 %v6468, %v6675
      %v6723 = vadd.f32 %v6469, %v6677
      %v6724 = vadd.f32 %v6470, %v6680
      %v6725 = vadd.f32 %v6471, %v6682
      %v6726 = vadd.f32 %v6472, %v6685
      %v6727 = vadd.f32 %v6473, %v6687
      %v6728 = vadd.f32 %v6474, %v6690
      %v6729 = vadd.f32 %v6475, %v6692
      %6730 = vst [vmem:[#allocation3] sm:$0xff] %v6694
      %6731 = vst [vmem:[#allocation3 + $0x8] sm:$0xff] %v6695
      %6732 = vst [vmem:[#allocation3 + $0x10] sm:$0xff] %v6696
      %6733 = vst [vmem:[#allocation3 + $0x18] sm:$0xff] %v6697
      %6734 = vst [vmem:[#allocation3 + $0x20] sm:$0xff] %v6698
      %6735 = vst [vmem:[#allocation3 + $0x28] sm:$0xff] %v6699
      %6736 = vst [vmem:[#allocation3 + $0x30] sm:$0xff] %v6700
      %6737 = vst [vmem:[#allocation3 + $0x38] sm:$0xff] %v6701
      %6738 = vst [vmem:[#allocation3 + $0x40] sm:$0xff] %v6702
      %6739 = vst [vmem:[#allocation3 + $0x48] sm:$0xff] %v6703
      %6740 = vst [vmem:[#allocation3 + $0x50] sm:$0xff] %v6704
      %6741 = vst [vmem:[#allocation3 + $0x58] sm:$0xff] %v6705
      %6742 = vst [vmem:[#allocation3 + $0x60] sm:$0xff] %v6706
      %6743 = vst [vmem:[#allocation3 + $0x68] sm:$0xff] %v6707
      %6744 = vst [vmem:[#allocation3 + $0x70] sm:$0xff] %v6708
      %6745 = vst [vmem:[#allocation3 + $0x78] sm:$0xff] %v6709
      %6746 = vst [vmem:[#allocation3 + $0x80] sm:$0xff] %v6710
      %6747 = vst [vmem:[#allocation3 + $0x88] sm:$0xff] %v6711
      %6748 = vst [vmem:[#allocation3 + $0x90] sm:$0xff] %v6712
      %6749 = vst [vmem:[#allocation3 + $0x98] sm:$0xff] %v6713
      %6750 = vst [vmem:[#allocation3 + $0xa0] sm:$0xff] %v6714
      %6751 = vst [vmem:[#allocation3 + $0xa8] sm:$0xff] %v6715
      %6752 = vst [vmem:[#allocation3 + $0xb0] sm:$0xff] %v6716
      %6753 = vst [vmem:[#allocation3 + $0xb8] sm:$0xff] %v6717
      %6754 = vst [vmem:[#allocation3 + $0xc0] sm:$0xff] %v6718
      %6755 = vst [vmem:[#allocation3 + $0xc8] sm:$0xff] %v6719
      %6756 = vst [vmem:[#allocation3 + $0xd0] sm:$0xff] %v6720
      %6757 = vst [vmem:[#allocation3 + $0xd8] sm:$0xff] %v6721
      %6758 = vst [vmem:[#allocation3 + $0xe0] sm:$0xff] %v6722
      %6759 = vst [vmem:[#allocation3 + $0xe8] sm:$0xff] %v6723
      %6760 = vst [vmem:[#allocation3 + $0xf0] sm:$0xff] %v6724
      %6761 = vst [vmem:[#allocation3 + $0xf8] sm:$0xff] %v6725
      %6762 = vst [vmem:[#allocation3 + $0x100] sm:$0xff] %v6726
      %6763 = vst [vmem:[#allocation3 + $0x108] sm:$0xff] %v6727
      %6764 = vst [vmem:[#allocation3 + $0x110] sm:$0xff] %v6728
      %6765 = vst [vmem:[#allocation3 + $0x118] sm:$0xff] %v6729
      %v6766 = vld [vmem:[#allocation2 + $0x20] sm:$0xff]
      %v6767 = vld [vmem:[#allocation2 + $0x28] sm:$0xff]
      %v6768 = vld [vmem:[#allocation2 + $0x30] sm:$0xff]
      %v6769 = vld [vmem:[#allocation2 + $0x38] sm:$0xff]
      %v6770 = vld [vmem:[#allocation2 + $0x40] sm:$0xff]
      %v6771 = vld [vmem:[#allocation2 + $0x48] sm:$0xff]
      %v6772 = vld [vmem:[#allocation2 + $0x50] sm:$0xff]
      %v6773 = vld [vmem:[#allocation2 + $0x58] sm:$0xff]
      %v6774 = vld [vmem:[#allocation2 + $0x60] sm:$0xff]
      %v6775 = vld [vmem:[#allocation2 + $0x68] sm:$0xff]
      %v6776 = vld [vmem:[#allocation2 + $0x70] sm:$0xff]
      %v6777 = vld [vmem:[#allocation2 + $0x78] sm:$0xff]
      %v6778 = vld [vmem:[#allocation2 + $0x80] sm:$0xff]
      %v6779 = vld [vmem:[#allocation2 + $0x88] sm:$0xff]
      %v6780 = vld [vmem:[#allocation2 + $0x90] sm:$0xff]
      %v6781 = vld [vmem:[#allocation2 + $0x98] sm:$0xff]
      %v6782 = vld [vmem:[#allocation2 + $0xa0] sm:$0xff]
      %v6783 = vld [vmem:[#allocation2 + $0xa8] sm:$0xff]
      %v6784 = vld [vmem:[#allocation2 + $0xb0] sm:$0xff]
      %v6785 = vld [vmem:[#allocation2 + $0xb8] sm:$0xff]
      %v6786 = vld [vmem:[#allocation2 + $0xc0] sm:$0xff]
      %v6787 = vld [vmem:[#allocation2 + $0xc8] sm:$0xff]
      %v6788 = vld [vmem:[#allocation2 + $0xd0] sm:$0xff]
      %v6789 = vld [vmem:[#allocation2 + $0xd8] sm:$0xff]
      %v6790 = vld [vmem:[#allocation2 + $0xe0] sm:$0xff]
      %v6791 = vld [vmem:[#allocation2 + $0xe8] sm:$0xff]
      %v6792 = vld [vmem:[#allocation2 + $0xf0] sm:$0xff]
      %v6793 = vld [vmem:[#allocation2 + $0xf8] sm:$0xff]
      %v6794 = vld [vmem:[#allocation2 + $0x100] sm:$0xff]
      %v6795 = vld [vmem:[#allocation2 + $0x108] sm:$0xff]
      %v6796 = vld [vmem:[#allocation2 + $0x110] sm:$0xff]
      %v6797 = vld [vmem:[#allocation2 + $0x118] sm:$0xff]
      %v6798 = vld [vmem:[#allocation2 + $0x120] sm:$0xff]
      %v6799 = vld [vmem:[#allocation2 + $0x128] sm:$0xff]
      %v6800 = vld [vmem:[#allocation2 + $0x130] sm:$0xff]
      %v6801 = vld [vmem:[#allocation2 + $0x138] sm:$0xff]
      %v6802 = vld [vmem:[#allocation3] sm:$0xff]
      %v6803 = vld [vmem:[#allocation3 + $0x8] sm:$0xff]
      %v6804 = vld [vmem:[#allocation3 + $0x10] sm:$0xff]
      %v6805 = vld [vmem:[#allocation3 + $0x18] sm:$0xff]
      %v6806 = vld [vmem:[#allocation3 + $0x20] sm:$0xff]
      %v6807 = vld [vmem:[#allocation3 + $0x28] sm:$0xff]
      %v6808 = vld [vmem:[#allocation3 + $0x30] sm:$0xff]
      %v6809 = vld [vmem:[#allocation3 + $0x38] sm:$0xff]
      %v6810 = vld [vmem:[#allocation3 + $0x40] sm:$0xff]
      %v6811 = vld [vmem:[#allocation3 + $0x48] sm:$0xff]
      %v6812 = vld [vmem:[#allocation3 + $0x50] sm:$0xff]
      %v6813 = vld [vmem:[#allocation3 + $0x58] sm:$0xff]
      %v6814 = vld [vmem:[#allocation3 + $0x60] sm:$0xff]
      %v6815 = vld [vmem:[#allocation3 + $0x68] sm:$0xff]
      %v6816 = vld [vmem:[#allocation3 + $0x70] sm:$0xff]
      %v6817 = vld [vmem:[#allocation3 + $0x78] sm:$0xff]
      %v6818 = vld [vmem:[#allocation3 + $0x80] sm:$0xff]
      %v6819 = vld [vmem:[#allocation3 + $0x88] sm:$0xff]
      %v6820 = vld [vmem:[#allocation3 + $0x90] sm:$0xff]
      %v6821 = vld [vmem:[#allocation3 + $0x98] sm:$0xff]
      %v6822 = vld [vmem:[#allocation3 + $0xa0] sm:$0xff]
      %v6823 = vld [vmem:[#allocation3 + $0xa8] sm:$0xff]
      %v6824 = vld [vmem:[#allocation3 + $0xb0] sm:$0xff]
      %v6825 = vld [vmem:[#allocation3 + $0xb8] sm:$0xff]
      %v6826 = vld [vmem:[#allocation3 + $0xc0] sm:$0xff]
      %v6827 = vld [vmem:[#allocation3 + $0xc8] sm:$0xff]
      %v6828 = vld [vmem:[#allocation3 + $0xd0] sm:$0xff]
      %v6829 = vld [vmem:[#allocation3 + $0xd8] sm:$0xff]
      %v6830 = vld [vmem:[#allocation3 + $0xe0] sm:$0xff]
      %v6831 = vld [vmem:[#allocation3 + $0xe8] sm:$0xff]
      %v6832 = vld [vmem:[#allocation3 + $0xf0] sm:$0xff]
      %v6833 = vld [vmem:[#allocation3 + $0xf8] sm:$0xff]
      %v6834 = vld [vmem:[#allocation3 + $0x100] sm:$0xff]
      %v6835 = vld [vmem:[#allocation3 + $0x108] sm:$0xff]
      %v6836 = vld [vmem:[#allocation3 + $0x110] sm:$0xff]
      %v6837 = vld [vmem:[#allocation3 + $0x118] sm:$0xff]
      %v6838 = vld [vmem:[%s4] sm:$0x1]
      %v6840 = vperm.slane %v6838, 0
      %v6842 = vadd.f32 %v6802, %v6840
      %v6843 = vadd.f32 %v6803, %v6840
      %v6844 = vadd.f32 %v6804, %v6840
      %v6845 = vadd.f32 %v6805, %v6840
      %v6846 = vadd.f32 %v6806, %v6840
      %v6847 = vadd.f32 %v6807, %v6840
      %v6848 = vadd.f32 %v6808, %v6840
      %v6849 = vadd.f32 %v6809, %v6840
      %v6850 = vadd.f32 %v6810, %v6840
      %v6851 = vadd.f32 %v6811, %v6840
      %v6852 = vadd.f32 %v6812, %v6840
      %v6853 = vadd.f32 %v6813, %v6840
      %v6854 = vadd.f32 %v6814, %v6840
      %v6855 = vadd.f32 %v6815, %v6840
      %v6856 = vadd.f32 %v6816, %v6840
      %v6857 = vadd.f32 %v6817, %v6840
      %v6858 = vadd.f32 %v6818, %v6840
      %v6859 = vadd.f32 %v6819, %v6840
      %v6860 = vadd.f32 %v6820, %v6840
      %v6861 = vadd.f32 %v6821, %v6840
      %v6862 = vadd.f32 %v6822, %v6840
      %v6863 = vadd.f32 %v6823, %v6840
      %v6864 = vadd.f32 %v6824, %v6840
      %v6865 = vadd.f32 %v6825, %v6840
      %v6866 = vadd.f32 %v6826, %v6840
      %v6867 = vadd.f32 %v6827, %v6840
      %v6868 = vadd.f32 %v6828, %v6840
      %v6869 = vadd.f32 %v6829, %v6840
      %v6870 = vadd.f32 %v6830, %v6840
      %v6871 = vadd.f32 %v6831, %v6840
      %v6872 = vadd.f32 %v6832, %v6840
      %v6873 = vadd.f32 %v6833, %v6840
      %v6874 = vadd.f32 %v6834, %v6840
      %v6875 = vadd.f32 %v6835, %v6840
      %v6876 = vadd.f32 %v6836, %v6840
      %v6877 = vadd.f32 %v6837, %v6840
      %v6878 = vadd.f32 %v6842, %v6766
      %v6879 = vadd.f32 %v6843, %v6767
      %v6880 = vadd.f32 %v6844, %v6768
      %v6881 = vadd.f32 %v6845, %v6769
      %v6882 = vadd.f32 %v6846, %v6770
      %v6883 = vadd.f32 %v6847, %v6771
      %v6884 = vadd.f32 %v6848, %v6772
      %v6885 = vadd.f32 %v6849, %v6773
      %v6886 = vadd.f32 %v6850, %v6774
      %v6887 = vadd.f32 %v6851, %v6775
      %v6888 = vadd.f32 %v6852, %v6776
      %v6889 = vadd.f32 %v6853, %v6777
      %v6890 = vadd.f32 %v6854, %v6778
      %v6891 = vadd.f32 %v6855, %v6779
      %v6892 = vadd.f32 %v6856, %v6780
      %v6893 = vadd.f32 %v6857, %v6781
      %v6894 = vadd.f32 %v6858, %v6782
      %v6895 = vadd.f32 %v6859, %v6783
      %v6896 = vadd.f32 %v6860, %v6784
      %v6897 = vadd.f32 %v6861, %v6785
      %v6898 = vadd.f32 %v6862, %v6786
      %v6899 = vadd.f32 %v6863, %v6787
      %v6900 = vadd.f32 %v6864, %v6788
      %v6901 = vadd.f32 %v6865, %v6789
      %v6902 = vadd.f32 %v6866, %v6790
      %v6903 = vadd.f32 %v6867, %v6791
      %v6904 = vadd.f32 %v6868, %v6792
      %v6905 = vadd.f32 %v6869, %v6793
      %v6906 = vadd.f32 %v6870, %v6794
      %v6907 = vadd.f32 %v6871, %v6795
      %v6908 = vadd.f32 %v6872, %v6796
      %v6909 = vadd.f32 %v6873, %v6797
      %v6910 = vadd.f32 %v6874, %v6798
      %v6911 = vadd.f32 %v6875, %v6799
      %v6912 = vadd.f32 %v6876, %v6800
      %v6913 = vadd.f32 %v6877, %v6801
      %v6914 = vmax.f32 %v6878, 0.0
      %v6915 = vmax.f32 %v6879, 0.0
      %v6916 = vmax.f32 %v6880, 0.0
      %v6917 = vmax.f32 %v6881, 0.0
      %v6918 = vmax.f32 %v6882, 0.0
      %v6919 = vmax.f32 %v6883, 0.0
      %v6920 = vmax.f32 %v6884, 0.0
      %v6921 = vmax.f32 %v6885, 0.0
      %v6922 = vmax.f32 %v6886, 0.0
      %v6923 = vmax.f32 %v6887, 0.0
      %v6924 = vmax.f32 %v6888, 0.0
      %v6925 = vmax.f32 %v6889, 0.0
      %v6926 = vmax.f32 %v6890, 0.0
      %v6927 = vmax.f32 %v6891, 0.0
      %v6928 = vmax.f32 %v6892, 0.0
      %v6929 = vmax.f32 %v6893, 0.0
      %v6930 = vmax.f32 %v6894, 0.0
      %v6931 = vmax.f32 %v6895, 0.0
      %v6932 = vmax.f32 %v6896, 0.0
      %v6933 = vmax.f32 %v6897, 0.0
      %v6934 = vmax.f32 %v6898, 0.0
      %v6935 = vmax.f32 %v6899, 0.0
      %v6936 = vmax.f32 %v6900, 0.0
      %v6937 = vmax.f32 %v6901, 0.0
      %v6938 = vmax.f32 %v6902, 0.0
      %v6939 = vmax.f32 %v6903, 0.0
      %v6940 = vmax.f32 %v6904, 0.0
      %v6941 = vmax.f32 %v6905, 0.0
      %v6942 = vmax.f32 %v6906, 0.0
      %v6943 = vmax.f32 %v6907, 0.0
      %v6944 = vmax.f32 %v6908, 0.0
      %v6945 = vmax.f32 %v6909, 0.0
      %v6946 = vmax.f32 %v6910, 0.0
      %v6947 = vmax.f32 %v6911, 0.0
      %v6948 = vmax.f32 %v6912, 0.0
      %v6949 = vmax.f32 %v6913, 0.0
      %6950 = vst [vmem:[%s251] sm:$0xff] %v6914
      %6951 = vst [vmem:[%s251 + $0x8] sm:$0xff] %v6915
      %6952 = vst [vmem:[%s251 + $0x10] sm:$0xff] %v6916
      %6953 = vst [vmem:[%s251 + $0x18] sm:$0xff] %v6917
      %6954 = vst [vmem:[%s251 + $0x20] sm:$0xff] %v6918
      %6955 = vst [vmem:[%s251 + $0x28] sm:$0xff] %v6919
      %6956 = vst [vmem:[%s251 + $0x30] sm:$0xff] %v6920
      %6957 = vst [vmem:[%s251 + $0x38] sm:$0xff] %v6921
      %6958 = vst [vmem:[%s251 + $0x40] sm:$0xff] %v6922
      %6959 = vst [vmem:[%s251 + $0x48] sm:$0xff] %v6923
      %6960 = vst [vmem:[%s251 + $0x50] sm:$0xff] %v6924
      %6961 = vst [vmem:[%s251 + $0x58] sm:$0xff] %v6925
      %6962 = vst [vmem:[%s251 + $0x60] sm:$0xff] %v6926
      %6963 = vst [vmem:[%s251 + $0x68] sm:$0xff] %v6927
      %6964 = vst [vmem:[%s251 + $0x70] sm:$0xff] %v6928
      %6965 = vst [vmem:[%s251 + $0x78] sm:$0xff] %v6929
      %6966 = vst [vmem:[%s251 + $0x80] sm:$0xff] %v6930
      %6967 = vst [vmem:[%s251 + $0x88] sm:$0xff] %v6931
      %6968 = vst [vmem:[%s251 + $0x90] sm:$0xff] %v6932
      %6969 = vst [vmem:[%s251 + $0x98] sm:$0xff] %v6933
      %6970 = vst [vmem:[%s251 + $0xa0] sm:$0xff] %v6934
      %6971 = vst [vmem:[%s251 + $0xa8] sm:$0xff] %v6935
      %6972 = vst [vmem:[%s251 + $0xb0] sm:$0xff] %v6936
      %6973 = vst [vmem:[%s251 + $0xb8] sm:$0xff] %v6937
      %6974 = vst [vmem:[%s251 + $0xc0] sm:$0xff] %v6938
      %6975 = vst [vmem:[%s251 + $0xc8] sm:$0xff] %v6939
      %6976 = vst [vmem:[%s251 + $0xd0] sm:$0xff] %v6940
      %6977 = vst [vmem:[%s251 + $0xd8] sm:$0xff] %v6941
      %6978 = vst [vmem:[%s251 + $0xe0] sm:$0xff] %v6942
      %6979 = vst [vmem:[%s251 + $0xe8] sm:$0xff] %v6943
      %6980 = vst [vmem:[%s251 + $0xf0] sm:$0xff] %v6944
      %6981 = vst [vmem:[%s251 + $0xf8] sm:$0xff] %v6945
      %6982 = vst [vmem:[%s251 + $0x100] sm:$0xff] %v6946
      %6983 = vst [vmem:[%s251 + $0x108] sm:$0xff] %v6947
      %6984 = vst [vmem:[%s251 + $0x110] sm:$0xff] %v6948
      %6985 = vst [vmem:[%s251 + $0x118] sm:$0xff] %v6949
      %p6986 = scmp.lt.s32.totalorder %s17, 1
      %s6987 = scalar_select %p6986, %s17, 1
      %s6988 = smul.addr %s6987, 36
      %s6989 = smul.addr %s6988, 8
      %s6990 = scalar_lea.vmem %s6, %s6989
      // Predicated region
      $region45: #{basic_block_forward.1} parent=43 // pred_check
        %p6991 = pneg %p166
      $region46: #{basic_block_forward.1} parent=43 // pred_check_branch
        %6993 = sbr.rel (%p6991) target = $region48
      $region47: #{basic_block_forward.1} parent=43 // pred_region
        _
      $region48: #{basic_block_forward.1} parent=43 // pred_fallthru
        _
    $region44: #{basic_block_forward.1} parent=5 // pred_fallthru
      _
    %p6994 = scmp.le.s32.totalorder 2, %s12
    // Predicated region
    $region49: #{basic_block_forward.1} parent=5 // pred_check
      %p6995 = pneg %p6994
    $region50: #{basic_block_forward.1} parent=5 // pred_check_branch
      %6997 = sbr.rel (%p6995) target = $region52
    $region51: #{basic_block_forward.1} parent=5 // pred_region
      %s6998 = ssub.s32 %s12, 2
      // Predicated region
      $region53: #{basic_block_forward.1} parent=51 // pred_check
        %p6999 = pneg %p172
      $region54: #{basic_block_forward.1} parent=51 // pred_check_branch
        %7001 = sbr.rel (%p6999) target = $region56
      $region55: #{basic_block_forward.1} parent=51 // pred_region
        %p7002 = scmp.lt.s32.totalorder %s18, 1
        %s7003 = scalar_select %p7002, %s18, 1
        %s7004 = smul.addr %s7003, 36
        %s7005 = smul.addr %s7004, 8
        %s7006 = scalar_lea.vmem %s6, %s7005
      $region56: #{basic_block_forward.1} parent=51 // pred_fallthru
        _
    $region52: #{basic_block_forward.1} parent=5 // pred_fallthru
      _
  $region6: #{basic_block_forward.1} parent=0 // loop_footer
    %s16 = sadd.s32 1, %s12
  $region7: #{basic_block_forward.1} parent=0 // loop_footer_branch
    %11 = sbr.rel target = $region3
  $region8: #{basic_block_forward.1} parent=0 // loop_exit
    _

</llo_original>
